<compile_context>
chip_gen: v7x
topology: tpu7x:2x2x1
jax: 0.10.0
libtpu: 0.0.40
codegen_flags: <defaults>
</compile_context>

<pallas_src>
import math
import numpy as np
import jax
import jax.numpy as jnp
from jax import lax
from jax.experimental import pallas as pl
from jax.experimental.pallas import tpu as pltpu

# ----------------------------- config -------------------------------------
D_MODEL = 32
NUM_HEADS = 2
HEAD_DIM = D_MODEL // NUM_HEADS
DIM_FF = 64
NUM_CLASSES = 10
C_PAD = 128                       # lane-dense classifier output width
LONG_N = 8
WORK_N = 8
ANTICIPATION_LENGTH = 4
ANTICIPATION_SAMPLE_RATE = 1
ANT_N = ANTICIPATION_LENGTH // ANTICIPATION_SAMPLE_RATE
FUTURE_N = 8
CONTEXT_N = 2
ENC_QUERY_N = 4
GEN_QUERY_N = 4
FUT_QUERY_N = 12
REFINE_TIMES = 2
LONG_MEMORY_USE_PE = False
WORK_MEMORY_USE_PE = True
VIS_DIM = 24
MOT_DIM = 8
BATCH = 2

TW = WORK_N + ANT_N                            # 12 work + anticipation tokens
TR = TW - CONTEXT_N                            # 10 refined work tokens
LM = ENC_QUERY_N                               # 4 compressed long memory
G = GEN_QUERY_N                                # 4 generated future tokens
T_TOTAL = LONG_N + WORK_N                      # 16 input frames
T_CLS = (REFINE_TIMES + 1) * TR + FUTURE_N     # 38 classified tokens
NUM_DEC = 3 + REFINE_TIMES                     # enc, dec, gen, 2 refinements

# --- weight-slab row layout (all matrices stored as (rows, 32)) ---
O_QKV = 0
O_WOS = O_QKV + 3 * D_MODEL
O_WQC = O_WOS + D_MODEL
O_WKV = O_WQC + D_MODEL
O_WOC = O_WKV + 2 * D_MODEL
O_W1 = O_WOC + D_MODEL
O_W2 = O_W1 + DIM_FF
DEC_W_ROWS = O_W2 + DIM_FF                     # 384
W_CLS_ROWS = C_PAD
W_ROWS = W_CLS_ROWS + NUM_DEC * DEC_W_ROWS     # 2048

# --- vector-slab row layout ---
VEC_DEC_BASE = 28
DEC_V_ROWS = 17
VEC_ROWS = VEC_DEC_BASE + NUM_DEC * DEC_V_ROWS

NEG_INF = -1e9
BF16 = jnp.bfloat16


# ----------------------------- in-kernel math ------------------------------
def _dot_t(x, w):
    """y = x @ w.T, bf16 operands on the MXU, f32 accumulation."""
    return lax.dot_general(x.astype(BF16), w.astype(BF16),
                           dimension_numbers=(((1,), (1,)), ((), ())),
                           preferred_element_type=jnp.float32)


def _dot_n(x, w):
    """y = x @ w, bf16 operands on the MXU, f32 accumulation."""
    return lax.dot_general(x.astype(BF16), w.astype(BF16),
                           dimension_numbers=(((1,), (0,)), ((), ())),
                           preferred_element_type=jnp.float32)


def _ln(x, g, b, eps=1e-5):
    """LayerNorm with fused statistics (E[x], E[x^2] in one pass)."""
    mu = jnp.mean(x, axis=-1, keepdims=True)
    msq = jnp.mean(x * x, axis=-1, keepdims=True)
    return (x - mu) * lax.rsqrt(msq - mu * mu + eps) * g + b


def _mha(q, k, v, wo, bo, mask):
    """Multi-head attention, softmax scale pre-folded into q.

    Heads are processed via 2-D lane slices + per-head fold of the output
    projection (avoids minor-dim reshapes / head concats; with H=2 the extra
    K=16 MXU push is negligible)."""
    out = None
    for h in range(NUM_HEADS):
        sl = slice(h * HEAD_DIM, (h + 1) * HEAD_DIM)
        s = _dot_t(q[:, sl], k[:, sl])                     # (Tq, Tk) f32
        if mask is not None:
            s = s + mask
        s = s - jnp.max(s, axis=-1, keepdims=True)
        p = jnp.exp(s)
        p = p * pl.reciprocal(jnp.sum(p, axis=-1, keepdims=True), approx=False)
        o_h = _dot_n(p, v[:, sl])                          # (Tq, dh)
        proj = _dot_t(o_h, wo[:, sl])                      # (Tq, D)
        out = proj if out is None else out + proj
    return out + bo


def _decoder(w_ref, v_ref, b1_ref, d, tgt, mem, tgt_mask, mem_mask):
    """Post-norm TransformerDecoder (1 layer + final norm), weights from slabs."""
    wb = W_CLS_ROWS + d * DEC_W_ROWS
    vb = VEC_DEC_BASE + d * DEC_V_ROWS
    W = lambda off, n: w_ref[wb + off:wb + off + n, :]
    V = lambda r: v_ref[vb + r:vb + r + 1, :]

    # --- self-attention (fused QKV projection) + residual + LN ---
    qkv = _dot_t(tgt, W(O_QKV, 3 * D_MODEL))               # (Tq, 3D)
    sa = _mha(qkv[:, 0:D_MODEL] + V(0),
              qkv[:, D_MODEL:2 * D_MODEL] + V(1),
              qkv[:, 2 * D_MODEL:3 * D_MODEL] + V(2),
              W(O_WOS, D_MODEL), V(3), tgt_mask)
    x = _ln(tgt + sa, V(9), V(10))

    # --- cross-attention (fused KV projection) + residual + LN ---
    qc = _dot_t(x, W(O_WQC, D_MODEL)) + V(4)
    kv = _dot_t(mem, W(O_WKV, 2 * D_MODEL))                # (S, 2D)
    ca = _mha(qc, kv[:, 0:D_MODEL] + V(5), kv[:, D_MODEL:2 * D_MODEL] + V(6),
              W(O_WOC, D_MODEL), V(7), mem_mask)
    x = _ln(x + ca, V(11), V(12))

    # --- feed-forward + residual + LN ---
    hid = jnp.maximum(_dot_t(x, W(O_W1, DIM_FF)) + b1_ref[d:d + 1, :], 0.0)
    x = _ln(x + _dot_n(hid, W(O_W2, DIM_FF)) + V(8), V(13), V(14))

    # --- final decoder norm ---
    return _ln(x, V(15), V(16))


# ----------------------------- fused kernel --------------------------------
def _cmert_kernel(vis_ref, mot_ref, fhv_ref, fhm_ref, w_ref, v_ref, b1_ref,
                  clsb_ref, sint_ref, mself_ref, mcross_ref, mrself_ref,
                  mrcross_ref, out_ref, ext_mem, tot_mem):
    vis = vis_ref[...]                                     # (16, 24)
    mot = mot_ref[...]                                     # (16, 8)

    # ---- feature heads: Linear(concat(vis,mot)) + ReLU, done as two dots ----
    # TODO(synk): BaseFeatureHead_mat internals are not public here; modelled
    # as concat(visual, motion) -> Linear -> ReLU (standard LSTR feature head).
    def fhead(r0, brow, xv, xm):
        y = (_dot_t(xv, fhv_ref[r0:r0 + D_MODEL, :])
             + _dot_t(xm, fhm_ref[r0:r0 + D_MODEL, :])
             + v_ref[brow:brow + 1, :])
        return jnp.maximum(y, 0.0)

    long_feats = fhead(0, 0, vis[0:LONG_N, :], mot[0:LONG_N, :])      # (8, 32)
    work_feats = (fhead(D_MODEL, 1, vis[LONG_N:, :], mot[LONG_N:, :])
                  + v_ref[8:16, :])                                   # + PE[0:8]

    # ---- long-memory compression (enc decoder, masks statically zero) ----
    memory = _decoder(w_ref, v_ref, b1_ref, 0, v_ref[16:20, :], long_feats,
                      None, None)                                     # (4, 32)

    # ---- extended memory scratch: [work+ant (12) | memory (4)] ----
    ext_mem[0:WORK_N, :] = work_feats
    ext_mem[WORK_N:TW, :] = v_ref[24:28, :]        # anticipation queries (+PE)
    ext_mem[TW:TW + LM, :] = memory
    work_mem = ext_mem[0:TW, :]

    # ---- main decoder over extended memory (INCLUDE_WORK=True path) ----
    output = _decoder(w_ref, v_ref, b1_ref, 1, work_mem, ext_mem[...],
                      mself_ref[...], mcross_ref[...])                # (12, 32)
    out_r = output[CONTEXT_N:, :]                                     # (10, 32)

    # ---- future generation (gen decoder, masks statically zero) ----
    future = _decoder(w_ref, v_ref, b1_ref, 2, v_ref[20:24, :], memory,
                      None, None)                                     # (4, 32)

    # ---- classifier (output padded to 128 lanes -> unmasked stores) ----
    cls_w = w_ref[0:C_PAD, :]
    cls_b = clsb_ref[...]

    def classify(x):
        return _dot_t(x, cls_w) + cls_b

    out_ref[0:TR, :] = classify(out_r)

    # ---- refinement: total memory scratch [memory (4) | future (4) | out (10)] ----
    tot_mem[0:LM, :] = memory
    tot_mem[LM:LM + G, :] = future
    for i in range(REFINE_TIMES):
        tot_mem[LM + G:LM + G + TR, :] = out_r
        out_r = _decoder(w_ref, v_ref, b1_ref, 3 + i, out_r, tot_mem[...],
                         mrself_ref[...], mrcross_ref[...])
        out_ref[(1 + i) * TR:(2 + i) * TR, :] = classify(out_r)

    # ---- F.interpolate(..., mode='nearest') via constant selection matmul ----
    fut = lax.dot_general(sint_ref[...], future,
                          dimension_numbers=(((1,), (0,)), ((), ())),
                          preferred_element_type=jnp.float32)         # (8, 32)
    out_ref[(1 + REFINE_TIMES) * TR:T_CLS, :] = classify(fut)


# ----------------------------- constants ------------------------------------
def sinusoidal_pe(max_len, d):
    pos = np.arange(max_len)[:, None].astype(np.float64)
    div = np.exp(np.arange(0, d, 2).astype(np.float64) * (-math.log(10000.0) / d))
    pe = np.zeros((max_len, d), dtype=np.float64)
    pe[:, 0::2] = np.sin(pos * div)
    pe[:, 1::2] = np.cos(pos * div)
    return jnp.asarray(pe, jnp.float32)


# ----------------------------- parameters ----------------------------------
def _normal(key, shape, scale=0.02):
    return (scale * jax.random.normal(key, shape)).astype(jnp.float32)


def init_linear(key, in_f, out_f):
    return {"w": _normal(key, (out_f, in_f)), "b": jnp.zeros((out_f,), jnp.float32)}


def init_ln(d):
    return {"g": jnp.ones((d,), jnp.float32), "b": jnp.zeros((d,), jnp.float32)}


def init_mha(key, d):
    ks = jax.random.split(key, 4)
    return {
        "wq": _normal(ks[0], (d, d)), "bq": jnp.zeros((d,), jnp.float32),
        "wk": _normal(ks[1], (d, d)), "bk": jnp.zeros((d,), jnp.float32),
        "wv": _normal(ks[2], (d, d)), "bv": jnp.zeros((d,), jnp.float32),
        "wo": _normal(ks[3], (d, d)), "bo": jnp.zeros((d,), jnp.float32),
    }


def init_dec_layer(key, d, dff):
    ks = jax.random.split(key, 4)
    return {
        "self_attn": init_mha(ks[0], d),
        "cross_attn": init_mha(ks[1], d),
        "linear1": init_linear(ks[2], d, dff),
        "linear2": init_linear(ks[3], dff, d),
        "norm1": init_ln(d), "norm2": init_ln(d), "norm3": init_ln(d),
    }


def init_decoder(key, d, dff, n_layers, with_norm=True):
    ks = jax.random.split(key, n_layers)
    return {
        "layers": [init_dec_layer(ks[i], d, dff) for i in range(n_layers)],
        "norm": init_ln(d) if with_norm else None,
    }


def init_params(key):
    ks = jax.random.split(key, 12)
    return {
        "fh_long": init_linear(ks[0], VIS_DIM + MOT_DIM, D_MODEL),
        "fh_work": init_linear(ks[1], VIS_DIM + MOT_DIM, D_MODEL),
        "enc_query": _normal(ks[2], (ENC_QUERY_N, D_MODEL), 1.0),
        "enc_dec": init_decoder(ks[3], D_MODEL, DIM_FF, 1, True),
        "dec": init_decoder(ks[4], D_MODEL, DIM_FF, 1, True),
        "gen_query": _normal(ks[5], (GEN_QUERY_N, D_MODEL), 1.0),
        "gen": init_decoder(ks[6], D_MODEL, DIM_FF, 1, True),
        "final_query": _normal(ks[7], (FUT_QUERY_N, D_MODEL), 1.0),
        "work_fusions": [init_decoder(jax.random.fold_in(ks[8], i),
                                      D_MODEL, DIM_FF, 1, True)
                         for i in range(REFINE_TIMES)],
        "classifier": init_linear(ks[9], D_MODEL, NUM_CLASSES),
    }


# ----------------------------- weight packing --------------------------------
def pack_all(params):
    scale = HEAD_DIM ** -0.5
    decs = ([params["enc_dec"], params["dec"], params["gen"]]
            + list(params["work_fusions"]))

    def dec_mats(dec):
        l = dec["layers"][0]
        sa, ca = l["self_attn"], l["cross_attn"]
        return jnp.concatenate([
            sa["wq"] * scale, sa["wk"], sa["wv"],      # fused QKV  (96, 32)
            sa["wo"],                                   # self out   (32, 32)
            ca["wq"] * scale,                           # cross Q    (32, 32)
            ca["wk"], ca["wv"],                         # fused KV   (64, 32)
            ca["wo"],                                   # cross out  (32, 32)
            l["linear1"]["w"],                          # FFN in     (64, 32)
            l["linear2"]["w"].T,                        # FFN out^T  (64, 32)
        ], axis=0)

    w_cls = jnp.zeros((C_PAD, D_MODEL), jnp.float32).at[:NUM_CLASSES].set(
        params["classifier"]["w"])
    wslab = jnp.concatenate([w_cls] + [dec_mats(d) for d in decs],
                            axis=0).astype(BF16)                     # (2048, 32)

    fhv = jnp.concatenate([params["fh_long"]["w"][:, :VIS_DIM],
                           params["fh_work"]["w"][:, :VIS_DIM]], axis=0).astype(BF16)
    fhm = jnp.concatenate([params["fh_long"]["w"][:, VIS_DIM:],
                           params["fh_work"]["w"][:, VIS_DIM:]], axis=0).astype(BF16)

    pe = sinusoidal_pe(4 * T_TOTAL, D_MODEL)
    pe_work = (pe[:WORK_N] if WORK_MEMORY_USE_PE
               else jnp.zeros((WORK_N, D_MODEL), jnp.float32))
    ant_pad = (LONG_N + WORK_N) if LONG_MEMORY_USE_PE else WORK_N
    ant = (params["final_query"][:ANTICIPATION_LENGTH:ANTICIPATION_SAMPLE_RATE]
           + pe[ant_pad:ant_pad + ANT_N])

    def dec_vecs(dec):
        l = dec["layers"][0]
        sa, ca = l["self_attn"], l["cross_attn"]
        if dec["norm"] is not None:
            nfg, nfb = dec["norm"]["g"], dec["norm"]["b"]
        else:
            nfg = jnp.ones((D_MODEL,), jnp.float32)
            nfb = jnp.zeros((D_MODEL,), jnp.float32)
        return jnp.stack([
            sa["bq"] * scale, sa["bk"], sa["bv"], sa["bo"],
            ca["bq"] * scale, ca["bk"], ca["bv"], ca["bo"],
            l["linear2"]["b"],
            l["norm1"]["g"], l["norm1"]["b"],
            l["norm2"]["g"], l["norm2"]["b"],
            l["norm3"]["g"], l["norm3"]["b"],
            nfg, nfb], axis=0)

    vslab = jnp.zeros((VEC_ROWS, D_MODEL), jnp.float32)
    vslab = vslab.at[0].set(params["fh_long"]["b"])
    vslab = vslab.at[1].set(params["fh_work"]["b"])
    vslab = vslab.at[8:16].set(pe_work)
    vslab = vslab.at[16:20].set(params["enc_query"])
    vslab = vslab.at[20:24].set(params["gen_query"])
    vslab = vslab.at[24:28].set(ant)
    for i, d in enumerate(decs):
        r = VEC_DEC_BASE + i * DEC_V_ROWS
        vslab = vslab.at[r:r + DEC_V_ROWS].set(dec_vecs(d))

    b1slab = jnp.stack([d["layers"][0]["linear1"]["b"] for d in decs], axis=0)
    clsb = jnp.zeros((1, C_PAD), jnp.float32).at[0, :NUM_CLASSES].set(
        params["classifier"]["b"])

    # masks (key order: dec = [work | memory]; refine = [memory | future | out])
    idx = np.arange(TW)
    causal = np.where(idx[None, :] <= idx[:, None], 0.0, NEG_INF).astype(np.float32)
    causal[-ANT_N:, -ANT_N:] = 0.0
    m_self = jnp.asarray(causal)
    m_cross = jnp.concatenate([m_self, jnp.zeros((TW, LM), jnp.float32)], axis=1)
    mr_self = m_self[CONTEXT_N:, CONTEXT_N:]
    mr_cross = jnp.concatenate(
        [jnp.zeros((TR, LM + G), jnp.float32), mr_self], axis=1)

    # nearest-neighbour interpolation selection matrix (FUTURE_N, G)
    sel = np.zeros((FUTURE_N, G), np.float32)
    sel[np.arange(FUTURE_N), (np.arange(FUTURE_N) * G) // FUTURE_N] = 1.0
    sint = jnp.asarray(sel)

    return dict(fhv=fhv, fhm=fhm, wslab=wslab, vslab=vslab, b1slab=b1slab,
                clsb=clsb, sint=sint, m_self=m_self, m_cross=m_cross,
                mr_self=mr_self, mr_cross=mr_cross)


# ----------------------------- forward -------------------------------------
def build_cmert_forward(params, batch_size):
    pk = pack_all(params)

    in_specs = [
        pl.BlockSpec((None, T_TOTAL, VIS_DIM), lambda b: (b, 0, 0)),   # visual
        pl.BlockSpec((None, T_TOTAL, MOT_DIM), lambda b: (b, 0, 0)),   # motion
        pl.BlockSpec((2 * D_MODEL, VIS_DIM), lambda b: (0, 0)),        # fhv
        pl.BlockSpec((2 * D_MODEL, MOT_DIM), lambda b: (0, 0)),        # fhm
        pl.BlockSpec((W_ROWS, D_MODEL), lambda b: (0, 0)),             # weight slab
        pl.BlockSpec((VEC_ROWS, D_MODEL), lambda b: (0, 0)),           # vector slab
        pl.BlockSpec((NUM_DEC, DIM_FF), lambda b: (0, 0)),             # linear1 biases
        pl.BlockSpec((1, C_PAD), lambda b: (0, 0)),                    # classifier bias
        pl.BlockSpec((FUTURE_N, G), lambda b: (0, 0)),                 # interp matrix
        pl.BlockSpec((TW, TW), lambda b: (0, 0)),                      # dec self mask
        pl.BlockSpec((TW, TW + LM), lambda b: (0, 0)),                 # dec cross mask
        pl.BlockSpec((TR, TR), lambda b: (0, 0)),                      # refine self mask
        pl.BlockSpec((TR, LM + G + TR), lambda b: (0, 0)),             # refine cross mask
    ]
    out_specs = pl.BlockSpec((None, T_CLS, C_PAD), lambda b: (b, 0, 0))
    scratch_shapes = [
        pltpu.VMEM((TW + LM, D_MODEL), jnp.float32),       # extended memory
        pltpu.VMEM((LM + G + TR, D_MODEL), jnp.float32),   # refinement memory
    ]

    fused = pl.pallas_call(
        _cmert_kernel,
        out_shape=jax.ShapeDtypeStruct((batch_size, T_CLS, C_PAD), jnp.float32),
        grid=(batch_size,),
        in_specs=in_specs,
        out_specs=out_specs,
        scratch_shapes=scratch_shapes,
        compiler_params=pltpu.CompilerParams(
            dimension_semantics=("parallel",)),
    )

    def forward(visual_inputs, motion_inputs):
        scores = fused(visual_inputs, motion_inputs, pk["fhv"], pk["fhm"],
                       pk["wslab"], pk["vslab"], pk["b1slab"], pk["clsb"],
                       pk["sint"], pk["m_self"], pk["m_cross"], pk["mr_self"],
                       pk["mr_cross"])
        work_scores = [scores[:, i * TR:(i + 1) * TR, :NUM_CLASSES]
                       for i in range(REFINE_TIMES + 1)]
        fut_scores = [scores[:, (REFINE_TIMES + 1) * TR:, :NUM_CLASSES]]
        return work_scores, fut_scores

    return jax.jit(forward)


# ----------------------------- main -----------------------------------------
if __name__ == "__main__":
    key = jax.random.PRNGKey(0)
    kp, kv, km = jax.random.split(key, 3)
    params = init_params(kp)

    visual_inputs = jax.random.normal(kv, (BATCH, T_TOTAL, VIS_DIM), jnp.float32)
    motion_inputs = jax.random.normal(km, (BATCH, T_TOTAL, MOT_DIM), jnp.float32)

    fwd = build_cmert_forward(params, BATCH)
    work_scores, fut_scores = fwd(visual_inputs, motion_inputs)

    for w in work_scores:
        jax.block_until_ready(w)
    for f in fut_scores:
        jax.block_until_ready(f)

    # sanity: shapes implied by the reference forward
    assert len(work_scores) == REFINE_TIMES + 1
    assert work_scores[0].shape == (BATCH, TR, NUM_CLASSES)
    assert len(fut_scores) == 1
    assert fut_scores[0].shape == (BATCH, FUTURE_N, NUM_CLASSES)
    print("KERNEL_OK")
</pallas_src>

<mosaic_0001>
module attributes {stable_mosaic.version = 11 : i64} {
  func.func @_cmert_kernel(%arg0: i32, %arg1: memref<1x16x24xf32, #tpu.memory_space<vmem>>, %arg2: memref<1x16x8xf32, #tpu.memory_space<vmem>>, %arg3: memref<64x24xbf16, #tpu.memory_space<vmem>>, %arg4: memref<64x8xbf16, #tpu.memory_space<vmem>>, %arg5: memref<2048x32xbf16, #tpu.memory_space<vmem>>, %arg6: memref<113x32xf32, #tpu.memory_space<vmem>>, %arg7: memref<5x64xf32, #tpu.memory_space<vmem>>, %arg8: memref<1x128xf32, #tpu.memory_space<vmem>>, %arg9: memref<8x4xf32, #tpu.memory_space<vmem>>, %arg10: memref<12x12xf32, #tpu.memory_space<vmem>>, %arg11: memref<12x16xf32, #tpu.memory_space<vmem>>, %arg12: memref<10x10xf32, #tpu.memory_space<vmem>>, %arg13: memref<10x18xf32, #tpu.memory_space<vmem>>, %arg14: memref<1x38x128xf32, #tpu.memory_space<vmem>>, %arg15: memref<16x32xf32, #tpu.memory_space<vmem>>, %arg16: memref<18x32xf32, #tpu.memory_space<vmem>>) attributes {dimension_semantics = [#tpu.dimension_semantics<parallel>], iteration_bounds = array<i64: 2>, scalar_prefetch = 0 : i64, scratch_operands = 2 : i64, tpu.core_type = #tpu.core_type<tc>, window_params = [{transform_indices = @transform_0, window_bounds = array<i64: 1, 16, 24>}, {transform_indices = @transform_1, window_bounds = array<i64: 1, 16, 8>}, {pipeline_mode = #tpu.pipeline_mode<synchronous>, transform_indices = @transform_2, window_bounds = array<i64: 64, 24>}, {pipeline_mode = #tpu.pipeline_mode<synchronous>, transform_indices = @transform_3, window_bounds = array<i64: 64, 8>}, {pipeline_mode = #tpu.pipeline_mode<synchronous>, transform_indices = @transform_4, window_bounds = array<i64: 2048, 32>}, {pipeline_mode = #tpu.pipeline_mode<synchronous>, transform_indices = @transform_5, window_bounds = array<i64: 113, 32>}, {pipeline_mode = #tpu.pipeline_mode<synchronous>, transform_indices = @transform_6, window_bounds = array<i64: 5, 64>}, {pipeline_mode = #tpu.pipeline_mode<synchronous>, transform_indices = @transform_7, window_bounds = array<i64: 1, 128>}, {pipeline_mode = #tpu.pipeline_mode<synchronous>, transform_indices = @transform_8, window_bounds = array<i64: 8, 4>}, {pipeline_mode = #tpu.pipeline_mode<synchronous>, transform_indices = @transform_9, window_bounds = array<i64: 12, 12>}, {pipeline_mode = #tpu.pipeline_mode<synchronous>, transform_indices = @transform_10, window_bounds = array<i64: 12, 16>}, {pipeline_mode = #tpu.pipeline_mode<synchronous>, transform_indices = @transform_11, window_bounds = array<i64: 10, 10>}, {pipeline_mode = #tpu.pipeline_mode<synchronous>, transform_indices = @transform_12, window_bounds = array<i64: 10, 18>}, {transform_indices = @transform_13, window_bounds = array<i64: 1, 38, 128>}]} {
    %c0 = arith.constant 0 : index
    %c0_0 = arith.constant 0 : index
    %c0_1 = arith.constant 0 : index
    %0 = vector.load %arg1[%c0, %c0_0, %c0_1] : memref<1x16x24xf32, #tpu.memory_space<vmem>>, vector<1x16x24xf32>
    %1 = vector.shape_cast %0 : vector<1x16x24xf32> to vector<16x24xf32>
    %c0_2 = arith.constant 0 : index
    %c0_3 = arith.constant 0 : index
    %c0_4 = arith.constant 0 : index
    %2 = vector.load %arg2[%c0_2, %c0_3, %c0_4] : memref<1x16x8xf32, #tpu.memory_space<vmem>>, vector<1x16x8xf32>
    %3 = vector.shape_cast %2 : vector<1x16x8xf32> to vector<16x8xf32>
    %4 = vector.extract_strided_slice %1 {offsets = [0, 0], sizes = [8, 24], strides = [1, 1]} : vector<16x24xf32> to vector<8x24xf32>
    %5 = vector.extract_strided_slice %3 {offsets = [0, 0], sizes = [8, 8], strides = [1, 1]} : vector<16x8xf32> to vector<8x8xf32>
    %c0_5 = arith.constant 0 : index
    %c0_6 = arith.constant 0 : index
    %6 = vector.load %arg3[%c0_5, %c0_6] : memref<64x24xbf16, #tpu.memory_space<vmem>>, vector<32x24xbf16>
    %7 = arith.truncf %4 : vector<8x24xf32> to vector<8x24xbf16>
    %cst = arith.constant dense<0.000000e+00> : vector<8x32xf32>
    %8 = tpu.matmul %7, %6, %cst {dimension_numbers = #tpu.dot_dimension_numbers<[1], [1], [0], [0], [0, 0, 1, 0], [], []>} : vector<8x24xbf16>, vector<32x24xbf16>, vector<8x32xf32> -> vector<8x32xf32>
    %c0_7 = arith.constant 0 : index
    %c0_8 = arith.constant 0 : index
    %9 = vector.load %arg4[%c0_7, %c0_8] : memref<64x8xbf16, #tpu.memory_space<vmem>>, vector<32x8xbf16>
    %10 = arith.truncf %5 : vector<8x8xf32> to vector<8x8xbf16>
    %cst_9 = arith.constant dense<0.000000e+00> : vector<8x32xf32>
    %11 = tpu.matmul %10, %9, %cst_9 {dimension_numbers = #tpu.dot_dimension_numbers<[1], [1], [0], [0], [0, 0, 1, 0], [], []>} : vector<8x8xbf16>, vector<32x8xbf16>, vector<8x32xf32> -> vector<8x32xf32>
    %12 = arith.addf %8, %11 : vector<8x32xf32>
    %c0_10 = arith.constant 0 : index
    %c0_11 = arith.constant 0 : index
    %13 = vector.load %arg6[%c0_10, %c0_11] : memref<113x32xf32, #tpu.memory_space<vmem>>, vector<1x32xf32>
    %14 = vector.broadcast %13 : vector<1x32xf32> to vector<8x32xf32>
    %15 = arith.addf %12, %14 : vector<8x32xf32>
    %cst_12 = arith.constant 0.000000e+00 : f32
    %16 = vector.broadcast %cst_12 : f32 to vector<8x32xf32>
    %17 = arith.maximumf %15, %16 : vector<8x32xf32>
    %18 = vector.extract_strided_slice %1 {offsets = [8, 0], sizes = [8, 24], strides = [1, 1]} : vector<16x24xf32> to vector<8x24xf32>
    %19 = vector.extract_strided_slice %3 {offsets = [8, 0], sizes = [8, 8], strides = [1, 1]} : vector<16x8xf32> to vector<8x8xf32>
    %c32 = arith.constant 32 : index
    %c0_13 = arith.constant 0 : index
    %20 = vector.load %arg3[%c32, %c0_13] : memref<64x24xbf16, #tpu.memory_space<vmem>>, vector<32x24xbf16>
    %21 = arith.truncf %18 : vector<8x24xf32> to vector<8x24xbf16>
    %cst_14 = arith.constant dense<0.000000e+00> : vector<8x32xf32>
    %22 = tpu.matmul %21, %20, %cst_14 {dimension_numbers = #tpu.dot_dimension_numbers<[1], [1], [0], [0], [0, 0, 1, 0], [], []>} : vector<8x24xbf16>, vector<32x24xbf16>, vector<8x32xf32> -> vector<8x32xf32>
    %c32_15 = arith.constant 32 : index
    %c0_16 = arith.constant 0 : index
    %23 = vector.load %arg4[%c32_15, %c0_16] : memref<64x8xbf16, #tpu.memory_space<vmem>>, vector<32x8xbf16>
    %24 = arith.truncf %19 : vector<8x8xf32> to vector<8x8xbf16>
    %cst_17 = arith.constant dense<0.000000e+00> : vector<8x32xf32>
    %25 = tpu.matmul %24, %23, %cst_17 {dimension_numbers = #tpu.dot_dimension_numbers<[1], [1], [0], [0], [0, 0, 1, 0], [], []>} : vector<8x8xbf16>, vector<32x8xbf16>, vector<8x32xf32> -> vector<8x32xf32>
    %26 = arith.addf %22, %25 : vector<8x32xf32>
    %c1 = arith.constant 1 : index
    %c0_18 = arith.constant 0 : index
    %27 = vector.load %arg6[%c1, %c0_18] : memref<113x32xf32, #tpu.memory_space<vmem>>, vector<1x32xf32>
    %28 = vector.broadcast %27 : vector<1x32xf32> to vector<8x32xf32>
    %29 = arith.addf %26, %28 : vector<8x32xf32>
    %cst_19 = arith.constant 0.000000e+00 : f32
    %30 = vector.broadcast %cst_19 : f32 to vector<8x32xf32>
    %31 = arith.maximumf %29, %30 : vector<8x32xf32>
    %c8 = arith.constant 8 : index
    %c0_20 = arith.constant 0 : index
    %32 = vector.load %arg6[%c8, %c0_20] : memref<113x32xf32, #tpu.memory_space<vmem>>, vector<8x32xf32>
    %33 = arith.addf %31, %32 : vector<8x32xf32>
    %c16 = arith.constant 16 : index
    %c0_21 = arith.constant 0 : index
    %34 = vector.load %arg6[%c16, %c0_21] : memref<113x32xf32, #tpu.memory_space<vmem>>, vector<4x32xf32>
    %c128 = arith.constant 128 : index
    %c0_22 = arith.constant 0 : index
    %35 = vector.load %arg5[%c128, %c0_22] : memref<2048x32xbf16, #tpu.memory_space<vmem>>, vector<96x32xbf16>
    %36 = arith.truncf %34 : vector<4x32xf32> to vector<4x32xbf16>
    %cst_23 = arith.constant dense<0.000000e+00> : vector<4x96xf32>
    %37 = tpu.matmul %36, %35, %cst_23 {dimension_numbers = #tpu.dot_dimension_numbers<[1], [1], [0], [0], [0, 0, 1, 0], [], []>} : vector<4x32xbf16>, vector<96x32xbf16>, vector<4x96xf32> -> vector<4x96xf32>
    %38 = vector.extract_strided_slice %37 {offsets = [0, 0], sizes = [4, 32], strides = [1, 1]} : vector<4x96xf32> to vector<4x32xf32>
    %c28 = arith.constant 28 : index
    %c0_24 = arith.constant 0 : index
    %39 = vector.load %arg6[%c28, %c0_24] : memref<113x32xf32, #tpu.memory_space<vmem>>, vector<1x32xf32>
    %40 = vector.broadcast %39 : vector<1x32xf32> to vector<4x32xf32>
    %41 = arith.addf %38, %40 : vector<4x32xf32>
    %42 = vector.extract_strided_slice %37 {offsets = [0, 32], sizes = [4, 32], strides = [1, 1]} : vector<4x96xf32> to vector<4x32xf32>
    %c29 = arith.constant 29 : index
    %c0_25 = arith.constant 0 : index
    %43 = vector.load %arg6[%c29, %c0_25] : memref<113x32xf32, #tpu.memory_space<vmem>>, vector<1x32xf32>
    %44 = vector.broadcast %43 : vector<1x32xf32> to vector<4x32xf32>
    %45 = arith.addf %42, %44 : vector<4x32xf32>
    %46 = vector.extract_strided_slice %37 {offsets = [0, 64], sizes = [4, 32], strides = [1, 1]} : vector<4x96xf32> to vector<4x32xf32>
    %c30 = arith.constant 30 : index
    %c0_26 = arith.constant 0 : index
    %47 = vector.load %arg6[%c30, %c0_26] : memref<113x32xf32, #tpu.memory_space<vmem>>, vector<1x32xf32>
    %48 = vector.broadcast %47 : vector<1x32xf32> to vector<4x32xf32>
    %49 = arith.addf %46, %48 : vector<4x32xf32>
    %c224 = arith.constant 224 : index
    %c0_27 = arith.constant 0 : index
    %50 = vector.load %arg5[%c224, %c0_27] : memref<2048x32xbf16, #tpu.memory_space<vmem>>, vector<32x32xbf16>
    %c31 = arith.constant 31 : index
    %c0_28 = arith.constant 0 : index
    %51 = vector.load %arg6[%c31, %c0_28] : memref<113x32xf32, #tpu.memory_space<vmem>>, vector<1x32xf32>
    %52 = vector.extract_strided_slice %41 {offsets = [0, 0], sizes = [4, 16], strides = [1, 1]} : vector<4x32xf32> to vector<4x16xf32>
    %53 = vector.extract_strided_slice %45 {offsets = [0, 0], sizes = [4, 16], strides = [1, 1]} : vector<4x32xf32> to vector<4x16xf32>
    %54 = arith.truncf %52 : vector<4x16xf32> to vector<4x16xbf16>
    %55 = arith.truncf %53 : vector<4x16xf32> to vector<4x16xbf16>
    %cst_29 = arith.constant dense<0.000000e+00> : vector<4x4xf32>
    %56 = tpu.matmul %54, %55, %cst_29 {dimension_numbers = #tpu.dot_dimension_numbers<[1], [1], [0], [0], [0, 0, 1, 0], [], []>} : vector<4x16xbf16>, vector<4x16xbf16>, vector<4x4xf32> -> vector<4x4xf32>
    %cst_30 = arith.constant dense<0xFF800000> : vector<4xf32>
    %57 = vector.multi_reduction <maximumf>, %56, %cst_30 [1] : vector<4x4xf32> to vector<4xf32>
    %58 = vector.shape_cast %57 : vector<4xf32> to vector<4x1xf32>
    %59 = vector.broadcast %58 : vector<4x1xf32> to vector<4x4xf32>
    %60 = arith.subf %56, %59 : vector<4x4xf32>
    %61 = math.exp %60 : vector<4x4xf32>
    %cst_31 = arith.constant dense<0.000000e+00> : vector<4xf32>
    %62 = vector.multi_reduction <add>, %61, %cst_31 [1] : vector<4x4xf32> to vector<4xf32>
    %63 = vector.shape_cast %62 : vector<4xf32> to vector<4x1xf32>
    %64 = tpu.reciprocal %63 : vector<4x1xf32> -> vector<4x1xf32>
    %65 = vector.broadcast %64 : vector<4x1xf32> to vector<4x4xf32>
    %66 = arith.mulf %61, %65 : vector<4x4xf32>
    %67 = vector.extract_strided_slice %49 {offsets = [0, 0], sizes = [4, 16], strides = [1, 1]} : vector<4x32xf32> to vector<4x16xf32>
    %68 = arith.truncf %66 : vector<4x4xf32> to vector<4x4xbf16>
    %69 = arith.truncf %67 : vector<4x16xf32> to vector<4x16xbf16>
    %cst_32 = arith.constant dense<0.000000e+00> : vector<4x16xf32>
    %70 = tpu.matmul %68, %69, %cst_32 {dimension_numbers = #tpu.dot_dimension_numbers<[1], [0], [0], [1], [0, 0, 1, 1], [], []>} : vector<4x4xbf16>, vector<4x16xbf16>, vector<4x16xf32> -> vector<4x16xf32>
    %71 = vector.extract_strided_slice %50 {offsets = [0, 0], sizes = [32, 16], strides = [1, 1]} : vector<32x32xbf16> to vector<32x16xbf16>
    %72 = arith.truncf %70 : vector<4x16xf32> to vector<4x16xbf16>
    %cst_33 = arith.constant dense<0.000000e+00> : vector<4x32xf32>
    %73 = tpu.matmul %72, %71, %cst_33 {dimension_numbers = #tpu.dot_dimension_numbers<[1], [1], [0], [0], [0, 0, 1, 0], [], []>} : vector<4x16xbf16>, vector<32x16xbf16>, vector<4x32xf32> -> vector<4x32xf32>
    %74 = vector.extract_strided_slice %41 {offsets = [0, 16], sizes = [4, 16], strides = [1, 1]} : vector<4x32xf32> to vector<4x16xf32>
    %75 = vector.extract_strided_slice %45 {offsets = [0, 16], sizes = [4, 16], strides = [1, 1]} : vector<4x32xf32> to vector<4x16xf32>
    %76 = arith.truncf %74 : vector<4x16xf32> to vector<4x16xbf16>
    %77 = arith.truncf %75 : vector<4x16xf32> to vector<4x16xbf16>
    %cst_34 = arith.constant dense<0.000000e+00> : vector<4x4xf32>
    %78 = tpu.matmul %76, %77, %cst_34 {dimension_numbers = #tpu.dot_dimension_numbers<[1], [1], [0], [0], [0, 0, 1, 0], [], []>} : vector<4x16xbf16>, vector<4x16xbf16>, vector<4x4xf32> -> vector<4x4xf32>
    %cst_35 = arith.constant dense<0xFF800000> : vector<4xf32>
    %79 = vector.multi_reduction <maximumf>, %78, %cst_35 [1] : vector<4x4xf32> to vector<4xf32>
    %80 = vector.shape_cast %79 : vector<4xf32> to vector<4x1xf32>
    %81 = vector.broadcast %80 : vector<4x1xf32> to vector<4x4xf32>
    %82 = arith.subf %78, %81 : vector<4x4xf32>
    %83 = math.exp %82 : vector<4x4xf32>
    %cst_36 = arith.constant dense<0.000000e+00> : vector<4xf32>
    %84 = vector.multi_reduction <add>, %83, %cst_36 [1] : vector<4x4xf32> to vector<4xf32>
    %85 = vector.shape_cast %84 : vector<4xf32> to vector<4x1xf32>
    %86 = tpu.reciprocal %85 : vector<4x1xf32> -> vector<4x1xf32>
    %87 = vector.broadcast %86 : vector<4x1xf32> to vector<4x4xf32>
    %88 = arith.mulf %83, %87 : vector<4x4xf32>
    %89 = vector.extract_strided_slice %49 {offsets = [0, 16], sizes = [4, 16], strides = [1, 1]} : vector<4x32xf32> to vector<4x16xf32>
    %90 = arith.truncf %88 : vector<4x4xf32> to vector<4x4xbf16>
    %91 = arith.truncf %89 : vector<4x16xf32> to vector<4x16xbf16>
    %cst_37 = arith.constant dense<0.000000e+00> : vector<4x16xf32>
    %92 = tpu.matmul %90, %91, %cst_37 {dimension_numbers = #tpu.dot_dimension_numbers<[1], [0], [0], [1], [0, 0, 1, 1], [], []>} : vector<4x4xbf16>, vector<4x16xbf16>, vector<4x16xf32> -> vector<4x16xf32>
    %93 = vector.extract_strided_slice %50 {offsets = [0, 16], sizes = [32, 16], strides = [1, 1]} : vector<32x32xbf16> to vector<32x16xbf16>
    %94 = arith.truncf %92 : vector<4x16xf32> to vector<4x16xbf16>
    %cst_38 = arith.constant dense<0.000000e+00> : vector<4x32xf32>
    %95 = tpu.matmul %94, %93, %cst_38 {dimension_numbers = #tpu.dot_dimension_numbers<[1], [1], [0], [0], [0, 0, 1, 0], [], []>} : vector<4x16xbf16>, vector<32x16xbf16>, vector<4x32xf32> -> vector<4x32xf32>
    %96 = arith.addf %73, %95 : vector<4x32xf32>
    %97 = vector.broadcast %51 : vector<1x32xf32> to vector<4x32xf32>
    %98 = arith.addf %96, %97 : vector<4x32xf32>
    %99 = arith.addf %34, %98 : vector<4x32xf32>
    %c37 = arith.constant 37 : index
    %c0_39 = arith.constant 0 : index
    %100 = vector.load %arg6[%c37, %c0_39] : memref<113x32xf32, #tpu.memory_space<vmem>>, vector<1x32xf32>
    %c38 = arith.constant 38 : index
    %c0_40 = arith.constant 0 : index
    %101 = vector.load %arg6[%c38, %c0_40] : memref<113x32xf32, #tpu.memory_space<vmem>>, vector<1x32xf32>
    %cst_41 = arith.constant dense<0.000000e+00> : vector<4xf32>
    %102 = vector.multi_reduction <add>, %99, %cst_41 [1] : vector<4x32xf32> to vector<4xf32>
    %103 = vector.shape_cast %102 : vector<4xf32> to vector<4x1xf32>
    %cst_42 = arith.constant 3.200000e+01 : f32
    %104 = vector.broadcast %cst_42 : f32 to vector<4x1xf32>
    %105 = arith.divf %103, %104 : vector<4x1xf32>
    %106 = arith.mulf %99, %99 : vector<4x32xf32>
    %cst_43 = arith.constant dense<0.000000e+00> : vector<4xf32>
    %107 = vector.multi_reduction <add>, %106, %cst_43 [1] : vector<4x32xf32> to vector<4xf32>
    %108 = vector.shape_cast %107 : vector<4xf32> to vector<4x1xf32>
    %cst_44 = arith.constant 3.200000e+01 : f32
    %109 = vector.broadcast %cst_44 : f32 to vector<4x1xf32>
    %110 = arith.divf %108, %109 : vector<4x1xf32>
    %111 = vector.broadcast %105 : vector<4x1xf32> to vector<4x32xf32>
    %112 = arith.subf %99, %111 : vector<4x32xf32>
    %113 = arith.mulf %105, %105 : vector<4x1xf32>
    %114 = arith.subf %110, %113 : vector<4x1xf32>
    %cst_45 = arith.constant 9.99999974E-6 : f32
    %115 = vector.broadcast %cst_45 : f32 to vector<4x1xf32>
    %116 = arith.addf %114, %115 : vector<4x1xf32>
    %117 = math.rsqrt %116 : vector<4x1xf32>
    %118 = vector.broadcast %117 : vector<4x1xf32> to vector<4x32xf32>
    %119 = arith.mulf %112, %118 : vector<4x32xf32>
    %120 = vector.broadcast %100 : vector<1x32xf32> to vector<4x32xf32>
    %121 = arith.mulf %119, %120 : vector<4x32xf32>
    %122 = vector.broadcast %101 : vector<1x32xf32> to vector<4x32xf32>
    %123 = arith.addf %121, %122 : vector<4x32xf32>
    %c256 = arith.constant 256 : index
    %c0_46 = arith.constant 0 : index
    %124 = vector.load %arg5[%c256, %c0_46] : memref<2048x32xbf16, #tpu.memory_space<vmem>>, vector<32x32xbf16>
    %125 = arith.truncf %123 : vector<4x32xf32> to vector<4x32xbf16>
    %cst_47 = arith.constant dense<0.000000e+00> : vector<4x32xf32>
    %126 = tpu.matmul %125, %124, %cst_47 {dimension_numbers = #tpu.dot_dimension_numbers<[1], [1], [0], [0], [0, 0, 1, 0], [], []>} : vector<4x32xbf16>, vector<32x32xbf16>, vector<4x32xf32> -> vector<4x32xf32>
    %c32_48 = arith.constant 32 : index
    %c0_49 = arith.constant 0 : index
    %127 = vector.load %arg6[%c32_48, %c0_49] : memref<113x32xf32, #tpu.memory_space<vmem>>, vector<1x32xf32>
    %128 = vector.broadcast %127 : vector<1x32xf32> to vector<4x32xf32>
    %129 = arith.addf %126, %128 : vector<4x32xf32>
    %c288 = arith.constant 288 : index
    %c0_50 = arith.constant 0 : index
    %130 = vector.load %arg5[%c288, %c0_50] : memref<2048x32xbf16, #tpu.memory_space<vmem>>, vector<64x32xbf16>
    %131 = arith.truncf %17 : vector<8x32xf32> to vector<8x32xbf16>
    %cst_51 = arith.constant dense<0.000000e+00> : vector<8x64xf32>
    %132 = tpu.matmul %131, %130, %cst_51 {dimension_numbers = #tpu.dot_dimension_numbers<[1], [1], [0], [0], [0, 0, 1, 0], [], []>} : vector<8x32xbf16>, vector<64x32xbf16>, vector<8x64xf32> -> vector<8x64xf32>
    %133 = vector.extract_strided_slice %132 {offsets = [0, 0], sizes = [8, 32], strides = [1, 1]} : vector<8x64xf32> to vector<8x32xf32>
    %c33 = arith.constant 33 : index
    %c0_52 = arith.constant 0 : index
    %134 = vector.load %arg6[%c33, %c0_52] : memref<113x32xf32, #tpu.memory_space<vmem>>, vector<1x32xf32>
    %135 = vector.broadcast %134 : vector<1x32xf32> to vector<8x32xf32>
    %136 = arith.addf %133, %135 : vector<8x32xf32>
    %137 = vector.extract_strided_slice %132 {offsets = [0, 32], sizes = [8, 32], strides = [1, 1]} : vector<8x64xf32> to vector<8x32xf32>
    %c34 = arith.constant 34 : index
    %c0_53 = arith.constant 0 : index
    %138 = vector.load %arg6[%c34, %c0_53] : memref<113x32xf32, #tpu.memory_space<vmem>>, vector<1x32xf32>
    %139 = vector.broadcast %138 : vector<1x32xf32> to vector<8x32xf32>
    %140 = arith.addf %137, %139 : vector<8x32xf32>
    %c352 = arith.constant 352 : index
    %c0_54 = arith.constant 0 : index
    %141 = vector.load %arg5[%c352, %c0_54] : memref<2048x32xbf16, #tpu.memory_space<vmem>>, vector<32x32xbf16>
    %c35 = arith.constant 35 : index
    %c0_55 = arith.constant 0 : index
    %142 = vector.load %arg6[%c35, %c0_55] : memref<113x32xf32, #tpu.memory_space<vmem>>, vector<1x32xf32>
    %143 = vector.extract_strided_slice %129 {offsets = [0, 0], sizes = [4, 16], strides = [1, 1]} : vector<4x32xf32> to vector<4x16xf32>
    %144 = vector.extract_strided_slice %136 {offsets = [0, 0], sizes = [8, 16], strides = [1, 1]} : vector<8x32xf32> to vector<8x16xf32>
    %145 = arith.truncf %143 : vector<4x16xf32> to vector<4x16xbf16>
    %146 = arith.truncf %144 : vector<8x16xf32> to vector<8x16xbf16>
    %cst_56 = arith.constant dense<0.000000e+00> : vector<4x8xf32>
    %147 = tpu.matmul %145, %146, %cst_56 {dimension_numbers = #tpu.dot_dimension_numbers<[1], [1], [0], [0], [0, 0, 1, 0], [], []>} : vector<4x16xbf16>, vector<8x16xbf16>, vector<4x8xf32> -> vector<4x8xf32>
    %cst_57 = arith.constant dense<0xFF800000> : vector<4xf32>
    %148 = vector.multi_reduction <maximumf>, %147, %cst_57 [1] : vector<4x8xf32> to vector<4xf32>
    %149 = vector.shape_cast %148 : vector<4xf32> to vector<4x1xf32>
    %150 = vector.broadcast %149 : vector<4x1xf32> to vector<4x8xf32>
    %151 = arith.subf %147, %150 : vector<4x8xf32>
    %152 = math.exp %151 : vector<4x8xf32>
    %cst_58 = arith.constant dense<0.000000e+00> : vector<4xf32>
    %153 = vector.multi_reduction <add>, %152, %cst_58 [1] : vector<4x8xf32> to vector<4xf32>
    %154 = vector.shape_cast %153 : vector<4xf32> to vector<4x1xf32>
    %155 = tpu.reciprocal %154 : vector<4x1xf32> -> vector<4x1xf32>
    %156 = vector.broadcast %155 : vector<4x1xf32> to vector<4x8xf32>
    %157 = arith.mulf %152, %156 : vector<4x8xf32>
    %158 = vector.extract_strided_slice %140 {offsets = [0, 0], sizes = [8, 16], strides = [1, 1]} : vector<8x32xf32> to vector<8x16xf32>
    %159 = arith.truncf %157 : vector<4x8xf32> to vector<4x8xbf16>
    %160 = arith.truncf %158 : vector<8x16xf32> to vector<8x16xbf16>
    %cst_59 = arith.constant dense<0.000000e+00> : vector<4x16xf32>
    %161 = tpu.matmul %159, %160, %cst_59 {dimension_numbers = #tpu.dot_dimension_numbers<[1], [0], [0], [1], [0, 0, 1, 1], [], []>} : vector<4x8xbf16>, vector<8x16xbf16>, vector<4x16xf32> -> vector<4x16xf32>
    %162 = vector.extract_strided_slice %141 {offsets = [0, 0], sizes = [32, 16], strides = [1, 1]} : vector<32x32xbf16> to vector<32x16xbf16>
    %163 = arith.truncf %161 : vector<4x16xf32> to vector<4x16xbf16>
    %cst_60 = arith.constant dense<0.000000e+00> : vector<4x32xf32>
    %164 = tpu.matmul %163, %162, %cst_60 {dimension_numbers = #tpu.dot_dimension_numbers<[1], [1], [0], [0], [0, 0, 1, 0], [], []>} : vector<4x16xbf16>, vector<32x16xbf16>, vector<4x32xf32> -> vector<4x32xf32>
    %165 = vector.extract_strided_slice %129 {offsets = [0, 16], sizes = [4, 16], strides = [1, 1]} : vector<4x32xf32> to vector<4x16xf32>
    %166 = vector.extract_strided_slice %136 {offsets = [0, 16], sizes = [8, 16], strides = [1, 1]} : vector<8x32xf32> to vector<8x16xf32>
    %167 = arith.truncf %165 : vector<4x16xf32> to vector<4x16xbf16>
    %168 = arith.truncf %166 : vector<8x16xf32> to vector<8x16xbf16>
    %cst_61 = arith.constant dense<0.000000e+00> : vector<4x8xf32>
    %169 = tpu.matmul %167, %168, %cst_61 {dimension_numbers = #tpu.dot_dimension_numbers<[1], [1], [0], [0], [0, 0, 1, 0], [], []>} : vector<4x16xbf16>, vector<8x16xbf16>, vector<4x8xf32> -> vector<4x8xf32>
    %cst_62 = arith.constant dense<0xFF800000> : vector<4xf32>
    %170 = vector.multi_reduction <maximumf>, %169, %cst_62 [1] : vector<4x8xf32> to vector<4xf32>
    %171 = vector.shape_cast %170 : vector<4xf32> to vector<4x1xf32>
    %172 = vector.broadcast %171 : vector<4x1xf32> to vector<4x8xf32>
    %173 = arith.subf %169, %172 : vector<4x8xf32>
    %174 = math.exp %173 : vector<4x8xf32>
    %cst_63 = arith.constant dense<0.000000e+00> : vector<4xf32>
    %175 = vector.multi_reduction <add>, %174, %cst_63 [1] : vector<4x8xf32> to vector<4xf32>
    %176 = vector.shape_cast %175 : vector<4xf32> to vector<4x1xf32>
    %177 = tpu.reciprocal %176 : vector<4x1xf32> -> vector<4x1xf32>
    %178 = vector.broadcast %177 : vector<4x1xf32> to vector<4x8xf32>
    %179 = arith.mulf %174, %178 : vector<4x8xf32>
    %180 = vector.extract_strided_slice %140 {offsets = [0, 16], sizes = [8, 16], strides = [1, 1]} : vector<8x32xf32> to vector<8x16xf32>
    %181 = arith.truncf %179 : vector<4x8xf32> to vector<4x8xbf16>
    %182 = arith.truncf %180 : vector<8x16xf32> to vector<8x16xbf16>
    %cst_64 = arith.constant dense<0.000000e+00> : vector<4x16xf32>
    %183 = tpu.matmul %181, %182, %cst_64 {dimension_numbers = #tpu.dot_dimension_numbers<[1], [0], [0], [1], [0, 0, 1, 1], [], []>} : vector<4x8xbf16>, vector<8x16xbf16>, vector<4x16xf32> -> vector<4x16xf32>
    %184 = vector.extract_strided_slice %141 {offsets = [0, 16], sizes = [32, 16], strides = [1, 1]} : vector<32x32xbf16> to vector<32x16xbf16>
    %185 = arith.truncf %183 : vector<4x16xf32> to vector<4x16xbf16>
    %cst_65 = arith.constant dense<0.000000e+00> : vector<4x32xf32>
    %186 = tpu.matmul %185, %184, %cst_65 {dimension_numbers = #tpu.dot_dimension_numbers<[1], [1], [0], [0], [0, 0, 1, 0], [], []>} : vector<4x16xbf16>, vector<32x16xbf16>, vector<4x32xf32> -> vector<4x32xf32>
    %187 = arith.addf %164, %186 : vector<4x32xf32>
    %188 = vector.broadcast %142 : vector<1x32xf32> to vector<4x32xf32>
    %189 = arith.addf %187, %188 : vector<4x32xf32>
    %190 = arith.addf %123, %189 : vector<4x32xf32>
    %c39 = arith.constant 39 : index
    %c0_66 = arith.constant 0 : index
    %191 = vector.load %arg6[%c39, %c0_66] : memref<113x32xf32, #tpu.memory_space<vmem>>, vector<1x32xf32>
    %c40 = arith.constant 40 : index
    %c0_67 = arith.constant 0 : index
    %192 = vector.load %arg6[%c40, %c0_67] : memref<113x32xf32, #tpu.memory_space<vmem>>, vector<1x32xf32>
    %cst_68 = arith.constant dense<0.000000e+00> : vector<4xf32>
    %193 = vector.multi_reduction <add>, %190, %cst_68 [1] : vector<4x32xf32> to vector<4xf32>
    %194 = vector.shape_cast %193 : vector<4xf32> to vector<4x1xf32>
    %cst_69 = arith.constant 3.200000e+01 : f32
    %195 = vector.broadcast %cst_69 : f32 to vector<4x1xf32>
    %196 = arith.divf %194, %195 : vector<4x1xf32>
    %197 = arith.mulf %190, %190 : vector<4x32xf32>
    %cst_70 = arith.constant dense<0.000000e+00> : vector<4xf32>
    %198 = vector.multi_reduction <add>, %197, %cst_70 [1] : vector<4x32xf32> to vector<4xf32>
    %199 = vector.shape_cast %198 : vector<4xf32> to vector<4x1xf32>
    %cst_71 = arith.constant 3.200000e+01 : f32
    %200 = vector.broadcast %cst_71 : f32 to vector<4x1xf32>
    %201 = arith.divf %199, %200 : vector<4x1xf32>
    %202 = vector.broadcast %196 : vector<4x1xf32> to vector<4x32xf32>
    %203 = arith.subf %190, %202 : vector<4x32xf32>
    %204 = arith.mulf %196, %196 : vector<4x1xf32>
    %205 = arith.subf %201, %204 : vector<4x1xf32>
    %cst_72 = arith.constant 9.99999974E-6 : f32
    %206 = vector.broadcast %cst_72 : f32 to vector<4x1xf32>
    %207 = arith.addf %205, %206 : vector<4x1xf32>
    %208 = math.rsqrt %207 : vector<4x1xf32>
    %209 = vector.broadcast %208 : vector<4x1xf32> to vector<4x32xf32>
    %210 = arith.mulf %203, %209 : vector<4x32xf32>
    %211 = vector.broadcast %191 : vector<1x32xf32> to vector<4x32xf32>
    %212 = arith.mulf %210, %211 : vector<4x32xf32>
    %213 = vector.broadcast %192 : vector<1x32xf32> to vector<4x32xf32>
    %214 = arith.addf %212, %213 : vector<4x32xf32>
    %c384 = arith.constant 384 : index
    %c0_73 = arith.constant 0 : index
    %215 = vector.load %arg5[%c384, %c0_73] : memref<2048x32xbf16, #tpu.memory_space<vmem>>, vector<64x32xbf16>
    %216 = arith.truncf %214 : vector<4x32xf32> to vector<4x32xbf16>
    %cst_74 = arith.constant dense<0.000000e+00> : vector<4x64xf32>
    %217 = tpu.matmul %216, %215, %cst_74 {dimension_numbers = #tpu.dot_dimension_numbers<[1], [1], [0], [0], [0, 0, 1, 0], [], []>} : vector<4x32xbf16>, vector<64x32xbf16>, vector<4x64xf32> -> vector<4x64xf32>
    %c0_75 = arith.constant 0 : index
    %c0_76 = arith.constant 0 : index
    %218 = vector.load %arg7[%c0_75, %c0_76] : memref<5x64xf32, #tpu.memory_space<vmem>>, vector<1x64xf32>
    %219 = vector.broadcast %218 : vector<1x64xf32> to vector<4x64xf32>
    %220 = arith.addf %217, %219 : vector<4x64xf32>
    %cst_77 = arith.constant 0.000000e+00 : f32
    %221 = vector.broadcast %cst_77 : f32 to vector<4x64xf32>
    %222 = arith.maximumf %220, %221 : vector<4x64xf32>
    %c448 = arith.constant 448 : index
    %c0_78 = arith.constant 0 : index
    %223 = vector.load %arg5[%c448, %c0_78] : memref<2048x32xbf16, #tpu.memory_space<vmem>>, vector<64x32xbf16>
    %224 = arith.truncf %222 : vector<4x64xf32> to vector<4x64xbf16>
    %cst_79 = arith.constant dense<0.000000e+00> : vector<4x32xf32>
    %225 = tpu.matmul %224, %223, %cst_79 {dimension_numbers = #tpu.dot_dimension_numbers<[1], [0], [0], [1], [0, 0, 1, 1], [], []>} : vector<4x64xbf16>, vector<64x32xbf16>, vector<4x32xf32> -> vector<4x32xf32>
    %226 = arith.addf %214, %225 : vector<4x32xf32>
    %c36 = arith.constant 36 : index
    %c0_80 = arith.constant 0 : index
    %227 = vector.load %arg6[%c36, %c0_80] : memref<113x32xf32, #tpu.memory_space<vmem>>, vector<1x32xf32>
    %228 = vector.broadcast %227 : vector<1x32xf32> to vector<4x32xf32>
    %229 = arith.addf %226, %228 : vector<4x32xf32>
    %c41 = arith.constant 41 : index
    %c0_81 = arith.constant 0 : index
    %230 = vector.load %arg6[%c41, %c0_81] : memref<113x32xf32, #tpu.memory_space<vmem>>, vector<1x32xf32>
    %c42 = arith.constant 42 : index
    %c0_82 = arith.constant 0 : index
    %231 = vector.load %arg6[%c42, %c0_82] : memref<113x32xf32, #tpu.memory_space<vmem>>, vector<1x32xf32>
    %cst_83 = arith.constant dense<0.000000e+00> : vector<4xf32>
    %232 = vector.multi_reduction <add>, %229, %cst_83 [1] : vector<4x32xf32> to vector<4xf32>
    %233 = vector.shape_cast %232 : vector<4xf32> to vector<4x1xf32>
    %cst_84 = arith.constant 3.200000e+01 : f32
    %234 = vector.broadcast %cst_84 : f32 to vector<4x1xf32>
    %235 = arith.divf %233, %234 : vector<4x1xf32>
    %236 = arith.mulf %229, %229 : vector<4x32xf32>
    %cst_85 = arith.constant dense<0.000000e+00> : vector<4xf32>
    %237 = vector.multi_reduction <add>, %236, %cst_85 [1] : vector<4x32xf32> to vector<4xf32>
    %238 = vector.shape_cast %237 : vector<4xf32> to vector<4x1xf32>
    %cst_86 = arith.constant 3.200000e+01 : f32
    %239 = vector.broadcast %cst_86 : f32 to vector<4x1xf32>
    %240 = arith.divf %238, %239 : vector<4x1xf32>
    %241 = vector.broadcast %235 : vector<4x1xf32> to vector<4x32xf32>
    %242 = arith.subf %229, %241 : vector<4x32xf32>
    %243 = arith.mulf %235, %235 : vector<4x1xf32>
    %244 = arith.subf %240, %243 : vector<4x1xf32>
    %cst_87 = arith.constant 9.99999974E-6 : f32
    %245 = vector.broadcast %cst_87 : f32 to vector<4x1xf32>
    %246 = arith.addf %244, %245 : vector<4x1xf32>
    %247 = math.rsqrt %246 : vector<4x1xf32>
    %248 = vector.broadcast %247 : vector<4x1xf32> to vector<4x32xf32>
    %249 = arith.mulf %242, %248 : vector<4x32xf32>
    %250 = vector.broadcast %230 : vector<1x32xf32> to vector<4x32xf32>
    %251 = arith.mulf %249, %250 : vector<4x32xf32>
    %252 = vector.broadcast %231 : vector<1x32xf32> to vector<4x32xf32>
    %253 = arith.addf %251, %252 : vector<4x32xf32>
    %c43 = arith.constant 43 : index
    %c0_88 = arith.constant 0 : index
    %254 = vector.load %arg6[%c43, %c0_88] : memref<113x32xf32, #tpu.memory_space<vmem>>, vector<1x32xf32>
    %c44 = arith.constant 44 : index
    %c0_89 = arith.constant 0 : index
    %255 = vector.load %arg6[%c44, %c0_89] : memref<113x32xf32, #tpu.memory_space<vmem>>, vector<1x32xf32>
    %cst_90 = arith.constant dense<0.000000e+00> : vector<4xf32>
    %256 = vector.multi_reduction <add>, %253, %cst_90 [1] : vector<4x32xf32> to vector<4xf32>
    %257 = vector.shape_cast %256 : vector<4xf32> to vector<4x1xf32>
    %cst_91 = arith.constant 3.200000e+01 : f32
    %258 = vector.broadcast %cst_91 : f32 to vector<4x1xf32>
    %259 = arith.divf %257, %258 : vector<4x1xf32>
    %260 = arith.mulf %253, %253 : vector<4x32xf32>
    %cst_92 = arith.constant dense<0.000000e+00> : vector<4xf32>
    %261 = vector.multi_reduction <add>, %260, %cst_92 [1] : vector<4x32xf32> to vector<4xf32>
    %262 = vector.shape_cast %261 : vector<4xf32> to vector<4x1xf32>
    %cst_93 = arith.constant 3.200000e+01 : f32
    %263 = vector.broadcast %cst_93 : f32 to vector<4x1xf32>
    %264 = arith.divf %262, %263 : vector<4x1xf32>
    %265 = vector.broadcast %259 : vector<4x1xf32> to vector<4x32xf32>
    %266 = arith.subf %253, %265 : vector<4x32xf32>
    %267 = arith.mulf %259, %259 : vector<4x1xf32>
    %268 = arith.subf %264, %267 : vector<4x1xf32>
    %cst_94 = arith.constant 9.99999974E-6 : f32
    %269 = vector.broadcast %cst_94 : f32 to vector<4x1xf32>
    %270 = arith.addf %268, %269 : vector<4x1xf32>
    %271 = math.rsqrt %270 : vector<4x1xf32>
    %272 = vector.broadcast %271 : vector<4x1xf32> to vector<4x32xf32>
    %273 = arith.mulf %266, %272 : vector<4x32xf32>
    %274 = vector.broadcast %254 : vector<1x32xf32> to vector<4x32xf32>
    %275 = arith.mulf %273, %274 : vector<4x32xf32>
    %276 = vector.broadcast %255 : vector<1x32xf32> to vector<4x32xf32>
    %277 = arith.addf %275, %276 : vector<4x32xf32>
    %c0_95 = arith.constant 0 : index
    %c0_96 = arith.constant 0 : index
    %278 = vector.load %arg15[%c0_95, %c0_96] : memref<16x32xf32, #tpu.memory_space<vmem>>, vector<8x32xf32>
    tpu.vector_store %arg15[%c0_95, %c0_96], %33 {strides = array<i32>} : memref<16x32xf32, #tpu.memory_space<vmem>>, vector<8x32xf32>,
    %c24 = arith.constant 24 : index
    %c0_97 = arith.constant 0 : index
    %279 = vector.load %arg6[%c24, %c0_97] : memref<113x32xf32, #tpu.memory_space<vmem>>, vector<4x32xf32>
    %c8_98 = arith.constant 8 : index
    %c0_99 = arith.constant 0 : index
    %280 = vector.load %arg15[%c8_98, %c0_99] : memref<16x32xf32, #tpu.memory_space<vmem>>, vector<4x32xf32>
    tpu.vector_store %arg15[%c8_98, %c0_99], %279 {strides = array<i32>} : memref<16x32xf32, #tpu.memory_space<vmem>>, vector<4x32xf32>,
    %c12 = arith.constant 12 : index
    %c0_100 = arith.constant 0 : index
    %281 = vector.load %arg15[%c12, %c0_100] : memref<16x32xf32, #tpu.memory_space<vmem>>, vector<4x32xf32>
    tpu.vector_store %arg15[%c12, %c0_100], %277 {strides = array<i32>} : memref<16x32xf32, #tpu.memory_space<vmem>>, vector<4x32xf32>,
    %c0_101 = arith.constant 0 : index
    %c0_102 = arith.constant 0 : index
    %282 = vector.load %arg15[%c0_101, %c0_102] : memref<16x32xf32, #tpu.memory_space<vmem>>, vector<12x32xf32>
    %c0_103 = arith.constant 0 : index
    %c0_104 = arith.constant 0 : index
    %283 = vector.load %arg15[%c0_103, %c0_104] : memref<16x32xf32, #tpu.memory_space<vmem>>, vector<16x32xf32>
    %c0_105 = arith.constant 0 : index
    %c0_106 = arith.constant 0 : index
    %284 = vector.load %arg10[%c0_105, %c0_106] : memref<12x12xf32, #tpu.memory_space<vmem>>, vector<12x12xf32>
    %c0_107 = arith.constant 0 : index
    %c0_108 = arith.constant 0 : index
    %285 = vector.load %arg11[%c0_107, %c0_108] : memref<12x16xf32, #tpu.memory_space<vmem>>, vector<12x16xf32>
    %c512 = arith.constant 512 : index
    %c0_109 = arith.constant 0 : index
    %286 = vector.load %arg5[%c512, %c0_109] : memref<2048x32xbf16, #tpu.memory_space<vmem>>, vector<96x32xbf16>
    %287 = arith.truncf %282 : vector<12x32xf32> to vector<12x32xbf16>
    %cst_110 = arith.constant dense<0.000000e+00> : vector<12x96xf32>
    %288 = tpu.matmul %287, %286, %cst_110 {dimension_numbers = #tpu.dot_dimension_numbers<[1], [1], [0], [0], [0, 0, 1, 0], [], []>} : vector<12x32xbf16>, vector<96x32xbf16>, vector<12x96xf32> -> vector<12x96xf32>
    %289 = vector.extract_strided_slice %288 {offsets = [0, 0], sizes = [12, 32], strides = [1, 1]} : vector<12x96xf32> to vector<12x32xf32>
    %c45 = arith.constant 45 : index
    %c0_111 = arith.constant 0 : index
    %290 = vector.load %arg6[%c45, %c0_111] : memref<113x32xf32, #tpu.memory_space<vmem>>, vector<1x32xf32>
    %291 = vector.broadcast %290 : vector<1x32xf32> to vector<12x32xf32>
    %292 = arith.addf %289, %291 : vector<12x32xf32>
    %293 = vector.extract_strided_slice %288 {offsets = [0, 32], sizes = [12, 32], strides = [1, 1]} : vector<12x96xf32> to vector<12x32xf32>
    %c46 = arith.constant 46 : index
    %c0_112 = arith.constant 0 : index
    %294 = vector.load %arg6[%c46, %c0_112] : memref<113x32xf32, #tpu.memory_space<vmem>>, vector<1x32xf32>
    %295 = vector.broadcast %294 : vector<1x32xf32> to vector<12x32xf32>
    %296 = arith.addf %293, %295 : vector<12x32xf32>
    %297 = vector.extract_strided_slice %288 {offsets = [0, 64], sizes = [12, 32], strides = [1, 1]} : vector<12x96xf32> to vector<12x32xf32>
    %c47 = arith.constant 47 : index
    %c0_113 = arith.constant 0 : index
    %298 = vector.load %arg6[%c47, %c0_113] : memref<113x32xf32, #tpu.memory_space<vmem>>, vector<1x32xf32>
    %299 = vector.broadcast %298 : vector<1x32xf32> to vector<12x32xf32>
    %300 = arith.addf %297, %299 : vector<12x32xf32>
    %c608 = arith.constant 608 : index
    %c0_114 = arith.constant 0 : index
    %301 = vector.load %arg5[%c608, %c0_114] : memref<2048x32xbf16, #tpu.memory_space<vmem>>, vector<32x32xbf16>
    %c48 = arith.constant 48 : index
    %c0_115 = arith.constant 0 : index
    %302 = vector.load %arg6[%c48, %c0_115] : memref<113x32xf32, #tpu.memory_space<vmem>>, vector<1x32xf32>
    %303 = vector.extract_strided_slice %292 {offsets = [0, 0], sizes = [12, 16], strides = [1, 1]} : vector<12x32xf32> to vector<12x16xf32>
    %304 = vector.extract_strided_slice %296 {offsets = [0, 0], sizes = [12, 16], strides = [1, 1]} : vector<12x32xf32> to vector<12x16xf32>
    %305 = arith.truncf %303 : vector<12x16xf32> to vector<12x16xbf16>
    %306 = arith.truncf %304 : vector<12x16xf32> to vector<12x16xbf16>
    %cst_116 = arith.constant dense<0.000000e+00> : vector<12x12xf32>
    %307 = tpu.matmul %305, %306, %cst_116 {dimension_numbers = #tpu.dot_dimension_numbers<[1], [1], [0], [0], [0, 0, 1, 0], [], []>} : vector<12x16xbf16>, vector<12x16xbf16>, vector<12x12xf32> -> vector<12x12xf32>
    %308 = arith.addf %307, %284 : vector<12x12xf32>
    %cst_117 = arith.constant dense<0xFF800000> : vector<12xf32>
    %309 = vector.multi_reduction <maximumf>, %308, %cst_117 [1] : vector<12x12xf32> to vector<12xf32>
    %310 = vector.shape_cast %309 : vector<12xf32> to vector<12x1xf32>
    %311 = vector.broadcast %310 : vector<12x1xf32> to vector<12x12xf32>
    %312 = arith.subf %308, %311 : vector<12x12xf32>
    %313 = math.exp %312 : vector<12x12xf32>
    %cst_118 = arith.constant dense<0.000000e+00> : vector<12xf32>
    %314 = vector.multi_reduction <add>, %313, %cst_118 [1] : vector<12x12xf32> to vector<12xf32>
    %315 = vector.shape_cast %314 : vector<12xf32> to vector<12x1xf32>
    %316 = tpu.reciprocal %315 : vector<12x1xf32> -> vector<12x1xf32>
    %317 = vector.broadcast %316 : vector<12x1xf32> to vector<12x12xf32>
    %318 = arith.mulf %313, %317 : vector<12x12xf32>
    %319 = vector.extract_strided_slice %300 {offsets = [0, 0], sizes = [12, 16], strides = [1, 1]} : vector<12x32xf32> to vector<12x16xf32>
    %320 = arith.truncf %318 : vector<12x12xf32> to vector<12x12xbf16>
    %321 = arith.truncf %319 : vector<12x16xf32> to vector<12x16xbf16>
    %cst_119 = arith.constant dense<0.000000e+00> : vector<12x16xf32>
    %322 = tpu.matmul %320, %321, %cst_119 {dimension_numbers = #tpu.dot_dimension_numbers<[1], [0], [0], [1], [0, 0, 1, 1], [], []>} : vector<12x12xbf16>, vector<12x16xbf16>, vector<12x16xf32> -> vector<12x16xf32>
    %323 = vector.extract_strided_slice %301 {offsets = [0, 0], sizes = [32, 16], strides = [1, 1]} : vector<32x32xbf16> to vector<32x16xbf16>
    %324 = arith.truncf %322 : vector<12x16xf32> to vector<12x16xbf16>
    %cst_120 = arith.constant dense<0.000000e+00> : vector<12x32xf32>
    %325 = tpu.matmul %324, %323, %cst_120 {dimension_numbers = #tpu.dot_dimension_numbers<[1], [1], [0], [0], [0, 0, 1, 0], [], []>} : vector<12x16xbf16>, vector<32x16xbf16>, vector<12x32xf32> -> vector<12x32xf32>
    %326 = vector.extract_strided_slice %292 {offsets = [0, 16], sizes = [12, 16], strides = [1, 1]} : vector<12x32xf32> to vector<12x16xf32>
    %327 = vector.extract_strided_slice %296 {offsets = [0, 16], sizes = [12, 16], strides = [1, 1]} : vector<12x32xf32> to vector<12x16xf32>
    %328 = arith.truncf %326 : vector<12x16xf32> to vector<12x16xbf16>
    %329 = arith.truncf %327 : vector<12x16xf32> to vector<12x16xbf16>
    %cst_121 = arith.constant dense<0.000000e+00> : vector<12x12xf32>
    %330 = tpu.matmul %328, %329, %cst_121 {dimension_numbers = #tpu.dot_dimension_numbers<[1], [1], [0], [0], [0, 0, 1, 0], [], []>} : vector<12x16xbf16>, vector<12x16xbf16>, vector<12x12xf32> -> vector<12x12xf32>
    %331 = arith.addf %330, %284 : vector<12x12xf32>
    %cst_122 = arith.constant dense<0xFF800000> : vector<12xf32>
    %332 = vector.multi_reduction <maximumf>, %331, %cst_122 [1] : vector<12x12xf32> to vector<12xf32>
    %333 = vector.shape_cast %332 : vector<12xf32> to vector<12x1xf32>
    %334 = vector.broadcast %333 : vector<12x1xf32> to vector<12x12xf32>
    %335 = arith.subf %331, %334 : vector<12x12xf32>
    %336 = math.exp %335 : vector<12x12xf32>
    %cst_123 = arith.constant dense<0.000000e+00> : vector<12xf32>
    %337 = vector.multi_reduction <add>, %336, %cst_123 [1] : vector<12x12xf32> to vector<12xf32>
    %338 = vector.shape_cast %337 : vector<12xf32> to vector<12x1xf32>
    %339 = tpu.reciprocal %338 : vector<12x1xf32> -> vector<12x1xf32>
    %340 = vector.broadcast %339 : vector<12x1xf32> to vector<12x12xf32>
    %341 = arith.mulf %336, %340 : vector<12x12xf32>
    %342 = vector.extract_strided_slice %300 {offsets = [0, 16], sizes = [12, 16], strides = [1, 1]} : vector<12x32xf32> to vector<12x16xf32>
    %343 = arith.truncf %341 : vector<12x12xf32> to vector<12x12xbf16>
    %344 = arith.truncf %342 : vector<12x16xf32> to vector<12x16xbf16>
    %cst_124 = arith.constant dense<0.000000e+00> : vector<12x16xf32>
    %345 = tpu.matmul %343, %344, %cst_124 {dimension_numbers = #tpu.dot_dimension_numbers<[1], [0], [0], [1], [0, 0, 1, 1], [], []>} : vector<12x12xbf16>, vector<12x16xbf16>, vector<12x16xf32> -> vector<12x16xf32>
    %346 = vector.extract_strided_slice %301 {offsets = [0, 16], sizes = [32, 16], strides = [1, 1]} : vector<32x32xbf16> to vector<32x16xbf16>
    %347 = arith.truncf %345 : vector<12x16xf32> to vector<12x16xbf16>
    %cst_125 = arith.constant dense<0.000000e+00> : vector<12x32xf32>
    %348 = tpu.matmul %347, %346, %cst_125 {dimension_numbers = #tpu.dot_dimension_numbers<[1], [1], [0], [0], [0, 0, 1, 0], [], []>} : vector<12x16xbf16>, vector<32x16xbf16>, vector<12x32xf32> -> vector<12x32xf32>
    %349 = arith.addf %325, %348 : vector<12x32xf32>
    %350 = vector.broadcast %302 : vector<1x32xf32> to vector<12x32xf32>
    %351 = arith.addf %349, %350 : vector<12x32xf32>
    %352 = arith.addf %282, %351 : vector<12x32xf32>
    %c54 = arith.constant 54 : index
    %c0_126 = arith.constant 0 : index
    %353 = vector.load %arg6[%c54, %c0_126] : memref<113x32xf32, #tpu.memory_space<vmem>>, vector<1x32xf32>
    %c55 = arith.constant 55 : index
    %c0_127 = arith.constant 0 : index
    %354 = vector.load %arg6[%c55, %c0_127] : memref<113x32xf32, #tpu.memory_space<vmem>>, vector<1x32xf32>
    %cst_128 = arith.constant dense<0.000000e+00> : vector<12xf32>
    %355 = vector.multi_reduction <add>, %352, %cst_128 [1] : vector<12x32xf32> to vector<12xf32>
    %356 = vector.shape_cast %355 : vector<12xf32> to vector<12x1xf32>
    %cst_129 = arith.constant 3.200000e+01 : f32
    %357 = vector.broadcast %cst_129 : f32 to vector<12x1xf32>
    %358 = arith.divf %356, %357 : vector<12x1xf32>
    %359 = arith.mulf %352, %352 : vector<12x32xf32>
    %cst_130 = arith.constant dense<0.000000e+00> : vector<12xf32>
    %360 = vector.multi_reduction <add>, %359, %cst_130 [1] : vector<12x32xf32> to vector<12xf32>
    %361 = vector.shape_cast %360 : vector<12xf32> to vector<12x1xf32>
    %cst_131 = arith.constant 3.200000e+01 : f32
    %362 = vector.broadcast %cst_131 : f32 to vector<12x1xf32>
    %363 = arith.divf %361, %362 : vector<12x1xf32>
    %364 = vector.broadcast %358 : vector<12x1xf32> to vector<12x32xf32>
    %365 = arith.subf %352, %364 : vector<12x32xf32>
    %366 = arith.mulf %358, %358 : vector<12x1xf32>
    %367 = arith.subf %363, %366 : vector<12x1xf32>
    %cst_132 = arith.constant 9.99999974E-6 : f32
    %368 = vector.broadcast %cst_132 : f32 to vector<12x1xf32>
    %369 = arith.addf %367, %368 : vector<12x1xf32>
    %370 = math.rsqrt %369 : vector<12x1xf32>
    %371 = vector.broadcast %370 : vector<12x1xf32> to vector<12x32xf32>
    %372 = arith.mulf %365, %371 : vector<12x32xf32>
    %373 = vector.broadcast %353 : vector<1x32xf32> to vector<12x32xf32>
    %374 = arith.mulf %372, %373 : vector<12x32xf32>
    %375 = vector.broadcast %354 : vector<1x32xf32> to vector<12x32xf32>
    %376 = arith.addf %374, %375 : vector<12x32xf32>
    %c640 = arith.constant 640 : index
    %c0_133 = arith.constant 0 : index
    %377 = vector.load %arg5[%c640, %c0_133] : memref<2048x32xbf16, #tpu.memory_space<vmem>>, vector<32x32xbf16>
    %378 = arith.truncf %376 : vector<12x32xf32> to vector<12x32xbf16>
    %cst_134 = arith.constant dense<0.000000e+00> : vector<12x32xf32>
    %379 = tpu.matmul %378, %377, %cst_134 {dimension_numbers = #tpu.dot_dimension_numbers<[1], [1], [0], [0], [0, 0, 1, 0], [], []>} : vector<12x32xbf16>, vector<32x32xbf16>, vector<12x32xf32> -> vector<12x32xf32>
    %c49 = arith.constant 49 : index
    %c0_135 = arith.constant 0 : index
    %380 = vector.load %arg6[%c49, %c0_135] : memref<113x32xf32, #tpu.memory_space<vmem>>, vector<1x32xf32>
    %381 = vector.broadcast %380 : vector<1x32xf32> to vector<12x32xf32>
    %382 = arith.addf %379, %381 : vector<12x32xf32>
    %c672 = arith.constant 672 : index
    %c0_136 = arith.constant 0 : index
    %383 = vector.load %arg5[%c672, %c0_136] : memref<2048x32xbf16, #tpu.memory_space<vmem>>, vector<64x32xbf16>
    %384 = arith.truncf %283 : vector<16x32xf32> to vector<16x32xbf16>
    %cst_137 = arith.constant dense<0.000000e+00> : vector<16x64xf32>
    %385 = tpu.matmul %384, %383, %cst_137 {dimension_numbers = #tpu.dot_dimension_numbers<[1], [1], [0], [0], [0, 0, 1, 0], [], []>} : vector<16x32xbf16>, vector<64x32xbf16>, vector<16x64xf32> -> vector<16x64xf32>
    %386 = vector.extract_strided_slice %385 {offsets = [0, 0], sizes = [16, 32], strides = [1, 1]} : vector<16x64xf32> to vector<16x32xf32>
    %c50 = arith.constant 50 : index
    %c0_138 = arith.constant 0 : index
    %387 = vector.load %arg6[%c50, %c0_138] : memref<113x32xf32, #tpu.memory_space<vmem>>, vector<1x32xf32>
    %388 = vector.broadcast %387 : vector<1x32xf32> to vector<16x32xf32>
    %389 = arith.addf %386, %388 : vector<16x32xf32>
    %390 = vector.extract_strided_slice %385 {offsets = [0, 32], sizes = [16, 32], strides = [1, 1]} : vector<16x64xf32> to vector<16x32xf32>
    %c51 = arith.constant 51 : index
    %c0_139 = arith.constant 0 : index
    %391 = vector.load %arg6[%c51, %c0_139] : memref<113x32xf32, #tpu.memory_space<vmem>>, vector<1x32xf32>
    %392 = vector.broadcast %391 : vector<1x32xf32> to vector<16x32xf32>
    %393 = arith.addf %390, %392 : vector<16x32xf32>
    %c736 = arith.constant 736 : index
    %c0_140 = arith.constant 0 : index
    %394 = vector.load %arg5[%c736, %c0_140] : memref<2048x32xbf16, #tpu.memory_space<vmem>>, vector<32x32xbf16>
    %c52 = arith.constant 52 : index
    %c0_141 = arith.constant 0 : index
    %395 = vector.load %arg6[%c52, %c0_141] : memref<113x32xf32, #tpu.memory_space<vmem>>, vector<1x32xf32>
    %396 = vector.extract_strided_slice %382 {offsets = [0, 0], sizes = [12, 16], strides = [1, 1]} : vector<12x32xf32> to vector<12x16xf32>
    %397 = vector.extract_strided_slice %389 {offsets = [0, 0], sizes = [16, 16], strides = [1, 1]} : vector<16x32xf32> to vector<16x16xf32>
    %398 = arith.truncf %396 : vector<12x16xf32> to vector<12x16xbf16>
    %399 = arith.truncf %397 : vector<16x16xf32> to vector<16x16xbf16>
    %cst_142 = arith.constant dense<0.000000e+00> : vector<12x16xf32>
    %400 = tpu.matmul %398, %399, %cst_142 {dimension_numbers = #tpu.dot_dimension_numbers<[1], [1], [0], [0], [0, 0, 1, 0], [], []>} : vector<12x16xbf16>, vector<16x16xbf16>, vector<12x16xf32> -> vector<12x16xf32>
    %401 = arith.addf %400, %285 : vector<12x16xf32>
    %cst_143 = arith.constant dense<0xFF800000> : vector<12xf32>
    %402 = vector.multi_reduction <maximumf>, %401, %cst_143 [1] : vector<12x16xf32> to vector<12xf32>
    %403 = vector.shape_cast %402 : vector<12xf32> to vector<12x1xf32>
    %404 = vector.broadcast %403 : vector<12x1xf32> to vector<12x16xf32>
    %405 = arith.subf %401, %404 : vector<12x16xf32>
    %406 = math.exp %405 : vector<12x16xf32>
    %cst_144 = arith.constant dense<0.000000e+00> : vector<12xf32>
    %407 = vector.multi_reduction <add>, %406, %cst_144 [1] : vector<12x16xf32> to vector<12xf32>
    %408 = vector.shape_cast %407 : vector<12xf32> to vector<12x1xf32>
    %409 = tpu.reciprocal %408 : vector<12x1xf32> -> vector<12x1xf32>
    %410 = vector.broadcast %409 : vector<12x1xf32> to vector<12x16xf32>
    %411 = arith.mulf %406, %410 : vector<12x16xf32>
    %412 = vector.extract_strided_slice %393 {offsets = [0, 0], sizes = [16, 16], strides = [1, 1]} : vector<16x32xf32> to vector<16x16xf32>
    %413 = arith.truncf %411 : vector<12x16xf32> to vector<12x16xbf16>
    %414 = arith.truncf %412 : vector<16x16xf32> to vector<16x16xbf16>
    %cst_145 = arith.constant dense<0.000000e+00> : vector<12x16xf32>
    %415 = tpu.matmul %413, %414, %cst_145 {dimension_numbers = #tpu.dot_dimension_numbers<[1], [0], [0], [1], [0, 0, 1, 1], [], []>} : vector<12x16xbf16>, vector<16x16xbf16>, vector<12x16xf32> -> vector<12x16xf32>
    %416 = vector.extract_strided_slice %394 {offsets = [0, 0], sizes = [32, 16], strides = [1, 1]} : vector<32x32xbf16> to vector<32x16xbf16>
    %417 = arith.truncf %415 : vector<12x16xf32> to vector<12x16xbf16>
    %cst_146 = arith.constant dense<0.000000e+00> : vector<12x32xf32>
    %418 = tpu.matmul %417, %416, %cst_146 {dimension_numbers = #tpu.dot_dimension_numbers<[1], [1], [0], [0], [0, 0, 1, 0], [], []>} : vector<12x16xbf16>, vector<32x16xbf16>, vector<12x32xf32> -> vector<12x32xf32>
    %419 = vector.extract_strided_slice %382 {offsets = [0, 16], sizes = [12, 16], strides = [1, 1]} : vector<12x32xf32> to vector<12x16xf32>
    %420 = vector.extract_strided_slice %389 {offsets = [0, 16], sizes = [16, 16], strides = [1, 1]} : vector<16x32xf32> to vector<16x16xf32>
    %421 = arith.truncf %419 : vector<12x16xf32> to vector<12x16xbf16>
    %422 = arith.truncf %420 : vector<16x16xf32> to vector<16x16xbf16>
    %cst_147 = arith.constant dense<0.000000e+00> : vector<12x16xf32>
    %423 = tpu.matmul %421, %422, %cst_147 {dimension_numbers = #tpu.dot_dimension_numbers<[1], [1], [0], [0], [0, 0, 1, 0], [], []>} : vector<12x16xbf16>, vector<16x16xbf16>, vector<12x16xf32> -> vector<12x16xf32>
    %424 = arith.addf %423, %285 : vector<12x16xf32>
    %cst_148 = arith.constant dense<0xFF800000> : vector<12xf32>
    %425 = vector.multi_reduction <maximumf>, %424, %cst_148 [1] : vector<12x16xf32> to vector<12xf32>
    %426 = vector.shape_cast %425 : vector<12xf32> to vector<12x1xf32>
    %427 = vector.broadcast %426 : vector<12x1xf32> to vector<12x16xf32>
    %428 = arith.subf %424, %427 : vector<12x16xf32>
    %429 = math.exp %428 : vector<12x16xf32>
    %cst_149 = arith.constant dense<0.000000e+00> : vector<12xf32>
    %430 = vector.multi_reduction <add>, %429, %cst_149 [1] : vector<12x16xf32> to vector<12xf32>
    %431 = vector.shape_cast %430 : vector<12xf32> to vector<12x1xf32>
    %432 = tpu.reciprocal %431 : vector<12x1xf32> -> vector<12x1xf32>
    %433 = vector.broadcast %432 : vector<12x1xf32> to vector<12x16xf32>
    %434 = arith.mulf %429, %433 : vector<12x16xf32>
    %435 = vector.extract_strided_slice %393 {offsets = [0, 16], sizes = [16, 16], strides = [1, 1]} : vector<16x32xf32> to vector<16x16xf32>
    %436 = arith.truncf %434 : vector<12x16xf32> to vector<12x16xbf16>
    %437 = arith.truncf %435 : vector<16x16xf32> to vector<16x16xbf16>
    %cst_150 = arith.constant dense<0.000000e+00> : vector<12x16xf32>
    %438 = tpu.matmul %436, %437, %cst_150 {dimension_numbers = #tpu.dot_dimension_numbers<[1], [0], [0], [1], [0, 0, 1, 1], [], []>} : vector<12x16xbf16>, vector<16x16xbf16>, vector<12x16xf32> -> vector<12x16xf32>
    %439 = vector.extract_strided_slice %394 {offsets = [0, 16], sizes = [32, 16], strides = [1, 1]} : vector<32x32xbf16> to vector<32x16xbf16>
    %440 = arith.truncf %438 : vector<12x16xf32> to vector<12x16xbf16>
    %cst_151 = arith.constant dense<0.000000e+00> : vector<12x32xf32>
    %441 = tpu.matmul %440, %439, %cst_151 {dimension_numbers = #tpu.dot_dimension_numbers<[1], [1], [0], [0], [0, 0, 1, 0], [], []>} : vector<12x16xbf16>, vector<32x16xbf16>, vector<12x32xf32> -> vector<12x32xf32>
    %442 = arith.addf %418, %441 : vector<12x32xf32>
    %443 = vector.broadcast %395 : vector<1x32xf32> to vector<12x32xf32>
    %444 = arith.addf %442, %443 : vector<12x32xf32>
    %445 = arith.addf %376, %444 : vector<12x32xf32>
    %c56 = arith.constant 56 : index
    %c0_152 = arith.constant 0 : index
    %446 = vector.load %arg6[%c56, %c0_152] : memref<113x32xf32, #tpu.memory_space<vmem>>, vector<1x32xf32>
    %c57 = arith.constant 57 : index
    %c0_153 = arith.constant 0 : index
    %447 = vector.load %arg6[%c57, %c0_153] : memref<113x32xf32, #tpu.memory_space<vmem>>, vector<1x32xf32>
    %cst_154 = arith.constant dense<0.000000e+00> : vector<12xf32>
    %448 = vector.multi_reduction <add>, %445, %cst_154 [1] : vector<12x32xf32> to vector<12xf32>
    %449 = vector.shape_cast %448 : vector<12xf32> to vector<12x1xf32>
    %cst_155 = arith.constant 3.200000e+01 : f32
    %450 = vector.broadcast %cst_155 : f32 to vector<12x1xf32>
    %451 = arith.divf %449, %450 : vector<12x1xf32>
    %452 = arith.mulf %445, %445 : vector<12x32xf32>
    %cst_156 = arith.constant dense<0.000000e+00> : vector<12xf32>
    %453 = vector.multi_reduction <add>, %452, %cst_156 [1] : vector<12x32xf32> to vector<12xf32>
    %454 = vector.shape_cast %453 : vector<12xf32> to vector<12x1xf32>
    %cst_157 = arith.constant 3.200000e+01 : f32
    %455 = vector.broadcast %cst_157 : f32 to vector<12x1xf32>
    %456 = arith.divf %454, %455 : vector<12x1xf32>
    %457 = vector.broadcast %451 : vector<12x1xf32> to vector<12x32xf32>
    %458 = arith.subf %445, %457 : vector<12x32xf32>
    %459 = arith.mulf %451, %451 : vector<12x1xf32>
    %460 = arith.subf %456, %459 : vector<12x1xf32>
    %cst_158 = arith.constant 9.99999974E-6 : f32
    %461 = vector.broadcast %cst_158 : f32 to vector<12x1xf32>
    %462 = arith.addf %460, %461 : vector<12x1xf32>
    %463 = math.rsqrt %462 : vector<12x1xf32>
    %464 = vector.broadcast %463 : vector<12x1xf32> to vector<12x32xf32>
    %465 = arith.mulf %458, %464 : vector<12x32xf32>
    %466 = vector.broadcast %446 : vector<1x32xf32> to vector<12x32xf32>
    %467 = arith.mulf %465, %466 : vector<12x32xf32>
    %468 = vector.broadcast %447 : vector<1x32xf32> to vector<12x32xf32>
    %469 = arith.addf %467, %468 : vector<12x32xf32>
    %c768 = arith.constant 768 : index
    %c0_159 = arith.constant 0 : index
    %470 = vector.load %arg5[%c768, %c0_159] : memref<2048x32xbf16, #tpu.memory_space<vmem>>, vector<64x32xbf16>
    %471 = arith.truncf %469 : vector<12x32xf32> to vector<12x32xbf16>
    %cst_160 = arith.constant dense<0.000000e+00> : vector<12x64xf32>
    %472 = tpu.matmul %471, %470, %cst_160 {dimension_numbers = #tpu.dot_dimension_numbers<[1], [1], [0], [0], [0, 0, 1, 0], [], []>} : vector<12x32xbf16>, vector<64x32xbf16>, vector<12x64xf32> -> vector<12x64xf32>
    %c1_161 = arith.constant 1 : index
    %c0_162 = arith.constant 0 : index
    %473 = vector.load %arg7[%c1_161, %c0_162] : memref<5x64xf32, #tpu.memory_space<vmem>>, vector<1x64xf32>
    %474 = vector.broadcast %473 : vector<1x64xf32> to vector<12x64xf32>
    %475 = arith.addf %472, %474 : vector<12x64xf32>
    %cst_163 = arith.constant 0.000000e+00 : f32
    %476 = vector.broadcast %cst_163 : f32 to vector<12x64xf32>
    %477 = arith.maximumf %475, %476 : vector<12x64xf32>
    %c832 = arith.constant 832 : index
    %c0_164 = arith.constant 0 : index
    %478 = vector.load %arg5[%c832, %c0_164] : memref<2048x32xbf16, #tpu.memory_space<vmem>>, vector<64x32xbf16>
    %479 = arith.truncf %477 : vector<12x64xf32> to vector<12x64xbf16>
    %cst_165 = arith.constant dense<0.000000e+00> : vector<12x32xf32>
    %480 = tpu.matmul %479, %478, %cst_165 {dimension_numbers = #tpu.dot_dimension_numbers<[1], [0], [0], [1], [0, 0, 1, 1], [], []>} : vector<12x64xbf16>, vector<64x32xbf16>, vector<12x32xf32> -> vector<12x32xf32>
    %481 = arith.addf %469, %480 : vector<12x32xf32>
    %c53 = arith.constant 53 : index
    %c0_166 = arith.constant 0 : index
    %482 = vector.load %arg6[%c53, %c0_166] : memref<113x32xf32, #tpu.memory_space<vmem>>, vector<1x32xf32>
    %483 = vector.broadcast %482 : vector<1x32xf32> to vector<12x32xf32>
    %484 = arith.addf %481, %483 : vector<12x32xf32>
    %c58 = arith.constant 58 : index
    %c0_167 = arith.constant 0 : index
    %485 = vector.load %arg6[%c58, %c0_167] : memref<113x32xf32, #tpu.memory_space<vmem>>, vector<1x32xf32>
    %c59 = arith.constant 59 : index
    %c0_168 = arith.constant 0 : index
    %486 = vector.load %arg6[%c59, %c0_168] : memref<113x32xf32, #tpu.memory_space<vmem>>, vector<1x32xf32>
    %cst_169 = arith.constant dense<0.000000e+00> : vector<12xf32>
    %487 = vector.multi_reduction <add>, %484, %cst_169 [1] : vector<12x32xf32> to vector<12xf32>
    %488 = vector.shape_cast %487 : vector<12xf32> to vector<12x1xf32>
    %cst_170 = arith.constant 3.200000e+01 : f32
    %489 = vector.broadcast %cst_170 : f32 to vector<12x1xf32>
    %490 = arith.divf %488, %489 : vector<12x1xf32>
    %491 = arith.mulf %484, %484 : vector<12x32xf32>
    %cst_171 = arith.constant dense<0.000000e+00> : vector<12xf32>
    %492 = vector.multi_reduction <add>, %491, %cst_171 [1] : vector<12x32xf32> to vector<12xf32>
    %493 = vector.shape_cast %492 : vector<12xf32> to vector<12x1xf32>
    %cst_172 = arith.constant 3.200000e+01 : f32
    %494 = vector.broadcast %cst_172 : f32 to vector<12x1xf32>
    %495 = arith.divf %493, %494 : vector<12x1xf32>
    %496 = vector.broadcast %490 : vector<12x1xf32> to vector<12x32xf32>
    %497 = arith.subf %484, %496 : vector<12x32xf32>
    %498 = arith.mulf %490, %490 : vector<12x1xf32>
    %499 = arith.subf %495, %498 : vector<12x1xf32>
    %cst_173 = arith.constant 9.99999974E-6 : f32
    %500 = vector.broadcast %cst_173 : f32 to vector<12x1xf32>
    %501 = arith.addf %499, %500 : vector<12x1xf32>
    %502 = math.rsqrt %501 : vector<12x1xf32>
    %503 = vector.broadcast %502 : vector<12x1xf32> to vector<12x32xf32>
    %504 = arith.mulf %497, %503 : vector<12x32xf32>
    %505 = vector.broadcast %485 : vector<1x32xf32> to vector<12x32xf32>
    %506 = arith.mulf %504, %505 : vector<12x32xf32>
    %507 = vector.broadcast %486 : vector<1x32xf32> to vector<12x32xf32>
    %508 = arith.addf %506, %507 : vector<12x32xf32>
    %c60 = arith.constant 60 : index
    %c0_174 = arith.constant 0 : index
    %509 = vector.load %arg6[%c60, %c0_174] : memref<113x32xf32, #tpu.memory_space<vmem>>, vector<1x32xf32>
    %c61 = arith.constant 61 : index
    %c0_175 = arith.constant 0 : index
    %510 = vector.load %arg6[%c61, %c0_175] : memref<113x32xf32, #tpu.memory_space<vmem>>, vector<1x32xf32>
    %cst_176 = arith.constant dense<0.000000e+00> : vector<12xf32>
    %511 = vector.multi_reduction <add>, %508, %cst_176 [1] : vector<12x32xf32> to vector<12xf32>
    %512 = vector.shape_cast %511 : vector<12xf32> to vector<12x1xf32>
    %cst_177 = arith.constant 3.200000e+01 : f32
    %513 = vector.broadcast %cst_177 : f32 to vector<12x1xf32>
    %514 = arith.divf %512, %513 : vector<12x1xf32>
    %515 = arith.mulf %508, %508 : vector<12x32xf32>
    %cst_178 = arith.constant dense<0.000000e+00> : vector<12xf32>
    %516 = vector.multi_reduction <add>, %515, %cst_178 [1] : vector<12x32xf32> to vector<12xf32>
    %517 = vector.shape_cast %516 : vector<12xf32> to vector<12x1xf32>
    %cst_179 = arith.constant 3.200000e+01 : f32
    %518 = vector.broadcast %cst_179 : f32 to vector<12x1xf32>
    %519 = arith.divf %517, %518 : vector<12x1xf32>
    %520 = vector.broadcast %514 : vector<12x1xf32> to vector<12x32xf32>
    %521 = arith.subf %508, %520 : vector<12x32xf32>
    %522 = arith.mulf %514, %514 : vector<12x1xf32>
    %523 = arith.subf %519, %522 : vector<12x1xf32>
    %cst_180 = arith.constant 9.99999974E-6 : f32
    %524 = vector.broadcast %cst_180 : f32 to vector<12x1xf32>
    %525 = arith.addf %523, %524 : vector<12x1xf32>
    %526 = math.rsqrt %525 : vector<12x1xf32>
    %527 = vector.broadcast %526 : vector<12x1xf32> to vector<12x32xf32>
    %528 = arith.mulf %521, %527 : vector<12x32xf32>
    %529 = vector.broadcast %509 : vector<1x32xf32> to vector<12x32xf32>
    %530 = arith.mulf %528, %529 : vector<12x32xf32>
    %531 = vector.broadcast %510 : vector<1x32xf32> to vector<12x32xf32>
    %532 = arith.addf %530, %531 : vector<12x32xf32>
    %533 = vector.extract_strided_slice %532 {offsets = [2, 0], sizes = [10, 32], strides = [1, 1]} : vector<12x32xf32> to vector<10x32xf32>
    %c20 = arith.constant 20 : index
    %c0_181 = arith.constant 0 : index
    %534 = vector.load %arg6[%c20, %c0_181] : memref<113x32xf32, #tpu.memory_space<vmem>>, vector<4x32xf32>
    %c896 = arith.constant 896 : index
    %c0_182 = arith.constant 0 : index
    %535 = vector.load %arg5[%c896, %c0_182] : memref<2048x32xbf16, #tpu.memory_space<vmem>>, vector<96x32xbf16>
    %536 = arith.truncf %534 : vector<4x32xf32> to vector<4x32xbf16>
    %cst_183 = arith.constant dense<0.000000e+00> : vector<4x96xf32>
    %537 = tpu.matmul %536, %535, %cst_183 {dimension_numbers = #tpu.dot_dimension_numbers<[1], [1], [0], [0], [0, 0, 1, 0], [], []>} : vector<4x32xbf16>, vector<96x32xbf16>, vector<4x96xf32> -> vector<4x96xf32>
    %538 = vector.extract_strided_slice %537 {offsets = [0, 0], sizes = [4, 32], strides = [1, 1]} : vector<4x96xf32> to vector<4x32xf32>
    %c62 = arith.constant 62 : index
    %c0_184 = arith.constant 0 : index
    %539 = vector.load %arg6[%c62, %c0_184] : memref<113x32xf32, #tpu.memory_space<vmem>>, vector<1x32xf32>
    %540 = vector.broadcast %539 : vector<1x32xf32> to vector<4x32xf32>
    %541 = arith.addf %538, %540 : vector<4x32xf32>
    %542 = vector.extract_strided_slice %537 {offsets = [0, 32], sizes = [4, 32], strides = [1, 1]} : vector<4x96xf32> to vector<4x32xf32>
    %c63 = arith.constant 63 : index
    %c0_185 = arith.constant 0 : index
    %543 = vector.load %arg6[%c63, %c0_185] : memref<113x32xf32, #tpu.memory_space<vmem>>, vector<1x32xf32>
    %544 = vector.broadcast %543 : vector<1x32xf32> to vector<4x32xf32>
    %545 = arith.addf %542, %544 : vector<4x32xf32>
    %546 = vector.extract_strided_slice %537 {offsets = [0, 64], sizes = [4, 32], strides = [1, 1]} : vector<4x96xf32> to vector<4x32xf32>
    %c64 = arith.constant 64 : index
    %c0_186 = arith.constant 0 : index
    %547 = vector.load %arg6[%c64, %c0_186] : memref<113x32xf32, #tpu.memory_space<vmem>>, vector<1x32xf32>
    %548 = vector.broadcast %547 : vector<1x32xf32> to vector<4x32xf32>
    %549 = arith.addf %546, %548 : vector<4x32xf32>
    %c992 = arith.constant 992 : index
    %c0_187 = arith.constant 0 : index
    %550 = vector.load %arg5[%c992, %c0_187] : memref<2048x32xbf16, #tpu.memory_space<vmem>>, vector<32x32xbf16>
    %c65 = arith.constant 65 : index
    %c0_188 = arith.constant 0 : index
    %551 = vector.load %arg6[%c65, %c0_188] : memref<113x32xf32, #tpu.memory_space<vmem>>, vector<1x32xf32>
    %552 = vector.extract_strided_slice %541 {offsets = [0, 0], sizes = [4, 16], strides = [1, 1]} : vector<4x32xf32> to vector<4x16xf32>
    %553 = vector.extract_strided_slice %545 {offsets = [0, 0], sizes = [4, 16], strides = [1, 1]} : vector<4x32xf32> to vector<4x16xf32>
    %554 = arith.truncf %552 : vector<4x16xf32> to vector<4x16xbf16>
    %555 = arith.truncf %553 : vector<4x16xf32> to vector<4x16xbf16>
    %cst_189 = arith.constant dense<0.000000e+00> : vector<4x4xf32>
    %556 = tpu.matmul %554, %555, %cst_189 {dimension_numbers = #tpu.dot_dimension_numbers<[1], [1], [0], [0], [0, 0, 1, 0], [], []>} : vector<4x16xbf16>, vector<4x16xbf16>, vector<4x4xf32> -> vector<4x4xf32>
    %cst_190 = arith.constant dense<0xFF800000> : vector<4xf32>
    %557 = vector.multi_reduction <maximumf>, %556, %cst_190 [1] : vector<4x4xf32> to vector<4xf32>
    %558 = vector.shape_cast %557 : vector<4xf32> to vector<4x1xf32>
    %559 = vector.broadcast %558 : vector<4x1xf32> to vector<4x4xf32>
    %560 = arith.subf %556, %559 : vector<4x4xf32>
    %561 = math.exp %560 : vector<4x4xf32>
    %cst_191 = arith.constant dense<0.000000e+00> : vector<4xf32>
    %562 = vector.multi_reduction <add>, %561, %cst_191 [1] : vector<4x4xf32> to vector<4xf32>
    %563 = vector.shape_cast %562 : vector<4xf32> to vector<4x1xf32>
    %564 = tpu.reciprocal %563 : vector<4x1xf32> -> vector<4x1xf32>
    %565 = vector.broadcast %564 : vector<4x1xf32> to vector<4x4xf32>
    %566 = arith.mulf %561, %565 : vector<4x4xf32>
    %567 = vector.extract_strided_slice %549 {offsets = [0, 0], sizes = [4, 16], strides = [1, 1]} : vector<4x32xf32> to vector<4x16xf32>
    %568 = arith.truncf %566 : vector<4x4xf32> to vector<4x4xbf16>
    %569 = arith.truncf %567 : vector<4x16xf32> to vector<4x16xbf16>
    %cst_192 = arith.constant dense<0.000000e+00> : vector<4x16xf32>
    %570 = tpu.matmul %568, %569, %cst_192 {dimension_numbers = #tpu.dot_dimension_numbers<[1], [0], [0], [1], [0, 0, 1, 1], [], []>} : vector<4x4xbf16>, vector<4x16xbf16>, vector<4x16xf32> -> vector<4x16xf32>
    %571 = vector.extract_strided_slice %550 {offsets = [0, 0], sizes = [32, 16], strides = [1, 1]} : vector<32x32xbf16> to vector<32x16xbf16>
    %572 = arith.truncf %570 : vector<4x16xf32> to vector<4x16xbf16>
    %cst_193 = arith.constant dense<0.000000e+00> : vector<4x32xf32>
    %573 = tpu.matmul %572, %571, %cst_193 {dimension_numbers = #tpu.dot_dimension_numbers<[1], [1], [0], [0], [0, 0, 1, 0], [], []>} : vector<4x16xbf16>, vector<32x16xbf16>, vector<4x32xf32> -> vector<4x32xf32>
    %574 = vector.extract_strided_slice %541 {offsets = [0, 16], sizes = [4, 16], strides = [1, 1]} : vector<4x32xf32> to vector<4x16xf32>
    %575 = vector.extract_strided_slice %545 {offsets = [0, 16], sizes = [4, 16], strides = [1, 1]} : vector<4x32xf32> to vector<4x16xf32>
    %576 = arith.truncf %574 : vector<4x16xf32> to vector<4x16xbf16>
    %577 = arith.truncf %575 : vector<4x16xf32> to vector<4x16xbf16>
    %cst_194 = arith.constant dense<0.000000e+00> : vector<4x4xf32>
    %578 = tpu.matmul %576, %577, %cst_194 {dimension_numbers = #tpu.dot_dimension_numbers<[1], [1], [0], [0], [0, 0, 1, 0], [], []>} : vector<4x16xbf16>, vector<4x16xbf16>, vector<4x4xf32> -> vector<4x4xf32>
    %cst_195 = arith.constant dense<0xFF800000> : vector<4xf32>
    %579 = vector.multi_reduction <maximumf>, %578, %cst_195 [1] : vector<4x4xf32> to vector<4xf32>
    %580 = vector.shape_cast %579 : vector<4xf32> to vector<4x1xf32>
    %581 = vector.broadcast %580 : vector<4x1xf32> to vector<4x4xf32>
    %582 = arith.subf %578, %581 : vector<4x4xf32>
    %583 = math.exp %582 : vector<4x4xf32>
    %cst_196 = arith.constant dense<0.000000e+00> : vector<4xf32>
    %584 = vector.multi_reduction <add>, %583, %cst_196 [1] : vector<4x4xf32> to vector<4xf32>
    %585 = vector.shape_cast %584 : vector<4xf32> to vector<4x1xf32>
    %586 = tpu.reciprocal %585 : vector<4x1xf32> -> vector<4x1xf32>
    %587 = vector.broadcast %586 : vector<4x1xf32> to vector<4x4xf32>
    %588 = arith.mulf %583, %587 : vector<4x4xf32>
    %589 = vector.extract_strided_slice %549 {offsets = [0, 16], sizes = [4, 16], strides = [1, 1]} : vector<4x32xf32> to vector<4x16xf32>
    %590 = arith.truncf %588 : vector<4x4xf32> to vector<4x4xbf16>
    %591 = arith.truncf %589 : vector<4x16xf32> to vector<4x16xbf16>
    %cst_197 = arith.constant dense<0.000000e+00> : vector<4x16xf32>
    %592 = tpu.matmul %590, %591, %cst_197 {dimension_numbers = #tpu.dot_dimension_numbers<[1], [0], [0], [1], [0, 0, 1, 1], [], []>} : vector<4x4xbf16>, vector<4x16xbf16>, vector<4x16xf32> -> vector<4x16xf32>
    %593 = vector.extract_strided_slice %550 {offsets = [0, 16], sizes = [32, 16], strides = [1, 1]} : vector<32x32xbf16> to vector<32x16xbf16>
    %594 = arith.truncf %592 : vector<4x16xf32> to vector<4x16xbf16>
    %cst_198 = arith.constant dense<0.000000e+00> : vector<4x32xf32>
    %595 = tpu.matmul %594, %593, %cst_198 {dimension_numbers = #tpu.dot_dimension_numbers<[1], [1], [0], [0], [0, 0, 1, 0], [], []>} : vector<4x16xbf16>, vector<32x16xbf16>, vector<4x32xf32> -> vector<4x32xf32>
    %596 = arith.addf %573, %595 : vector<4x32xf32>
    %597 = vector.broadcast %551 : vector<1x32xf32> to vector<4x32xf32>
    %598 = arith.addf %596, %597 : vector<4x32xf32>
    %599 = arith.addf %534, %598 : vector<4x32xf32>
    %c71 = arith.constant 71 : index
    %c0_199 = arith.constant 0 : index
    %600 = vector.load %arg6[%c71, %c0_199] : memref<113x32xf32, #tpu.memory_space<vmem>>, vector<1x32xf32>
    %c72 = arith.constant 72 : index
    %c0_200 = arith.constant 0 : index
    %601 = vector.load %arg6[%c72, %c0_200] : memref<113x32xf32, #tpu.memory_space<vmem>>, vector<1x32xf32>
    %cst_201 = arith.constant dense<0.000000e+00> : vector<4xf32>
    %602 = vector.multi_reduction <add>, %599, %cst_201 [1] : vector<4x32xf32> to vector<4xf32>
    %603 = vector.shape_cast %602 : vector<4xf32> to vector<4x1xf32>
    %cst_202 = arith.constant 3.200000e+01 : f32
    %604 = vector.broadcast %cst_202 : f32 to vector<4x1xf32>
    %605 = arith.divf %603, %604 : vector<4x1xf32>
    %606 = arith.mulf %599, %599 : vector<4x32xf32>
    %cst_203 = arith.constant dense<0.000000e+00> : vector<4xf32>
    %607 = vector.multi_reduction <add>, %606, %cst_203 [1] : vector<4x32xf32> to vector<4xf32>
    %608 = vector.shape_cast %607 : vector<4xf32> to vector<4x1xf32>
    %cst_204 = arith.constant 3.200000e+01 : f32
    %609 = vector.broadcast %cst_204 : f32 to vector<4x1xf32>
    %610 = arith.divf %608, %609 : vector<4x1xf32>
    %611 = vector.broadcast %605 : vector<4x1xf32> to vector<4x32xf32>
    %612 = arith.subf %599, %611 : vector<4x32xf32>
    %613 = arith.mulf %605, %605 : vector<4x1xf32>
    %614 = arith.subf %610, %613 : vector<4x1xf32>
    %cst_205 = arith.constant 9.99999974E-6 : f32
    %615 = vector.broadcast %cst_205 : f32 to vector<4x1xf32>
    %616 = arith.addf %614, %615 : vector<4x1xf32>
    %617 = math.rsqrt %616 : vector<4x1xf32>
    %618 = vector.broadcast %617 : vector<4x1xf32> to vector<4x32xf32>
    %619 = arith.mulf %612, %618 : vector<4x32xf32>
    %620 = vector.broadcast %600 : vector<1x32xf32> to vector<4x32xf32>
    %621 = arith.mulf %619, %620 : vector<4x32xf32>
    %622 = vector.broadcast %601 : vector<1x32xf32> to vector<4x32xf32>
    %623 = arith.addf %621, %622 : vector<4x32xf32>
    %c1024 = arith.constant 1024 : index
    %c0_206 = arith.constant 0 : index
    %624 = vector.load %arg5[%c1024, %c0_206] : memref<2048x32xbf16, #tpu.memory_space<vmem>>, vector<32x32xbf16>
    %625 = arith.truncf %623 : vector<4x32xf32> to vector<4x32xbf16>
    %cst_207 = arith.constant dense<0.000000e+00> : vector<4x32xf32>
    %626 = tpu.matmul %625, %624, %cst_207 {dimension_numbers = #tpu.dot_dimension_numbers<[1], [1], [0], [0], [0, 0, 1, 0], [], []>} : vector<4x32xbf16>, vector<32x32xbf16>, vector<4x32xf32> -> vector<4x32xf32>
    %c66 = arith.constant 66 : index
    %c0_208 = arith.constant 0 : index
    %627 = vector.load %arg6[%c66, %c0_208] : memref<113x32xf32, #tpu.memory_space<vmem>>, vector<1x32xf32>
    %628 = vector.broadcast %627 : vector<1x32xf32> to vector<4x32xf32>
    %629 = arith.addf %626, %628 : vector<4x32xf32>
    %c1056 = arith.constant 1056 : index
    %c0_209 = arith.constant 0 : index
    %630 = vector.load %arg5[%c1056, %c0_209] : memref<2048x32xbf16, #tpu.memory_space<vmem>>, vector<64x32xbf16>
    %631 = arith.truncf %277 : vector<4x32xf32> to vector<4x32xbf16>
    %cst_210 = arith.constant dense<0.000000e+00> : vector<4x64xf32>
    %632 = tpu.matmul %631, %630, %cst_210 {dimension_numbers = #tpu.dot_dimension_numbers<[1], [1], [0], [0], [0, 0, 1, 0], [], []>} : vector<4x32xbf16>, vector<64x32xbf16>, vector<4x64xf32> -> vector<4x64xf32>
    %633 = vector.extract_strided_slice %632 {offsets = [0, 0], sizes = [4, 32], strides = [1, 1]} : vector<4x64xf32> to vector<4x32xf32>
    %c67 = arith.constant 67 : index
    %c0_211 = arith.constant 0 : index
    %634 = vector.load %arg6[%c67, %c0_211] : memref<113x32xf32, #tpu.memory_space<vmem>>, vector<1x32xf32>
    %635 = vector.broadcast %634 : vector<1x32xf32> to vector<4x32xf32>
    %636 = arith.addf %633, %635 : vector<4x32xf32>
    %637 = vector.extract_strided_slice %632 {offsets = [0, 32], sizes = [4, 32], strides = [1, 1]} : vector<4x64xf32> to vector<4x32xf32>
    %c68 = arith.constant 68 : index
    %c0_212 = arith.constant 0 : index
    %638 = vector.load %arg6[%c68, %c0_212] : memref<113x32xf32, #tpu.memory_space<vmem>>, vector<1x32xf32>
    %639 = vector.broadcast %638 : vector<1x32xf32> to vector<4x32xf32>
    %640 = arith.addf %637, %639 : vector<4x32xf32>
    %c1120 = arith.constant 1120 : index
    %c0_213 = arith.constant 0 : index
    %641 = vector.load %arg5[%c1120, %c0_213] : memref<2048x32xbf16, #tpu.memory_space<vmem>>, vector<32x32xbf16>
    %c69 = arith.constant 69 : index
    %c0_214 = arith.constant 0 : index
    %642 = vector.load %arg6[%c69, %c0_214] : memref<113x32xf32, #tpu.memory_space<vmem>>, vector<1x32xf32>
    %643 = vector.extract_strided_slice %629 {offsets = [0, 0], sizes = [4, 16], strides = [1, 1]} : vector<4x32xf32> to vector<4x16xf32>
    %644 = vector.extract_strided_slice %636 {offsets = [0, 0], sizes = [4, 16], strides = [1, 1]} : vector<4x32xf32> to vector<4x16xf32>
    %645 = arith.truncf %643 : vector<4x16xf32> to vector<4x16xbf16>
    %646 = arith.truncf %644 : vector<4x16xf32> to vector<4x16xbf16>
    %cst_215 = arith.constant dense<0.000000e+00> : vector<4x4xf32>
    %647 = tpu.matmul %645, %646, %cst_215 {dimension_numbers = #tpu.dot_dimension_numbers<[1], [1], [0], [0], [0, 0, 1, 0], [], []>} : vector<4x16xbf16>, vector<4x16xbf16>, vector<4x4xf32> -> vector<4x4xf32>
    %cst_216 = arith.constant dense<0xFF800000> : vector<4xf32>
    %648 = vector.multi_reduction <maximumf>, %647, %cst_216 [1] : vector<4x4xf32> to vector<4xf32>
    %649 = vector.shape_cast %648 : vector<4xf32> to vector<4x1xf32>
    %650 = vector.broadcast %649 : vector<4x1xf32> to vector<4x4xf32>
    %651 = arith.subf %647, %650 : vector<4x4xf32>
    %652 = math.exp %651 : vector<4x4xf32>
    %cst_217 = arith.constant dense<0.000000e+00> : vector<4xf32>
    %653 = vector.multi_reduction <add>, %652, %cst_217 [1] : vector<4x4xf32> to vector<4xf32>
    %654 = vector.shape_cast %653 : vector<4xf32> to vector<4x1xf32>
    %655 = tpu.reciprocal %654 : vector<4x1xf32> -> vector<4x1xf32>
    %656 = vector.broadcast %655 : vector<4x1xf32> to vector<4x4xf32>
    %657 = arith.mulf %652, %656 : vector<4x4xf32>
    %658 = vector.extract_strided_slice %640 {offsets = [0, 0], sizes = [4, 16], strides = [1, 1]} : vector<4x32xf32> to vector<4x16xf32>
    %659 = arith.truncf %657 : vector<4x4xf32> to vector<4x4xbf16>
    %660 = arith.truncf %658 : vector<4x16xf32> to vector<4x16xbf16>
    %cst_218 = arith.constant dense<0.000000e+00> : vector<4x16xf32>
    %661 = tpu.matmul %659, %660, %cst_218 {dimension_numbers = #tpu.dot_dimension_numbers<[1], [0], [0], [1], [0, 0, 1, 1], [], []>} : vector<4x4xbf16>, vector<4x16xbf16>, vector<4x16xf32> -> vector<4x16xf32>
    %662 = vector.extract_strided_slice %641 {offsets = [0, 0], sizes = [32, 16], strides = [1, 1]} : vector<32x32xbf16> to vector<32x16xbf16>
    %663 = arith.truncf %661 : vector<4x16xf32> to vector<4x16xbf16>
    %cst_219 = arith.constant dense<0.000000e+00> : vector<4x32xf32>
    %664 = tpu.matmul %663, %662, %cst_219 {dimension_numbers = #tpu.dot_dimension_numbers<[1], [1], [0], [0], [0, 0, 1, 0], [], []>} : vector<4x16xbf16>, vector<32x16xbf16>, vector<4x32xf32> -> vector<4x32xf32>
    %665 = vector.extract_strided_slice %629 {offsets = [0, 16], sizes = [4, 16], strides = [1, 1]} : vector<4x32xf32> to vector<4x16xf32>
    %666 = vector.extract_strided_slice %636 {offsets = [0, 16], sizes = [4, 16], strides = [1, 1]} : vector<4x32xf32> to vector<4x16xf32>
    %667 = arith.truncf %665 : vector<4x16xf32> to vector<4x16xbf16>
    %668 = arith.truncf %666 : vector<4x16xf32> to vector<4x16xbf16>
    %cst_220 = arith.constant dense<0.000000e+00> : vector<4x4xf32>
    %669 = tpu.matmul %667, %668, %cst_220 {dimension_numbers = #tpu.dot_dimension_numbers<[1], [1], [0], [0], [0, 0, 1, 0], [], []>} : vector<4x16xbf16>, vector<4x16xbf16>, vector<4x4xf32> -> vector<4x4xf32>
    %cst_221 = arith.constant dense<0xFF800000> : vector<4xf32>
    %670 = vector.multi_reduction <maximumf>, %669, %cst_221 [1] : vector<4x4xf32> to vector<4xf32>
    %671 = vector.shape_cast %670 : vector<4xf32> to vector<4x1xf32>
    %672 = vector.broadcast %671 : vector<4x1xf32> to vector<4x4xf32>
    %673 = arith.subf %669, %672 : vector<4x4xf32>
    %674 = math.exp %673 : vector<4x4xf32>
    %cst_222 = arith.constant dense<0.000000e+00> : vector<4xf32>
    %675 = vector.multi_reduction <add>, %674, %cst_222 [1] : vector<4x4xf32> to vector<4xf32>
    %676 = vector.shape_cast %675 : vector<4xf32> to vector<4x1xf32>
    %677 = tpu.reciprocal %676 : vector<4x1xf32> -> vector<4x1xf32>
    %678 = vector.broadcast %677 : vector<4x1xf32> to vector<4x4xf32>
    %679 = arith.mulf %674, %678 : vector<4x4xf32>
    %680 = vector.extract_strided_slice %640 {offsets = [0, 16], sizes = [4, 16], strides = [1, 1]} : vector<4x32xf32> to vector<4x16xf32>
    %681 = arith.truncf %679 : vector<4x4xf32> to vector<4x4xbf16>
    %682 = arith.truncf %680 : vector<4x16xf32> to vector<4x16xbf16>
    %cst_223 = arith.constant dense<0.000000e+00> : vector<4x16xf32>
    %683 = tpu.matmul %681, %682, %cst_223 {dimension_numbers = #tpu.dot_dimension_numbers<[1], [0], [0], [1], [0, 0, 1, 1], [], []>} : vector<4x4xbf16>, vector<4x16xbf16>, vector<4x16xf32> -> vector<4x16xf32>
    %684 = vector.extract_strided_slice %641 {offsets = [0, 16], sizes = [32, 16], strides = [1, 1]} : vector<32x32xbf16> to vector<32x16xbf16>
    %685 = arith.truncf %683 : vector<4x16xf32> to vector<4x16xbf16>
    %cst_224 = arith.constant dense<0.000000e+00> : vector<4x32xf32>
    %686 = tpu.matmul %685, %684, %cst_224 {dimension_numbers = #tpu.dot_dimension_numbers<[1], [1], [0], [0], [0, 0, 1, 0], [], []>} : vector<4x16xbf16>, vector<32x16xbf16>, vector<4x32xf32> -> vector<4x32xf32>
    %687 = arith.addf %664, %686 : vector<4x32xf32>
    %688 = vector.broadcast %642 : vector<1x32xf32> to vector<4x32xf32>
    %689 = arith.addf %687, %688 : vector<4x32xf32>
    %690 = arith.addf %623, %689 : vector<4x32xf32>
    %c73 = arith.constant 73 : index
    %c0_225 = arith.constant 0 : index
    %691 = vector.load %arg6[%c73, %c0_225] : memref<113x32xf32, #tpu.memory_space<vmem>>, vector<1x32xf32>
    %c74 = arith.constant 74 : index
    %c0_226 = arith.constant 0 : index
    %692 = vector.load %arg6[%c74, %c0_226] : memref<113x32xf32, #tpu.memory_space<vmem>>, vector<1x32xf32>
    %cst_227 = arith.constant dense<0.000000e+00> : vector<4xf32>
    %693 = vector.multi_reduction <add>, %690, %cst_227 [1] : vector<4x32xf32> to vector<4xf32>
    %694 = vector.shape_cast %693 : vector<4xf32> to vector<4x1xf32>
    %cst_228 = arith.constant 3.200000e+01 : f32
    %695 = vector.broadcast %cst_228 : f32 to vector<4x1xf32>
    %696 = arith.divf %694, %695 : vector<4x1xf32>
    %697 = arith.mulf %690, %690 : vector<4x32xf32>
    %cst_229 = arith.constant dense<0.000000e+00> : vector<4xf32>
    %698 = vector.multi_reduction <add>, %697, %cst_229 [1] : vector<4x32xf32> to vector<4xf32>
    %699 = vector.shape_cast %698 : vector<4xf32> to vector<4x1xf32>
    %cst_230 = arith.constant 3.200000e+01 : f32
    %700 = vector.broadcast %cst_230 : f32 to vector<4x1xf32>
    %701 = arith.divf %699, %700 : vector<4x1xf32>
    %702 = vector.broadcast %696 : vector<4x1xf32> to vector<4x32xf32>
    %703 = arith.subf %690, %702 : vector<4x32xf32>
    %704 = arith.mulf %696, %696 : vector<4x1xf32>
    %705 = arith.subf %701, %704 : vector<4x1xf32>
    %cst_231 = arith.constant 9.99999974E-6 : f32
    %706 = vector.broadcast %cst_231 : f32 to vector<4x1xf32>
    %707 = arith.addf %705, %706 : vector<4x1xf32>
    %708 = math.rsqrt %707 : vector<4x1xf32>
    %709 = vector.broadcast %708 : vector<4x1xf32> to vector<4x32xf32>
    %710 = arith.mulf %703, %709 : vector<4x32xf32>
    %711 = vector.broadcast %691 : vector<1x32xf32> to vector<4x32xf32>
    %712 = arith.mulf %710, %711 : vector<4x32xf32>
    %713 = vector.broadcast %692 : vector<1x32xf32> to vector<4x32xf32>
    %714 = arith.addf %712, %713 : vector<4x32xf32>
    %c1152 = arith.constant 1152 : index
    %c0_232 = arith.constant 0 : index
    %715 = vector.load %arg5[%c1152, %c0_232] : memref<2048x32xbf16, #tpu.memory_space<vmem>>, vector<64x32xbf16>
    %716 = arith.truncf %714 : vector<4x32xf32> to vector<4x32xbf16>
    %cst_233 = arith.constant dense<0.000000e+00> : vector<4x64xf32>
    %717 = tpu.matmul %716, %715, %cst_233 {dimension_numbers = #tpu.dot_dimension_numbers<[1], [1], [0], [0], [0, 0, 1, 0], [], []>} : vector<4x32xbf16>, vector<64x32xbf16>, vector<4x64xf32> -> vector<4x64xf32>
    %c2 = arith.constant 2 : index
    %c0_234 = arith.constant 0 : index
    %718 = vector.load %arg7[%c2, %c0_234] : memref<5x64xf32, #tpu.memory_space<vmem>>, vector<1x64xf32>
    %719 = vector.broadcast %718 : vector<1x64xf32> to vector<4x64xf32>
    %720 = arith.addf %717, %719 : vector<4x64xf32>
    %cst_235 = arith.constant 0.000000e+00 : f32
    %721 = vector.broadcast %cst_235 : f32 to vector<4x64xf32>
    %722 = arith.maximumf %720, %721 : vector<4x64xf32>
    %c1216 = arith.constant 1216 : index
    %c0_236 = arith.constant 0 : index
    %723 = vector.load %arg5[%c1216, %c0_236] : memref<2048x32xbf16, #tpu.memory_space<vmem>>, vector<64x32xbf16>
    %724 = arith.truncf %722 : vector<4x64xf32> to vector<4x64xbf16>
    %cst_237 = arith.constant dense<0.000000e+00> : vector<4x32xf32>
    %725 = tpu.matmul %724, %723, %cst_237 {dimension_numbers = #tpu.dot_dimension_numbers<[1], [0], [0], [1], [0, 0, 1, 1], [], []>} : vector<4x64xbf16>, vector<64x32xbf16>, vector<4x32xf32> -> vector<4x32xf32>
    %726 = arith.addf %714, %725 : vector<4x32xf32>
    %c70 = arith.constant 70 : index
    %c0_238 = arith.constant 0 : index
    %727 = vector.load %arg6[%c70, %c0_238] : memref<113x32xf32, #tpu.memory_space<vmem>>, vector<1x32xf32>
    %728 = vector.broadcast %727 : vector<1x32xf32> to vector<4x32xf32>
    %729 = arith.addf %726, %728 : vector<4x32xf32>
    %c75 = arith.constant 75 : index
    %c0_239 = arith.constant 0 : index
    %730 = vector.load %arg6[%c75, %c0_239] : memref<113x32xf32, #tpu.memory_space<vmem>>, vector<1x32xf32>
    %c76 = arith.constant 76 : index
    %c0_240 = arith.constant 0 : index
    %731 = vector.load %arg6[%c76, %c0_240] : memref<113x32xf32, #tpu.memory_space<vmem>>, vector<1x32xf32>
    %cst_241 = arith.constant dense<0.000000e+00> : vector<4xf32>
    %732 = vector.multi_reduction <add>, %729, %cst_241 [1] : vector<4x32xf32> to vector<4xf32>
    %733 = vector.shape_cast %732 : vector<4xf32> to vector<4x1xf32>
    %cst_242 = arith.constant 3.200000e+01 : f32
    %734 = vector.broadcast %cst_242 : f32 to vector<4x1xf32>
    %735 = arith.divf %733, %734 : vector<4x1xf32>
    %736 = arith.mulf %729, %729 : vector<4x32xf32>
    %cst_243 = arith.constant dense<0.000000e+00> : vector<4xf32>
    %737 = vector.multi_reduction <add>, %736, %cst_243 [1] : vector<4x32xf32> to vector<4xf32>
    %738 = vector.shape_cast %737 : vector<4xf32> to vector<4x1xf32>
    %cst_244 = arith.constant 3.200000e+01 : f32
    %739 = vector.broadcast %cst_244 : f32 to vector<4x1xf32>
    %740 = arith.divf %738, %739 : vector<4x1xf32>
    %741 = vector.broadcast %735 : vector<4x1xf32> to vector<4x32xf32>
    %742 = arith.subf %729, %741 : vector<4x32xf32>
    %743 = arith.mulf %735, %735 : vector<4x1xf32>
    %744 = arith.subf %740, %743 : vector<4x1xf32>
    %cst_245 = arith.constant 9.99999974E-6 : f32
    %745 = vector.broadcast %cst_245 : f32 to vector<4x1xf32>
    %746 = arith.addf %744, %745 : vector<4x1xf32>
    %747 = math.rsqrt %746 : vector<4x1xf32>
    %748 = vector.broadcast %747 : vector<4x1xf32> to vector<4x32xf32>
    %749 = arith.mulf %742, %748 : vector<4x32xf32>
    %750 = vector.broadcast %730 : vector<1x32xf32> to vector<4x32xf32>
    %751 = arith.mulf %749, %750 : vector<4x32xf32>
    %752 = vector.broadcast %731 : vector<1x32xf32> to vector<4x32xf32>
    %753 = arith.addf %751, %752 : vector<4x32xf32>
    %c77 = arith.constant 77 : index
    %c0_246 = arith.constant 0 : index
    %754 = vector.load %arg6[%c77, %c0_246] : memref<113x32xf32, #tpu.memory_space<vmem>>, vector<1x32xf32>
    %c78 = arith.constant 78 : index
    %c0_247 = arith.constant 0 : index
    %755 = vector.load %arg6[%c78, %c0_247] : memref<113x32xf32, #tpu.memory_space<vmem>>, vector<1x32xf32>
    %cst_248 = arith.constant dense<0.000000e+00> : vector<4xf32>
    %756 = vector.multi_reduction <add>, %753, %cst_248 [1] : vector<4x32xf32> to vector<4xf32>
    %757 = vector.shape_cast %756 : vector<4xf32> to vector<4x1xf32>
    %cst_249 = arith.constant 3.200000e+01 : f32
    %758 = vector.broadcast %cst_249 : f32 to vector<4x1xf32>
    %759 = arith.divf %757, %758 : vector<4x1xf32>
    %760 = arith.mulf %753, %753 : vector<4x32xf32>
    %cst_250 = arith.constant dense<0.000000e+00> : vector<4xf32>
    %761 = vector.multi_reduction <add>, %760, %cst_250 [1] : vector<4x32xf32> to vector<4xf32>
    %762 = vector.shape_cast %761 : vector<4xf32> to vector<4x1xf32>
    %cst_251 = arith.constant 3.200000e+01 : f32
    %763 = vector.broadcast %cst_251 : f32 to vector<4x1xf32>
    %764 = arith.divf %762, %763 : vector<4x1xf32>
    %765 = vector.broadcast %759 : vector<4x1xf32> to vector<4x32xf32>
    %766 = arith.subf %753, %765 : vector<4x32xf32>
    %767 = arith.mulf %759, %759 : vector<4x1xf32>
    %768 = arith.subf %764, %767 : vector<4x1xf32>
    %cst_252 = arith.constant 9.99999974E-6 : f32
    %769 = vector.broadcast %cst_252 : f32 to vector<4x1xf32>
    %770 = arith.addf %768, %769 : vector<4x1xf32>
    %771 = math.rsqrt %770 : vector<4x1xf32>
    %772 = vector.broadcast %771 : vector<4x1xf32> to vector<4x32xf32>
    %773 = arith.mulf %766, %772 : vector<4x32xf32>
    %774 = vector.broadcast %754 : vector<1x32xf32> to vector<4x32xf32>
    %775 = arith.mulf %773, %774 : vector<4x32xf32>
    %776 = vector.broadcast %755 : vector<1x32xf32> to vector<4x32xf32>
    %777 = arith.addf %775, %776 : vector<4x32xf32>
    %c0_253 = arith.constant 0 : index
    %c0_254 = arith.constant 0 : index
    %778 = vector.load %arg5[%c0_253, %c0_254] : memref<2048x32xbf16, #tpu.memory_space<vmem>>, vector<128x32xbf16>
    %c0_255 = arith.constant 0 : index
    %c0_256 = arith.constant 0 : index
    %779 = vector.load %arg8[%c0_255, %c0_256] : memref<1x128xf32, #tpu.memory_space<vmem>>, vector<1x128xf32>
    %780 = arith.truncf %533 : vector<10x32xf32> to vector<10x32xbf16>
    %cst_257 = arith.constant dense<0.000000e+00> : vector<10x128xf32>
    %781 = tpu.matmul %780, %778, %cst_257 {dimension_numbers = #tpu.dot_dimension_numbers<[1], [1], [0], [0], [0, 0, 1, 0], [], []>} : vector<10x32xbf16>, vector<128x32xbf16>, vector<10x128xf32> -> vector<10x128xf32>
    %782 = vector.broadcast %779 : vector<1x128xf32> to vector<10x128xf32>
    %783 = arith.addf %781, %782 : vector<10x128xf32>
    %c0_258 = arith.constant 0 : index
    %c0_259 = arith.constant 0 : index
    %c0_260 = arith.constant 0 : index
    %784 = vector.load %arg14[%c0_258, %c0_259, %c0_260] : memref<1x38x128xf32, #tpu.memory_space<vmem>>, vector<1x10x128xf32>
    %785 = vector.shape_cast %784 : vector<1x10x128xf32> to vector<10x128xf32>
    %786 = vector.shape_cast %783 : vector<10x128xf32> to vector<1x10x128xf32>
    tpu.vector_store %arg14[%c0_258, %c0_259, %c0_260], %786 {strides = array<i32>} : memref<1x38x128xf32, #tpu.memory_space<vmem>>, vector<1x10x128xf32>,
    %c0_261 = arith.constant 0 : index
    %c0_262 = arith.constant 0 : index
    %787 = vector.load %arg16[%c0_261, %c0_262] : memref<18x32xf32, #tpu.memory_space<vmem>>, vector<4x32xf32>
    tpu.vector_store %arg16[%c0_261, %c0_262], %277 {strides = array<i32>} : memref<18x32xf32, #tpu.memory_space<vmem>>, vector<4x32xf32>,
    %c4 = arith.constant 4 : index
    %c0_263 = arith.constant 0 : index
    %788 = vector.load %arg16[%c4, %c0_263] : memref<18x32xf32, #tpu.memory_space<vmem>>, vector<4x32xf32>
    tpu.vector_store %arg16[%c4, %c0_263], %777 {strides = array<i32>} : memref<18x32xf32, #tpu.memory_space<vmem>>, vector<4x32xf32>,
    %c8_264 = arith.constant 8 : index
    %c0_265 = arith.constant 0 : index
    %789 = vector.load %arg16[%c8_264, %c0_265] : memref<18x32xf32, #tpu.memory_space<vmem>>, vector<10x32xf32>
    tpu.vector_store %arg16[%c8_264, %c0_265], %533 {strides = array<i32>} : memref<18x32xf32, #tpu.memory_space<vmem>>, vector<10x32xf32>,
    %c0_266 = arith.constant 0 : index
    %c0_267 = arith.constant 0 : index
    %790 = vector.load %arg16[%c0_266, %c0_267] : memref<18x32xf32, #tpu.memory_space<vmem>>, vector<18x32xf32>
    %c0_268 = arith.constant 0 : index
    %c0_269 = arith.constant 0 : index
    %791 = vector.load %arg12[%c0_268, %c0_269] : memref<10x10xf32, #tpu.memory_space<vmem>>, vector<10x10xf32>
    %c0_270 = arith.constant 0 : index
    %c0_271 = arith.constant 0 : index
    %792 = vector.load %arg13[%c0_270, %c0_271] : memref<10x18xf32, #tpu.memory_space<vmem>>, vector<10x18xf32>
    %c1280 = arith.constant 1280 : index
    %c0_272 = arith.constant 0 : index
    %793 = vector.load %arg5[%c1280, %c0_272] : memref<2048x32xbf16, #tpu.memory_space<vmem>>, vector<96x32xbf16>
    %794 = arith.truncf %533 : vector<10x32xf32> to vector<10x32xbf16>
    %cst_273 = arith.constant dense<0.000000e+00> : vector<10x96xf32>
    %795 = tpu.matmul %794, %793, %cst_273 {dimension_numbers = #tpu.dot_dimension_numbers<[1], [1], [0], [0], [0, 0, 1, 0], [], []>} : vector<10x32xbf16>, vector<96x32xbf16>, vector<10x96xf32> -> vector<10x96xf32>
    %796 = vector.extract_strided_slice %795 {offsets = [0, 0], sizes = [10, 32], strides = [1, 1]} : vector<10x96xf32> to vector<10x32xf32>
    %c79 = arith.constant 79 : index
    %c0_274 = arith.constant 0 : index
    %797 = vector.load %arg6[%c79, %c0_274] : memref<113x32xf32, #tpu.memory_space<vmem>>, vector<1x32xf32>
    %798 = vector.broadcast %797 : vector<1x32xf32> to vector<10x32xf32>
    %799 = arith.addf %796, %798 : vector<10x32xf32>
    %800 = vector.extract_strided_slice %795 {offsets = [0, 32], sizes = [10, 32], strides = [1, 1]} : vector<10x96xf32> to vector<10x32xf32>
    %c80 = arith.constant 80 : index
    %c0_275 = arith.constant 0 : index
    %801 = vector.load %arg6[%c80, %c0_275] : memref<113x32xf32, #tpu.memory_space<vmem>>, vector<1x32xf32>
    %802 = vector.broadcast %801 : vector<1x32xf32> to vector<10x32xf32>
    %803 = arith.addf %800, %802 : vector<10x32xf32>
    %804 = vector.extract_strided_slice %795 {offsets = [0, 64], sizes = [10, 32], strides = [1, 1]} : vector<10x96xf32> to vector<10x32xf32>
    %c81 = arith.constant 81 : index
    %c0_276 = arith.constant 0 : index
    %805 = vector.load %arg6[%c81, %c0_276] : memref<113x32xf32, #tpu.memory_space<vmem>>, vector<1x32xf32>
    %806 = vector.broadcast %805 : vector<1x32xf32> to vector<10x32xf32>
    %807 = arith.addf %804, %806 : vector<10x32xf32>
    %c1376 = arith.constant 1376 : index
    %c0_277 = arith.constant 0 : index
    %808 = vector.load %arg5[%c1376, %c0_277] : memref<2048x32xbf16, #tpu.memory_space<vmem>>, vector<32x32xbf16>
    %c82 = arith.constant 82 : index
    %c0_278 = arith.constant 0 : index
    %809 = vector.load %arg6[%c82, %c0_278] : memref<113x32xf32, #tpu.memory_space<vmem>>, vector<1x32xf32>
    %810 = vector.extract_strided_slice %799 {offsets = [0, 0], sizes = [10, 16], strides = [1, 1]} : vector<10x32xf32> to vector<10x16xf32>
    %811 = vector.extract_strided_slice %803 {offsets = [0, 0], sizes = [10, 16], strides = [1, 1]} : vector<10x32xf32> to vector<10x16xf32>
    %812 = arith.truncf %810 : vector<10x16xf32> to vector<10x16xbf16>
    %813 = arith.truncf %811 : vector<10x16xf32> to vector<10x16xbf16>
    %cst_279 = arith.constant dense<0.000000e+00> : vector<10x10xf32>
    %814 = tpu.matmul %812, %813, %cst_279 {dimension_numbers = #tpu.dot_dimension_numbers<[1], [1], [0], [0], [0, 0, 1, 0], [], []>} : vector<10x16xbf16>, vector<10x16xbf16>, vector<10x10xf32> -> vector<10x10xf32>
    %815 = arith.addf %814, %791 : vector<10x10xf32>
    %cst_280 = arith.constant dense<0xFF800000> : vector<10xf32>
    %816 = vector.multi_reduction <maximumf>, %815, %cst_280 [1] : vector<10x10xf32> to vector<10xf32>
    %817 = vector.shape_cast %816 : vector<10xf32> to vector<10x1xf32>
    %818 = vector.broadcast %817 : vector<10x1xf32> to vector<10x10xf32>
    %819 = arith.subf %815, %818 : vector<10x10xf32>
    %820 = math.exp %819 : vector<10x10xf32>
    %cst_281 = arith.constant dense<0.000000e+00> : vector<10xf32>
    %821 = vector.multi_reduction <add>, %820, %cst_281 [1] : vector<10x10xf32> to vector<10xf32>
    %822 = vector.shape_cast %821 : vector<10xf32> to vector<10x1xf32>
    %823 = tpu.reciprocal %822 : vector<10x1xf32> -> vector<10x1xf32>
    %824 = vector.broadcast %823 : vector<10x1xf32> to vector<10x10xf32>
    %825 = arith.mulf %820, %824 : vector<10x10xf32>
    %826 = vector.extract_strided_slice %807 {offsets = [0, 0], sizes = [10, 16], strides = [1, 1]} : vector<10x32xf32> to vector<10x16xf32>
    %827 = arith.truncf %825 : vector<10x10xf32> to vector<10x10xbf16>
    %828 = arith.truncf %826 : vector<10x16xf32> to vector<10x16xbf16>
    %cst_282 = arith.constant dense<0.000000e+00> : vector<10x16xf32>
    %829 = tpu.matmul %827, %828, %cst_282 {dimension_numbers = #tpu.dot_dimension_numbers<[1], [0], [0], [1], [0, 0, 1, 1], [], []>} : vector<10x10xbf16>, vector<10x16xbf16>, vector<10x16xf32> -> vector<10x16xf32>
    %830 = vector.extract_strided_slice %808 {offsets = [0, 0], sizes = [32, 16], strides = [1, 1]} : vector<32x32xbf16> to vector<32x16xbf16>
    %831 = arith.truncf %829 : vector<10x16xf32> to vector<10x16xbf16>
    %cst_283 = arith.constant dense<0.000000e+00> : vector<10x32xf32>
    %832 = tpu.matmul %831, %830, %cst_283 {dimension_numbers = #tpu.dot_dimension_numbers<[1], [1], [0], [0], [0, 0, 1, 0], [], []>} : vector<10x16xbf16>, vector<32x16xbf16>, vector<10x32xf32> -> vector<10x32xf32>
    %833 = vector.extract_strided_slice %799 {offsets = [0, 16], sizes = [10, 16], strides = [1, 1]} : vector<10x32xf32> to vector<10x16xf32>
    %834 = vector.extract_strided_slice %803 {offsets = [0, 16], sizes = [10, 16], strides = [1, 1]} : vector<10x32xf32> to vector<10x16xf32>
    %835 = arith.truncf %833 : vector<10x16xf32> to vector<10x16xbf16>
    %836 = arith.truncf %834 : vector<10x16xf32> to vector<10x16xbf16>
    %cst_284 = arith.constant dense<0.000000e+00> : vector<10x10xf32>
    %837 = tpu.matmul %835, %836, %cst_284 {dimension_numbers = #tpu.dot_dimension_numbers<[1], [1], [0], [0], [0, 0, 1, 0], [], []>} : vector<10x16xbf16>, vector<10x16xbf16>, vector<10x10xf32> -> vector<10x10xf32>
    %838 = arith.addf %837, %791 : vector<10x10xf32>
    %cst_285 = arith.constant dense<0xFF800000> : vector<10xf32>
    %839 = vector.multi_reduction <maximumf>, %838, %cst_285 [1] : vector<10x10xf32> to vector<10xf32>
    %840 = vector.shape_cast %839 : vector<10xf32> to vector<10x1xf32>
    %841 = vector.broadcast %840 : vector<10x1xf32> to vector<10x10xf32>
    %842 = arith.subf %838, %841 : vector<10x10xf32>
    %843 = math.exp %842 : vector<10x10xf32>
    %cst_286 = arith.constant dense<0.000000e+00> : vector<10xf32>
    %844 = vector.multi_reduction <add>, %843, %cst_286 [1] : vector<10x10xf32> to vector<10xf32>
    %845 = vector.shape_cast %844 : vector<10xf32> to vector<10x1xf32>
    %846 = tpu.reciprocal %845 : vector<10x1xf32> -> vector<10x1xf32>
    %847 = vector.broadcast %846 : vector<10x1xf32> to vector<10x10xf32>
    %848 = arith.mulf %843, %847 : vector<10x10xf32>
    %849 = vector.extract_strided_slice %807 {offsets = [0, 16], sizes = [10, 16], strides = [1, 1]} : vector<10x32xf32> to vector<10x16xf32>
    %850 = arith.truncf %848 : vector<10x10xf32> to vector<10x10xbf16>
    %851 = arith.truncf %849 : vector<10x16xf32> to vector<10x16xbf16>
    %cst_287 = arith.constant dense<0.000000e+00> : vector<10x16xf32>
    %852 = tpu.matmul %850, %851, %cst_287 {dimension_numbers = #tpu.dot_dimension_numbers<[1], [0], [0], [1], [0, 0, 1, 1], [], []>} : vector<10x10xbf16>, vector<10x16xbf16>, vector<10x16xf32> -> vector<10x16xf32>
    %853 = vector.extract_strided_slice %808 {offsets = [0, 16], sizes = [32, 16], strides = [1, 1]} : vector<32x32xbf16> to vector<32x16xbf16>
    %854 = arith.truncf %852 : vector<10x16xf32> to vector<10x16xbf16>
    %cst_288 = arith.constant dense<0.000000e+00> : vector<10x32xf32>
    %855 = tpu.matmul %854, %853, %cst_288 {dimension_numbers = #tpu.dot_dimension_numbers<[1], [1], [0], [0], [0, 0, 1, 0], [], []>} : vector<10x16xbf16>, vector<32x16xbf16>, vector<10x32xf32> -> vector<10x32xf32>
    %856 = arith.addf %832, %855 : vector<10x32xf32>
    %857 = vector.broadcast %809 : vector<1x32xf32> to vector<10x32xf32>
    %858 = arith.addf %856, %857 : vector<10x32xf32>
    %859 = arith.addf %533, %858 : vector<10x32xf32>
    %c88 = arith.constant 88 : index
    %c0_289 = arith.constant 0 : index
    %860 = vector.load %arg6[%c88, %c0_289] : memref<113x32xf32, #tpu.memory_space<vmem>>, vector<1x32xf32>
    %c89 = arith.constant 89 : index
    %c0_290 = arith.constant 0 : index
    %861 = vector.load %arg6[%c89, %c0_290] : memref<113x32xf32, #tpu.memory_space<vmem>>, vector<1x32xf32>
    %cst_291 = arith.constant dense<0.000000e+00> : vector<10xf32>
    %862 = vector.multi_reduction <add>, %859, %cst_291 [1] : vector<10x32xf32> to vector<10xf32>
    %863 = vector.shape_cast %862 : vector<10xf32> to vector<10x1xf32>
    %cst_292 = arith.constant 3.200000e+01 : f32
    %864 = vector.broadcast %cst_292 : f32 to vector<10x1xf32>
    %865 = arith.divf %863, %864 : vector<10x1xf32>
    %866 = arith.mulf %859, %859 : vector<10x32xf32>
    %cst_293 = arith.constant dense<0.000000e+00> : vector<10xf32>
    %867 = vector.multi_reduction <add>, %866, %cst_293 [1] : vector<10x32xf32> to vector<10xf32>
    %868 = vector.shape_cast %867 : vector<10xf32> to vector<10x1xf32>
    %cst_294 = arith.constant 3.200000e+01 : f32
    %869 = vector.broadcast %cst_294 : f32 to vector<10x1xf32>
    %870 = arith.divf %868, %869 : vector<10x1xf32>
    %871 = vector.broadcast %865 : vector<10x1xf32> to vector<10x32xf32>
    %872 = arith.subf %859, %871 : vector<10x32xf32>
    %873 = arith.mulf %865, %865 : vector<10x1xf32>
    %874 = arith.subf %870, %873 : vector<10x1xf32>
    %cst_295 = arith.constant 9.99999974E-6 : f32
    %875 = vector.broadcast %cst_295 : f32 to vector<10x1xf32>
    %876 = arith.addf %874, %875 : vector<10x1xf32>
    %877 = math.rsqrt %876 : vector<10x1xf32>
    %878 = vector.broadcast %877 : vector<10x1xf32> to vector<10x32xf32>
    %879 = arith.mulf %872, %878 : vector<10x32xf32>
    %880 = vector.broadcast %860 : vector<1x32xf32> to vector<10x32xf32>
    %881 = arith.mulf %879, %880 : vector<10x32xf32>
    %882 = vector.broadcast %861 : vector<1x32xf32> to vector<10x32xf32>
    %883 = arith.addf %881, %882 : vector<10x32xf32>
    %c1408 = arith.constant 1408 : index
    %c0_296 = arith.constant 0 : index
    %884 = vector.load %arg5[%c1408, %c0_296] : memref<2048x32xbf16, #tpu.memory_space<vmem>>, vector<32x32xbf16>
    %885 = arith.truncf %883 : vector<10x32xf32> to vector<10x32xbf16>
    %cst_297 = arith.constant dense<0.000000e+00> : vector<10x32xf32>
    %886 = tpu.matmul %885, %884, %cst_297 {dimension_numbers = #tpu.dot_dimension_numbers<[1], [1], [0], [0], [0, 0, 1, 0], [], []>} : vector<10x32xbf16>, vector<32x32xbf16>, vector<10x32xf32> -> vector<10x32xf32>
    %c83 = arith.constant 83 : index
    %c0_298 = arith.constant 0 : index
    %887 = vector.load %arg6[%c83, %c0_298] : memref<113x32xf32, #tpu.memory_space<vmem>>, vector<1x32xf32>
    %888 = vector.broadcast %887 : vector<1x32xf32> to vector<10x32xf32>
    %889 = arith.addf %886, %888 : vector<10x32xf32>
    %c1440 = arith.constant 1440 : index
    %c0_299 = arith.constant 0 : index
    %890 = vector.load %arg5[%c1440, %c0_299] : memref<2048x32xbf16, #tpu.memory_space<vmem>>, vector<64x32xbf16>
    %891 = arith.truncf %790 : vector<18x32xf32> to vector<18x32xbf16>
    %cst_300 = arith.constant dense<0.000000e+00> : vector<18x64xf32>
    %892 = tpu.matmul %891, %890, %cst_300 {dimension_numbers = #tpu.dot_dimension_numbers<[1], [1], [0], [0], [0, 0, 1, 0], [], []>} : vector<18x32xbf16>, vector<64x32xbf16>, vector<18x64xf32> -> vector<18x64xf32>
    %893 = vector.extract_strided_slice %892 {offsets = [0, 0], sizes = [18, 32], strides = [1, 1]} : vector<18x64xf32> to vector<18x32xf32>
    %c84 = arith.constant 84 : index
    %c0_301 = arith.constant 0 : index
    %894 = vector.load %arg6[%c84, %c0_301] : memref<113x32xf32, #tpu.memory_space<vmem>>, vector<1x32xf32>
    %895 = vector.broadcast %894 : vector<1x32xf32> to vector<18x32xf32>
    %896 = arith.addf %893, %895 : vector<18x32xf32>
    %897 = vector.extract_strided_slice %892 {offsets = [0, 32], sizes = [18, 32], strides = [1, 1]} : vector<18x64xf32> to vector<18x32xf32>
    %c85 = arith.constant 85 : index
    %c0_302 = arith.constant 0 : index
    %898 = vector.load %arg6[%c85, %c0_302] : memref<113x32xf32, #tpu.memory_space<vmem>>, vector<1x32xf32>
    %899 = vector.broadcast %898 : vector<1x32xf32> to vector<18x32xf32>
    %900 = arith.addf %897, %899 : vector<18x32xf32>
    %c1504 = arith.constant 1504 : index
    %c0_303 = arith.constant 0 : index
    %901 = vector.load %arg5[%c1504, %c0_303] : memref<2048x32xbf16, #tpu.memory_space<vmem>>, vector<32x32xbf16>
    %c86 = arith.constant 86 : index
    %c0_304 = arith.constant 0 : index
    %902 = vector.load %arg6[%c86, %c0_304] : memref<113x32xf32, #tpu.memory_space<vmem>>, vector<1x32xf32>
    %903 = vector.extract_strided_slice %889 {offsets = [0, 0], sizes = [10, 16], strides = [1, 1]} : vector<10x32xf32> to vector<10x16xf32>
    %904 = vector.extract_strided_slice %896 {offsets = [0, 0], sizes = [18, 16], strides = [1, 1]} : vector<18x32xf32> to vector<18x16xf32>
    %905 = arith.truncf %903 : vector<10x16xf32> to vector<10x16xbf16>
    %906 = arith.truncf %904 : vector<18x16xf32> to vector<18x16xbf16>
    %cst_305 = arith.constant dense<0.000000e+00> : vector<10x18xf32>
    %907 = tpu.matmul %905, %906, %cst_305 {dimension_numbers = #tpu.dot_dimension_numbers<[1], [1], [0], [0], [0, 0, 1, 0], [], []>} : vector<10x16xbf16>, vector<18x16xbf16>, vector<10x18xf32> -> vector<10x18xf32>
    %908 = arith.addf %907, %792 : vector<10x18xf32>
    %cst_306 = arith.constant dense<0xFF800000> : vector<10xf32>
    %909 = vector.multi_reduction <maximumf>, %908, %cst_306 [1] : vector<10x18xf32> to vector<10xf32>
    %910 = vector.shape_cast %909 : vector<10xf32> to vector<10x1xf32>
    %911 = vector.broadcast %910 : vector<10x1xf32> to vector<10x18xf32>
    %912 = arith.subf %908, %911 : vector<10x18xf32>
    %913 = math.exp %912 : vector<10x18xf32>
    %cst_307 = arith.constant dense<0.000000e+00> : vector<10xf32>
    %914 = vector.multi_reduction <add>, %913, %cst_307 [1] : vector<10x18xf32> to vector<10xf32>
    %915 = vector.shape_cast %914 : vector<10xf32> to vector<10x1xf32>
    %916 = tpu.reciprocal %915 : vector<10x1xf32> -> vector<10x1xf32>
    %917 = vector.broadcast %916 : vector<10x1xf32> to vector<10x18xf32>
    %918 = arith.mulf %913, %917 : vector<10x18xf32>
    %919 = vector.extract_strided_slice %900 {offsets = [0, 0], sizes = [18, 16], strides = [1, 1]} : vector<18x32xf32> to vector<18x16xf32>
    %920 = arith.truncf %918 : vector<10x18xf32> to vector<10x18xbf16>
    %921 = arith.truncf %919 : vector<18x16xf32> to vector<18x16xbf16>
    %cst_308 = arith.constant dense<0.000000e+00> : vector<10x16xf32>
    %922 = tpu.matmul %920, %921, %cst_308 {dimension_numbers = #tpu.dot_dimension_numbers<[1], [0], [0], [1], [0, 0, 1, 1], [], []>} : vector<10x18xbf16>, vector<18x16xbf16>, vector<10x16xf32> -> vector<10x16xf32>
    %923 = vector.extract_strided_slice %901 {offsets = [0, 0], sizes = [32, 16], strides = [1, 1]} : vector<32x32xbf16> to vector<32x16xbf16>
    %924 = arith.truncf %922 : vector<10x16xf32> to vector<10x16xbf16>
    %cst_309 = arith.constant dense<0.000000e+00> : vector<10x32xf32>
    %925 = tpu.matmul %924, %923, %cst_309 {dimension_numbers = #tpu.dot_dimension_numbers<[1], [1], [0], [0], [0, 0, 1, 0], [], []>} : vector<10x16xbf16>, vector<32x16xbf16>, vector<10x32xf32> -> vector<10x32xf32>
    %926 = vector.extract_strided_slice %889 {offsets = [0, 16], sizes = [10, 16], strides = [1, 1]} : vector<10x32xf32> to vector<10x16xf32>
    %927 = vector.extract_strided_slice %896 {offsets = [0, 16], sizes = [18, 16], strides = [1, 1]} : vector<18x32xf32> to vector<18x16xf32>
    %928 = arith.truncf %926 : vector<10x16xf32> to vector<10x16xbf16>
    %929 = arith.truncf %927 : vector<18x16xf32> to vector<18x16xbf16>
    %cst_310 = arith.constant dense<0.000000e+00> : vector<10x18xf32>
    %930 = tpu.matmul %928, %929, %cst_310 {dimension_numbers = #tpu.dot_dimension_numbers<[1], [1], [0], [0], [0, 0, 1, 0], [], []>} : vector<10x16xbf16>, vector<18x16xbf16>, vector<10x18xf32> -> vector<10x18xf32>
    %931 = arith.addf %930, %792 : vector<10x18xf32>
    %cst_311 = arith.constant dense<0xFF800000> : vector<10xf32>
    %932 = vector.multi_reduction <maximumf>, %931, %cst_311 [1] : vector<10x18xf32> to vector<10xf32>
    %933 = vector.shape_cast %932 : vector<10xf32> to vector<10x1xf32>
    %934 = vector.broadcast %933 : vector<10x1xf32> to vector<10x18xf32>
    %935 = arith.subf %931, %934 : vector<10x18xf32>
    %936 = math.exp %935 : vector<10x18xf32>
    %cst_312 = arith.constant dense<0.000000e+00> : vector<10xf32>
    %937 = vector.multi_reduction <add>, %936, %cst_312 [1] : vector<10x18xf32> to vector<10xf32>
    %938 = vector.shape_cast %937 : vector<10xf32> to vector<10x1xf32>
    %939 = tpu.reciprocal %938 : vector<10x1xf32> -> vector<10x1xf32>
    %940 = vector.broadcast %939 : vector<10x1xf32> to vector<10x18xf32>
    %941 = arith.mulf %936, %940 : vector<10x18xf32>
    %942 = vector.extract_strided_slice %900 {offsets = [0, 16], sizes = [18, 16], strides = [1, 1]} : vector<18x32xf32> to vector<18x16xf32>
    %943 = arith.truncf %941 : vector<10x18xf32> to vector<10x18xbf16>
    %944 = arith.truncf %942 : vector<18x16xf32> to vector<18x16xbf16>
    %cst_313 = arith.constant dense<0.000000e+00> : vector<10x16xf32>
    %945 = tpu.matmul %943, %944, %cst_313 {dimension_numbers = #tpu.dot_dimension_numbers<[1], [0], [0], [1], [0, 0, 1, 1], [], []>} : vector<10x18xbf16>, vector<18x16xbf16>, vector<10x16xf32> -> vector<10x16xf32>
    %946 = vector.extract_strided_slice %901 {offsets = [0, 16], sizes = [32, 16], strides = [1, 1]} : vector<32x32xbf16> to vector<32x16xbf16>
    %947 = arith.truncf %945 : vector<10x16xf32> to vector<10x16xbf16>
    %cst_314 = arith.constant dense<0.000000e+00> : vector<10x32xf32>
    %948 = tpu.matmul %947, %946, %cst_314 {dimension_numbers = #tpu.dot_dimension_numbers<[1], [1], [0], [0], [0, 0, 1, 0], [], []>} : vector<10x16xbf16>, vector<32x16xbf16>, vector<10x32xf32> -> vector<10x32xf32>
    %949 = arith.addf %925, %948 : vector<10x32xf32>
    %950 = vector.broadcast %902 : vector<1x32xf32> to vector<10x32xf32>
    %951 = arith.addf %949, %950 : vector<10x32xf32>
    %952 = arith.addf %883, %951 : vector<10x32xf32>
    %c90 = arith.constant 90 : index
    %c0_315 = arith.constant 0 : index
    %953 = vector.load %arg6[%c90, %c0_315] : memref<113x32xf32, #tpu.memory_space<vmem>>, vector<1x32xf32>
    %c91 = arith.constant 91 : index
    %c0_316 = arith.constant 0 : index
    %954 = vector.load %arg6[%c91, %c0_316] : memref<113x32xf32, #tpu.memory_space<vmem>>, vector<1x32xf32>
    %cst_317 = arith.constant dense<0.000000e+00> : vector<10xf32>
    %955 = vector.multi_reduction <add>, %952, %cst_317 [1] : vector<10x32xf32> to vector<10xf32>
    %956 = vector.shape_cast %955 : vector<10xf32> to vector<10x1xf32>
    %cst_318 = arith.constant 3.200000e+01 : f32
    %957 = vector.broadcast %cst_318 : f32 to vector<10x1xf32>
    %958 = arith.divf %956, %957 : vector<10x1xf32>
    %959 = arith.mulf %952, %952 : vector<10x32xf32>
    %cst_319 = arith.constant dense<0.000000e+00> : vector<10xf32>
    %960 = vector.multi_reduction <add>, %959, %cst_319 [1] : vector<10x32xf32> to vector<10xf32>
    %961 = vector.shape_cast %960 : vector<10xf32> to vector<10x1xf32>
    %cst_320 = arith.constant 3.200000e+01 : f32
    %962 = vector.broadcast %cst_320 : f32 to vector<10x1xf32>
    %963 = arith.divf %961, %962 : vector<10x1xf32>
    %964 = vector.broadcast %958 : vector<10x1xf32> to vector<10x32xf32>
    %965 = arith.subf %952, %964 : vector<10x32xf32>
    %966 = arith.mulf %958, %958 : vector<10x1xf32>
    %967 = arith.subf %963, %966 : vector<10x1xf32>
    %cst_321 = arith.constant 9.99999974E-6 : f32
    %968 = vector.broadcast %cst_321 : f32 to vector<10x1xf32>
    %969 = arith.addf %967, %968 : vector<10x1xf32>
    %970 = math.rsqrt %969 : vector<10x1xf32>
    %971 = vector.broadcast %970 : vector<10x1xf32> to vector<10x32xf32>
    %972 = arith.mulf %965, %971 : vector<10x32xf32>
    %973 = vector.broadcast %953 : vector<1x32xf32> to vector<10x32xf32>
    %974 = arith.mulf %972, %973 : vector<10x32xf32>
    %975 = vector.broadcast %954 : vector<1x32xf32> to vector<10x32xf32>
    %976 = arith.addf %974, %975 : vector<10x32xf32>
    %c1536 = arith.constant 1536 : index
    %c0_322 = arith.constant 0 : index
    %977 = vector.load %arg5[%c1536, %c0_322] : memref<2048x32xbf16, #tpu.memory_space<vmem>>, vector<64x32xbf16>
    %978 = arith.truncf %976 : vector<10x32xf32> to vector<10x32xbf16>
    %cst_323 = arith.constant dense<0.000000e+00> : vector<10x64xf32>
    %979 = tpu.matmul %978, %977, %cst_323 {dimension_numbers = #tpu.dot_dimension_numbers<[1], [1], [0], [0], [0, 0, 1, 0], [], []>} : vector<10x32xbf16>, vector<64x32xbf16>, vector<10x64xf32> -> vector<10x64xf32>
    %c3 = arith.constant 3 : index
    %c0_324 = arith.constant 0 : index
    %980 = vector.load %arg7[%c3, %c0_324] : memref<5x64xf32, #tpu.memory_space<vmem>>, vector<1x64xf32>
    %981 = vector.broadcast %980 : vector<1x64xf32> to vector<10x64xf32>
    %982 = arith.addf %979, %981 : vector<10x64xf32>
    %cst_325 = arith.constant 0.000000e+00 : f32
    %983 = vector.broadcast %cst_325 : f32 to vector<10x64xf32>
    %984 = arith.maximumf %982, %983 : vector<10x64xf32>
    %c1600 = arith.constant 1600 : index
    %c0_326 = arith.constant 0 : index
    %985 = vector.load %arg5[%c1600, %c0_326] : memref<2048x32xbf16, #tpu.memory_space<vmem>>, vector<64x32xbf16>
    %986 = arith.truncf %984 : vector<10x64xf32> to vector<10x64xbf16>
    %cst_327 = arith.constant dense<0.000000e+00> : vector<10x32xf32>
    %987 = tpu.matmul %986, %985, %cst_327 {dimension_numbers = #tpu.dot_dimension_numbers<[1], [0], [0], [1], [0, 0, 1, 1], [], []>} : vector<10x64xbf16>, vector<64x32xbf16>, vector<10x32xf32> -> vector<10x32xf32>
    %988 = arith.addf %976, %987 : vector<10x32xf32>
    %c87 = arith.constant 87 : index
    %c0_328 = arith.constant 0 : index
    %989 = vector.load %arg6[%c87, %c0_328] : memref<113x32xf32, #tpu.memory_space<vmem>>, vector<1x32xf32>
    %990 = vector.broadcast %989 : vector<1x32xf32> to vector<10x32xf32>
    %991 = arith.addf %988, %990 : vector<10x32xf32>
    %c92 = arith.constant 92 : index
    %c0_329 = arith.constant 0 : index
    %992 = vector.load %arg6[%c92, %c0_329] : memref<113x32xf32, #tpu.memory_space<vmem>>, vector<1x32xf32>
    %c93 = arith.constant 93 : index
    %c0_330 = arith.constant 0 : index
    %993 = vector.load %arg6[%c93, %c0_330] : memref<113x32xf32, #tpu.memory_space<vmem>>, vector<1x32xf32>
    %cst_331 = arith.constant dense<0.000000e+00> : vector<10xf32>
    %994 = vector.multi_reduction <add>, %991, %cst_331 [1] : vector<10x32xf32> to vector<10xf32>
    %995 = vector.shape_cast %994 : vector<10xf32> to vector<10x1xf32>
    %cst_332 = arith.constant 3.200000e+01 : f32
    %996 = vector.broadcast %cst_332 : f32 to vector<10x1xf32>
    %997 = arith.divf %995, %996 : vector<10x1xf32>
    %998 = arith.mulf %991, %991 : vector<10x32xf32>
    %cst_333 = arith.constant dense<0.000000e+00> : vector<10xf32>
    %999 = vector.multi_reduction <add>, %998, %cst_333 [1] : vector<10x32xf32> to vector<10xf32>
    %1000 = vector.shape_cast %999 : vector<10xf32> to vector<10x1xf32>
    %cst_334 = arith.constant 3.200000e+01 : f32
    %1001 = vector.broadcast %cst_334 : f32 to vector<10x1xf32>
    %1002 = arith.divf %1000, %1001 : vector<10x1xf32>
    %1003 = vector.broadcast %997 : vector<10x1xf32> to vector<10x32xf32>
    %1004 = arith.subf %991, %1003 : vector<10x32xf32>
    %1005 = arith.mulf %997, %997 : vector<10x1xf32>
    %1006 = arith.subf %1002, %1005 : vector<10x1xf32>
    %cst_335 = arith.constant 9.99999974E-6 : f32
    %1007 = vector.broadcast %cst_335 : f32 to vector<10x1xf32>
    %1008 = arith.addf %1006, %1007 : vector<10x1xf32>
    %1009 = math.rsqrt %1008 : vector<10x1xf32>
    %1010 = vector.broadcast %1009 : vector<10x1xf32> to vector<10x32xf32>
    %1011 = arith.mulf %1004, %1010 : vector<10x32xf32>
    %1012 = vector.broadcast %992 : vector<1x32xf32> to vector<10x32xf32>
    %1013 = arith.mulf %1011, %1012 : vector<10x32xf32>
    %1014 = vector.broadcast %993 : vector<1x32xf32> to vector<10x32xf32>
    %1015 = arith.addf %1013, %1014 : vector<10x32xf32>
    %c94 = arith.constant 94 : index
    %c0_336 = arith.constant 0 : index
    %1016 = vector.load %arg6[%c94, %c0_336] : memref<113x32xf32, #tpu.memory_space<vmem>>, vector<1x32xf32>
    %c95 = arith.constant 95 : index
    %c0_337 = arith.constant 0 : index
    %1017 = vector.load %arg6[%c95, %c0_337] : memref<113x32xf32, #tpu.memory_space<vmem>>, vector<1x32xf32>
    %cst_338 = arith.constant dense<0.000000e+00> : vector<10xf32>
    %1018 = vector.multi_reduction <add>, %1015, %cst_338 [1] : vector<10x32xf32> to vector<10xf32>
    %1019 = vector.shape_cast %1018 : vector<10xf32> to vector<10x1xf32>
    %cst_339 = arith.constant 3.200000e+01 : f32
    %1020 = vector.broadcast %cst_339 : f32 to vector<10x1xf32>
    %1021 = arith.divf %1019, %1020 : vector<10x1xf32>
    %1022 = arith.mulf %1015, %1015 : vector<10x32xf32>
    %cst_340 = arith.constant dense<0.000000e+00> : vector<10xf32>
    %1023 = vector.multi_reduction <add>, %1022, %cst_340 [1] : vector<10x32xf32> to vector<10xf32>
    %1024 = vector.shape_cast %1023 : vector<10xf32> to vector<10x1xf32>
    %cst_341 = arith.constant 3.200000e+01 : f32
    %1025 = vector.broadcast %cst_341 : f32 to vector<10x1xf32>
    %1026 = arith.divf %1024, %1025 : vector<10x1xf32>
    %1027 = vector.broadcast %1021 : vector<10x1xf32> to vector<10x32xf32>
    %1028 = arith.subf %1015, %1027 : vector<10x32xf32>
    %1029 = arith.mulf %1021, %1021 : vector<10x1xf32>
    %1030 = arith.subf %1026, %1029 : vector<10x1xf32>
    %cst_342 = arith.constant 9.99999974E-6 : f32
    %1031 = vector.broadcast %cst_342 : f32 to vector<10x1xf32>
    %1032 = arith.addf %1030, %1031 : vector<10x1xf32>
    %1033 = math.rsqrt %1032 : vector<10x1xf32>
    %1034 = vector.broadcast %1033 : vector<10x1xf32> to vector<10x32xf32>
    %1035 = arith.mulf %1028, %1034 : vector<10x32xf32>
    %1036 = vector.broadcast %1016 : vector<1x32xf32> to vector<10x32xf32>
    %1037 = arith.mulf %1035, %1036 : vector<10x32xf32>
    %1038 = vector.broadcast %1017 : vector<1x32xf32> to vector<10x32xf32>
    %1039 = arith.addf %1037, %1038 : vector<10x32xf32>
    %1040 = arith.truncf %1039 : vector<10x32xf32> to vector<10x32xbf16>
    %cst_343 = arith.constant dense<0.000000e+00> : vector<10x128xf32>
    %1041 = tpu.matmul %1040, %778, %cst_343 {dimension_numbers = #tpu.dot_dimension_numbers<[1], [1], [0], [0], [0, 0, 1, 0], [], []>} : vector<10x32xbf16>, vector<128x32xbf16>, vector<10x128xf32> -> vector<10x128xf32>
    %1042 = vector.broadcast %779 : vector<1x128xf32> to vector<10x128xf32>
    %1043 = arith.addf %1041, %1042 : vector<10x128xf32>
    %c0_344 = arith.constant 0 : index
    %c10 = arith.constant 10 : index
    %c0_345 = arith.constant 0 : index
    %1044 = vector.load %arg14[%c0_344, %c10, %c0_345] : memref<1x38x128xf32, #tpu.memory_space<vmem>>, vector<1x10x128xf32>
    %1045 = vector.shape_cast %1044 : vector<1x10x128xf32> to vector<10x128xf32>
    %1046 = vector.shape_cast %1043 : vector<10x128xf32> to vector<1x10x128xf32>
    tpu.vector_store %arg14[%c0_344, %c10, %c0_345], %1046 {strides = array<i32>} : memref<1x38x128xf32, #tpu.memory_space<vmem>>, vector<1x10x128xf32>,
    %c8_346 = arith.constant 8 : index
    %c0_347 = arith.constant 0 : index
    %1047 = vector.load %arg16[%c8_346, %c0_347] : memref<18x32xf32, #tpu.memory_space<vmem>>, vector<10x32xf32>
    tpu.vector_store %arg16[%c8_346, %c0_347], %1039 {strides = array<i32>} : memref<18x32xf32, #tpu.memory_space<vmem>>, vector<10x32xf32>,
    %c0_348 = arith.constant 0 : index
    %c0_349 = arith.constant 0 : index
    %1048 = vector.load %arg16[%c0_348, %c0_349] : memref<18x32xf32, #tpu.memory_space<vmem>>, vector<18x32xf32>
    %c0_350 = arith.constant 0 : index
    %c0_351 = arith.constant 0 : index
    %1049 = vector.load %arg12[%c0_350, %c0_351] : memref<10x10xf32, #tpu.memory_space<vmem>>, vector<10x10xf32>
    %c0_352 = arith.constant 0 : index
    %c0_353 = arith.constant 0 : index
    %1050 = vector.load %arg13[%c0_352, %c0_353] : memref<10x18xf32, #tpu.memory_space<vmem>>, vector<10x18xf32>
    %c1664 = arith.constant 1664 : index
    %c0_354 = arith.constant 0 : index
    %1051 = vector.load %arg5[%c1664, %c0_354] : memref<2048x32xbf16, #tpu.memory_space<vmem>>, vector<96x32xbf16>
    %1052 = arith.truncf %1039 : vector<10x32xf32> to vector<10x32xbf16>
    %cst_355 = arith.constant dense<0.000000e+00> : vector<10x96xf32>
    %1053 = tpu.matmul %1052, %1051, %cst_355 {dimension_numbers = #tpu.dot_dimension_numbers<[1], [1], [0], [0], [0, 0, 1, 0], [], []>} : vector<10x32xbf16>, vector<96x32xbf16>, vector<10x96xf32> -> vector<10x96xf32>
    %1054 = vector.extract_strided_slice %1053 {offsets = [0, 0], sizes = [10, 32], strides = [1, 1]} : vector<10x96xf32> to vector<10x32xf32>
    %c96 = arith.constant 96 : index
    %c0_356 = arith.constant 0 : index
    %1055 = vector.load %arg6[%c96, %c0_356] : memref<113x32xf32, #tpu.memory_space<vmem>>, vector<1x32xf32>
    %1056 = vector.broadcast %1055 : vector<1x32xf32> to vector<10x32xf32>
    %1057 = arith.addf %1054, %1056 : vector<10x32xf32>
    %1058 = vector.extract_strided_slice %1053 {offsets = [0, 32], sizes = [10, 32], strides = [1, 1]} : vector<10x96xf32> to vector<10x32xf32>
    %c97 = arith.constant 97 : index
    %c0_357 = arith.constant 0 : index
    %1059 = vector.load %arg6[%c97, %c0_357] : memref<113x32xf32, #tpu.memory_space<vmem>>, vector<1x32xf32>
    %1060 = vector.broadcast %1059 : vector<1x32xf32> to vector<10x32xf32>
    %1061 = arith.addf %1058, %1060 : vector<10x32xf32>
    %1062 = vector.extract_strided_slice %1053 {offsets = [0, 64], sizes = [10, 32], strides = [1, 1]} : vector<10x96xf32> to vector<10x32xf32>
    %c98 = arith.constant 98 : index
    %c0_358 = arith.constant 0 : index
    %1063 = vector.load %arg6[%c98, %c0_358] : memref<113x32xf32, #tpu.memory_space<vmem>>, vector<1x32xf32>
    %1064 = vector.broadcast %1063 : vector<1x32xf32> to vector<10x32xf32>
    %1065 = arith.addf %1062, %1064 : vector<10x32xf32>
    %c1760 = arith.constant 1760 : index
    %c0_359 = arith.constant 0 : index
    %1066 = vector.load %arg5[%c1760, %c0_359] : memref<2048x32xbf16, #tpu.memory_space<vmem>>, vector<32x32xbf16>
    %c99 = arith.constant 99 : index
    %c0_360 = arith.constant 0 : index
    %1067 = vector.load %arg6[%c99, %c0_360] : memref<113x32xf32, #tpu.memory_space<vmem>>, vector<1x32xf32>
    %1068 = vector.extract_strided_slice %1057 {offsets = [0, 0], sizes = [10, 16], strides = [1, 1]} : vector<10x32xf32> to vector<10x16xf32>
    %1069 = vector.extract_strided_slice %1061 {offsets = [0, 0], sizes = [10, 16], strides = [1, 1]} : vector<10x32xf32> to vector<10x16xf32>
    %1070 = arith.truncf %1068 : vector<10x16xf32> to vector<10x16xbf16>
    %1071 = arith.truncf %1069 : vector<10x16xf32> to vector<10x16xbf16>
    %cst_361 = arith.constant dense<0.000000e+00> : vector<10x10xf32>
    %1072 = tpu.matmul %1070, %1071, %cst_361 {dimension_numbers = #tpu.dot_dimension_numbers<[1], [1], [0], [0], [0, 0, 1, 0], [], []>} : vector<10x16xbf16>, vector<10x16xbf16>, vector<10x10xf32> -> vector<10x10xf32>
    %1073 = arith.addf %1072, %1049 : vector<10x10xf32>
    %cst_362 = arith.constant dense<0xFF800000> : vector<10xf32>
    %1074 = vector.multi_reduction <maximumf>, %1073, %cst_362 [1] : vector<10x10xf32> to vector<10xf32>
    %1075 = vector.shape_cast %1074 : vector<10xf32> to vector<10x1xf32>
    %1076 = vector.broadcast %1075 : vector<10x1xf32> to vector<10x10xf32>
    %1077 = arith.subf %1073, %1076 : vector<10x10xf32>
    %1078 = math.exp %1077 : vector<10x10xf32>
    %cst_363 = arith.constant dense<0.000000e+00> : vector<10xf32>
    %1079 = vector.multi_reduction <add>, %1078, %cst_363 [1] : vector<10x10xf32> to vector<10xf32>
    %1080 = vector.shape_cast %1079 : vector<10xf32> to vector<10x1xf32>
    %1081 = tpu.reciprocal %1080 : vector<10x1xf32> -> vector<10x1xf32>
    %1082 = vector.broadcast %1081 : vector<10x1xf32> to vector<10x10xf32>
    %1083 = arith.mulf %1078, %1082 : vector<10x10xf32>
    %1084 = vector.extract_strided_slice %1065 {offsets = [0, 0], sizes = [10, 16], strides = [1, 1]} : vector<10x32xf32> to vector<10x16xf32>
    %1085 = arith.truncf %1083 : vector<10x10xf32> to vector<10x10xbf16>
    %1086 = arith.truncf %1084 : vector<10x16xf32> to vector<10x16xbf16>
    %cst_364 = arith.constant dense<0.000000e+00> : vector<10x16xf32>
    %1087 = tpu.matmul %1085, %1086, %cst_364 {dimension_numbers = #tpu.dot_dimension_numbers<[1], [0], [0], [1], [0, 0, 1, 1], [], []>} : vector<10x10xbf16>, vector<10x16xbf16>, vector<10x16xf32> -> vector<10x16xf32>
    %1088 = vector.extract_strided_slice %1066 {offsets = [0, 0], sizes = [32, 16], strides = [1, 1]} : vector<32x32xbf16> to vector<32x16xbf16>
    %1089 = arith.truncf %1087 : vector<10x16xf32> to vector<10x16xbf16>
    %cst_365 = arith.constant dense<0.000000e+00> : vector<10x32xf32>
    %1090 = tpu.matmul %1089, %1088, %cst_365 {dimension_numbers = #tpu.dot_dimension_numbers<[1], [1], [0], [0], [0, 0, 1, 0], [], []>} : vector<10x16xbf16>, vector<32x16xbf16>, vector<10x32xf32> -> vector<10x32xf32>
    %1091 = vector.extract_strided_slice %1057 {offsets = [0, 16], sizes = [10, 16], strides = [1, 1]} : vector<10x32xf32> to vector<10x16xf32>
    %1092 = vector.extract_strided_slice %1061 {offsets = [0, 16], sizes = [10, 16], strides = [1, 1]} : vector<10x32xf32> to vector<10x16xf32>
    %1093 = arith.truncf %1091 : vector<10x16xf32> to vector<10x16xbf16>
    %1094 = arith.truncf %1092 : vector<10x16xf32> to vector<10x16xbf16>
    %cst_366 = arith.constant dense<0.000000e+00> : vector<10x10xf32>
    %1095 = tpu.matmul %1093, %1094, %cst_366 {dimension_numbers = #tpu.dot_dimension_numbers<[1], [1], [0], [0], [0, 0, 1, 0], [], []>} : vector<10x16xbf16>, vector<10x16xbf16>, vector<10x10xf32> -> vector<10x10xf32>
    %1096 = arith.addf %1095, %1049 : vector<10x10xf32>
    %cst_367 = arith.constant dense<0xFF800000> : vector<10xf32>
    %1097 = vector.multi_reduction <maximumf>, %1096, %cst_367 [1] : vector<10x10xf32> to vector<10xf32>
    %1098 = vector.shape_cast %1097 : vector<10xf32> to vector<10x1xf32>
    %1099 = vector.broadcast %1098 : vector<10x1xf32> to vector<10x10xf32>
    %1100 = arith.subf %1096, %1099 : vector<10x10xf32>
    %1101 = math.exp %1100 : vector<10x10xf32>
    %cst_368 = arith.constant dense<0.000000e+00> : vector<10xf32>
    %1102 = vector.multi_reduction <add>, %1101, %cst_368 [1] : vector<10x10xf32> to vector<10xf32>
    %1103 = vector.shape_cast %1102 : vector<10xf32> to vector<10x1xf32>
    %1104 = tpu.reciprocal %1103 : vector<10x1xf32> -> vector<10x1xf32>
    %1105 = vector.broadcast %1104 : vector<10x1xf32> to vector<10x10xf32>
    %1106 = arith.mulf %1101, %1105 : vector<10x10xf32>
    %1107 = vector.extract_strided_slice %1065 {offsets = [0, 16], sizes = [10, 16], strides = [1, 1]} : vector<10x32xf32> to vector<10x16xf32>
    %1108 = arith.truncf %1106 : vector<10x10xf32> to vector<10x10xbf16>
    %1109 = arith.truncf %1107 : vector<10x16xf32> to vector<10x16xbf16>
    %cst_369 = arith.constant dense<0.000000e+00> : vector<10x16xf32>
    %1110 = tpu.matmul %1108, %1109, %cst_369 {dimension_numbers = #tpu.dot_dimension_numbers<[1], [0], [0], [1], [0, 0, 1, 1], [], []>} : vector<10x10xbf16>, vector<10x16xbf16>, vector<10x16xf32> -> vector<10x16xf32>
    %1111 = vector.extract_strided_slice %1066 {offsets = [0, 16], sizes = [32, 16], strides = [1, 1]} : vector<32x32xbf16> to vector<32x16xbf16>
    %1112 = arith.truncf %1110 : vector<10x16xf32> to vector<10x16xbf16>
    %cst_370 = arith.constant dense<0.000000e+00> : vector<10x32xf32>
    %1113 = tpu.matmul %1112, %1111, %cst_370 {dimension_numbers = #tpu.dot_dimension_numbers<[1], [1], [0], [0], [0, 0, 1, 0], [], []>} : vector<10x16xbf16>, vector<32x16xbf16>, vector<10x32xf32> -> vector<10x32xf32>
    %1114 = arith.addf %1090, %1113 : vector<10x32xf32>
    %1115 = vector.broadcast %1067 : vector<1x32xf32> to vector<10x32xf32>
    %1116 = arith.addf %1114, %1115 : vector<10x32xf32>
    %1117 = arith.addf %1039, %1116 : vector<10x32xf32>
    %c105 = arith.constant 105 : index
    %c0_371 = arith.constant 0 : index
    %1118 = vector.load %arg6[%c105, %c0_371] : memref<113x32xf32, #tpu.memory_space<vmem>>, vector<1x32xf32>
    %c106 = arith.constant 106 : index
    %c0_372 = arith.constant 0 : index
    %1119 = vector.load %arg6[%c106, %c0_372] : memref<113x32xf32, #tpu.memory_space<vmem>>, vector<1x32xf32>
    %cst_373 = arith.constant dense<0.000000e+00> : vector<10xf32>
    %1120 = vector.multi_reduction <add>, %1117, %cst_373 [1] : vector<10x32xf32> to vector<10xf32>
    %1121 = vector.shape_cast %1120 : vector<10xf32> to vector<10x1xf32>
    %cst_374 = arith.constant 3.200000e+01 : f32
    %1122 = vector.broadcast %cst_374 : f32 to vector<10x1xf32>
    %1123 = arith.divf %1121, %1122 : vector<10x1xf32>
    %1124 = arith.mulf %1117, %1117 : vector<10x32xf32>
    %cst_375 = arith.constant dense<0.000000e+00> : vector<10xf32>
    %1125 = vector.multi_reduction <add>, %1124, %cst_375 [1] : vector<10x32xf32> to vector<10xf32>
    %1126 = vector.shape_cast %1125 : vector<10xf32> to vector<10x1xf32>
    %cst_376 = arith.constant 3.200000e+01 : f32
    %1127 = vector.broadcast %cst_376 : f32 to vector<10x1xf32>
    %1128 = arith.divf %1126, %1127 : vector<10x1xf32>
    %1129 = vector.broadcast %1123 : vector<10x1xf32> to vector<10x32xf32>
    %1130 = arith.subf %1117, %1129 : vector<10x32xf32>
    %1131 = arith.mulf %1123, %1123 : vector<10x1xf32>
    %1132 = arith.subf %1128, %1131 : vector<10x1xf32>
    %cst_377 = arith.constant 9.99999974E-6 : f32
    %1133 = vector.broadcast %cst_377 : f32 to vector<10x1xf32>
    %1134 = arith.addf %1132, %1133 : vector<10x1xf32>
    %1135 = math.rsqrt %1134 : vector<10x1xf32>
    %1136 = vector.broadcast %1135 : vector<10x1xf32> to vector<10x32xf32>
    %1137 = arith.mulf %1130, %1136 : vector<10x32xf32>
    %1138 = vector.broadcast %1118 : vector<1x32xf32> to vector<10x32xf32>
    %1139 = arith.mulf %1137, %1138 : vector<10x32xf32>
    %1140 = vector.broadcast %1119 : vector<1x32xf32> to vector<10x32xf32>
    %1141 = arith.addf %1139, %1140 : vector<10x32xf32>
    %c1792 = arith.constant 1792 : index
    %c0_378 = arith.constant 0 : index
    %1142 = vector.load %arg5[%c1792, %c0_378] : memref<2048x32xbf16, #tpu.memory_space<vmem>>, vector<32x32xbf16>
    %1143 = arith.truncf %1141 : vector<10x32xf32> to vector<10x32xbf16>
    %cst_379 = arith.constant dense<0.000000e+00> : vector<10x32xf32>
    %1144 = tpu.matmul %1143, %1142, %cst_379 {dimension_numbers = #tpu.dot_dimension_numbers<[1], [1], [0], [0], [0, 0, 1, 0], [], []>} : vector<10x32xbf16>, vector<32x32xbf16>, vector<10x32xf32> -> vector<10x32xf32>
    %c100 = arith.constant 100 : index
    %c0_380 = arith.constant 0 : index
    %1145 = vector.load %arg6[%c100, %c0_380] : memref<113x32xf32, #tpu.memory_space<vmem>>, vector<1x32xf32>
    %1146 = vector.broadcast %1145 : vector<1x32xf32> to vector<10x32xf32>
    %1147 = arith.addf %1144, %1146 : vector<10x32xf32>
    %c1824 = arith.constant 1824 : index
    %c0_381 = arith.constant 0 : index
    %1148 = vector.load %arg5[%c1824, %c0_381] : memref<2048x32xbf16, #tpu.memory_space<vmem>>, vector<64x32xbf16>
    %1149 = arith.truncf %1048 : vector<18x32xf32> to vector<18x32xbf16>
    %cst_382 = arith.constant dense<0.000000e+00> : vector<18x64xf32>
    %1150 = tpu.matmul %1149, %1148, %cst_382 {dimension_numbers = #tpu.dot_dimension_numbers<[1], [1], [0], [0], [0, 0, 1, 0], [], []>} : vector<18x32xbf16>, vector<64x32xbf16>, vector<18x64xf32> -> vector<18x64xf32>
    %1151 = vector.extract_strided_slice %1150 {offsets = [0, 0], sizes = [18, 32], strides = [1, 1]} : vector<18x64xf32> to vector<18x32xf32>
    %c101 = arith.constant 101 : index
    %c0_383 = arith.constant 0 : index
    %1152 = vector.load %arg6[%c101, %c0_383] : memref<113x32xf32, #tpu.memory_space<vmem>>, vector<1x32xf32>
    %1153 = vector.broadcast %1152 : vector<1x32xf32> to vector<18x32xf32>
    %1154 = arith.addf %1151, %1153 : vector<18x32xf32>
    %1155 = vector.extract_strided_slice %1150 {offsets = [0, 32], sizes = [18, 32], strides = [1, 1]} : vector<18x64xf32> to vector<18x32xf32>
    %c102 = arith.constant 102 : index
    %c0_384 = arith.constant 0 : index
    %1156 = vector.load %arg6[%c102, %c0_384] : memref<113x32xf32, #tpu.memory_space<vmem>>, vector<1x32xf32>
    %1157 = vector.broadcast %1156 : vector<1x32xf32> to vector<18x32xf32>
    %1158 = arith.addf %1155, %1157 : vector<18x32xf32>
    %c1888 = arith.constant 1888 : index
    %c0_385 = arith.constant 0 : index
    %1159 = vector.load %arg5[%c1888, %c0_385] : memref<2048x32xbf16, #tpu.memory_space<vmem>>, vector<32x32xbf16>
    %c103 = arith.constant 103 : index
    %c0_386 = arith.constant 0 : index
    %1160 = vector.load %arg6[%c103, %c0_386] : memref<113x32xf32, #tpu.memory_space<vmem>>, vector<1x32xf32>
    %1161 = vector.extract_strided_slice %1147 {offsets = [0, 0], sizes = [10, 16], strides = [1, 1]} : vector<10x32xf32> to vector<10x16xf32>
    %1162 = vector.extract_strided_slice %1154 {offsets = [0, 0], sizes = [18, 16], strides = [1, 1]} : vector<18x32xf32> to vector<18x16xf32>
    %1163 = arith.truncf %1161 : vector<10x16xf32> to vector<10x16xbf16>
    %1164 = arith.truncf %1162 : vector<18x16xf32> to vector<18x16xbf16>
    %cst_387 = arith.constant dense<0.000000e+00> : vector<10x18xf32>
    %1165 = tpu.matmul %1163, %1164, %cst_387 {dimension_numbers = #tpu.dot_dimension_numbers<[1], [1], [0], [0], [0, 0, 1, 0], [], []>} : vector<10x16xbf16>, vector<18x16xbf16>, vector<10x18xf32> -> vector<10x18xf32>
    %1166 = arith.addf %1165, %1050 : vector<10x18xf32>
    %cst_388 = arith.constant dense<0xFF800000> : vector<10xf32>
    %1167 = vector.multi_reduction <maximumf>, %1166, %cst_388 [1] : vector<10x18xf32> to vector<10xf32>
    %1168 = vector.shape_cast %1167 : vector<10xf32> to vector<10x1xf32>
    %1169 = vector.broadcast %1168 : vector<10x1xf32> to vector<10x18xf32>
    %1170 = arith.subf %1166, %1169 : vector<10x18xf32>
    %1171 = math.exp %1170 : vector<10x18xf32>
    %cst_389 = arith.constant dense<0.000000e+00> : vector<10xf32>
    %1172 = vector.multi_reduction <add>, %1171, %cst_389 [1] : vector<10x18xf32> to vector<10xf32>
    %1173 = vector.shape_cast %1172 : vector<10xf32> to vector<10x1xf32>
    %1174 = tpu.reciprocal %1173 : vector<10x1xf32> -> vector<10x1xf32>
    %1175 = vector.broadcast %1174 : vector<10x1xf32> to vector<10x18xf32>
    %1176 = arith.mulf %1171, %1175 : vector<10x18xf32>
    %1177 = vector.extract_strided_slice %1158 {offsets = [0, 0], sizes = [18, 16], strides = [1, 1]} : vector<18x32xf32> to vector<18x16xf32>
    %1178 = arith.truncf %1176 : vector<10x18xf32> to vector<10x18xbf16>
    %1179 = arith.truncf %1177 : vector<18x16xf32> to vector<18x16xbf16>
    %cst_390 = arith.constant dense<0.000000e+00> : vector<10x16xf32>
    %1180 = tpu.matmul %1178, %1179, %cst_390 {dimension_numbers = #tpu.dot_dimension_numbers<[1], [0], [0], [1], [0, 0, 1, 1], [], []>} : vector<10x18xbf16>, vector<18x16xbf16>, vector<10x16xf32> -> vector<10x16xf32>
    %1181 = vector.extract_strided_slice %1159 {offsets = [0, 0], sizes = [32, 16], strides = [1, 1]} : vector<32x32xbf16> to vector<32x16xbf16>
    %1182 = arith.truncf %1180 : vector<10x16xf32> to vector<10x16xbf16>
    %cst_391 = arith.constant dense<0.000000e+00> : vector<10x32xf32>
    %1183 = tpu.matmul %1182, %1181, %cst_391 {dimension_numbers = #tpu.dot_dimension_numbers<[1], [1], [0], [0], [0, 0, 1, 0], [], []>} : vector<10x16xbf16>, vector<32x16xbf16>, vector<10x32xf32> -> vector<10x32xf32>
    %1184 = vector.extract_strided_slice %1147 {offsets = [0, 16], sizes = [10, 16], strides = [1, 1]} : vector<10x32xf32> to vector<10x16xf32>
    %1185 = vector.extract_strided_slice %1154 {offsets = [0, 16], sizes = [18, 16], strides = [1, 1]} : vector<18x32xf32> to vector<18x16xf32>
    %1186 = arith.truncf %1184 : vector<10x16xf32> to vector<10x16xbf16>
    %1187 = arith.truncf %1185 : vector<18x16xf32> to vector<18x16xbf16>
    %cst_392 = arith.constant dense<0.000000e+00> : vector<10x18xf32>
    %1188 = tpu.matmul %1186, %1187, %cst_392 {dimension_numbers = #tpu.dot_dimension_numbers<[1], [1], [0], [0], [0, 0, 1, 0], [], []>} : vector<10x16xbf16>, vector<18x16xbf16>, vector<10x18xf32> -> vector<10x18xf32>
    %1189 = arith.addf %1188, %1050 : vector<10x18xf32>
    %cst_393 = arith.constant dense<0xFF800000> : vector<10xf32>
    %1190 = vector.multi_reduction <maximumf>, %1189, %cst_393 [1] : vector<10x18xf32> to vector<10xf32>
    %1191 = vector.shape_cast %1190 : vector<10xf32> to vector<10x1xf32>
    %1192 = vector.broadcast %1191 : vector<10x1xf32> to vector<10x18xf32>
    %1193 = arith.subf %1189, %1192 : vector<10x18xf32>
    %1194 = math.exp %1193 : vector<10x18xf32>
    %cst_394 = arith.constant dense<0.000000e+00> : vector<10xf32>
    %1195 = vector.multi_reduction <add>, %1194, %cst_394 [1] : vector<10x18xf32> to vector<10xf32>
    %1196 = vector.shape_cast %1195 : vector<10xf32> to vector<10x1xf32>
    %1197 = tpu.reciprocal %1196 : vector<10x1xf32> -> vector<10x1xf32>
    %1198 = vector.broadcast %1197 : vector<10x1xf32> to vector<10x18xf32>
    %1199 = arith.mulf %1194, %1198 : vector<10x18xf32>
    %1200 = vector.extract_strided_slice %1158 {offsets = [0, 16], sizes = [18, 16], strides = [1, 1]} : vector<18x32xf32> to vector<18x16xf32>
    %1201 = arith.truncf %1199 : vector<10x18xf32> to vector<10x18xbf16>
    %1202 = arith.truncf %1200 : vector<18x16xf32> to vector<18x16xbf16>
    %cst_395 = arith.constant dense<0.000000e+00> : vector<10x16xf32>
    %1203 = tpu.matmul %1201, %1202, %cst_395 {dimension_numbers = #tpu.dot_dimension_numbers<[1], [0], [0], [1], [0, 0, 1, 1], [], []>} : vector<10x18xbf16>, vector<18x16xbf16>, vector<10x16xf32> -> vector<10x16xf32>
    %1204 = vector.extract_strided_slice %1159 {offsets = [0, 16], sizes = [32, 16], strides = [1, 1]} : vector<32x32xbf16> to vector<32x16xbf16>
    %1205 = arith.truncf %1203 : vector<10x16xf32> to vector<10x16xbf16>
    %cst_396 = arith.constant dense<0.000000e+00> : vector<10x32xf32>
    %1206 = tpu.matmul %1205, %1204, %cst_396 {dimension_numbers = #tpu.dot_dimension_numbers<[1], [1], [0], [0], [0, 0, 1, 0], [], []>} : vector<10x16xbf16>, vector<32x16xbf16>, vector<10x32xf32> -> vector<10x32xf32>
    %1207 = arith.addf %1183, %1206 : vector<10x32xf32>
    %1208 = vector.broadcast %1160 : vector<1x32xf32> to vector<10x32xf32>
    %1209 = arith.addf %1207, %1208 : vector<10x32xf32>
    %1210 = arith.addf %1141, %1209 : vector<10x32xf32>
    %c107 = arith.constant 107 : index
    %c0_397 = arith.constant 0 : index
    %1211 = vector.load %arg6[%c107, %c0_397] : memref<113x32xf32, #tpu.memory_space<vmem>>, vector<1x32xf32>
    %c108 = arith.constant 108 : index
    %c0_398 = arith.constant 0 : index
    %1212 = vector.load %arg6[%c108, %c0_398] : memref<113x32xf32, #tpu.memory_space<vmem>>, vector<1x32xf32>
    %cst_399 = arith.constant dense<0.000000e+00> : vector<10xf32>
    %1213 = vector.multi_reduction <add>, %1210, %cst_399 [1] : vector<10x32xf32> to vector<10xf32>
    %1214 = vector.shape_cast %1213 : vector<10xf32> to vector<10x1xf32>
    %cst_400 = arith.constant 3.200000e+01 : f32
    %1215 = vector.broadcast %cst_400 : f32 to vector<10x1xf32>
    %1216 = arith.divf %1214, %1215 : vector<10x1xf32>
    %1217 = arith.mulf %1210, %1210 : vector<10x32xf32>
    %cst_401 = arith.constant dense<0.000000e+00> : vector<10xf32>
    %1218 = vector.multi_reduction <add>, %1217, %cst_401 [1] : vector<10x32xf32> to vector<10xf32>
    %1219 = vector.shape_cast %1218 : vector<10xf32> to vector<10x1xf32>
    %cst_402 = arith.constant 3.200000e+01 : f32
    %1220 = vector.broadcast %cst_402 : f32 to vector<10x1xf32>
    %1221 = arith.divf %1219, %1220 : vector<10x1xf32>
    %1222 = vector.broadcast %1216 : vector<10x1xf32> to vector<10x32xf32>
    %1223 = arith.subf %1210, %1222 : vector<10x32xf32>
    %1224 = arith.mulf %1216, %1216 : vector<10x1xf32>
    %1225 = arith.subf %1221, %1224 : vector<10x1xf32>
    %cst_403 = arith.constant 9.99999974E-6 : f32
    %1226 = vector.broadcast %cst_403 : f32 to vector<10x1xf32>
    %1227 = arith.addf %1225, %1226 : vector<10x1xf32>
    %1228 = math.rsqrt %1227 : vector<10x1xf32>
    %1229 = vector.broadcast %1228 : vector<10x1xf32> to vector<10x32xf32>
    %1230 = arith.mulf %1223, %1229 : vector<10x32xf32>
    %1231 = vector.broadcast %1211 : vector<1x32xf32> to vector<10x32xf32>
    %1232 = arith.mulf %1230, %1231 : vector<10x32xf32>
    %1233 = vector.broadcast %1212 : vector<1x32xf32> to vector<10x32xf32>
    %1234 = arith.addf %1232, %1233 : vector<10x32xf32>
    %c1920 = arith.constant 1920 : index
    %c0_404 = arith.constant 0 : index
    %1235 = vector.load %arg5[%c1920, %c0_404] : memref<2048x32xbf16, #tpu.memory_space<vmem>>, vector<64x32xbf16>
    %1236 = arith.truncf %1234 : vector<10x32xf32> to vector<10x32xbf16>
    %cst_405 = arith.constant dense<0.000000e+00> : vector<10x64xf32>
    %1237 = tpu.matmul %1236, %1235, %cst_405 {dimension_numbers = #tpu.dot_dimension_numbers<[1], [1], [0], [0], [0, 0, 1, 0], [], []>} : vector<10x32xbf16>, vector<64x32xbf16>, vector<10x64xf32> -> vector<10x64xf32>
    %c4_406 = arith.constant 4 : index
    %c0_407 = arith.constant 0 : index
    %1238 = vector.load %arg7[%c4_406, %c0_407] : memref<5x64xf32, #tpu.memory_space<vmem>>, vector<1x64xf32>
    %1239 = vector.broadcast %1238 : vector<1x64xf32> to vector<10x64xf32>
    %1240 = arith.addf %1237, %1239 : vector<10x64xf32>
    %cst_408 = arith.constant 0.000000e+00 : f32
    %1241 = vector.broadcast %cst_408 : f32 to vector<10x64xf32>
    %1242 = arith.maximumf %1240, %1241 : vector<10x64xf32>
    %c1984 = arith.constant 1984 : index
    %c0_409 = arith.constant 0 : index
    %1243 = vector.load %arg5[%c1984, %c0_409] : memref<2048x32xbf16, #tpu.memory_space<vmem>>, vector<64x32xbf16>
    %1244 = arith.truncf %1242 : vector<10x64xf32> to vector<10x64xbf16>
    %cst_410 = arith.constant dense<0.000000e+00> : vector<10x32xf32>
    %1245 = tpu.matmul %1244, %1243, %cst_410 {dimension_numbers = #tpu.dot_dimension_numbers<[1], [0], [0], [1], [0, 0, 1, 1], [], []>} : vector<10x64xbf16>, vector<64x32xbf16>, vector<10x32xf32> -> vector<10x32xf32>
    %1246 = arith.addf %1234, %1245 : vector<10x32xf32>
    %c104 = arith.constant 104 : index
    %c0_411 = arith.constant 0 : index
    %1247 = vector.load %arg6[%c104, %c0_411] : memref<113x32xf32, #tpu.memory_space<vmem>>, vector<1x32xf32>
    %1248 = vector.broadcast %1247 : vector<1x32xf32> to vector<10x32xf32>
    %1249 = arith.addf %1246, %1248 : vector<10x32xf32>
    %c109 = arith.constant 109 : index
    %c0_412 = arith.constant 0 : index
    %1250 = vector.load %arg6[%c109, %c0_412] : memref<113x32xf32, #tpu.memory_space<vmem>>, vector<1x32xf32>
    %c110 = arith.constant 110 : index
    %c0_413 = arith.constant 0 : index
    %1251 = vector.load %arg6[%c110, %c0_413] : memref<113x32xf32, #tpu.memory_space<vmem>>, vector<1x32xf32>
    %cst_414 = arith.constant dense<0.000000e+00> : vector<10xf32>
    %1252 = vector.multi_reduction <add>, %1249, %cst_414 [1] : vector<10x32xf32> to vector<10xf32>
    %1253 = vector.shape_cast %1252 : vector<10xf32> to vector<10x1xf32>
    %cst_415 = arith.constant 3.200000e+01 : f32
    %1254 = vector.broadcast %cst_415 : f32 to vector<10x1xf32>
    %1255 = arith.divf %1253, %1254 : vector<10x1xf32>
    %1256 = arith.mulf %1249, %1249 : vector<10x32xf32>
    %cst_416 = arith.constant dense<0.000000e+00> : vector<10xf32>
    %1257 = vector.multi_reduction <add>, %1256, %cst_416 [1] : vector<10x32xf32> to vector<10xf32>
    %1258 = vector.shape_cast %1257 : vector<10xf32> to vector<10x1xf32>
    %cst_417 = arith.constant 3.200000e+01 : f32
    %1259 = vector.broadcast %cst_417 : f32 to vector<10x1xf32>
    %1260 = arith.divf %1258, %1259 : vector<10x1xf32>
    %1261 = vector.broadcast %1255 : vector<10x1xf32> to vector<10x32xf32>
    %1262 = arith.subf %1249, %1261 : vector<10x32xf32>
    %1263 = arith.mulf %1255, %1255 : vector<10x1xf32>
    %1264 = arith.subf %1260, %1263 : vector<10x1xf32>
    %cst_418 = arith.constant 9.99999974E-6 : f32
    %1265 = vector.broadcast %cst_418 : f32 to vector<10x1xf32>
    %1266 = arith.addf %1264, %1265 : vector<10x1xf32>
    %1267 = math.rsqrt %1266 : vector<10x1xf32>
    %1268 = vector.broadcast %1267 : vector<10x1xf32> to vector<10x32xf32>
    %1269 = arith.mulf %1262, %1268 : vector<10x32xf32>
    %1270 = vector.broadcast %1250 : vector<1x32xf32> to vector<10x32xf32>
    %1271 = arith.mulf %1269, %1270 : vector<10x32xf32>
    %1272 = vector.broadcast %1251 : vector<1x32xf32> to vector<10x32xf32>
    %1273 = arith.addf %1271, %1272 : vector<10x32xf32>
    %c111 = arith.constant 111 : index
    %c0_419 = arith.constant 0 : index
    %1274 = vector.load %arg6[%c111, %c0_419] : memref<113x32xf32, #tpu.memory_space<vmem>>, vector<1x32xf32>
    %c112 = arith.constant 112 : index
    %c0_420 = arith.constant 0 : index
    %1275 = vector.load %arg6[%c112, %c0_420] : memref<113x32xf32, #tpu.memory_space<vmem>>, vector<1x32xf32>
    %cst_421 = arith.constant dense<0.000000e+00> : vector<10xf32>
    %1276 = vector.multi_reduction <add>, %1273, %cst_421 [1] : vector<10x32xf32> to vector<10xf32>
    %1277 = vector.shape_cast %1276 : vector<10xf32> to vector<10x1xf32>
    %cst_422 = arith.constant 3.200000e+01 : f32
    %1278 = vector.broadcast %cst_422 : f32 to vector<10x1xf32>
    %1279 = arith.divf %1277, %1278 : vector<10x1xf32>
    %1280 = arith.mulf %1273, %1273 : vector<10x32xf32>
    %cst_423 = arith.constant dense<0.000000e+00> : vector<10xf32>
    %1281 = vector.multi_reduction <add>, %1280, %cst_423 [1] : vector<10x32xf32> to vector<10xf32>
    %1282 = vector.shape_cast %1281 : vector<10xf32> to vector<10x1xf32>
    %cst_424 = arith.constant 3.200000e+01 : f32
    %1283 = vector.broadcast %cst_424 : f32 to vector<10x1xf32>
    %1284 = arith.divf %1282, %1283 : vector<10x1xf32>
    %1285 = vector.broadcast %1279 : vector<10x1xf32> to vector<10x32xf32>
    %1286 = arith.subf %1273, %1285 : vector<10x32xf32>
    %1287 = arith.mulf %1279, %1279 : vector<10x1xf32>
    %1288 = arith.subf %1284, %1287 : vector<10x1xf32>
    %cst_425 = arith.constant 9.99999974E-6 : f32
    %1289 = vector.broadcast %cst_425 : f32 to vector<10x1xf32>
    %1290 = arith.addf %1288, %1289 : vector<10x1xf32>
    %1291 = math.rsqrt %1290 : vector<10x1xf32>
    %1292 = vector.broadcast %1291 : vector<10x1xf32> to vector<10x32xf32>
    %1293 = arith.mulf %1286, %1292 : vector<10x32xf32>
    %1294 = vector.broadcast %1274 : vector<1x32xf32> to vector<10x32xf32>
    %1295 = arith.mulf %1293, %1294 : vector<10x32xf32>
    %1296 = vector.broadcast %1275 : vector<1x32xf32> to vector<10x32xf32>
    %1297 = arith.addf %1295, %1296 : vector<10x32xf32>
    %1298 = arith.truncf %1297 : vector<10x32xf32> to vector<10x32xbf16>
    %cst_426 = arith.constant dense<0.000000e+00> : vector<10x128xf32>
    %1299 = tpu.matmul %1298, %778, %cst_426 {dimension_numbers = #tpu.dot_dimension_numbers<[1], [1], [0], [0], [0, 0, 1, 0], [], []>} : vector<10x32xbf16>, vector<128x32xbf16>, vector<10x128xf32> -> vector<10x128xf32>
    %1300 = vector.broadcast %779 : vector<1x128xf32> to vector<10x128xf32>
    %1301 = arith.addf %1299, %1300 : vector<10x128xf32>
    %c0_427 = arith.constant 0 : index
    %c20_428 = arith.constant 20 : index
    %c0_429 = arith.constant 0 : index
    %1302 = vector.load %arg14[%c0_427, %c20_428, %c0_429] : memref<1x38x128xf32, #tpu.memory_space<vmem>>, vector<1x10x128xf32>
    %1303 = vector.shape_cast %1302 : vector<1x10x128xf32> to vector<10x128xf32>
    %1304 = vector.shape_cast %1301 : vector<10x128xf32> to vector<1x10x128xf32>
    tpu.vector_store %arg14[%c0_427, %c20_428, %c0_429], %1304 {strides = array<i32>} : memref<1x38x128xf32, #tpu.memory_space<vmem>>, vector<1x10x128xf32>,
    %c0_430 = arith.constant 0 : index
    %c0_431 = arith.constant 0 : index
    %1305 = vector.load %arg9[%c0_430, %c0_431] : memref<8x4xf32, #tpu.memory_space<vmem>>, vector<8x4xf32>
    %cst_432 = arith.constant dense<0.000000e+00> : vector<8x32xf32>
    %1306 = tpu.matmul %1305, %777, %cst_432 {dimension_numbers = #tpu.dot_dimension_numbers<[1], [0], [0], [1], [0, 0, 1, 1], [], []>} : vector<8x4xf32>, vector<4x32xf32>, vector<8x32xf32> -> vector<8x32xf32>
    %1307 = arith.truncf %1306 : vector<8x32xf32> to vector<8x32xbf16>
    %cst_433 = arith.constant dense<0.000000e+00> : vector<8x128xf32>
    %1308 = tpu.matmul %1307, %778, %cst_433 {dimension_numbers = #tpu.dot_dimension_numbers<[1], [1], [0], [0], [0, 0, 1, 0], [], []>} : vector<8x32xbf16>, vector<128x32xbf16>, vector<8x128xf32> -> vector<8x128xf32>
    %1309 = vector.broadcast %779 : vector<1x128xf32> to vector<8x128xf32>
    %1310 = arith.addf %1308, %1309 : vector<8x128xf32>
    %c0_434 = arith.constant 0 : index
    %c30_435 = arith.constant 30 : index
    %c0_436 = arith.constant 0 : index
    %1311 = vector.load %arg14[%c0_434, %c30_435, %c0_436] : memref<1x38x128xf32, #tpu.memory_space<vmem>>, vector<1x8x128xf32>
    %1312 = vector.shape_cast %1311 : vector<1x8x128xf32> to vector<8x128xf32>
    %1313 = vector.shape_cast %1310 : vector<8x128xf32> to vector<1x8x128xf32>
    tpu.vector_store %arg14[%c0_434, %c30_435, %c0_436], %1313 {strides = array<i32>} : memref<1x38x128xf32, #tpu.memory_space<vmem>>, vector<1x8x128xf32>,
    return
  }
  func.func @transform_0(%arg0: i32) -> (i32, i32, i32) {
    %c0_i32 = arith.constant 0 : i32
    %c0_i32_0 = arith.constant 0 : i32
    %c0_i32_1 = arith.constant 0 : i32
    return %arg0, %c0_i32, %c0_i32_0 : i32, i32, i32
  }
  func.func @transform_1(%arg0: i32) -> (i32, i32, i32) {
    %c0_i32 = arith.constant 0 : i32
    %c0_i32_0 = arith.constant 0 : i32
    %c0_i32_1 = arith.constant 0 : i32
    return %arg0, %c0_i32, %c0_i32_0 : i32, i32, i32
  }
  func.func @transform_2(%arg0: i32) -> (i32, i32) {
    %c0_i32 = arith.constant 0 : i32
    %c0_i32_0 = arith.constant 0 : i32
    %c0_i32_1 = arith.constant 0 : i32
    return %c0_i32, %c0_i32_0 : i32, i32
  }
  func.func @transform_3(%arg0: i32) -> (i32, i32) {
    %c0_i32 = arith.constant 0 : i32
    %c0_i32_0 = arith.constant 0 : i32
    %c0_i32_1 = arith.constant 0 : i32
    return %c0_i32, %c0_i32_0 : i32, i32
  }
  func.func @transform_4(%arg0: i32) -> (i32, i32) {
    %c0_i32 = arith.constant 0 : i32
    %c0_i32_0 = arith.constant 0 : i32
    %c0_i32_1 = arith.constant 0 : i32
    return %c0_i32, %c0_i32_0 : i32, i32
  }
  func.func @transform_5(%arg0: i32) -> (i32, i32) {
    %c0_i32 = arith.constant 0 : i32
    %c0_i32_0 = arith.constant 0 : i32
    %c0_i32_1 = arith.constant 0 : i32
    return %c0_i32, %c0_i32_0 : i32, i32
  }
  func.func @transform_6(%arg0: i32) -> (i32, i32) {
    %c0_i32 = arith.constant 0 : i32
    %c0_i32_0 = arith.constant 0 : i32
    %c0_i32_1 = arith.constant 0 : i32
    return %c0_i32, %c0_i32_0 : i32, i32
  }
  func.func @transform_7(%arg0: i32) -> (i32, i32) {
    %c0_i32 = arith.constant 0 : i32
    %c0_i32_0 = arith.constant 0 : i32
    %c0_i32_1 = arith.constant 0 : i32
    return %c0_i32, %c0_i32_0 : i32, i32
  }
  func.func @transform_8(%arg0: i32) -> (i32, i32) {
    %c0_i32 = arith.constant 0 : i32
    %c0_i32_0 = arith.constant 0 : i32
    %c0_i32_1 = arith.constant 0 : i32
    return %c0_i32, %c0_i32_0 : i32, i32
  }
  func.func @transform_9(%arg0: i32) -> (i32, i32) {
    %c0_i32 = arith.constant 0 : i32
    %c0_i32_0 = arith.constant 0 : i32
    %c0_i32_1 = arith.constant 0 : i32
    return %c0_i32, %c0_i32_0 : i32, i32
  }
  func.func @transform_10(%arg0: i32) -> (i32, i32) {
    %c0_i32 = arith.constant 0 : i32
    %c0_i32_0 = arith.constant 0 : i32
    %c0_i32_1 = arith.constant 0 : i32
    return %c0_i32, %c0_i32_0 : i32, i32
  }
  func.func @transform_11(%arg0: i32) -> (i32, i32) {
    %c0_i32 = arith.constant 0 : i32
    %c0_i32_0 = arith.constant 0 : i32
    %c0_i32_1 = arith.constant 0 : i32
    return %c0_i32, %c0_i32_0 : i32, i32
  }
  func.func @transform_12(%arg0: i32) -> (i32, i32) {
    %c0_i32 = arith.constant 0 : i32
    %c0_i32_0 = arith.constant 0 : i32
    %c0_i32_1 = arith.constant 0 : i32
    return %c0_i32, %c0_i32_0 : i32, i32
  }
  func.func @transform_13(%arg0: i32) -> (i32, i32, i32) {
    %c0_i32 = arith.constant 0 : i32
    %c0_i32_0 = arith.constant 0 : i32
    %c0_i32_1 = arith.constant 0 : i32
    return %arg0, %c0_i32, %c0_i32_0 : i32, i32, i32
  }
}

</mosaic_0001>

<llo_original>
// kernel: forward.1
$region0: #{forward.1}
  #allocation0 [shape = 'u32[]', space=smem, size = 0x4, offset = 0x4, fixed_abs, tag = 'smem constant byte address 0x4 - core index']
  #allocation1 [shape = 'u32[144,128]{1,0:T(1,128)}', space=vmem, size = 0x12000, scoped, tag = 'internal scratch']
  #allocation2 [shape = 'f32[16,32]{1,0:T(8,128)}', space=vmem, size = 0x2000, scoped, tag = 'scratch operand']
  #allocation3 [shape = 'f32[18,32]{1,0:T(8,128)}', space=vmem, size = 0x3000, scoped, tag = 'scratch operand']
  %s0 = inlined_call_operand.vmem [shape: f32[2,16,24], index: 0, kind: input, shape index: {}]
  %s1 = inlined_call_operand.vmem [shape: f32[2,16,8], index: 1, kind: input, shape index: {}]
  %s2 = inlined_call_operand.vmem [shape: bf16[64,24], index: 2, kind: input, shape index: {}]
  %s3 = inlined_call_operand.vmem [shape: bf16[64,8], index: 3, kind: input, shape index: {}]
  %s4 = inlined_call_operand.hbm [shape: bf16[2048,32], index: 4, kind: input, shape index: {}]
  %s5 = inlined_call_operand.hbm [shape: f32[113,32], index: 5, kind: input, shape index: {}]
  %s6 = inlined_call_operand.vmem [shape: f32[5,64], index: 6, kind: input, shape index: {}]
  %s7 = inlined_call_operand.vmem [shape: f32[1,128], index: 7, kind: input, shape index: {}]
  %s8 = inlined_call_operand.hbm [shape: f32[8,4], index: 8, kind: input, shape index: {}]
  %s9 = inlined_call_operand.hbm [shape: f32[12,12], index: 9, kind: input, shape index: {}]
  %s10 = inlined_call_operand.hbm [shape: f32[12,16], index: 10, kind: input, shape index: {}]
  %s11 = inlined_call_operand.hbm [shape: f32[10,10], index: 11, kind: input, shape index: {}]
  %s12 = inlined_call_operand.hbm [shape: f32[10,18], index: 12, kind: input, shape index: {}]
  %s13 = inlined_call_operand.vmem [shape: f32[2,38,128], index: 13, kind: output, shape index: {}]
  %s14 = sld [smem:[#allocation0]]
  $region113: #{forward.1} parent=0
    _
  %s16 = ssub.s32 1, %s14
  %s17 = scalar_select 0, %s16, %s14
  $region1: #{forward.1} parent=0
    #allocation4 [shape = 'u8[524288]{0}', space=vmem, size = 0x80000, scoped, tag = 'input window, operand 4, single buffered']
    #allocation5 [shape = 's32[2]{0}', space=sflag, size = 0x8, scoped, tag = 'scoped memory for forward.1']
    #allocation6 [shape = 'u8[61440]{0}', space=vmem, size = 0xf000, scoped, tag = 'input window, operand 5, single buffered']
    #allocation7 [shape = 's32[1]{0}', space=sflag, size = 0x4, scoped, tag = 'scoped memory for forward.1']
    #allocation8 [shape = 'u8[4096]{0}', space=vmem, size = 0x1000, scoped, tag = 'input window, operand 8, single buffered']
    #allocation9 [shape = 'u8[8192]{0}', space=vmem, size = 0x2000, scoped, tag = 'input window, operand 9, single buffered']
    #allocation10 [shape = 's32[1]{0}', space=sflag, size = 0x4, scoped, tag = 'scoped memory for forward.1']
    #allocation11 [shape = 'u8[8192]{0}', space=vmem, size = 0x2000, scoped, tag = 'input window, operand 10, single buffered']
    #allocation12 [shape = 'u8[8192]{0}', space=vmem, size = 0x2000, scoped, tag = 'input window, operand 11, single buffered']
    #allocation13 [shape = 's32[1]{0}', space=sflag, size = 0x4, scoped, tag = 'scoped memory for forward.1']
    #allocation14 [shape = 'u8[8192]{0}', space=vmem, size = 0x2000, scoped, tag = 'input window, operand 12, single buffered']
    %18 = vsyncpa [#allocation5], 0
    %19 = vsyncpa [#allocation7], 0
    %20 = vsyncpa [#allocation10], 0
    %21 = vsyncpa [#allocation13], 0
    loop: start=0, step=1, limit=4
    $region2: #{forward.1} parent=1 // loop_pre_header
      _
    $region3: #{forward.1} parent=1 // loop_header
      %s23 = sphi 0, %s27
      %p24 = scmp.ge.s32.totalorder %s23, 4
      %s33 = sphi 0, %s35
      %s36 = sphi 0, %s33
      %s37 = sphi 0, %s36
      %s53 = sphi 0, %s37
      %s59 = sphi 0, %s61
      %s62 = sphi 0, %s59
      %s63 = sphi 0, %s62
      %s79 = sphi 0, %s63
      %s83 = sphi 0, %s83
      %s85 = sphi 0, %s83
      %s86 = sphi 0, %s85
      %s100 = sphi 0, %s86
      %s104 = sphi 0, %s104
      %s106 = sphi 0, %s104
      %s107 = sphi 0, %s106
      %s121 = sphi 0, %s107
      %s125 = sphi 0, %s125
      %s127 = sphi 0, %s125
      %s128 = sphi 0, %s127
      %s142 = sphi 0, %s128
      %s146 = sphi 0, %s146
      %s148 = sphi 0, %s146
      %s149 = sphi 0, %s148
      %s163 = sphi 0, %s149
      %s167 = sphi 0, %s167
      %s169 = sphi 0, %s167
      %s170 = sphi 0, %s169
      %s184 = sphi 0, %s170
      %s188 = sphi 0, %s188
      %s190 = sphi 0, %s188
      %s191 = sphi 0, %s190
      %s205 = sphi 0, %s191
      %s209 = sphi 0, %s209
      %s211 = sphi 0, %s209
      %s212 = sphi 0, %s211
      %s226 = sphi 0, %s212
      %s230 = sphi 0, %s230
      %s232 = sphi 0, %s230
      %s233 = sphi 0, %s232
      %s247 = sphi 0, %s233
      %s251 = sphi 0, %s251
      %s253 = sphi 0, %s251
      %s254 = sphi 0, %s253
      %s268 = sphi 0, %s254
      %s272 = sphi 0, %s272
      %s274 = sphi 0, %s272
      %s275 = sphi 0, %s274
      %s289 = sphi 0, %s275
      %s293 = sphi 0, %s293
      %s295 = sphi 0, %s293
      %s296 = sphi 0, %s295
      %s310 = sphi 0, %s296
      %s316 = sphi 0, %s318
      %s319 = sphi 0, %s316
      %s320 = sphi 0, %s319
      %s336 = sphi 0, %s320
    $region4: #{forward.1} parent=1 // loop_header_branch
      %26 = sbr.rel (%p24) target = $region8
    $region5: #{forward.1} parent=1 // loop_body
      %s28 = ssub.s32 %s23, 1
      %s29 = ssub.s32 %s23, 2
      %s30 = sadd.s32 %s23, 1
      %s31 = ssub.s32 %s23, %s30
      %p32 = scmp.eq.s32.totalorder %s31, 0
      %s34 = sadd.s32 %s33, 1
      %s35 = scalar_select %p32, %s33, %s34
      %p38 = pneg %p32
      %p39 = scmp.eq.s32.totalorder %s23, 1
      %p40 = por %p38, %p39
      %p41 = scmp.ne.s32.totalorder %s33, %s36
      %p42 = scmp.eq.s32.totalorder %s23, 0
      %p43 = por %p41, %p42
      %p44 = scmp.ne.s32.totalorder %s33, %s36
      %p45 = scmp.eq.s32.totalorder %s28, 1
      %p46 = por %p44, %p45
      %p47 = scmp.ne.s32.totalorder %s36, %s37
      %p48 = scmp.eq.s32.totalorder %s28, 0
      %p49 = por %p47, %p48
      %p50 = scmp.ne.s32.totalorder %s36, %s37
      %p51 = scmp.eq.s32.totalorder %s29, 1
      %p52 = por %p50, %p51
      %p54 = scmp.ne.s32.totalorder %s37, %s53
      %p55 = scmp.eq.s32.totalorder %s29, 0
      %p56 = por %p54, %p55
      %s57 = ssub.s32 %s23, %s30
      %p58 = scmp.eq.s32.totalorder %s57, 0
      %s60 = sadd.s32 %s59, 1
      %s61 = scalar_select %p58, %s59, %s60
      %p64 = pneg %p58
      %p65 = scmp.eq.s32.totalorder %s23, 1
      %p66 = por %p64, %p65
      %p67 = scmp.ne.s32.totalorder %s59, %s62
      %p68 = scmp.eq.s32.totalorder %s23, 0
      %p69 = por %p67, %p68
      %p70 = scmp.ne.s32.totalorder %s59, %s62
      %p71 = scmp.eq.s32.totalorder %s28, 1
      %p72 = por %p70, %p71
      %p73 = scmp.ne.s32.totalorder %s62, %s63
      %p74 = scmp.eq.s32.totalorder %s28, 0
      %p75 = por %p73, %p74
      %p76 = scmp.ne.s32.totalorder %s62, %s63
      %p77 = scmp.eq.s32.totalorder %s29, 1
      %p78 = por %p76, %p77
      %p80 = scmp.ne.s32.totalorder %s63, %s79
      %p81 = scmp.eq.s32.totalorder %s29, 0
      %p82 = por %p80, %p81
      %s84 = sadd.s32 %s83, 1
      %p87 = scmp.eq.s32.totalorder %s23, 1
      %p88 = scmp.ne.s32.totalorder %s83, %s85
      %p89 = scmp.eq.s32.totalorder %s23, 0
      %p90 = por %p88, %p89
      %p91 = scmp.ne.s32.totalorder %s83, %s85
      %p92 = scmp.eq.s32.totalorder %s28, 1
      %p93 = por %p91, %p92
      %p94 = scmp.ne.s32.totalorder %s85, %s86
      %p95 = scmp.eq.s32.totalorder %s28, 0
      %p96 = por %p94, %p95
      %p97 = scmp.ne.s32.totalorder %s85, %s86
      %p98 = scmp.eq.s32.totalorder %s29, 1
      %p99 = por %p97, %p98
      %p101 = scmp.ne.s32.totalorder %s86, %s100
      %p102 = scmp.eq.s32.totalorder %s29, 0
      %p103 = por %p101, %p102
      %s105 = sadd.s32 %s104, 1
      %p108 = scmp.eq.s32.totalorder %s23, 1
      %p109 = scmp.ne.s32.totalorder %s104, %s106
      %p110 = scmp.eq.s32.totalorder %s23, 0
      %p111 = por %p109, %p110
      %p112 = scmp.ne.s32.totalorder %s104, %s106
      %p113 = scmp.eq.s32.totalorder %s28, 1
      %p114 = por %p112, %p113
      %p115 = scmp.ne.s32.totalorder %s106, %s107
      %p116 = scmp.eq.s32.totalorder %s28, 0
      %p117 = por %p115, %p116
      %p118 = scmp.ne.s32.totalorder %s106, %s107
      %p119 = scmp.eq.s32.totalorder %s29, 1
      %p120 = por %p118, %p119
      %p122 = scmp.ne.s32.totalorder %s107, %s121
      %p123 = scmp.eq.s32.totalorder %s29, 0
      %p124 = por %p122, %p123
      %s126 = sadd.s32 %s125, 1
      %p129 = scmp.eq.s32.totalorder %s23, 1
      %p130 = scmp.ne.s32.totalorder %s125, %s127
      %p131 = scmp.eq.s32.totalorder %s23, 0
      %p132 = por %p130, %p131
      %p133 = scmp.ne.s32.totalorder %s125, %s127
      %p134 = scmp.eq.s32.totalorder %s28, 1
      %p135 = por %p133, %p134
      %p136 = scmp.ne.s32.totalorder %s127, %s128
      %p137 = scmp.eq.s32.totalorder %s28, 0
      %p138 = por %p136, %p137
      %p139 = scmp.ne.s32.totalorder %s127, %s128
      %p140 = scmp.eq.s32.totalorder %s29, 1
      %p141 = por %p139, %p140
      %p143 = scmp.ne.s32.totalorder %s128, %s142
      %p144 = scmp.eq.s32.totalorder %s29, 0
      %p145 = por %p143, %p144
      %s147 = sadd.s32 %s146, 1
      %p150 = scmp.eq.s32.totalorder %s23, 1
      %p151 = scmp.ne.s32.totalorder %s146, %s148
      %p152 = scmp.eq.s32.totalorder %s23, 0
      %p153 = por %p151, %p152
      %p154 = scmp.ne.s32.totalorder %s146, %s148
      %p155 = scmp.eq.s32.totalorder %s28, 1
      %p156 = por %p154, %p155
      %p157 = scmp.ne.s32.totalorder %s148, %s149
      %p158 = scmp.eq.s32.totalorder %s28, 0
      %p159 = por %p157, %p158
      %p160 = scmp.ne.s32.totalorder %s148, %s149
      %p161 = scmp.eq.s32.totalorder %s29, 1
      %p162 = por %p160, %p161
      %p164 = scmp.ne.s32.totalorder %s149, %s163
      %p165 = scmp.eq.s32.totalorder %s29, 0
      %p166 = por %p164, %p165
      %s168 = sadd.s32 %s167, 1
      %p171 = scmp.eq.s32.totalorder %s23, 1
      %p172 = scmp.ne.s32.totalorder %s167, %s169
      %p173 = scmp.eq.s32.totalorder %s23, 0
      %p174 = por %p172, %p173
      %p175 = scmp.ne.s32.totalorder %s167, %s169
      %p176 = scmp.eq.s32.totalorder %s28, 1
      %p177 = por %p175, %p176
      %p178 = scmp.ne.s32.totalorder %s169, %s170
      %p179 = scmp.eq.s32.totalorder %s28, 0
      %p180 = por %p178, %p179
      %p181 = scmp.ne.s32.totalorder %s169, %s170
      %p182 = scmp.eq.s32.totalorder %s29, 1
      %p183 = por %p181, %p182
      %p185 = scmp.ne.s32.totalorder %s170, %s184
      %p186 = scmp.eq.s32.totalorder %s29, 0
      %p187 = por %p185, %p186
      %s189 = sadd.s32 %s188, 1
      %p192 = scmp.eq.s32.totalorder %s23, 1
      %p193 = scmp.ne.s32.totalorder %s188, %s190
      %p194 = scmp.eq.s32.totalorder %s23, 0
      %p195 = por %p193, %p194
      %p196 = scmp.ne.s32.totalorder %s188, %s190
      %p197 = scmp.eq.s32.totalorder %s28, 1
      %p198 = por %p196, %p197
      %p199 = scmp.ne.s32.totalorder %s190, %s191
      %p200 = scmp.eq.s32.totalorder %s28, 0
      %p201 = por %p199, %p200
      %p202 = scmp.ne.s32.totalorder %s190, %s191
      %p203 = scmp.eq.s32.totalorder %s29, 1
      %p204 = por %p202, %p203
      %p206 = scmp.ne.s32.totalorder %s191, %s205
      %p207 = scmp.eq.s32.totalorder %s29, 0
      %p208 = por %p206, %p207
      %s210 = sadd.s32 %s209, 1
      %p213 = scmp.eq.s32.totalorder %s23, 1
      %p214 = scmp.ne.s32.totalorder %s209, %s211
      %p215 = scmp.eq.s32.totalorder %s23, 0
      %p216 = por %p214, %p215
      %p217 = scmp.ne.s32.totalorder %s209, %s211
      %p218 = scmp.eq.s32.totalorder %s28, 1
      %p219 = por %p217, %p218
      %p220 = scmp.ne.s32.totalorder %s211, %s212
      %p221 = scmp.eq.s32.totalorder %s28, 0
      %p222 = por %p220, %p221
      %p223 = scmp.ne.s32.totalorder %s211, %s212
      %p224 = scmp.eq.s32.totalorder %s29, 1
      %p225 = por %p223, %p224
      %p227 = scmp.ne.s32.totalorder %s212, %s226
      %p228 = scmp.eq.s32.totalorder %s29, 0
      %p229 = por %p227, %p228
      %s231 = sadd.s32 %s230, 1
      %p234 = scmp.eq.s32.totalorder %s23, 1
      %p235 = scmp.ne.s32.totalorder %s230, %s232
      %p236 = scmp.eq.s32.totalorder %s23, 0
      %p237 = por %p235, %p236
      %p238 = scmp.ne.s32.totalorder %s230, %s232
      %p239 = scmp.eq.s32.totalorder %s28, 1
      %p240 = por %p238, %p239
      %p241 = scmp.ne.s32.totalorder %s232, %s233
      %p242 = scmp.eq.s32.totalorder %s28, 0
      %p243 = por %p241, %p242
      %p244 = scmp.ne.s32.totalorder %s232, %s233
      %p245 = scmp.eq.s32.totalorder %s29, 1
      %p246 = por %p244, %p245
      %p248 = scmp.ne.s32.totalorder %s233, %s247
      %p249 = scmp.eq.s32.totalorder %s29, 0
      %p250 = por %p248, %p249
      %s252 = sadd.s32 %s251, 1
      %p255 = scmp.eq.s32.totalorder %s23, 1
      %p256 = scmp.ne.s32.totalorder %s251, %s253
      %p257 = scmp.eq.s32.totalorder %s23, 0
      %p258 = por %p256, %p257
      %p259 = scmp.ne.s32.totalorder %s251, %s253
      %p260 = scmp.eq.s32.totalorder %s28, 1
      %p261 = por %p259, %p260
      %p262 = scmp.ne.s32.totalorder %s253, %s254
      %p263 = scmp.eq.s32.totalorder %s28, 0
      %p264 = por %p262, %p263
      %p265 = scmp.ne.s32.totalorder %s253, %s254
      %p266 = scmp.eq.s32.totalorder %s29, 1
      %p267 = por %p265, %p266
      %p269 = scmp.ne.s32.totalorder %s254, %s268
      %p270 = scmp.eq.s32.totalorder %s29, 0
      %p271 = por %p269, %p270
      %s273 = sadd.s32 %s272, 1
      %p276 = scmp.eq.s32.totalorder %s23, 1
      %p277 = scmp.ne.s32.totalorder %s272, %s274
      %p278 = scmp.eq.s32.totalorder %s23, 0
      %p279 = por %p277, %p278
      %p280 = scmp.ne.s32.totalorder %s272, %s274
      %p281 = scmp.eq.s32.totalorder %s28, 1
      %p282 = por %p280, %p281
      %p283 = scmp.ne.s32.totalorder %s274, %s275
      %p284 = scmp.eq.s32.totalorder %s28, 0
      %p285 = por %p283, %p284
      %p286 = scmp.ne.s32.totalorder %s274, %s275
      %p287 = scmp.eq.s32.totalorder %s29, 1
      %p288 = por %p286, %p287
      %p290 = scmp.ne.s32.totalorder %s275, %s289
      %p291 = scmp.eq.s32.totalorder %s29, 0
      %p292 = por %p290, %p291
      %s294 = sadd.s32 %s293, 1
      %p297 = scmp.eq.s32.totalorder %s23, 1
      %p298 = scmp.ne.s32.totalorder %s293, %s295
      %p299 = scmp.eq.s32.totalorder %s23, 0
      %p300 = por %p298, %p299
      %p301 = scmp.ne.s32.totalorder %s293, %s295
      %p302 = scmp.eq.s32.totalorder %s28, 1
      %p303 = por %p301, %p302
      %p304 = scmp.ne.s32.totalorder %s295, %s296
      %p305 = scmp.eq.s32.totalorder %s28, 0
      %p306 = por %p304, %p305
      %p307 = scmp.ne.s32.totalorder %s295, %s296
      %p308 = scmp.eq.s32.totalorder %s29, 1
      %p309 = por %p307, %p308
      %p311 = scmp.ne.s32.totalorder %s296, %s310
      %p312 = scmp.eq.s32.totalorder %s29, 0
      %p313 = por %p311, %p312
      %s314 = ssub.s32 %s23, %s30
      %p315 = scmp.eq.s32.totalorder %s314, 0
      %s317 = sadd.s32 %s316, 1
      %s318 = scalar_select %p315, %s316, %s317
      %p321 = pneg %p315
      %p322 = scmp.eq.s32.totalorder %s23, 1
      %p323 = por %p321, %p322
      %p324 = scmp.ne.s32.totalorder %s316, %s319
      %p325 = scmp.eq.s32.totalorder %s23, 0
      %p326 = por %p324, %p325
      %p327 = scmp.ne.s32.totalorder %s316, %s319
      %p328 = scmp.eq.s32.totalorder %s28, 1
      %p329 = por %p327, %p328
      %p330 = scmp.ne.s32.totalorder %s319, %s320
      %p331 = scmp.eq.s32.totalorder %s28, 0
      %p332 = por %p330, %p331
      %p333 = scmp.ne.s32.totalorder %s319, %s320
      %p334 = scmp.eq.s32.totalorder %s29, 1
      %p335 = por %p333, %p334
      %p337 = scmp.ne.s32.totalorder %s320, %s336
      %p338 = scmp.eq.s32.totalorder %s29, 0
      %p339 = por %p337, %p338
      %p340 = scmp.le.s32.totalorder 1, %s23
      %p341 = scmp.lt.s32.totalorder %s23, 3
      %p342 = pnand %p340, %p341
      %p343 = pneg %p342
      // Predicated region
      $region9: #{forward.1} parent=5 // pred_check
        _
      $region10: #{forward.1} parent=5 // pred_check_branch
        %345 = sbr.rel (%p342) target = $region12
      $region11: #{forward.1} parent=5 // pred_region
        %s346 = ssub.s32 %s23, 1
        // Predicated region
        $region13: #{forward.1} parent=11 // pred_check
          %p347 = pneg %p96
        $region14: #{forward.1} parent=11 // pred_check_branch
          %349 = sbr.rel (%p347) target = $region16
        $region15: #{forward.1} parent=11 // pred_region
          _
        $region16: #{forward.1} parent=11 // pred_fallthru
          _
        // Predicated region
        $region17: #{forward.1} parent=11 // pred_check
          %p350 = pneg %p117
        $region18: #{forward.1} parent=11 // pred_check_branch
          %352 = sbr.rel (%p350) target = $region20
        $region19: #{forward.1} parent=11 // pred_region
          _
        $region20: #{forward.1} parent=11 // pred_fallthru
          _
        // Predicated region
        $region21: #{forward.1} parent=11 // pred_check
          %p353 = pneg %p138
        $region22: #{forward.1} parent=11 // pred_check_branch
          %355 = sbr.rel (%p353) target = $region24
        $region23: #{forward.1} parent=11 // pred_region
          %s357 = ssub.s32 16384, 16384
          %358 = vsyncadd [#allocation5], %s357
          %s359 = sshll.u32 [#allocation4], 4
          %s360 = int_to_ptr.vmem [resolvable:$true] %s359
          %365 = dma.hbm_to_vmem [thread:$0]  %s4, 16384, %s360, [#allocation5], 64, 64, 4
        $region24: #{forward.1} parent=11 // pred_fallthru
          _
        // Predicated region
        $region25: #{forward.1} parent=11 // pred_check
          %p366 = pneg %p159
        $region26: #{forward.1} parent=11 // pred_check_branch
          %368 = sbr.rel (%p366) target = $region28
        $region27: #{forward.1} parent=11 // pred_region
          %s370 = ssub.s32 1920, 1920
          %371 = vsyncadd [#allocation7], %s370
          %s372 = sshll.u32 [#allocation6], 4
          %s373 = int_to_ptr.vmem [resolvable:$true] %s372
          %378 = dma.hbm_to_vmem [thread:$0]  %s5, 1920, %s373, [#allocation7], 128, 128, 8
        $region28: #{forward.1} parent=11 // pred_fallthru
          _
        // Predicated region
        $region29: #{forward.1} parent=11 // pred_check
          %p379 = pneg %p180
        $region30: #{forward.1} parent=11 // pred_check_branch
          %381 = sbr.rel (%p379) target = $region32
        $region31: #{forward.1} parent=11 // pred_region
          _
        $region32: #{forward.1} parent=11 // pred_fallthru
          _
        // Predicated region
        $region33: #{forward.1} parent=11 // pred_check
          %p382 = pneg %p201
        $region34: #{forward.1} parent=11 // pred_check_branch
          %384 = sbr.rel (%p382) target = $region36
        $region35: #{forward.1} parent=11 // pred_region
          _
        $region36: #{forward.1} parent=11 // pred_fallthru
          _
        // Predicated region
        $region37: #{forward.1} parent=11 // pred_check
          %p385 = pneg %p222
        $region38: #{forward.1} parent=11 // pred_check_branch
          %387 = sbr.rel (%p385) target = $region40
        $region39: #{forward.1} parent=11 // pred_region
          %s389 = ssub.s32 128, 128
          %390 = vsyncadd [#allocation7], %s389
          %s392 = sshll.u32 [#allocation8], 4
          %s393 = int_to_ptr.vmem [resolvable:$true] %s392
          %395 = dma.hbm_to_vmem [thread:$0]  %s8, 128, %s393, [#allocation7]
        $region40: #{forward.1} parent=11 // pred_fallthru
          _
        // Predicated region
        $region41: #{forward.1} parent=11 // pred_check
          %p396 = pneg %p243
        $region42: #{forward.1} parent=11 // pred_check_branch
          %398 = sbr.rel (%p396) target = $region44
        $region43: #{forward.1} parent=11 // pred_region
          %s400 = ssub.s32 256, 256
          %401 = vsyncadd [#allocation10], %s400
          %s402 = sshll.u32 [#allocation9], 4
          %s403 = int_to_ptr.vmem [resolvable:$true] %s402
          %408 = dma.hbm_to_vmem [thread:$0]  %s9, 256, %s403, [#allocation10], 128, 128, 8
        $region44: #{forward.1} parent=11 // pred_fallthru
          _
        // Predicated region
        $region45: #{forward.1} parent=11 // pred_check
          %p409 = pneg %p264
        $region46: #{forward.1} parent=11 // pred_check_branch
          %411 = sbr.rel (%p409) target = $region48
        $region47: #{forward.1} parent=11 // pred_region
          %s413 = ssub.s32 256, 256
          %414 = vsyncadd [#allocation10], %s413
          %s415 = sshll.u32 [#allocation11], 4
          %s416 = int_to_ptr.vmem [resolvable:$true] %s415
          %421 = dma.hbm_to_vmem [thread:$0]  %s10, 256, %s416, [#allocation10], 128, 128, 8
        $region48: #{forward.1} parent=11 // pred_fallthru
          _
        // Predicated region
        $region49: #{forward.1} parent=11 // pred_check
          %p422 = pneg %p285
        $region50: #{forward.1} parent=11 // pred_check_branch
          %424 = sbr.rel (%p422) target = $region52
        $region51: #{forward.1} parent=11 // pred_region
          %s426 = ssub.s32 256, 256
          %427 = vsyncadd [#allocation13], %s426
          %s428 = sshll.u32 [#allocation12], 4
          %s429 = int_to_ptr.vmem [resolvable:$true] %s428
          %434 = dma.hbm_to_vmem [thread:$0]  %s11, 256, %s429, [#allocation13], 128, 128, 8
        $region52: #{forward.1} parent=11 // pred_fallthru
          _
        // Predicated region
        $region53: #{forward.1} parent=11 // pred_check
          %p435 = pneg %p306
        $region54: #{forward.1} parent=11 // pred_check_branch
          %437 = sbr.rel (%p435) target = $region56
        $region55: #{forward.1} parent=11 // pred_region
          %s439 = ssub.s32 256, 256
          %440 = vsyncadd [#allocation13], %s439
          %s441 = sshll.u32 [#allocation14], 4
          %s442 = int_to_ptr.vmem [resolvable:$true] %s441
          %447 = dma.hbm_to_vmem [thread:$0]  %s12, 256, %s442, [#allocation13], 128, 128, 8
        $region56: #{forward.1} parent=11 // pred_fallthru
          _
      $region12: #{forward.1} parent=5 // pred_fallthru
        _
      %p448 = scmp.lt.s32.totalorder %s23, 2
      // Predicated region
      $region57: #{forward.1} parent=5 // pred_check
        %p449 = pneg %p448
      $region58: #{forward.1} parent=5 // pred_check_branch
        %451 = sbr.rel (%p449) target = $region60
      $region59: #{forward.1} parent=5 // pred_region
        // Predicated region
        $region61: #{forward.1} parent=59 // pred_check
          %p452 = pneg %p43
        $region62: #{forward.1} parent=59 // pred_check_branch
          %454 = sbr.rel (%p452) target = $region64
        $region63: #{forward.1} parent=59 // pred_region
          %p455 = scmp.lt.s32.totalorder %s23, 1
          %s456 = scalar_select %p455, %s23, 1
          %s457 = smul.addr %s456, 2
          %s458 = smul.addr %s457, 8
          %s459 = scalar_lea.vmem %s0, %s458
        $region64: #{forward.1} parent=59 // pred_fallthru
          _
        // Predicated region
        $region65: #{forward.1} parent=59 // pred_check
          %p460 = pneg %p69
        $region66: #{forward.1} parent=59 // pred_check_branch
          %462 = sbr.rel (%p460) target = $region68
        $region67: #{forward.1} parent=59 // pred_region
          %p463 = scmp.lt.s32.totalorder %s23, 1
          %s464 = scalar_select %p463, %s23, 1
          %s465 = smul.addr %s464, 2
          %s466 = smul.addr %s465, 8
          %s467 = scalar_lea.vmem %s1, %s466
        $region68: #{forward.1} parent=59 // pred_fallthru
          _
      $region60: #{forward.1} parent=5 // pred_fallthru
        _
      %p468 = scmp.le.s32.totalorder 1, %s23
      %p469 = scmp.lt.s32.totalorder %s23, 3
      %p470 = pnand %p468, %p469
      %p471 = pneg %p470
      // Predicated region
      $region69: #{forward.1} parent=5 // pred_check
        _
      $region70: #{forward.1} parent=5 // pred_check_branch
        %473 = sbr.rel (%p470) target = $region72
      $region71: #{forward.1} parent=5 // pred_region
        %s474 = ssub.s32 %s23, 1
        // Predicated region
        $region73: #{forward.1} parent=71 // pred_check
          %p475 = pneg %p138
        $region74: #{forward.1} parent=71 // pred_check_branch
          %477 = sbr.rel (%p475) target = $region76
        $region75: #{forward.1} parent=71 // pred_region
          %478 = dma.done [#allocation5], 16384
        $region76: #{forward.1} parent=71 // pred_fallthru
          _
        // Predicated region
        $region77: #{forward.1} parent=71 // pred_check
          %p479 = pneg %p159
        $region78: #{forward.1} parent=71 // pred_check_branch
          %481 = sbr.rel (%p479) target = $region80
        $region79: #{forward.1} parent=71 // pred_region
          %482 = dma.done [#allocation7], 1920
        $region80: #{forward.1} parent=71 // pred_fallthru
          _
        // Predicated region
        $region81: #{forward.1} parent=71 // pred_check
          %p483 = pneg %p222
        $region82: #{forward.1} parent=71 // pred_check_branch
          %485 = sbr.rel (%p483) target = $region84
        $region83: #{forward.1} parent=71 // pred_region
          %486 = dma.done [#allocation7], 128
        $region84: #{forward.1} parent=71 // pred_fallthru
          _
        // Predicated region
        $region85: #{forward.1} parent=71 // pred_check
          %p487 = pneg %p243
        $region86: #{forward.1} parent=71 // pred_check_branch
          %489 = sbr.rel (%p487) target = $region88
        $region87: #{forward.1} parent=71 // pred_region
          %490 = dma.done [#allocation10], 256
        $region88: #{forward.1} parent=71 // pred_fallthru
          _
        // Predicated region
        $region89: #{forward.1} parent=71 // pred_check
          %p491 = pneg %p264
        $region90: #{forward.1} parent=71 // pred_check_branch
          %493 = sbr.rel (%p491) target = $region92
        $region91: #{forward.1} parent=71 // pred_region
          %494 = dma.done [#allocation10], 256
        $region92: #{forward.1} parent=71 // pred_fallthru
          _
        // Predicated region
        $region93: #{forward.1} parent=71 // pred_check
          %p495 = pneg %p285
        $region94: #{forward.1} parent=71 // pred_check_branch
          %497 = sbr.rel (%p495) target = $region96
        $region95: #{forward.1} parent=71 // pred_region
          %498 = dma.done [#allocation13], 256
        $region96: #{forward.1} parent=71 // pred_fallthru
          _
        // Predicated region
        $region97: #{forward.1} parent=71 // pred_check
          %p499 = pneg %p306
        $region98: #{forward.1} parent=71 // pred_check_branch
          %501 = sbr.rel (%p499) target = $region100
        $region99: #{forward.1} parent=71 // pred_region
          %502 = dma.done [#allocation13], 256
        $region100: #{forward.1} parent=71 // pred_fallthru
          _
        %p503 = scmp.lt.s32.totalorder %s28, 1
        %s504 = scalar_select %p503, %s28, 1
        %s505 = smul.addr %s504, 2
        %s506 = smul.addr %s505, 8
        %s507 = scalar_lea.vmem %s0, %s506
        %p508 = pneg %p49
        %p509 = pneg %p46
        %p510 = scmp.lt.s32.totalorder %s28, 1
        %s511 = scalar_select %p510, %s28, 1
        %s512 = smul.addr %s511, 2
        %s513 = smul.addr %s512, 8
        %s514 = scalar_lea.vmem %s1, %s513
        %p515 = pneg %p75
        %p516 = pneg %p72
        %p517 = pneg %p96
        %p518 = pneg %p93
        %p519 = pneg %p117
        %p520 = pneg %p114
        %p521 = pneg %p138
        %p522 = pneg %p135
        %p523 = pneg %p159
        %p524 = pneg %p156
        %p525 = pneg %p180
        %p526 = pneg %p177
        %p527 = pneg %p201
        %p528 = pneg %p198
        %p529 = pneg %p222
        %p530 = pneg %p219
        %p531 = pneg %p243
        %p532 = pneg %p240
        %p533 = pneg %p264
        %p534 = pneg %p261
        %p535 = pneg %p285
        %p536 = pneg %p282
        %p537 = pneg %p306
        %p538 = pneg %p303
        %p539 = pneg %p332
        %p540 = pneg %p329
        %p541 = scmp.lt.s32.totalorder %s28, 1
        %s542 = scalar_select %p541, %s28, 1
        %s543 = smul.addr %s542, 5
        %s544 = smul.addr %s543, 8
        %s545 = scalar_lea.vmem %s13, %s544
        %p546 = scmp.lt.s32.totalorder %s28, 1
        %s547 = scalar_select %p546, %s28, 1
        %s548 = smul.addr %s547, 2
        %s549 = smul.addr %s548, 8
        %s550 = scalar_lea.vmem %s0, %s549
        %p551 = scmp.lt.s32.totalorder %s28, 1
        %s552 = scalar_select %p551, %s28, 1
        %s553 = smul.addr %s552, 2
        %s554 = smul.addr %s553, 8
        %s555 = scalar_lea.vmem %s1, %s554
        %p556 = scmp.lt.s32.totalorder %s28, 1
        %s557 = scalar_select %p556, %s28, 1
        %s558 = smul.addr %s557, 5
        %s559 = smul.addr %s558, 8
        %s560 = scalar_lea.vmem %s13, %s559
        %v562 = vld [vmem:[%s550] sm:$0xff]
        %v563 = vld [vmem:[%s550 + $0x8] sm:$0xff]
        %v564 = vld [vmem:[%s555] sm:$0xff]
        %v565 = vld [vmem:[%s555 + $0x8] sm:$0xff]
        %v566 = vld [vmem:[%s2] sm:$0xf]
        %v567 = vld [vmem:[%s2 + $0x4] sm:$0xf]
        %v568 = vld [vmem:[%s2 + $0x8] sm:$0xf]
        %v569 = vld [vmem:[%s2 + $0xc] sm:$0xf]
        %v570 = vpack.c.bf16 %v562, %v562
        %v571 = vld [vmem:[%s3] sm:$0xf]
        %v572 = vld [vmem:[%s3 + $0x4] sm:$0xf]
        %v573 = vld [vmem:[%s3 + $0x8] sm:$0xf]
        %v574 = vld [vmem:[%s3 + $0xc] sm:$0xf]
        %v575 = vpack.c.bf16 %v564, %v564
        %v580 = vunpack.c.l.b16 %v571
        %v581 = vunpack.c.l.b16 %v572
        %v582 = vunpack.c.l.b16 %v573
        %v583 = vunpack.c.l.b16 %v574
        %v584 = vpack.c.b16 %v581, %v580
        %v585 = vpack.c.b16 %v583, %v582
        %vm586 = vcmask 64512
        %v588 = vsel %vm586, %v575, 0
        %v591 = vsel %vm586, %v584, 0
        %v594 = vsel %vm586, %v585, 0
        %596 = vmatprep.subr.bf16.mxu0 0
        %597 = vmatpush1.bf16.xpose.msra.mxu0 %v591
        %598 = vmatprep.subr.bf16.mxu0 0
        %599 = vmatpush1.bf16.xpose.msra.mxu0 %v594
        %600 = vmatprep.subr.bf16.mxu0 0
        %601 = vmatpush1.bf16.xpose.msra.mxu0 0
        %602 = vmatprep.subr.bf16.mxu0 0
        %603 = vmatpush1.bf16.xpose.msra.mxu0 0
        %604 = vmatprep.subr.bf16.mxu0 0
        %605 = vmatpush1.bf16.xpose.msra.mxu0 0
        %606 = vmatprep.subr.bf16.mxu0 0
        %607 = vmatpush1.bf16.xpose.msra.mxu0 0
        %608 = vmatprep.subr.bf16.mxu0 0
        %609 = vmatpush1.bf16.xpose.msra.mxu0 0
        %610 = vmatprep.subr.bf16.mxu0 0
        %611 = vmatpush1.bf16.xpose.msra.mxu0 0
        %612 = vmatprep.subr.bf16.mxu0 0
        %613 = vmatpush1.bf16.xpose.msra.mxu0 0
        %614 = vmatprep.subr.bf16.mxu0 0
        %615 = vmatpush1.bf16.xpose.msra.mxu0 0
        %616 = vmatprep.subr.bf16.mxu0 0
        %617 = vmatpush1.bf16.xpose.msra.mxu0 0
        %618 = vmatprep.subr.bf16.mxu0 0
        %619 = vmatpush1.bf16.xpose.msra.mxu0 0
        %620 = vmatprep.subr.bf16.mxu0 0
        %621 = vmatpush1.bf16.xpose.msra.mxu0 0
        %622 = vmatprep.subr.bf16.mxu0 0
        %623 = vmatpush1.bf16.xpose.msra.mxu0 0
        %624 = vmatprep.subr.bf16.mxu0 0
        %625 = vmatpush1.bf16.xpose.msra.mxu0 0
        %626 = vmatprep.subr.bf16.mxu0 0
        %627 = vmatpush1.bf16.xpose.msra.mxu0 0
        %628 = vmatprep.mubr.bf16.mxu0 0
        %629 = vmatmul.mubr.bf16.gmra.mrb[0].mxu0 %v588
        %v630 = vpop.f32.mrb[0].mxu0
        %v631 = vadd.f32 0.0, %v630
        %v632 = vpop.f32.mrb[0].mxu0
        %v633 = vpop.f32.mrb[0].mxu0
        %v634 = vpop.f32.mrb[0].mxu0
        %635 = vdwg.mxu0
        %v640 = vunpack.c.l.b16 %v566
        %v641 = vunpack.c.l.b16 %v567
        %v642 = vunpack.c.l.b16 %v568
        %v643 = vunpack.c.l.b16 %v569
        %v644 = vpack.c.b16 %v641, %v640
        %v645 = vpack.c.b16 %v643, %v642
        %vm646 = vcmask 195584
        %v648 = vsel %vm646, %v570, 0
        %v651 = vsel %vm646, %v644, 0
        %v654 = vsel %vm646, %v645, 0
        %656 = vmatprep.subr.bf16.mxu0 0
        %657 = vmatpush1.bf16.xpose.msra.mxu0 %v651
        %658 = vmatprep.subr.bf16.mxu0 0
        %659 = vmatpush1.bf16.xpose.msra.mxu0 %v654
        %660 = vmatprep.subr.bf16.mxu0 0
        %661 = vmatpush1.bf16.xpose.msra.mxu0 0
        %662 = vmatprep.subr.bf16.mxu0 0
        %663 = vmatpush1.bf16.xpose.msra.mxu0 0
        %664 = vmatprep.subr.bf16.mxu0 0
        %665 = vmatpush1.bf16.xpose.msra.mxu0 0
        %666 = vmatprep.subr.bf16.mxu0 0
        %667 = vmatpush1.bf16.xpose.msra.mxu0 0
        %668 = vmatprep.subr.bf16.mxu0 0
        %669 = vmatpush1.bf16.xpose.msra.mxu0 0
        %670 = vmatprep.subr.bf16.mxu0 0
        %671 = vmatpush1.bf16.xpose.msra.mxu0 0
        %672 = vmatprep.subr.bf16.mxu0 0
        %673 = vmatpush1.bf16.xpose.msra.mxu0 0
        %674 = vmatprep.subr.bf16.mxu0 0
        %675 = vmatpush1.bf16.xpose.msra.mxu0 0
        %676 = vmatprep.subr.bf16.mxu0 0
        %677 = vmatpush1.bf16.xpose.msra.mxu0 0
        %678 = vmatprep.subr.bf16.mxu0 0
        %679 = vmatpush1.bf16.xpose.msra.mxu0 0
        %680 = vmatprep.subr.bf16.mxu0 0
        %681 = vmatpush1.bf16.xpose.msra.mxu0 0
        %682 = vmatprep.subr.bf16.mxu0 0
        %683 = vmatpush1.bf16.xpose.msra.mxu0 0
        %684 = vmatprep.subr.bf16.mxu0 0
        %685 = vmatpush1.bf16.xpose.msra.mxu0 0
        %686 = vmatprep.subr.bf16.mxu0 0
        %687 = vmatpush1.bf16.xpose.msra.mxu0 0
        %688 = vmatprep.mubr.bf16.mxu0 0
        %689 = vmatmul.mubr.bf16.gmra.mrb[0].mxu0 %v648
        %v690 = vpop.f32.mrb[0].mxu0
        %v691 = vadd.f32 %v631, %v690
        %v692 = vpop.f32.mrb[0].mxu0
        %v693 = vpop.f32.mrb[0].mxu0
        %v694 = vpop.f32.mrb[0].mxu0
        %695 = vdwg.mxu0
        %v696 = vld [vmem:[#allocation6] sm:$0x1]
        %v697 = vlaneseq
        %v698 = vshrl.u32 %v697, 7
        %v699 = vsub.s32 0, %v698
        %v700 = vrot.slane %v696, %v699
        %v701 = vadd.f32 %v691, %v700
        %v702 = vmax.f32 %v701, 0.0
        %v703 = vld [vmem:[%s2 + $0x10] sm:$0xf]
        %v704 = vld [vmem:[%s2 + $0x14] sm:$0xf]
        %v705 = vld [vmem:[%s2 + $0x18] sm:$0xf]
        %v706 = vld [vmem:[%s2 + $0x1c] sm:$0xf]
        %v707 = vpack.c.bf16 %v563, %v563
        %v708 = vld [vmem:[%s3 + $0x10] sm:$0xf]
        %v709 = vld [vmem:[%s3 + $0x14] sm:$0xf]
        %v710 = vld [vmem:[%s3 + $0x18] sm:$0xf]
        %v711 = vld [vmem:[%s3 + $0x1c] sm:$0xf]
        %v712 = vpack.c.bf16 %v565, %v565
        %v717 = vunpack.c.l.b16 %v708
        %v718 = vunpack.c.l.b16 %v709
        %v719 = vunpack.c.l.b16 %v710
        %v720 = vunpack.c.l.b16 %v711
        %v721 = vpack.c.b16 %v718, %v717
        %v722 = vpack.c.b16 %v720, %v719
        %v724 = vsel %vm586, %v712, 0
        %v727 = vsel %vm586, %v721, 0
        %v730 = vsel %vm586, %v722, 0
        %732 = vmatprep.subr.bf16.mxu0 0
        %733 = vmatpush1.bf16.xpose.msra.mxu0 %v727
        %734 = vmatprep.subr.bf16.mxu0 0
        %735 = vmatpush1.bf16.xpose.msra.mxu0 %v730
        %736 = vmatprep.subr.bf16.mxu0 0
        %737 = vmatpush1.bf16.xpose.msra.mxu0 0
        %738 = vmatprep.subr.bf16.mxu0 0
        %739 = vmatpush1.bf16.xpose.msra.mxu0 0
        %740 = vmatprep.subr.bf16.mxu0 0
        %741 = vmatpush1.bf16.xpose.msra.mxu0 0
        %742 = vmatprep.subr.bf16.mxu0 0
        %743 = vmatpush1.bf16.xpose.msra.mxu0 0
        %744 = vmatprep.subr.bf16.mxu0 0
        %745 = vmatpush1.bf16.xpose.msra.mxu0 0
        %746 = vmatprep.subr.bf16.mxu0 0
        %747 = vmatpush1.bf16.xpose.msra.mxu0 0
        %748 = vmatprep.subr.bf16.mxu0 0
        %749 = vmatpush1.bf16.xpose.msra.mxu0 0
        %750 = vmatprep.subr.bf16.mxu0 0
        %751 = vmatpush1.bf16.xpose.msra.mxu0 0
        %752 = vmatprep.subr.bf16.mxu0 0
        %753 = vmatpush1.bf16.xpose.msra.mxu0 0
        %754 = vmatprep.subr.bf16.mxu0 0
        %755 = vmatpush1.bf16.xpose.msra.mxu0 0
        %756 = vmatprep.subr.bf16.mxu0 0
        %757 = vmatpush1.bf16.xpose.msra.mxu0 0
        %758 = vmatprep.subr.bf16.mxu0 0
        %759 = vmatpush1.bf16.xpose.msra.mxu0 0
        %760 = vmatprep.subr.bf16.mxu0 0
        %761 = vmatpush1.bf16.xpose.msra.mxu0 0
        %762 = vmatprep.subr.bf16.mxu0 0
        %763 = vmatpush1.bf16.xpose.msra.mxu0 0
        %764 = vmatprep.mubr.bf16.mxu0 0
        %765 = vmatmul.mubr.bf16.gmra.mrb[0].mxu0 %v724
        %v766 = vpop.f32.mrb[0].mxu0
        %v767 = vadd.f32 0.0, %v766
        %v768 = vpop.f32.mrb[0].mxu0
        %v769 = vpop.f32.mrb[0].mxu0
        %v770 = vpop.f32.mrb[0].mxu0
        %771 = vdwg.mxu0
        %v776 = vunpack.c.l.b16 %v703
        %v777 = vunpack.c.l.b16 %v704
        %v778 = vunpack.c.l.b16 %v705
        %v779 = vunpack.c.l.b16 %v706
        %v780 = vpack.c.b16 %v777, %v776
        %v781 = vpack.c.b16 %v779, %v778
        %v783 = vsel %vm646, %v707, 0
        %v786 = vsel %vm646, %v780, 0
        %v789 = vsel %vm646, %v781, 0
        %791 = vmatprep.subr.bf16.mxu0 0
        %792 = vmatpush1.bf16.xpose.msra.mxu0 %v786
        %793 = vmatprep.subr.bf16.mxu0 0
        %794 = vmatpush1.bf16.xpose.msra.mxu0 %v789
        %795 = vmatprep.subr.bf16.mxu0 0
        %796 = vmatpush1.bf16.xpose.msra.mxu0 0
        %797 = vmatprep.subr.bf16.mxu0 0
        %798 = vmatpush1.bf16.xpose.msra.mxu0 0
        %799 = vmatprep.subr.bf16.mxu0 0
        %800 = vmatpush1.bf16.xpose.msra.mxu0 0
        %801 = vmatprep.subr.bf16.mxu0 0
        %802 = vmatpush1.bf16.xpose.msra.mxu0 0
        %803 = vmatprep.subr.bf16.mxu0 0
        %804 = vmatpush1.bf16.xpose.msra.mxu0 0
        %805 = vmatprep.subr.bf16.mxu0 0
        %806 = vmatpush1.bf16.xpose.msra.mxu0 0
        %807 = vmatprep.subr.bf16.mxu0 0
        %808 = vmatpush1.bf16.xpose.msra.mxu0 0
        %809 = vmatprep.subr.bf16.mxu0 0
        %810 = vmatpush1.bf16.xpose.msra.mxu0 0
        %811 = vmatprep.subr.bf16.mxu0 0
        %812 = vmatpush1.bf16.xpose.msra.mxu0 0
        %813 = vmatprep.subr.bf16.mxu0 0
        %814 = vmatpush1.bf16.xpose.msra.mxu0 0
        %815 = vmatprep.subr.bf16.mxu0 0
        %816 = vmatpush1.bf16.xpose.msra.mxu0 0
        %817 = vmatprep.subr.bf16.mxu0 0
        %818 = vmatpush1.bf16.xpose.msra.mxu0 0
        %819 = vmatprep.subr.bf16.mxu0 0
        %820 = vmatpush1.bf16.xpose.msra.mxu0 0
        %821 = vmatprep.subr.bf16.mxu0 0
        %822 = vmatpush1.bf16.xpose.msra.mxu0 0
        %823 = vmatprep.mubr.bf16.mxu0 0
        %824 = vmatmul.mubr.bf16.gmra.mrb[0].mxu0 %v783
        %v825 = vpop.f32.mrb[0].mxu0
        %v826 = vadd.f32 %v767, %v825
        %v827 = vpop.f32.mrb[0].mxu0
        %v828 = vpop.f32.mrb[0].mxu0
        %v829 = vpop.f32.mrb[0].mxu0
        %830 = vdwg.mxu0
        %v831 = vld [vmem:[#allocation6 + $0x1] sm:$0x1]
        %v832 = vlaneseq
        %v833 = vshrl.u32 %v832, 7
        %v834 = vsub.s32 0, %v833
        %v835 = vrot.slane %v831, %v834
        %v836 = vadd.f32 %v826, %v835
        %v837 = vmax.f32 %v836, 0.0
        %v838 = vld [vmem:[#allocation6 + $0x8] sm:$0xff]
        %v839 = vadd.f32 %v837, %v838
        %v840 = vld [vmem:[#allocation6 + $0x10] sm:$0xf]
        %v841 = vld [vmem:[#allocation4 + $0x40] sm:$0xf]
        %v842 = vld [vmem:[#allocation4 + $0x44] sm:$0xf]
        %v843 = vld [vmem:[#allocation4 + $0x48] sm:$0xf]
        %v844 = vld [vmem:[#allocation4 + $0x4c] sm:$0xf]
        %v845 = vld [vmem:[#allocation4 + $0x50] sm:$0xf]
        %v846 = vld [vmem:[#allocation4 + $0x54] sm:$0xf]
        %v847 = vld [vmem:[#allocation4 + $0x58] sm:$0xf]
        %v848 = vld [vmem:[#allocation4 + $0x5c] sm:$0xf]
        %v849 = vld [vmem:[#allocation4 + $0x60] sm:$0xf]
        %v850 = vld [vmem:[#allocation4 + $0x64] sm:$0xf]
        %v851 = vld [vmem:[#allocation4 + $0x68] sm:$0xf]
        %v852 = vld [vmem:[#allocation4 + $0x6c] sm:$0xf]
        %v853 = vpack.c.bf16 %v840, %v840
        %v866 = vunpack.c.l.b16 %v841
        %v867 = vunpack.c.l.b16 %v842
        %v868 = vunpack.c.l.b16 %v843
        %v869 = vunpack.c.l.b16 %v844
        %v870 = vunpack.c.l.b16 %v845
        %v871 = vunpack.c.l.b16 %v846
        %v872 = vunpack.c.l.b16 %v847
        %v873 = vunpack.c.l.b16 %v848
        %v874 = vunpack.c.l.b16 %v849
        %v875 = vunpack.c.l.b16 %v850
        %v876 = vunpack.c.l.b16 %v851
        %v877 = vunpack.c.l.b16 %v852
        %v878 = vpack.c.b16 %v867, %v866
        %v879 = vpack.c.b16 %v869, %v868
        %v880 = vpack.c.b16 %v871, %v870
        %v881 = vpack.c.b16 %v873, %v872
        %v882 = vpack.c.b16 %v875, %v874
        %v883 = vpack.c.b16 %v877, %v876
        %vm884 = vcmask 261120
        %v886 = vsel %vm884, %v853, 0
        %v889 = vsel %vm884, %v878, 0
        %v892 = vsel %vm884, %v879, 0
        %v895 = vsel %vm884, %v880, 0
        %v898 = vsel %vm884, %v881, 0
        %v901 = vsel %vm884, %v882, 0
        %v904 = vsel %vm884, %v883, 0
        %906 = vmatprep.subr.bf16.mxu0 0
        %907 = vmatpush1.bf16.xpose.msra.mxu0 %v889
        %908 = vmatprep.subr.bf16.mxu0 0
        %909 = vmatpush1.bf16.xpose.msra.mxu0 %v892
        %910 = vmatprep.subr.bf16.mxu0 0
        %911 = vmatpush1.bf16.xpose.msra.mxu0 %v895
        %912 = vmatprep.subr.bf16.mxu0 0
        %913 = vmatpush1.bf16.xpose.msra.mxu0 %v898
        %914 = vmatprep.subr.bf16.mxu0 0
        %915 = vmatpush1.bf16.xpose.msra.mxu0 %v901
        %916 = vmatprep.subr.bf16.mxu0 0
        %917 = vmatpush1.bf16.xpose.msra.mxu0 %v904
        %918 = vmatprep.subr.bf16.mxu0 0
        %919 = vmatpush1.bf16.xpose.msra.mxu0 0
        %920 = vmatprep.subr.bf16.mxu0 0
        %921 = vmatpush1.bf16.xpose.msra.mxu0 0
        %922 = vmatprep.subr.bf16.mxu0 0
        %923 = vmatpush1.bf16.xpose.msra.mxu0 0
        %924 = vmatprep.subr.bf16.mxu0 0
        %925 = vmatpush1.bf16.xpose.msra.mxu0 0
        %926 = vmatprep.subr.bf16.mxu0 0
        %927 = vmatpush1.bf16.xpose.msra.mxu0 0
        %928 = vmatprep.subr.bf16.mxu0 0
        %929 = vmatpush1.bf16.xpose.msra.mxu0 0
        %930 = vmatprep.subr.bf16.mxu0 0
        %931 = vmatpush1.bf16.xpose.msra.mxu0 0
        %932 = vmatprep.subr.bf16.mxu0 0
        %933 = vmatpush1.bf16.xpose.msra.mxu0 0
        %934 = vmatprep.subr.bf16.mxu0 0
        %935 = vmatpush1.bf16.xpose.msra.mxu0 0
        %936 = vmatprep.subr.bf16.mxu0 0
        %937 = vmatpush1.bf16.xpose.msra.mxu0 0
        %938 = vmatprep.mubr.bf16.mxu0 0
        %939 = vmatmul.mubr.bf16.gmra.mrb[0].mxu0 %v886
        %v940 = vpop.f32.mrb[0].mxu0
        %v941 = vadd.f32 0.0, %v940
        %v942 = vpop.f32.mrb[0].mxu0
        %v943 = vpop.f32.mrb[0].mxu0
        %v944 = vpop.f32.mrb[0].mxu0
        %945 = vdwg.mxu0
        %v946 = vld [vmem:[#allocation6 + $0x1c] sm:$0x1]
        %v947 = vlaneseq
        %v948 = vshrl.u32 %v947, 7
        %v949 = vsub.s32 0, %v948
        %v950 = vrot.slane %v946, %v949
        %v951 = vadd.f32 %v941, %v950
        %v952 = vld [vmem:[#allocation6 + $0x1d] sm:$0x1]
        %v953 = vlaneseq
        %v954 = vshrl.u32 %v953, 7
        %v955 = vsub.s32 0, %v954
        %v956 = vrot.slane %v952, %v955
        %958 = vrot.lane.b32.xlu0 %v956, 32
        %v959 = vpop.permute.xlu0 %958
        %v961 = vadd.f32 %v941, %v959
        %v962 = vld [vmem:[#allocation6 + $0x1e] sm:$0x1]
        %v963 = vlaneseq
        %v964 = vshrl.u32 %v963, 7
        %v965 = vsub.s32 0, %v964
        %v966 = vrot.slane %v962, %v965
        %968 = vrot.lane.b32.xlu0 %v966, 64
        %v969 = vpop.permute.xlu0 %968
        %v971 = vadd.f32 %v941, %v969
        %v972 = vld [vmem:[#allocation4 + $0x70] sm:$0xf]
        %v973 = vld [vmem:[#allocation4 + $0x74] sm:$0xf]
        %v974 = vld [vmem:[#allocation4 + $0x78] sm:$0xf]
        %v975 = vld [vmem:[#allocation4 + $0x7c] sm:$0xf]
        %v976 = vld [vmem:[#allocation6 + $0x1f] sm:$0x1]
        %v977 = vpack.c.bf16 %v951, %v951
        %v978 = vpack.c.bf16 %v961, %v961
        %980 = vrot.lane.b32.xlu0 %v978, 96
        %v981 = vpop.permute.xlu0 %980
        %vm982 = vcmask 130048
        %v984 = vsel %vm982, %v977, 0
        %v987 = vsel %vm982, %v981, 0
        %989 = vmatprep.subr.bf16.mxu0 0
        %990 = vmatpush1.bf16.xpose.msra.mxu0 %v987
        %991 = vmatprep.subr.bf16.mxu0 0
        %992 = vmatpush1.bf16.xpose.msra.mxu0 0
        %993 = vmatprep.subr.bf16.mxu0 0
        %994 = vmatpush1.bf16.xpose.msra.mxu0 0
        %995 = vmatprep.subr.bf16.mxu0 0
        %996 = vmatpush1.bf16.xpose.msra.mxu0 0
        %997 = vmatprep.subr.bf16.mxu0 0
        %998 = vmatpush1.bf16.xpose.msra.mxu0 0
        %999 = vmatprep.subr.bf16.mxu0 0
        %1000 = vmatpush1.bf16.xpose.msra.mxu0 0
        %1001 = vmatprep.subr.bf16.mxu0 0
        %1002 = vmatpush1.bf16.xpose.msra.mxu0 0
        %1003 = vmatprep.subr.bf16.mxu0 0
        %1004 = vmatpush1.bf16.xpose.msra.mxu0 0
        %1005 = vmatprep.subr.bf16.mxu0 0
        %1006 = vmatpush1.bf16.xpose.msra.mxu0 0
        %1007 = vmatprep.subr.bf16.mxu0 0
        %1008 = vmatpush1.bf16.xpose.msra.mxu0 0
        %1009 = vmatprep.subr.bf16.mxu0 0
        %1010 = vmatpush1.bf16.xpose.msra.mxu0 0
        %1011 = vmatprep.subr.bf16.mxu0 0
        %1012 = vmatpush1.bf16.xpose.msra.mxu0 0
        %1013 = vmatprep.subr.bf16.mxu0 0
        %1014 = vmatpush1.bf16.xpose.msra.mxu0 0
        %1015 = vmatprep.subr.bf16.mxu0 0
        %1016 = vmatpush1.bf16.xpose.msra.mxu0 0
        %1017 = vmatprep.subr.bf16.mxu0 0
        %1018 = vmatpush1.bf16.xpose.msra.mxu0 0
        %1019 = vmatprep.subr.bf16.mxu0 0
        %1020 = vmatpush1.bf16.xpose.msra.mxu0 0
        %1021 = vmatprep.mubr.bf16.mxu0 0
        %1022 = vmatmul.mubr.bf16.gmra.mrb[0].mxu0 %v984
        %v1023 = vpop.f32.mrb[0].mxu0
        %v1024 = vadd.f32 0.0, %v1023
        %v1025 = vpop.f32.mrb[0].mxu0
        %v1026 = vpop.f32.mrb[0].mxu0
        %v1027 = vpop.f32.mrb[0].mxu0
        %1028 = vdwg.mxu0
        %vm1029 = vcmask 27648
        %v1030 = vsel %vm1029, %v1024, -inf
        %1031 = vmax.xlane.f32.xlu0 %v1030
        %v1032 = vpop.xlane.xlu0 %1031
        %v1033 = vsub.f32 %v1024, %v1032
        %v1034 = vmul.f32 %v1033, 1.442695
        %v1035 = vpow.pop %v1034
        %v1036 = vsel %vm1029, %v1035, 0.0
        %1037 = vadd.xlane.f32.xlu0 %v1036
        %v1038 = vpop.xlane.xlu0 %1037
        %v1039 = vrcp.pop %v1038
        %v1040 = vmul.f32 %v1035, %v1039
        %v1041 = vpack.c.bf16 %v1040, %v1040
        %v1042 = vpack.c.bf16 %v971, %v971
        %1044 = vrot.lane.b32.xlu0 %v1042, 64
        %v1045 = vpop.permute.xlu0 %1044
        %vm1046 = vcmask 31744
        %v1048 = vsel %vm1046, %v1041, 0
        %vm1050 = vcmask 1041408
        %v1052 = vsel %vm1050, %v1045, 0
        %1054 = vmatprep.subr.bf16.mxu0 0
        %1055 = vmatpush1.bf16.msra.mxu0 %v1052
        %1056 = vmatprep.subr.bf16.mxu0 0
        %1057 = vmatpush1.bf16.msra.mxu0 0
        %1058 = vmatprep.subr.bf16.mxu0 0
        %1059 = vmatpush1.bf16.msra.mxu0 0
        %1060 = vmatprep.subr.bf16.mxu0 0
        %1061 = vmatpush1.bf16.msra.mxu0 0
        %1062 = vmatprep.subr.bf16.mxu0 0
        %1063 = vmatpush1.bf16.msra.mxu0 0
        %1064 = vmatprep.subr.bf16.mxu0 0
        %1065 = vmatpush1.bf16.msra.mxu0 0
        %1066 = vmatprep.subr.bf16.mxu0 0
        %1067 = vmatpush1.bf16.msra.mxu0 0
        %1068 = vmatprep.subr.bf16.mxu0 0
        %1069 = vmatpush1.bf16.msra.mxu0 0
        %1070 = vmatprep.subr.bf16.mxu0 0
        %1071 = vmatpush1.bf16.msra.mxu0 0
        %1072 = vmatprep.subr.bf16.mxu0 0
        %1073 = vmatpush1.bf16.msra.mxu0 0
        %1074 = vmatprep.subr.bf16.mxu0 0
        %1075 = vmatpush1.bf16.msra.mxu0 0
        %1076 = vmatprep.subr.bf16.mxu0 0
        %1077 = vmatpush1.bf16.msra.mxu0 0
        %1078 = vmatprep.subr.bf16.mxu0 0
        %1079 = vmatpush1.bf16.msra.mxu0 0
        %1080 = vmatprep.subr.bf16.mxu0 0
        %1081 = vmatpush1.bf16.msra.mxu0 0
        %1082 = vmatprep.subr.bf16.mxu0 0
        %1083 = vmatpush1.bf16.msra.mxu0 0
        %1084 = vmatprep.subr.bf16.mxu0 0
        %1085 = vmatpush1.bf16.msra.mxu0 0
        %1086 = vmatprep.mubr.bf16.mxu0 0
        %1087 = vmatmul.mubr.bf16.gmra.mrb[0].mxu0 %v1048
        %v1088 = vpop.f32.mrb[0].mxu0
        %v1089 = vadd.f32 0.0, %v1088
        %v1090 = vpop.f32.mrb[0].mxu0
        %v1091 = vpop.f32.mrb[0].mxu0
        %v1092 = vpop.f32.mrb[0].mxu0
        %1093 = vdwg.mxu0
        %v1094 = vpack.c.bf16 %v1089, %v1089
        %1096 = vrot.lane.b32.xlu0 %v977, 112
        %v1097 = vpop.permute.xlu0 %1096
        %1098 = vrot.lane.b32.xlu0 %v978, 80
        %v1099 = vpop.permute.xlu0 %1098
        %v1101 = vsel %vm982, %v1097, 0
        %v1104 = vsel %vm982, %v1099, 0
        %1106 = vmatprep.subr.bf16.mxu0 0
        %1107 = vmatpush1.bf16.xpose.msra.mxu0 %v1104
        %1108 = vmatprep.subr.bf16.mxu0 0
        %1109 = vmatpush1.bf16.xpose.msra.mxu0 0
        %1110 = vmatprep.subr.bf16.mxu0 0
        %1111 = vmatpush1.bf16.xpose.msra.mxu0 0
        %1112 = vmatprep.subr.bf16.mxu0 0
        %1113 = vmatpush1.bf16.xpose.msra.mxu0 0
        %1114 = vmatprep.subr.bf16.mxu0 0
        %1115 = vmatpush1.bf16.xpose.msra.mxu0 0
        %1116 = vmatprep.subr.bf16.mxu0 0
        %1117 = vmatpush1.bf16.xpose.msra.mxu0 0
        %1118 = vmatprep.subr.bf16.mxu0 0
        %1119 = vmatpush1.bf16.xpose.msra.mxu0 0
        %1120 = vmatprep.subr.bf16.mxu0 0
        %1121 = vmatpush1.bf16.xpose.msra.mxu0 0
        %1122 = vmatprep.subr.bf16.mxu0 0
        %1123 = vmatpush1.bf16.xpose.msra.mxu0 0
        %1124 = vmatprep.subr.bf16.mxu0 0
        %1125 = vmatpush1.bf16.xpose.msra.mxu0 0
        %1126 = vmatprep.subr.bf16.mxu0 0
        %1127 = vmatpush1.bf16.xpose.msra.mxu0 0
        %1128 = vmatprep.subr.bf16.mxu0 0
        %1129 = vmatpush1.bf16.xpose.msra.mxu0 0
        %1130 = vmatprep.subr.bf16.mxu0 0
        %1131 = vmatpush1.bf16.xpose.msra.mxu0 0
        %1132 = vmatprep.subr.bf16.mxu0 0
        %1133 = vmatpush1.bf16.xpose.msra.mxu0 0
        %1134 = vmatprep.subr.bf16.mxu0 0
        %1135 = vmatpush1.bf16.xpose.msra.mxu0 0
        %1136 = vmatprep.subr.bf16.mxu0 0
        %1137 = vmatpush1.bf16.xpose.msra.mxu0 0
        %1138 = vmatprep.mubr.bf16.mxu0 0
        %1139 = vmatmul.mubr.bf16.gmra.mrb[0].mxu0 %v1101
        %v1140 = vpop.f32.mrb[0].mxu0
        %v1141 = vadd.f32 0.0, %v1140
        %v1142 = vpop.f32.mrb[0].mxu0
        %v1143 = vpop.f32.mrb[0].mxu0
        %v1144 = vpop.f32.mrb[0].mxu0
        %1145 = vdwg.mxu0
        %v1146 = vsel %vm1029, %v1141, -inf
        %1147 = vmax.xlane.f32.xlu0 %v1146
        %v1148 = vpop.xlane.xlu0 %1147
        %v1149 = vsub.f32 %v1141, %v1148
        %v1150 = vmul.f32 %v1149, 1.442695
        %v1151 = vpow.pop %v1150
        %v1152 = vsel %vm1029, %v1151, 0.0
        %1153 = vadd.xlane.f32.xlu0 %v1152
        %v1154 = vpop.xlane.xlu0 %1153
        %v1155 = vrcp.pop %v1154
        %v1156 = vmul.f32 %v1151, %v1155
        %v1157 = vpack.c.bf16 %v1156, %v1156
        %1158 = vrot.lane.b32.xlu0 %v1042, 48
        %v1159 = vpop.permute.xlu0 %1158
        %v1161 = vsel %vm1046, %v1157, 0
        %v1164 = vsel %vm1050, %v1159, 0
        %1166 = vmatprep.subr.bf16.mxu0 0
        %1167 = vmatpush1.bf16.msra.mxu0 %v1164
        %1168 = vmatprep.subr.bf16.mxu0 0
        %1169 = vmatpush1.bf16.msra.mxu0 0
        %1170 = vmatprep.subr.bf16.mxu0 0
        %1171 = vmatpush1.bf16.msra.mxu0 0
        %1172 = vmatprep.subr.bf16.mxu0 0
        %1173 = vmatpush1.bf16.msra.mxu0 0
        %1174 = vmatprep.subr.bf16.mxu0 0
        %1175 = vmatpush1.bf16.msra.mxu0 0
        %1176 = vmatprep.subr.bf16.mxu0 0
        %1177 = vmatpush1.bf16.msra.mxu0 0
        %1178 = vmatprep.subr.bf16.mxu0 0
        %1179 = vmatpush1.bf16.msra.mxu0 0
        %1180 = vmatprep.subr.bf16.mxu0 0
        %1181 = vmatpush1.bf16.msra.mxu0 0
        %1182 = vmatprep.subr.bf16.mxu0 0
        %1183 = vmatpush1.bf16.msra.mxu0 0
        %1184 = vmatprep.subr.bf16.mxu0 0
        %1185 = vmatpush1.bf16.msra.mxu0 0
        %1186 = vmatprep.subr.bf16.mxu0 0
        %1187 = vmatpush1.bf16.msra.mxu0 0
        %1188 = vmatprep.subr.bf16.mxu0 0
        %1189 = vmatpush1.bf16.msra.mxu0 0
        %1190 = vmatprep.subr.bf16.mxu0 0
        %1191 = vmatpush1.bf16.msra.mxu0 0
        %1192 = vmatprep.subr.bf16.mxu0 0
        %1193 = vmatpush1.bf16.msra.mxu0 0
        %1194 = vmatprep.subr.bf16.mxu0 0
        %1195 = vmatpush1.bf16.msra.mxu0 0
        %1196 = vmatprep.subr.bf16.mxu0 0
        %1197 = vmatpush1.bf16.msra.mxu0 0
        %1198 = vmatprep.mubr.bf16.mxu0 0
        %1199 = vmatmul.mubr.bf16.gmra.mrb[0].mxu0 %v1161
        %v1200 = vpop.f32.mrb[0].mxu0
        %v1201 = vadd.f32 0.0, %v1200
        %v1202 = vpop.f32.mrb[0].mxu0
        %v1203 = vpop.f32.mrb[0].mxu0
        %v1204 = vpop.f32.mrb[0].mxu0
        %1205 = vdwg.mxu0
        %v1206 = vpack.c.bf16 %v1201, %v1201
        %v1211 = vunpack.c.l.b16 %v972
        %v1212 = vunpack.c.l.b16 %v973
        %v1213 = vunpack.c.l.b16 %v974
        %v1214 = vunpack.c.l.b16 %v975
        %v1215 = vpack.c.b16 %v1212, %v1211
        %v1216 = vpack.c.b16 %v1214, %v1213
        %1217 = vrot.lane.b32.xlu0 %v1215, 112
        %v1218 = vpop.permute.xlu0 %1217
        %1219 = vrot.lane.b32.xlu0 %v1216, 112
        %v1220 = vpop.permute.xlu0 %1219
        %v1222 = vsel %vm982, %v1206, 0
        %v1225 = vsel %vm982, %v1218, 0
        %v1228 = vsel %vm982, %v1220, 0
        %1230 = vmatprep.subr.bf16.mxu0 0
        %1231 = vmatpush1.bf16.xpose.msra.mxu0 %v1225
        %1232 = vmatprep.subr.bf16.mxu0 0
        %1233 = vmatpush1.bf16.xpose.msra.mxu0 %v1228
        %1234 = vmatprep.subr.bf16.mxu0 0
        %1235 = vmatpush1.bf16.xpose.msra.mxu0 0
        %1236 = vmatprep.subr.bf16.mxu0 0
        %1237 = vmatpush1.bf16.xpose.msra.mxu0 0
        %1238 = vmatprep.subr.bf16.mxu0 0
        %1239 = vmatpush1.bf16.xpose.msra.mxu0 0
        %1240 = vmatprep.subr.bf16.mxu0 0
        %1241 = vmatpush1.bf16.xpose.msra.mxu0 0
        %1242 = vmatprep.subr.bf16.mxu0 0
        %1243 = vmatpush1.bf16.xpose.msra.mxu0 0
        %1244 = vmatprep.subr.bf16.mxu0 0
        %1245 = vmatpush1.bf16.xpose.msra.mxu0 0
        %1246 = vmatprep.subr.bf16.mxu0 0
        %1247 = vmatpush1.bf16.xpose.msra.mxu0 0
        %1248 = vmatprep.subr.bf16.mxu0 0
        %1249 = vmatpush1.bf16.xpose.msra.mxu0 0
        %1250 = vmatprep.subr.bf16.mxu0 0
        %1251 = vmatpush1.bf16.xpose.msra.mxu0 0
        %1252 = vmatprep.subr.bf16.mxu0 0
        %1253 = vmatpush1.bf16.xpose.msra.mxu0 0
        %1254 = vmatprep.subr.bf16.mxu0 0
        %1255 = vmatpush1.bf16.xpose.msra.mxu0 0
        %1256 = vmatprep.subr.bf16.mxu0 0
        %1257 = vmatpush1.bf16.xpose.msra.mxu0 0
        %1258 = vmatprep.subr.bf16.mxu0 0
        %1259 = vmatpush1.bf16.xpose.msra.mxu0 0
        %1260 = vmatprep.subr.bf16.mxu0 0
        %1261 = vmatpush1.bf16.xpose.msra.mxu0 0
        %1262 = vmatprep.mubr.bf16.mxu0 0
        %1263 = vmatmul.mubr.bf16.gmra.mrb[0].mxu0 %v1222
        %v1264 = vpop.f32.mrb[0].mxu0
        %v1265 = vadd.f32 0.0, %v1264
        %v1266 = vpop.f32.mrb[0].mxu0
        %v1267 = vpop.f32.mrb[0].mxu0
        %v1268 = vpop.f32.mrb[0].mxu0
        %1269 = vdwg.mxu0
        %v1271 = vsel %vm982, %v1094, 0
        %v1274 = vsel %vm982, %v1215, 0
        %v1277 = vsel %vm982, %v1216, 0
        %1279 = vmatprep.subr.bf16.mxu0 0
        %1280 = vmatpush1.bf16.xpose.msra.mxu0 %v1274
        %1281 = vmatprep.subr.bf16.mxu0 0
        %1282 = vmatpush1.bf16.xpose.msra.mxu0 %v1277
        %1283 = vmatprep.subr.bf16.mxu0 0
        %1284 = vmatpush1.bf16.xpose.msra.mxu0 0
        %1285 = vmatprep.subr.bf16.mxu0 0
        %1286 = vmatpush1.bf16.xpose.msra.mxu0 0
        %1287 = vmatprep.subr.bf16.mxu0 0
        %1288 = vmatpush1.bf16.xpose.msra.mxu0 0
        %1289 = vmatprep.subr.bf16.mxu0 0
        %1290 = vmatpush1.bf16.xpose.msra.mxu0 0
        %1291 = vmatprep.subr.bf16.mxu0 0
        %1292 = vmatpush1.bf16.xpose.msra.mxu0 0
        %1293 = vmatprep.subr.bf16.mxu0 0
        %1294 = vmatpush1.bf16.xpose.msra.mxu0 0
        %1295 = vmatprep.subr.bf16.mxu0 0
        %1296 = vmatpush1.bf16.xpose.msra.mxu0 0
        %1297 = vmatprep.subr.bf16.mxu0 0
        %1298 = vmatpush1.bf16.xpose.msra.mxu0 0
        %1299 = vmatprep.subr.bf16.mxu0 0
        %1300 = vmatpush1.bf16.xpose.msra.mxu0 0
        %1301 = vmatprep.subr.bf16.mxu0 0
        %1302 = vmatpush1.bf16.xpose.msra.mxu0 0
        %1303 = vmatprep.subr.bf16.mxu0 0
        %1304 = vmatpush1.bf16.xpose.msra.mxu0 0
        %1305 = vmatprep.subr.bf16.mxu0 0
        %1306 = vmatpush1.bf16.xpose.msra.mxu0 0
        %1307 = vmatprep.subr.bf16.mxu0 0
        %1308 = vmatpush1.bf16.xpose.msra.mxu0 0
        %1309 = vmatprep.subr.bf16.mxu0 0
        %1310 = vmatpush1.bf16.xpose.msra.mxu0 0
        %1311 = vmatprep.mubr.bf16.mxu0 0
        %1312 = vmatmul.mubr.bf16.gmra.mrb[0].mxu0 %v1271
        %v1313 = vpop.f32.mrb[0].mxu0
        %v1314 = vadd.f32 %v1265, %v1313
        %v1315 = vpop.f32.mrb[0].mxu0
        %v1316 = vpop.f32.mrb[0].mxu0
        %v1317 = vpop.f32.mrb[0].mxu0
        %1318 = vdwg.mxu0
        %v1319 = vlaneseq
        %v1320 = vshrl.u32 %v1319, 7
        %v1321 = vsub.s32 0, %v1320
        %v1322 = vrot.slane %v976, %v1321
        %v1323 = vadd.f32 %v1314, %v1322
        %v1324 = vadd.f32 %v840, %v1323
        %v1325 = vld [vmem:[#allocation6 + $0x25] sm:$0x1]
        %v1326 = vld [vmem:[#allocation6 + $0x26] sm:$0x1]
        %vm1327 = vcmask 257024
        %v1328 = vsel %vm1327, %v1324, 0.0
        %1329 = vadd.xlane.f32.xlu0 %v1328
        %v1330 = vpop.xlane.xlu0 %1329
        %v1331 = vrcp.pop 32.0
        %v1332 = vmul.f32 %v1330, %v1331
        %v1333 = vmul.f32 %v1324, %v1324
        %v1334 = vsel %vm1327, %v1333, 0.0
        %1335 = vadd.xlane.f32.xlu0 %v1334
        %v1336 = vpop.xlane.xlu0 %1335
        %v1337 = vmul.f32 %v1336, %v1331
        %v1338 = vsub.f32 %v1324, %v1332
        %v1339 = vmul.f32 %v1332, %v1332
        %v1340 = vsub.f32 %v1337, %v1339
        %v1341 = vadd.f32 %v1340, 1e-05
        %v1342 = vrsqrt.pop %v1341
        %v1343 = vmul.f32 %v1338, %v1342
        %v1344 = vlaneseq
        %v1345 = vshrl.u32 %v1344, 7
        %v1346 = vsub.s32 0, %v1345
        %v1347 = vrot.slane %v1325, %v1346
        %v1348 = vmul.f32 %v1343, %v1347
        %v1349 = vlaneseq
        %v1350 = vshrl.u32 %v1349, 7
        %v1351 = vsub.s32 0, %v1350
        %v1352 = vrot.slane %v1326, %v1351
        %v1353 = vadd.f32 %v1348, %v1352
        %v1354 = vld [vmem:[#allocation4 + $0x80] sm:$0xf]
        %v1355 = vld [vmem:[#allocation4 + $0x84] sm:$0xf]
        %v1356 = vld [vmem:[#allocation4 + $0x88] sm:$0xf]
        %v1357 = vld [vmem:[#allocation4 + $0x8c] sm:$0xf]
        %v1358 = vpack.c.bf16 %v1353, %v1353
        %v1359 = vld [vmem:[#allocation6 + $0x20] sm:$0x1]
        %v1360 = vlaneseq
        %v1361 = vshrl.u32 %v1360, 7
        %v1362 = vsub.s32 0, %v1361
        %v1363 = vrot.slane %v1359, %v1362
        %v1368 = vunpack.c.l.b16 %v1354
        %v1369 = vunpack.c.l.b16 %v1355
        %v1370 = vunpack.c.l.b16 %v1356
        %v1371 = vunpack.c.l.b16 %v1357
        %v1372 = vpack.c.b16 %v1369, %v1368
        %v1373 = vpack.c.b16 %v1371, %v1370
        %v1375 = vsel %vm884, %v1358, 0
        %v1378 = vsel %vm884, %v1372, 0
        %v1381 = vsel %vm884, %v1373, 0
        %1383 = vmatprep.subr.bf16.mxu0 0
        %1384 = vmatpush1.bf16.xpose.msra.mxu0 %v1378
        %1385 = vmatprep.subr.bf16.mxu0 0
        %1386 = vmatpush1.bf16.xpose.msra.mxu0 %v1381
        %1387 = vmatprep.subr.bf16.mxu0 0
        %1388 = vmatpush1.bf16.xpose.msra.mxu0 0
        %1389 = vmatprep.subr.bf16.mxu0 0
        %1390 = vmatpush1.bf16.xpose.msra.mxu0 0
        %1391 = vmatprep.subr.bf16.mxu0 0
        %1392 = vmatpush1.bf16.xpose.msra.mxu0 0
        %1393 = vmatprep.subr.bf16.mxu0 0
        %1394 = vmatpush1.bf16.xpose.msra.mxu0 0
        %1395 = vmatprep.subr.bf16.mxu0 0
        %1396 = vmatpush1.bf16.xpose.msra.mxu0 0
        %1397 = vmatprep.subr.bf16.mxu0 0
        %1398 = vmatpush1.bf16.xpose.msra.mxu0 0
        %1399 = vmatprep.subr.bf16.mxu0 0
        %1400 = vmatpush1.bf16.xpose.msra.mxu0 0
        %1401 = vmatprep.subr.bf16.mxu0 0
        %1402 = vmatpush1.bf16.xpose.msra.mxu0 0
        %1403 = vmatprep.subr.bf16.mxu0 0
        %1404 = vmatpush1.bf16.xpose.msra.mxu0 0
        %1405 = vmatprep.subr.bf16.mxu0 0
        %1406 = vmatpush1.bf16.xpose.msra.mxu0 0
        %1407 = vmatprep.subr.bf16.mxu0 0
        %1408 = vmatpush1.bf16.xpose.msra.mxu0 0
        %1409 = vmatprep.subr.bf16.mxu0 0
        %1410 = vmatpush1.bf16.xpose.msra.mxu0 0
        %1411 = vmatprep.subr.bf16.mxu0 0
        %1412 = vmatpush1.bf16.xpose.msra.mxu0 0
        %1413 = vmatprep.subr.bf16.mxu0 0
        %1414 = vmatpush1.bf16.xpose.msra.mxu0 0
        %1415 = vmatprep.mubr.bf16.mxu0 0
        %1416 = vmatmul.mubr.bf16.gmra.mrb[0].mxu0 %v1375
        %v1417 = vpop.f32.mrb[0].mxu0
        %v1418 = vadd.f32 %v1363, %v1417
        %v1419 = vpop.f32.mrb[0].mxu0
        %v1420 = vpop.f32.mrb[0].mxu0
        %v1421 = vpop.f32.mrb[0].mxu0
        %1422 = vdwg.mxu0
        %v1423 = vld [vmem:[#allocation4 + $0x90] sm:$0xf]
        %v1424 = vld [vmem:[#allocation4 + $0x94] sm:$0xf]
        %v1425 = vld [vmem:[#allocation4 + $0x98] sm:$0xf]
        %v1426 = vld [vmem:[#allocation4 + $0x9c] sm:$0xf]
        %v1427 = vld [vmem:[#allocation4 + $0xa0] sm:$0xf]
        %v1428 = vld [vmem:[#allocation4 + $0xa4] sm:$0xf]
        %v1429 = vld [vmem:[#allocation4 + $0xa8] sm:$0xf]
        %v1430 = vld [vmem:[#allocation4 + $0xac] sm:$0xf]
        %v1431 = vpack.c.bf16 %v702, %v702
        %v1440 = vunpack.c.l.b16 %v1423
        %v1441 = vunpack.c.l.b16 %v1424
        %v1442 = vunpack.c.l.b16 %v1425
        %v1443 = vunpack.c.l.b16 %v1426
        %v1444 = vunpack.c.l.b16 %v1427
        %v1445 = vunpack.c.l.b16 %v1428
        %v1446 = vunpack.c.l.b16 %v1429
        %v1447 = vunpack.c.l.b16 %v1430
        %v1448 = vpack.c.b16 %v1441, %v1440
        %v1449 = vpack.c.b16 %v1443, %v1442
        %v1450 = vpack.c.b16 %v1445, %v1444
        %v1451 = vpack.c.b16 %v1447, %v1446
        %v1453 = vsel %vm884, %v1431, 0
        %v1456 = vsel %vm884, %v1448, 0
        %v1459 = vsel %vm884, %v1449, 0
        %v1462 = vsel %vm884, %v1450, 0
        %v1465 = vsel %vm884, %v1451, 0
        %1467 = vmatprep.subr.bf16.mxu0 0
        %1468 = vmatpush1.bf16.xpose.msra.mxu0 %v1456
        %1469 = vmatprep.subr.bf16.mxu0 0
        %1470 = vmatpush1.bf16.xpose.msra.mxu0 %v1459
        %1471 = vmatprep.subr.bf16.mxu0 0
        %1472 = vmatpush1.bf16.xpose.msra.mxu0 %v1462
        %1473 = vmatprep.subr.bf16.mxu0 0
        %1474 = vmatpush1.bf16.xpose.msra.mxu0 %v1465
        %1475 = vmatprep.subr.bf16.mxu0 0
        %1476 = vmatpush1.bf16.xpose.msra.mxu0 0
        %1477 = vmatprep.subr.bf16.mxu0 0
        %1478 = vmatpush1.bf16.xpose.msra.mxu0 0
        %1479 = vmatprep.subr.bf16.mxu0 0
        %1480 = vmatpush1.bf16.xpose.msra.mxu0 0
        %1481 = vmatprep.subr.bf16.mxu0 0
        %1482 = vmatpush1.bf16.xpose.msra.mxu0 0
        %1483 = vmatprep.subr.bf16.mxu0 0
        %1484 = vmatpush1.bf16.xpose.msra.mxu0 0
        %1485 = vmatprep.subr.bf16.mxu0 0
        %1486 = vmatpush1.bf16.xpose.msra.mxu0 0
        %1487 = vmatprep.subr.bf16.mxu0 0
        %1488 = vmatpush1.bf16.xpose.msra.mxu0 0
        %1489 = vmatprep.subr.bf16.mxu0 0
        %1490 = vmatpush1.bf16.xpose.msra.mxu0 0
        %1491 = vmatprep.subr.bf16.mxu0 0
        %1492 = vmatpush1.bf16.xpose.msra.mxu0 0
        %1493 = vmatprep.subr.bf16.mxu0 0
        %1494 = vmatpush1.bf16.xpose.msra.mxu0 0
        %1495 = vmatprep.subr.bf16.mxu0 0
        %1496 = vmatpush1.bf16.xpose.msra.mxu0 0
        %1497 = vmatprep.subr.bf16.mxu0 0
        %1498 = vmatpush1.bf16.xpose.msra.mxu0 0
        %1499 = vmatprep.mubr.bf16.mxu0 0
        %1500 = vmatmul.mubr.bf16.gmra.mrb[0].mxu0 %v1453
        %v1501 = vpop.f32.mrb[0].mxu0
        %v1502 = vadd.f32 0.0, %v1501
        %v1503 = vpop.f32.mrb[0].mxu0
        %v1504 = vpop.f32.mrb[0].mxu0
        %v1505 = vpop.f32.mrb[0].mxu0
        %1506 = vdwg.mxu0
        %v1507 = vld [vmem:[#allocation6 + $0x21] sm:$0x1]
        %v1508 = vlaneseq
        %v1509 = vshrl.u32 %v1508, 7
        %v1510 = vsub.s32 0, %v1509
        %v1511 = vrot.slane %v1507, %v1510
        %v1512 = vadd.f32 %v1502, %v1511
        %v1513 = vld [vmem:[#allocation6 + $0x22] sm:$0x1]
        %v1514 = vlaneseq
        %v1515 = vshrl.u32 %v1514, 7
        %v1516 = vsub.s32 0, %v1515
        %v1517 = vrot.slane %v1513, %v1516
        %1519 = vrot.lane.b32.xlu0 %v1517, 32
        %v1520 = vpop.permute.xlu0 %1519
        %v1522 = vadd.f32 %v1502, %v1520
        %v1523 = vld [vmem:[#allocation4 + $0xb0] sm:$0xf]
        %v1524 = vld [vmem:[#allocation4 + $0xb4] sm:$0xf]
        %v1525 = vld [vmem:[#allocation4 + $0xb8] sm:$0xf]
        %v1526 = vld [vmem:[#allocation4 + $0xbc] sm:$0xf]
        %v1527 = vld [vmem:[#allocation6 + $0x23] sm:$0x1]
        %v1528 = vpack.c.bf16 %v1418, %v1418
        %v1529 = vpack.c.bf16 %v1512, %v1512
        %v1531 = vsel %vm982, %v1528, 0
        %v1534 = vsel %vm982, %v1529, 0
        %1536 = vmatprep.subr.bf16.mxu0 0
        %1537 = vmatpush1.bf16.xpose.msra.mxu0 %v1534
        %1538 = vmatprep.subr.bf16.mxu0 0
        %1539 = vmatpush1.bf16.xpose.msra.mxu0 0
        %1540 = vmatprep.subr.bf16.mxu0 0
        %1541 = vmatpush1.bf16.xpose.msra.mxu0 0
        %1542 = vmatprep.subr.bf16.mxu0 0
        %1543 = vmatpush1.bf16.xpose.msra.mxu0 0
        %1544 = vmatprep.subr.bf16.mxu0 0
        %1545 = vmatpush1.bf16.xpose.msra.mxu0 0
        %1546 = vmatprep.subr.bf16.mxu0 0
        %1547 = vmatpush1.bf16.xpose.msra.mxu0 0
        %1548 = vmatprep.subr.bf16.mxu0 0
        %1549 = vmatpush1.bf16.xpose.msra.mxu0 0
        %1550 = vmatprep.subr.bf16.mxu0 0
        %1551 = vmatpush1.bf16.xpose.msra.mxu0 0
        %1552 = vmatprep.subr.bf16.mxu0 0
        %1553 = vmatpush1.bf16.xpose.msra.mxu0 0
        %1554 = vmatprep.subr.bf16.mxu0 0
        %1555 = vmatpush1.bf16.xpose.msra.mxu0 0
        %1556 = vmatprep.subr.bf16.mxu0 0
        %1557 = vmatpush1.bf16.xpose.msra.mxu0 0
        %1558 = vmatprep.subr.bf16.mxu0 0
        %1559 = vmatpush1.bf16.xpose.msra.mxu0 0
        %1560 = vmatprep.subr.bf16.mxu0 0
        %1561 = vmatpush1.bf16.xpose.msra.mxu0 0
        %1562 = vmatprep.subr.bf16.mxu0 0
        %1563 = vmatpush1.bf16.xpose.msra.mxu0 0
        %1564 = vmatprep.subr.bf16.mxu0 0
        %1565 = vmatpush1.bf16.xpose.msra.mxu0 0
        %1566 = vmatprep.subr.bf16.mxu0 0
        %1567 = vmatpush1.bf16.xpose.msra.mxu0 0
        %1568 = vmatprep.mubr.bf16.mxu0 0
        %1569 = vmatmul.mubr.bf16.gmra.mrb[0].mxu0 %v1531
        %v1570 = vpop.f32.mrb[0].mxu0
        %v1571 = vadd.f32 0.0, %v1570
        %v1572 = vpop.f32.mrb[0].mxu0
        %v1573 = vpop.f32.mrb[0].mxu0
        %v1574 = vpop.f32.mrb[0].mxu0
        %1575 = vdwg.mxu0
        %vm1576 = vcmask 60416
        %v1577 = vsel %vm1576, %v1571, -inf
        %1578 = vmax.xlane.f32.xlu0 %v1577
        %v1579 = vpop.xlane.xlu0 %1578
        %v1580 = vsub.f32 %v1571, %v1579
        %v1581 = vmul.f32 %v1580, 1.442695
        %v1582 = vpow.pop %v1581
        %v1583 = vsel %vm1576, %v1582, 0.0
        %1584 = vadd.xlane.f32.xlu0 %v1583
        %v1585 = vpop.xlane.xlu0 %1584
        %v1586 = vrcp.pop %v1585
        %v1587 = vmul.f32 %v1582, %v1586
        %v1588 = vpack.c.bf16 %v1587, %v1587
        %v1589 = vpack.c.bf16 %v1522, %v1522
        %1591 = vrot.lane.b32.xlu0 %v1589, 96
        %v1592 = vpop.permute.xlu0 %1591
        %v1594 = vsel %vm586, %v1588, 0
        %vm1596 = vcmask 1043456
        %v1598 = vsel %vm1596, %v1592, 0
        %1600 = vmatprep.subr.bf16.mxu0 0
        %1601 = vmatpush1.bf16.msra.mxu0 %v1598
        %1602 = vmatprep.subr.bf16.mxu0 0
        %1603 = vmatpush1.bf16.msra.mxu0 0
        %1604 = vmatprep.subr.bf16.mxu0 0
        %1605 = vmatpush1.bf16.msra.mxu0 0
        %1606 = vmatprep.subr.bf16.mxu0 0
        %1607 = vmatpush1.bf16.msra.mxu0 0
        %1608 = vmatprep.subr.bf16.mxu0 0
        %1609 = vmatpush1.bf16.msra.mxu0 0
        %1610 = vmatprep.subr.bf16.mxu0 0
        %1611 = vmatpush1.bf16.msra.mxu0 0
        %1612 = vmatprep.subr.bf16.mxu0 0
        %1613 = vmatpush1.bf16.msra.mxu0 0
        %1614 = vmatprep.subr.bf16.mxu0 0
        %1615 = vmatpush1.bf16.msra.mxu0 0
        %1616 = vmatprep.subr.bf16.mxu0 0
        %1617 = vmatpush1.bf16.msra.mxu0 0
        %1618 = vmatprep.subr.bf16.mxu0 0
        %1619 = vmatpush1.bf16.msra.mxu0 0
        %1620 = vmatprep.subr.bf16.mxu0 0
        %1621 = vmatpush1.bf16.msra.mxu0 0
        %1622 = vmatprep.subr.bf16.mxu0 0
        %1623 = vmatpush1.bf16.msra.mxu0 0
        %1624 = vmatprep.subr.bf16.mxu0 0
        %1625 = vmatpush1.bf16.msra.mxu0 0
        %1626 = vmatprep.subr.bf16.mxu0 0
        %1627 = vmatpush1.bf16.msra.mxu0 0
        %1628 = vmatprep.subr.bf16.mxu0 0
        %1629 = vmatpush1.bf16.msra.mxu0 0
        %1630 = vmatprep.subr.bf16.mxu0 0
        %1631 = vmatpush1.bf16.msra.mxu0 0
        %1632 = vmatprep.mubr.bf16.mxu0 0
        %1633 = vmatmul.mubr.bf16.gmra.mrb[0].mxu0 %v1594
        %v1634 = vpop.f32.mrb[0].mxu0
        %v1635 = vadd.f32 0.0, %v1634
        %v1636 = vpop.f32.mrb[0].mxu0
        %v1637 = vpop.f32.mrb[0].mxu0
        %v1638 = vpop.f32.mrb[0].mxu0
        %1639 = vdwg.mxu0
        %v1640 = vpack.c.bf16 %v1635, %v1635
        %1642 = vrot.lane.b32.xlu0 %v1528, 112
        %v1643 = vpop.permute.xlu0 %1642
        %1645 = vrot.lane.b32.xlu0 %v1529, 112
        %v1646 = vpop.permute.xlu0 %1645
        %v1648 = vsel %vm982, %v1643, 0
        %v1651 = vsel %vm982, %v1646, 0
        %1653 = vmatprep.subr.bf16.mxu0 0
        %1654 = vmatpush1.bf16.xpose.msra.mxu0 %v1651
        %1655 = vmatprep.subr.bf16.mxu0 0
        %1656 = vmatpush1.bf16.xpose.msra.mxu0 0
        %1657 = vmatprep.subr.bf16.mxu0 0
        %1658 = vmatpush1.bf16.xpose.msra.mxu0 0
        %1659 = vmatprep.subr.bf16.mxu0 0
        %1660 = vmatpush1.bf16.xpose.msra.mxu0 0
        %1661 = vmatprep.subr.bf16.mxu0 0
        %1662 = vmatpush1.bf16.xpose.msra.mxu0 0
        %1663 = vmatprep.subr.bf16.mxu0 0
        %1664 = vmatpush1.bf16.xpose.msra.mxu0 0
        %1665 = vmatprep.subr.bf16.mxu0 0
        %1666 = vmatpush1.bf16.xpose.msra.mxu0 0
        %1667 = vmatprep.subr.bf16.mxu0 0
        %1668 = vmatpush1.bf16.xpose.msra.mxu0 0
        %1669 = vmatprep.subr.bf16.mxu0 0
        %1670 = vmatpush1.bf16.xpose.msra.mxu0 0
        %1671 = vmatprep.subr.bf16.mxu0 0
        %1672 = vmatpush1.bf16.xpose.msra.mxu0 0
        %1673 = vmatprep.subr.bf16.mxu0 0
        %1674 = vmatpush1.bf16.xpose.msra.mxu0 0
        %1675 = vmatprep.subr.bf16.mxu0 0
        %1676 = vmatpush1.bf16.xpose.msra.mxu0 0
        %1677 = vmatprep.subr.bf16.mxu0 0
        %1678 = vmatpush1.bf16.xpose.msra.mxu0 0
        %1679 = vmatprep.subr.bf16.mxu0 0
        %1680 = vmatpush1.bf16.xpose.msra.mxu0 0
        %1681 = vmatprep.subr.bf16.mxu0 0
        %1682 = vmatpush1.bf16.xpose.msra.mxu0 0
        %1683 = vmatprep.subr.bf16.mxu0 0
        %1684 = vmatpush1.bf16.xpose.msra.mxu0 0
        %1685 = vmatprep.mubr.bf16.mxu0 0
        %1686 = vmatmul.mubr.bf16.gmra.mrb[0].mxu0 %v1648
        %v1687 = vpop.f32.mrb[0].mxu0
        %v1688 = vadd.f32 0.0, %v1687
        %v1689 = vpop.f32.mrb[0].mxu0
        %v1690 = vpop.f32.mrb[0].mxu0
        %v1691 = vpop.f32.mrb[0].mxu0
        %1692 = vdwg.mxu0
        %v1693 = vsel %vm1576, %v1688, -inf
        %1694 = vmax.xlane.f32.xlu0 %v1693
        %v1695 = vpop.xlane.xlu0 %1694
        %v1696 = vsub.f32 %v1688, %v1695
        %v1697 = vmul.f32 %v1696, 1.442695
        %v1698 = vpow.pop %v1697
        %v1699 = vsel %vm1576, %v1698, 0.0
        %1700 = vadd.xlane.f32.xlu0 %v1699
        %v1701 = vpop.xlane.xlu0 %1700
        %v1702 = vrcp.pop %v1701
        %v1703 = vmul.f32 %v1698, %v1702
        %v1704 = vpack.c.bf16 %v1703, %v1703
        %1705 = vrot.lane.b32.xlu0 %v1589, 80
        %v1706 = vpop.permute.xlu0 %1705
        %v1708 = vsel %vm586, %v1704, 0
        %v1711 = vsel %vm1596, %v1706, 0
        %1713 = vmatprep.subr.bf16.mxu0 0
        %1714 = vmatpush1.bf16.msra.mxu0 %v1711
        %1715 = vmatprep.subr.bf16.mxu0 0
        %1716 = vmatpush1.bf16.msra.mxu0 0
        %1717 = vmatprep.subr.bf16.mxu0 0
        %1718 = vmatpush1.bf16.msra.mxu0 0
        %1719 = vmatprep.subr.bf16.mxu0 0
        %1720 = vmatpush1.bf16.msra.mxu0 0
        %1721 = vmatprep.subr.bf16.mxu0 0
        %1722 = vmatpush1.bf16.msra.mxu0 0
        %1723 = vmatprep.subr.bf16.mxu0 0
        %1724 = vmatpush1.bf16.msra.mxu0 0
        %1725 = vmatprep.subr.bf16.mxu0 0
        %1726 = vmatpush1.bf16.msra.mxu0 0
        %1727 = vmatprep.subr.bf16.mxu0 0
        %1728 = vmatpush1.bf16.msra.mxu0 0
        %1729 = vmatprep.subr.bf16.mxu0 0
        %1730 = vmatpush1.bf16.msra.mxu0 0
        %1731 = vmatprep.subr.bf16.mxu0 0
        %1732 = vmatpush1.bf16.msra.mxu0 0
        %1733 = vmatprep.subr.bf16.mxu0 0
        %1734 = vmatpush1.bf16.msra.mxu0 0
        %1735 = vmatprep.subr.bf16.mxu0 0
        %1736 = vmatpush1.bf16.msra.mxu0 0
        %1737 = vmatprep.subr.bf16.mxu0 0
        %1738 = vmatpush1.bf16.msra.mxu0 0
        %1739 = vmatprep.subr.bf16.mxu0 0
        %1740 = vmatpush1.bf16.msra.mxu0 0
        %1741 = vmatprep.subr.bf16.mxu0 0
        %1742 = vmatpush1.bf16.msra.mxu0 0
        %1743 = vmatprep.subr.bf16.mxu0 0
        %1744 = vmatpush1.bf16.msra.mxu0 0
        %1745 = vmatprep.mubr.bf16.mxu0 0
        %1746 = vmatmul.mubr.bf16.gmra.mrb[0].mxu0 %v1708
        %v1747 = vpop.f32.mrb[0].mxu0
        %v1748 = vadd.f32 0.0, %v1747
        %v1749 = vpop.f32.mrb[0].mxu0
        %v1750 = vpop.f32.mrb[0].mxu0
        %v1751 = vpop.f32.mrb[0].mxu0
        %1752 = vdwg.mxu0
        %v1753 = vpack.c.bf16 %v1748, %v1748
        %v1758 = vunpack.c.l.b16 %v1523
        %v1759 = vunpack.c.l.b16 %v1524
        %v1760 = vunpack.c.l.b16 %v1525
        %v1761 = vunpack.c.l.b16 %v1526
        %v1762 = vpack.c.b16 %v1759, %v1758
        %v1763 = vpack.c.b16 %v1761, %v1760
        %1764 = vrot.lane.b32.xlu0 %v1762, 112
        %v1765 = vpop.permute.xlu0 %1764
        %1766 = vrot.lane.b32.xlu0 %v1763, 112
        %v1767 = vpop.permute.xlu0 %1766
        %v1769 = vsel %vm982, %v1753, 0
        %v1772 = vsel %vm982, %v1765, 0
        %v1775 = vsel %vm982, %v1767, 0
        %1777 = vmatprep.subr.bf16.mxu0 0
        %1778 = vmatpush1.bf16.xpose.msra.mxu0 %v1772
        %1779 = vmatprep.subr.bf16.mxu0 0
        %1780 = vmatpush1.bf16.xpose.msra.mxu0 %v1775
        %1781 = vmatprep.subr.bf16.mxu0 0
        %1782 = vmatpush1.bf16.xpose.msra.mxu0 0
        %1783 = vmatprep.subr.bf16.mxu0 0
        %1784 = vmatpush1.bf16.xpose.msra.mxu0 0
        %1785 = vmatprep.subr.bf16.mxu0 0
        %1786 = vmatpush1.bf16.xpose.msra.mxu0 0
        %1787 = vmatprep.subr.bf16.mxu0 0
        %1788 = vmatpush1.bf16.xpose.msra.mxu0 0
        %1789 = vmatprep.subr.bf16.mxu0 0
        %1790 = vmatpush1.bf16.xpose.msra.mxu0 0
        %1791 = vmatprep.subr.bf16.mxu0 0
        %1792 = vmatpush1.bf16.xpose.msra.mxu0 0
        %1793 = vmatprep.subr.bf16.mxu0 0
        %1794 = vmatpush1.bf16.xpose.msra.mxu0 0
        %1795 = vmatprep.subr.bf16.mxu0 0
        %1796 = vmatpush1.bf16.xpose.msra.mxu0 0
        %1797 = vmatprep.subr.bf16.mxu0 0
        %1798 = vmatpush1.bf16.xpose.msra.mxu0 0
        %1799 = vmatprep.subr.bf16.mxu0 0
        %1800 = vmatpush1.bf16.xpose.msra.mxu0 0
        %1801 = vmatprep.subr.bf16.mxu0 0
        %1802 = vmatpush1.bf16.xpose.msra.mxu0 0
        %1803 = vmatprep.subr.bf16.mxu0 0
        %1804 = vmatpush1.bf16.xpose.msra.mxu0 0
        %1805 = vmatprep.subr.bf16.mxu0 0
        %1806 = vmatpush1.bf16.xpose.msra.mxu0 0
        %1807 = vmatprep.subr.bf16.mxu0 0
        %1808 = vmatpush1.bf16.xpose.msra.mxu0 0
        %1809 = vmatprep.mubr.bf16.mxu0 0
        %1810 = vmatmul.mubr.bf16.gmra.mrb[0].mxu0 %v1769
        %v1811 = vpop.f32.mrb[0].mxu0
        %v1812 = vadd.f32 0.0, %v1811
        %v1813 = vpop.f32.mrb[0].mxu0
        %v1814 = vpop.f32.mrb[0].mxu0
        %v1815 = vpop.f32.mrb[0].mxu0
        %1816 = vdwg.mxu0
        %v1818 = vsel %vm982, %v1640, 0
        %v1821 = vsel %vm982, %v1762, 0
        %v1824 = vsel %vm982, %v1763, 0
        %1826 = vmatprep.subr.bf16.mxu0 0
        %1827 = vmatpush1.bf16.xpose.msra.mxu0 %v1821
        %1828 = vmatprep.subr.bf16.mxu0 0
        %1829 = vmatpush1.bf16.xpose.msra.mxu0 %v1824
        %1830 = vmatprep.subr.bf16.mxu0 0
        %1831 = vmatpush1.bf16.xpose.msra.mxu0 0
        %1832 = vmatprep.subr.bf16.mxu0 0
        %1833 = vmatpush1.bf16.xpose.msra.mxu0 0
        %1834 = vmatprep.subr.bf16.mxu0 0
        %1835 = vmatpush1.bf16.xpose.msra.mxu0 0
        %1836 = vmatprep.subr.bf16.mxu0 0
        %1837 = vmatpush1.bf16.xpose.msra.mxu0 0
        %1838 = vmatprep.subr.bf16.mxu0 0
        %1839 = vmatpush1.bf16.xpose.msra.mxu0 0
        %1840 = vmatprep.subr.bf16.mxu0 0
        %1841 = vmatpush1.bf16.xpose.msra.mxu0 0
        %1842 = vmatprep.subr.bf16.mxu0 0
        %1843 = vmatpush1.bf16.xpose.msra.mxu0 0
        %1844 = vmatprep.subr.bf16.mxu0 0
        %1845 = vmatpush1.bf16.xpose.msra.mxu0 0
        %1846 = vmatprep.subr.bf16.mxu0 0
        %1847 = vmatpush1.bf16.xpose.msra.mxu0 0
        %1848 = vmatprep.subr.bf16.mxu0 0
        %1849 = vmatpush1.bf16.xpose.msra.mxu0 0
        %1850 = vmatprep.subr.bf16.mxu0 0
        %1851 = vmatpush1.bf16.xpose.msra.mxu0 0
        %1852 = vmatprep.subr.bf16.mxu0 0
        %1853 = vmatpush1.bf16.xpose.msra.mxu0 0
        %1854 = vmatprep.subr.bf16.mxu0 0
        %1855 = vmatpush1.bf16.xpose.msra.mxu0 0
        %1856 = vmatprep.subr.bf16.mxu0 0
        %1857 = vmatpush1.bf16.xpose.msra.mxu0 0
        %1858 = vmatprep.mubr.bf16.mxu0 0
        %1859 = vmatmul.mubr.bf16.gmra.mrb[0].mxu0 %v1818
        %v1860 = vpop.f32.mrb[0].mxu0
        %v1861 = vadd.f32 %v1812, %v1860
        %v1862 = vpop.f32.mrb[0].mxu0
        %v1863 = vpop.f32.mrb[0].mxu0
        %v1864 = vpop.f32.mrb[0].mxu0
        %1865 = vdwg.mxu0
        %v1866 = vlaneseq
        %v1867 = vshrl.u32 %v1866, 7
        %v1868 = vsub.s32 0, %v1867
        %v1869 = vrot.slane %v1527, %v1868
        %v1870 = vadd.f32 %v1861, %v1869
        %v1871 = vadd.f32 %v1353, %v1870
        %v1872 = vld [vmem:[#allocation6 + $0x27] sm:$0x1]
        %v1873 = vld [vmem:[#allocation6 + $0x28] sm:$0x1]
        %v1874 = vsel %vm1327, %v1871, 0.0
        %1875 = vadd.xlane.f32.xlu0 %v1874
        %v1876 = vpop.xlane.xlu0 %1875
        %v1877 = vmul.f32 %v1876, %v1331
        %v1878 = vmul.f32 %v1871, %v1871
        %v1879 = vsel %vm1327, %v1878, 0.0
        %1880 = vadd.xlane.f32.xlu0 %v1879
        %v1881 = vpop.xlane.xlu0 %1880
        %v1882 = vmul.f32 %v1881, %v1331
        %v1883 = vsub.f32 %v1871, %v1877
        %v1884 = vmul.f32 %v1877, %v1877
        %v1885 = vsub.f32 %v1882, %v1884
        %v1886 = vadd.f32 %v1885, 1e-05
        %v1887 = vrsqrt.pop %v1886
        %v1888 = vmul.f32 %v1883, %v1887
        %v1889 = vlaneseq
        %v1890 = vshrl.u32 %v1889, 7
        %v1891 = vsub.s32 0, %v1890
        %v1892 = vrot.slane %v1872, %v1891
        %v1893 = vmul.f32 %v1888, %v1892
        %v1894 = vlaneseq
        %v1895 = vshrl.u32 %v1894, 7
        %v1896 = vsub.s32 0, %v1895
        %v1897 = vrot.slane %v1873, %v1896
        %v1898 = vadd.f32 %v1893, %v1897
        %v1899 = vld [vmem:[#allocation4 + $0xc0] sm:$0xf]
        %v1900 = vld [vmem:[#allocation4 + $0xc4] sm:$0xf]
        %v1901 = vld [vmem:[#allocation4 + $0xc8] sm:$0xf]
        %v1902 = vld [vmem:[#allocation4 + $0xcc] sm:$0xf]
        %v1903 = vld [vmem:[#allocation4 + $0xd0] sm:$0xf]
        %v1904 = vld [vmem:[#allocation4 + $0xd4] sm:$0xf]
        %v1905 = vld [vmem:[#allocation4 + $0xd8] sm:$0xf]
        %v1906 = vld [vmem:[#allocation4 + $0xdc] sm:$0xf]
        %v1907 = vpack.c.bf16 %v1898, %v1898
        %v1908 = vld [vmem:[%s6] sm:$0x1]
        %v1909 = vlaneseq
        %v1910 = vshrl.u32 %v1909, 7
        %v1911 = vsub.s32 0, %v1910
        %v1912 = vrot.slane %v1908, %v1911
        %v1921 = vunpack.c.l.b16 %v1899
        %v1922 = vunpack.c.l.b16 %v1900
        %v1923 = vunpack.c.l.b16 %v1901
        %v1924 = vunpack.c.l.b16 %v1902
        %v1925 = vunpack.c.l.b16 %v1903
        %v1926 = vunpack.c.l.b16 %v1904
        %v1927 = vunpack.c.l.b16 %v1905
        %v1928 = vunpack.c.l.b16 %v1906
        %v1929 = vpack.c.b16 %v1922, %v1921
        %v1930 = vpack.c.b16 %v1924, %v1923
        %v1931 = vpack.c.b16 %v1926, %v1925
        %v1932 = vpack.c.b16 %v1928, %v1927
        %v1934 = vsel %vm884, %v1907, 0
        %v1937 = vsel %vm884, %v1929, 0
        %v1940 = vsel %vm884, %v1930, 0
        %v1943 = vsel %vm884, %v1931, 0
        %v1946 = vsel %vm884, %v1932, 0
        %1948 = vmatprep.subr.bf16.mxu0 0
        %1949 = vmatpush1.bf16.xpose.msra.mxu0 %v1937
        %1950 = vmatprep.subr.bf16.mxu0 0
        %1951 = vmatpush1.bf16.xpose.msra.mxu0 %v1940
        %1952 = vmatprep.subr.bf16.mxu0 0
        %1953 = vmatpush1.bf16.xpose.msra.mxu0 %v1943
        %1954 = vmatprep.subr.bf16.mxu0 0
        %1955 = vmatpush1.bf16.xpose.msra.mxu0 %v1946
        %1956 = vmatprep.subr.bf16.mxu0 0
        %1957 = vmatpush1.bf16.xpose.msra.mxu0 0
        %1958 = vmatprep.subr.bf16.mxu0 0
        %1959 = vmatpush1.bf16.xpose.msra.mxu0 0
        %1960 = vmatprep.subr.bf16.mxu0 0
        %1961 = vmatpush1.bf16.xpose.msra.mxu0 0
        %1962 = vmatprep.subr.bf16.mxu0 0
        %1963 = vmatpush1.bf16.xpose.msra.mxu0 0
        %1964 = vmatprep.subr.bf16.mxu0 0
        %1965 = vmatpush1.bf16.xpose.msra.mxu0 0
        %1966 = vmatprep.subr.bf16.mxu0 0
        %1967 = vmatpush1.bf16.xpose.msra.mxu0 0
        %1968 = vmatprep.subr.bf16.mxu0 0
        %1969 = vmatpush1.bf16.xpose.msra.mxu0 0
        %1970 = vmatprep.subr.bf16.mxu0 0
        %1971 = vmatpush1.bf16.xpose.msra.mxu0 0
        %1972 = vmatprep.subr.bf16.mxu0 0
        %1973 = vmatpush1.bf16.xpose.msra.mxu0 0
        %1974 = vmatprep.subr.bf16.mxu0 0
        %1975 = vmatpush1.bf16.xpose.msra.mxu0 0
        %1976 = vmatprep.subr.bf16.mxu0 0
        %1977 = vmatpush1.bf16.xpose.msra.mxu0 0
        %1978 = vmatprep.subr.bf16.mxu0 0
        %1979 = vmatpush1.bf16.xpose.msra.mxu0 0
        %1980 = vmatprep.mubr.bf16.mxu0 0
        %1981 = vmatmul.mubr.bf16.gmra.mrb[0].mxu0 %v1934
        %v1982 = vpop.f32.mrb[0].mxu0
        %v1983 = vadd.f32 %v1912, %v1982
        %v1984 = vpop.f32.mrb[0].mxu0
        %v1985 = vpop.f32.mrb[0].mxu0
        %v1986 = vpop.f32.mrb[0].mxu0
        %1987 = vdwg.mxu0
        %v1988 = vmax.f32 %v1983, 0.0
        %v1989 = vld [vmem:[#allocation4 + $0xe0] sm:$0xf]
        %v1990 = vld [vmem:[#allocation4 + $0xe4] sm:$0xf]
        %v1991 = vld [vmem:[#allocation4 + $0xe8] sm:$0xf]
        %v1992 = vld [vmem:[#allocation4 + $0xec] sm:$0xf]
        %v1993 = vld [vmem:[#allocation4 + $0xf0] sm:$0xf]
        %v1994 = vld [vmem:[#allocation4 + $0xf4] sm:$0xf]
        %v1995 = vld [vmem:[#allocation4 + $0xf8] sm:$0xf]
        %v1996 = vld [vmem:[#allocation4 + $0xfc] sm:$0xf]
        %v1997 = vpack.c.bf16 %v1988, %v1988
        %v2006 = vunpack.c.l.b16 %v1989
        %v2007 = vunpack.c.l.b16 %v1990
        %v2008 = vunpack.c.l.b16 %v1991
        %v2009 = vunpack.c.l.b16 %v1992
        %v2010 = vunpack.c.l.b16 %v1993
        %v2011 = vunpack.c.l.b16 %v1994
        %v2012 = vunpack.c.l.b16 %v1995
        %v2013 = vunpack.c.l.b16 %v1996
        %v2014 = vpack.c.b16 %v2007, %v2006
        %v2015 = vpack.c.b16 %v2009, %v2008
        %v2016 = vpack.c.b16 %v2011, %v2010
        %v2017 = vpack.c.b16 %v2013, %v2012
        %vm2022 = vcmask 523264
        %v2024 = vsel %vm2022, %v1997, 0
        %2026 = vmatprep.subr.bf16.mxu0 0
        %2027 = vmatpush1.bf16.msra.mxu0 %v2014
        %2028 = vmatprep.subr.bf16.mxu0 0
        %2029 = vmatpush1.bf16.msra.mxu0 %v2015
        %2030 = vmatprep.subr.bf16.mxu0 0
        %2031 = vmatpush1.bf16.msra.mxu0 %v2016
        %2032 = vmatprep.subr.bf16.mxu0 0
        %2033 = vmatpush1.bf16.msra.mxu0 %v2017
        %2034 = vmatprep.subr.bf16.mxu0 0
        %2035 = vmatpush1.bf16.msra.mxu0 0
        %2036 = vmatprep.subr.bf16.mxu0 0
        %2037 = vmatpush1.bf16.msra.mxu0 0
        %2038 = vmatprep.subr.bf16.mxu0 0
        %2039 = vmatpush1.bf16.msra.mxu0 0
        %2040 = vmatprep.subr.bf16.mxu0 0
        %2041 = vmatpush1.bf16.msra.mxu0 0
        %2042 = vmatprep.subr.bf16.mxu0 0
        %2043 = vmatpush1.bf16.msra.mxu0 0
        %2044 = vmatprep.subr.bf16.mxu0 0
        %2045 = vmatpush1.bf16.msra.mxu0 0
        %2046 = vmatprep.subr.bf16.mxu0 0
        %2047 = vmatpush1.bf16.msra.mxu0 0
        %2048 = vmatprep.subr.bf16.mxu0 0
        %2049 = vmatpush1.bf16.msra.mxu0 0
        %2050 = vmatprep.subr.bf16.mxu0 0
        %2051 = vmatpush1.bf16.msra.mxu0 0
        %2052 = vmatprep.subr.bf16.mxu0 0
        %2053 = vmatpush1.bf16.msra.mxu0 0
        %2054 = vmatprep.subr.bf16.mxu0 0
        %2055 = vmatpush1.bf16.msra.mxu0 0
        %2056 = vmatprep.subr.bf16.mxu0 0
        %2057 = vmatpush1.bf16.msra.mxu0 0
        %2058 = vmatprep.mubr.bf16.mxu0 0
        %2059 = vmatmul.mubr.bf16.gmra.mrb[0].mxu0 %v2024
        %v2060 = vpop.f32.mrb[0].mxu0
        %v2061 = vadd.f32 0.0, %v2060
        %v2062 = vpop.f32.mrb[0].mxu0
        %v2063 = vpop.f32.mrb[0].mxu0
        %v2064 = vpop.f32.mrb[0].mxu0
        %2065 = vdwg.mxu0
        %v2066 = vadd.f32 %v1898, %v2061
        %v2067 = vld [vmem:[#allocation6 + $0x24] sm:$0x1]
        %v2068 = vlaneseq
        %v2069 = vshrl.u32 %v2068, 7
        %v2070 = vsub.s32 0, %v2069
        %v2071 = vrot.slane %v2067, %v2070
        %v2072 = vadd.f32 %v2066, %v2071
        %v2073 = vld [vmem:[#allocation6 + $0x29] sm:$0x1]
        %v2074 = vld [vmem:[#allocation6 + $0x2a] sm:$0x1]
        %v2075 = vsel %vm1327, %v2072, 0.0
        %2076 = vadd.xlane.f32.xlu0 %v2075
        %v2077 = vpop.xlane.xlu0 %2076
        %v2078 = vmul.f32 %v2077, %v1331
        %v2079 = vmul.f32 %v2072, %v2072
        %v2080 = vsel %vm1327, %v2079, 0.0
        %2081 = vadd.xlane.f32.xlu0 %v2080
        %v2082 = vpop.xlane.xlu0 %2081
        %v2083 = vmul.f32 %v2082, %v1331
        %v2084 = vsub.f32 %v2072, %v2078
        %v2085 = vmul.f32 %v2078, %v2078
        %v2086 = vsub.f32 %v2083, %v2085
        %v2087 = vadd.f32 %v2086, 1e-05
        %v2088 = vrsqrt.pop %v2087
        %v2089 = vmul.f32 %v2084, %v2088
        %v2090 = vlaneseq
        %v2091 = vshrl.u32 %v2090, 7
        %v2092 = vsub.s32 0, %v2091
        %v2093 = vrot.slane %v2073, %v2092
        %v2094 = vmul.f32 %v2089, %v2093
        %v2095 = vlaneseq
        %v2096 = vshrl.u32 %v2095, 7
        %v2097 = vsub.s32 0, %v2096
        %v2098 = vrot.slane %v2074, %v2097
        %v2099 = vadd.f32 %v2094, %v2098
        %v2100 = vld [vmem:[#allocation6 + $0x2b] sm:$0x1]
        %v2101 = vld [vmem:[#allocation6 + $0x2c] sm:$0x1]
        %v2102 = vsel %vm1327, %v2099, 0.0
        %2103 = vadd.xlane.f32.xlu0 %v2102
        %v2104 = vpop.xlane.xlu0 %2103
        %v2105 = vmul.f32 %v2104, %v1331
        %v2106 = vmul.f32 %v2099, %v2099
        %v2107 = vsel %vm1327, %v2106, 0.0
        %2108 = vadd.xlane.f32.xlu0 %v2107
        %v2109 = vpop.xlane.xlu0 %2108
        %v2110 = vmul.f32 %v2109, %v1331
        %v2111 = vsub.f32 %v2099, %v2105
        %v2112 = vmul.f32 %v2105, %v2105
        %v2113 = vsub.f32 %v2110, %v2112
        %v2114 = vadd.f32 %v2113, 1e-05
        %v2115 = vrsqrt.pop %v2114
        %v2116 = vmul.f32 %v2111, %v2115
        %v2117 = vlaneseq
        %v2118 = vshrl.u32 %v2117, 7
        %v2119 = vsub.s32 0, %v2118
        %v2120 = vrot.slane %v2100, %v2119
        %v2121 = vmul.f32 %v2116, %v2120
        %v2122 = vlaneseq
        %v2123 = vshrl.u32 %v2122, 7
        %v2124 = vsub.s32 0, %v2123
        %v2125 = vrot.slane %v2101, %v2124
        %v2126 = vadd.f32 %v2121, %v2125
        %2127 = vst.msk [vmem:[#allocation2] sm:$0xff] %vm884, %v839
        %v2128 = vld [vmem:[#allocation6 + $0x18] sm:$0xf]
        %2129 = vst.msk [vmem:[#allocation2 + $0x8] sm:$0xf] %vm1327, %v2128
        %2130 = vst.msk [vmem:[#allocation2 + $0xc] sm:$0xf] %vm1327, %v2126
        %v2131 = vld [vmem:[#allocation2] sm:$0xff]
        %v2132 = vld [vmem:[#allocation2 + $0x8] sm:$0xf]
        %v2133 = vld [vmem:[#allocation2 + $0x8] sm:$0xff]
        %v2134 = vld [vmem:[#allocation9] sm:$0xff]
        %v2135 = vld [vmem:[#allocation9 + $0x8] sm:$0xf]
        %v2136 = vld [vmem:[#allocation11] sm:$0xff]
        %v2137 = vld [vmem:[#allocation11 + $0x8] sm:$0xf]
        %v2138 = vld [vmem:[#allocation4 + $0x100] sm:$0xf]
        %v2139 = vld [vmem:[#allocation4 + $0x104] sm:$0xf]
        %v2140 = vld [vmem:[#allocation4 + $0x108] sm:$0xf]
        %v2141 = vld [vmem:[#allocation4 + $0x10c] sm:$0xf]
        %v2142 = vld [vmem:[#allocation4 + $0x110] sm:$0xf]
        %v2143 = vld [vmem:[#allocation4 + $0x114] sm:$0xf]
        %v2144 = vld [vmem:[#allocation4 + $0x118] sm:$0xf]
        %v2145 = vld [vmem:[#allocation4 + $0x11c] sm:$0xf]
        %v2146 = vld [vmem:[#allocation4 + $0x120] sm:$0xf]
        %v2147 = vld [vmem:[#allocation4 + $0x124] sm:$0xf]
        %v2148 = vld [vmem:[#allocation4 + $0x128] sm:$0xf]
        %v2149 = vld [vmem:[#allocation4 + $0x12c] sm:$0xf]
        %v2150 = vpack.c.bf16 %v2132, %v2131
        %v2163 = vunpack.c.l.b16 %v2138
        %v2164 = vunpack.c.l.b16 %v2139
        %v2165 = vunpack.c.l.b16 %v2140
        %v2166 = vunpack.c.l.b16 %v2141
        %v2167 = vunpack.c.l.b16 %v2142
        %v2168 = vunpack.c.l.b16 %v2143
        %v2169 = vunpack.c.l.b16 %v2144
        %v2170 = vunpack.c.l.b16 %v2145
        %v2171 = vunpack.c.l.b16 %v2146
        %v2172 = vunpack.c.l.b16 %v2147
        %v2173 = vunpack.c.l.b16 %v2148
        %v2174 = vunpack.c.l.b16 %v2149
        %v2175 = vpack.c.b16 %v2164, %v2163
        %v2176 = vpack.c.b16 %v2166, %v2165
        %v2177 = vpack.c.b16 %v2168, %v2167
        %v2178 = vpack.c.b16 %v2170, %v2169
        %v2179 = vpack.c.b16 %v2172, %v2171
        %v2180 = vpack.c.b16 %v2174, %v2173
        %v2182 = vsel %vm884, %v2150, 0
        %v2185 = vsel %vm884, %v2175, 0
        %v2188 = vsel %vm884, %v2176, 0
        %v2191 = vsel %vm884, %v2177, 0
        %v2194 = vsel %vm884, %v2178, 0
        %v2197 = vsel %vm884, %v2179, 0
        %v2200 = vsel %vm884, %v2180, 0
        %2202 = vmatprep.subr.bf16.mxu0 0
        %2203 = vmatpush1.bf16.xpose.msra.mxu0 %v2185
        %2204 = vmatprep.subr.bf16.mxu0 0
        %2205 = vmatpush1.bf16.xpose.msra.mxu0 %v2188
        %2206 = vmatprep.subr.bf16.mxu0 0
        %2207 = vmatpush1.bf16.xpose.msra.mxu0 %v2191
        %2208 = vmatprep.subr.bf16.mxu0 0
        %2209 = vmatpush1.bf16.xpose.msra.mxu0 %v2194
        %2210 = vmatprep.subr.bf16.mxu0 0
        %2211 = vmatpush1.bf16.xpose.msra.mxu0 %v2197
        %2212 = vmatprep.subr.bf16.mxu0 0
        %2213 = vmatpush1.bf16.xpose.msra.mxu0 %v2200
        %2214 = vmatprep.subr.bf16.mxu0 0
        %2215 = vmatpush1.bf16.xpose.msra.mxu0 0
        %2216 = vmatprep.subr.bf16.mxu0 0
        %2217 = vmatpush1.bf16.xpose.msra.mxu0 0
        %2218 = vmatprep.subr.bf16.mxu0 0
        %2219 = vmatpush1.bf16.xpose.msra.mxu0 0
        %2220 = vmatprep.subr.bf16.mxu0 0
        %2221 = vmatpush1.bf16.xpose.msra.mxu0 0
        %2222 = vmatprep.subr.bf16.mxu0 0
        %2223 = vmatpush1.bf16.xpose.msra.mxu0 0
        %2224 = vmatprep.subr.bf16.mxu0 0
        %2225 = vmatpush1.bf16.xpose.msra.mxu0 0
        %2226 = vmatprep.subr.bf16.mxu0 0
        %2227 = vmatpush1.bf16.xpose.msra.mxu0 0
        %2228 = vmatprep.subr.bf16.mxu0 0
        %2229 = vmatpush1.bf16.xpose.msra.mxu0 0
        %2230 = vmatprep.subr.bf16.mxu0 0
        %2231 = vmatpush1.bf16.xpose.msra.mxu0 0
        %2232 = vmatprep.subr.bf16.mxu0 0
        %2233 = vmatpush1.bf16.xpose.msra.mxu0 0
        %2234 = vmatprep.mubr.bf16.mxu0 0
        %2235 = vmatmul.mubr.bf16.gmra.mrb[0].mxu0 %v2182
        %v2236 = vpop.f32.mrb[0].mxu0
        %v2237 = vadd.f32 0.0, %v2236
        %v2238 = vpop.f32.mrb[0].mxu0
        %v2239 = vpop.f32.mrb[0].mxu0
        %v2240 = vadd.f32 0.0, %v2239
        %v2241 = vpop.f32.mrb[0].mxu0
        %2242 = vdwg.mxu0
        %v2243 = vld [vmem:[#allocation6 + $0x2d] sm:$0x1]
        %v2244 = vlaneseq
        %v2245 = vshrl.u32 %v2244, 7
        %v2246 = vsub.s32 0, %v2245
        %v2247 = vrot.slane %v2243, %v2246
        %v2248 = vadd.f32 %v2237, %v2247
        %v2249 = vadd.f32 %v2240, %v2247
        %v2250 = vld [vmem:[#allocation6 + $0x2e] sm:$0x1]
        %v2251 = vlaneseq
        %v2252 = vshrl.u32 %v2251, 7
        %v2253 = vsub.s32 0, %v2252
        %v2254 = vrot.slane %v2250, %v2253
        %2256 = vrot.lane.b32.xlu0 %v2254, 32
        %v2257 = vpop.permute.xlu0 %2256
        %v2259 = vadd.f32 %v2237, %v2257
        %v2260 = vadd.f32 %v2240, %v2257
        %v2261 = vld [vmem:[#allocation6 + $0x2f] sm:$0x1]
        %v2262 = vlaneseq
        %v2263 = vshrl.u32 %v2262, 7
        %v2264 = vsub.s32 0, %v2263
        %v2265 = vrot.slane %v2261, %v2264
        %2267 = vrot.lane.b32.xlu0 %v2265, 64
        %v2268 = vpop.permute.xlu0 %2267
        %v2270 = vadd.f32 %v2237, %v2268
        %v2271 = vadd.f32 %v2240, %v2268
        %v2272 = vld [vmem:[#allocation4 + $0x130] sm:$0xf]
        %v2273 = vld [vmem:[#allocation4 + $0x134] sm:$0xf]
        %v2274 = vld [vmem:[#allocation4 + $0x138] sm:$0xf]
        %v2275 = vld [vmem:[#allocation4 + $0x13c] sm:$0xf]
        %v2276 = vld [vmem:[#allocation6 + $0x30] sm:$0x1]
        %v2277 = vpack.c.bf16 %v2249, %v2248
        %v2278 = vpack.c.bf16 %v2260, %v2259
        %2280 = vrot.lane.b32.xlu0 %v2278, 96
        %v2281 = vpop.permute.xlu0 %2280
        %v2283 = vsel %vm982, %v2277, 0
        %v2286 = vsel %vm982, %v2281, 0
        %2288 = vmatprep.subr.bf16.mxu0 0
        %2289 = vmatpush1.bf16.xpose.msra.mxu0 %v2286
        %2290 = vmatprep.subr.bf16.mxu0 0
        %2291 = vmatpush1.bf16.xpose.msra.mxu0 0
        %2292 = vmatprep.subr.bf16.mxu0 0
        %2293 = vmatpush1.bf16.xpose.msra.mxu0 0
        %2294 = vmatprep.subr.bf16.mxu0 0
        %2295 = vmatpush1.bf16.xpose.msra.mxu0 0
        %2296 = vmatprep.subr.bf16.mxu0 0
        %2297 = vmatpush1.bf16.xpose.msra.mxu0 0
        %2298 = vmatprep.subr.bf16.mxu0 0
        %2299 = vmatpush1.bf16.xpose.msra.mxu0 0
        %2300 = vmatprep.subr.bf16.mxu0 0
        %2301 = vmatpush1.bf16.xpose.msra.mxu0 0
        %2302 = vmatprep.subr.bf16.mxu0 0
        %2303 = vmatpush1.bf16.xpose.msra.mxu0 0
        %2304 = vmatprep.subr.bf16.mxu0 0
        %2305 = vmatpush1.bf16.xpose.msra.mxu0 0
        %2306 = vmatprep.subr.bf16.mxu0 0
        %2307 = vmatpush1.bf16.xpose.msra.mxu0 0
        %2308 = vmatprep.subr.bf16.mxu0 0
        %2309 = vmatpush1.bf16.xpose.msra.mxu0 0
        %2310 = vmatprep.subr.bf16.mxu0 0
        %2311 = vmatpush1.bf16.xpose.msra.mxu0 0
        %2312 = vmatprep.subr.bf16.mxu0 0
        %2313 = vmatpush1.bf16.xpose.msra.mxu0 0
        %2314 = vmatprep.subr.bf16.mxu0 0
        %2315 = vmatpush1.bf16.xpose.msra.mxu0 0
        %2316 = vmatprep.subr.bf16.mxu0 0
        %2317 = vmatpush1.bf16.xpose.msra.mxu0 0
        %2318 = vmatprep.subr.bf16.mxu0 0
        %2319 = vmatpush1.bf16.xpose.msra.mxu0 0
        %2320 = vmatprep.mubr.bf16.mxu0 0
        %2321 = vmatmul.mubr.bf16.gmra.mrb[0].mxu0 %v2283
        %v2322 = vpop.f32.mrb[0].mxu0
        %v2323 = vadd.f32 %v2134, %v2322
        %v2324 = vpop.f32.mrb[0].mxu0
        %v2325 = vpop.f32.mrb[0].mxu0
        %v2326 = vadd.f32 %v2135, %v2325
        %v2327 = vpop.f32.mrb[0].mxu0
        %2328 = vdwg.mxu0
        %vm2329 = vcmask 97280
        %v2330 = vsel %vm2329, %v2323, -inf
        %2331 = vmax.xlane.f32.xlu0 %v2330
        %v2332 = vpop.xlane.xlu0 %2331
        %vm2333 = vcmask 93184
        %v2334 = vsel %vm2333, %v2326, -inf
        %2335 = vmax.xlane.f32.xlu0 %v2334
        %v2336 = vpop.xlane.xlu0 %2335
        %v2337 = vsub.f32 %v2323, %v2332
        %v2338 = vsub.f32 %v2326, %v2336
        %v2339 = vmul.f32 %v2337, 1.442695
        %v2340 = vpow.pop %v2339
        %v2341 = vmul.f32 %v2338, 1.442695
        %v2342 = vpow.pop %v2341
        %v2343 = vsel %vm2329, %v2340, 0.0
        %2344 = vadd.xlane.f32.xlu0 %v2343
        %v2345 = vpop.xlane.xlu0 %2344
        %v2346 = vsel %vm2333, %v2342, 0.0
        %2347 = vadd.xlane.f32.xlu0 %v2346
        %v2348 = vpop.xlane.xlu0 %2347
        %v2349 = vrcp.pop %v2345
        %v2350 = vrcp.pop %v2348
        %v2351 = vmul.f32 %v2340, %v2349
        %v2352 = vmul.f32 %v2342, %v2350
        %v2353 = vpack.c.bf16 %v2352, %v2351
        %v2354 = vpack.c.bf16 %v2271, %v2270
        %2356 = vrot.lane.b32.xlu0 %v2354, 64
        %v2357 = vpop.permute.xlu0 %2356
        %v2359 = vsel %vm2329, %v2353, 0
        %vm2361 = vcmask 1045504
        %v2363 = vsel %vm2361, %v2357, 0
        %2365 = vmatprep.subr.bf16.mxu0 0
        %2366 = vmatpush1.bf16.msra.mxu0 %v2363
        %2367 = vmatprep.subr.bf16.mxu0 0
        %2368 = vmatpush1.bf16.msra.mxu0 0
        %2369 = vmatprep.subr.bf16.mxu0 0
        %2370 = vmatpush1.bf16.msra.mxu0 0
        %2371 = vmatprep.subr.bf16.mxu0 0
        %2372 = vmatpush1.bf16.msra.mxu0 0
        %2373 = vmatprep.subr.bf16.mxu0 0
        %2374 = vmatpush1.bf16.msra.mxu0 0
        %2375 = vmatprep.subr.bf16.mxu0 0
        %2376 = vmatpush1.bf16.msra.mxu0 0
        %2377 = vmatprep.subr.bf16.mxu0 0
        %2378 = vmatpush1.bf16.msra.mxu0 0
        %2379 = vmatprep.subr.bf16.mxu0 0
        %2380 = vmatpush1.bf16.msra.mxu0 0
        %2381 = vmatprep.subr.bf16.mxu0 0
        %2382 = vmatpush1.bf16.msra.mxu0 0
        %2383 = vmatprep.subr.bf16.mxu0 0
        %2384 = vmatpush1.bf16.msra.mxu0 0
        %2385 = vmatprep.subr.bf16.mxu0 0
        %2386 = vmatpush1.bf16.msra.mxu0 0
        %2387 = vmatprep.subr.bf16.mxu0 0
        %2388 = vmatpush1.bf16.msra.mxu0 0
        %2389 = vmatprep.subr.bf16.mxu0 0
        %2390 = vmatpush1.bf16.msra.mxu0 0
        %2391 = vmatprep.subr.bf16.mxu0 0
        %2392 = vmatpush1.bf16.msra.mxu0 0
        %2393 = vmatprep.subr.bf16.mxu0 0
        %2394 = vmatpush1.bf16.msra.mxu0 0
        %2395 = vmatprep.subr.bf16.mxu0 0
        %2396 = vmatpush1.bf16.msra.mxu0 0
        %2397 = vmatprep.mubr.bf16.mxu0 0
        %2398 = vmatmul.mubr.bf16.gmra.mrb[0].mxu0 %v2359
        %v2399 = vpop.f32.mrb[0].mxu0
        %v2400 = vadd.f32 0.0, %v2399
        %v2401 = vpop.f32.mrb[0].mxu0
        %v2402 = vpop.f32.mrb[0].mxu0
        %v2403 = vadd.f32 0.0, %v2402
        %v2404 = vpop.f32.mrb[0].mxu0
        %2405 = vdwg.mxu0
        %v2406 = vpack.c.bf16 %v2403, %v2400
        %2408 = vrot.lane.b32.xlu0 %v2277, 112
        %v2409 = vpop.permute.xlu0 %2408
        %2410 = vrot.lane.b32.xlu0 %v2278, 80
        %v2411 = vpop.permute.xlu0 %2410
        %v2413 = vsel %vm982, %v2409, 0
        %v2416 = vsel %vm982, %v2411, 0
        %2418 = vmatprep.subr.bf16.mxu0 0
        %2419 = vmatpush1.bf16.xpose.msra.mxu0 %v2416
        %2420 = vmatprep.subr.bf16.mxu0 0
        %2421 = vmatpush1.bf16.xpose.msra.mxu0 0
        %2422 = vmatprep.subr.bf16.mxu0 0
        %2423 = vmatpush1.bf16.xpose.msra.mxu0 0
        %2424 = vmatprep.subr.bf16.mxu0 0
        %2425 = vmatpush1.bf16.xpose.msra.mxu0 0
        %2426 = vmatprep.subr.bf16.mxu0 0
        %2427 = vmatpush1.bf16.xpose.msra.mxu0 0
        %2428 = vmatprep.subr.bf16.mxu0 0
        %2429 = vmatpush1.bf16.xpose.msra.mxu0 0
        %2430 = vmatprep.subr.bf16.mxu0 0
        %2431 = vmatpush1.bf16.xpose.msra.mxu0 0
        %2432 = vmatprep.subr.bf16.mxu0 0
        %2433 = vmatpush1.bf16.xpose.msra.mxu0 0
        %2434 = vmatprep.subr.bf16.mxu0 0
        %2435 = vmatpush1.bf16.xpose.msra.mxu0 0
        %2436 = vmatprep.subr.bf16.mxu0 0
        %2437 = vmatpush1.bf16.xpose.msra.mxu0 0
        %2438 = vmatprep.subr.bf16.mxu0 0
        %2439 = vmatpush1.bf16.xpose.msra.mxu0 0
        %2440 = vmatprep.subr.bf16.mxu0 0
        %2441 = vmatpush1.bf16.xpose.msra.mxu0 0
        %2442 = vmatprep.subr.bf16.mxu0 0
        %2443 = vmatpush1.bf16.xpose.msra.mxu0 0
        %2444 = vmatprep.subr.bf16.mxu0 0
        %2445 = vmatpush1.bf16.xpose.msra.mxu0 0
        %2446 = vmatprep.subr.bf16.mxu0 0
        %2447 = vmatpush1.bf16.xpose.msra.mxu0 0
        %2448 = vmatprep.subr.bf16.mxu0 0
        %2449 = vmatpush1.bf16.xpose.msra.mxu0 0
        %2450 = vmatprep.mubr.bf16.mxu0 0
        %2451 = vmatmul.mubr.bf16.gmra.mrb[0].mxu0 %v2413
        %v2452 = vpop.f32.mrb[0].mxu0
        %v2453 = vadd.f32 %v2134, %v2452
        %v2454 = vpop.f32.mrb[0].mxu0
        %v2455 = vpop.f32.mrb[0].mxu0
        %v2456 = vadd.f32 %v2135, %v2455
        %v2457 = vpop.f32.mrb[0].mxu0
        %2458 = vdwg.mxu0
        %v2459 = vsel %vm2329, %v2453, -inf
        %2460 = vmax.xlane.f32.xlu0 %v2459
        %v2461 = vpop.xlane.xlu0 %2460
        %v2462 = vsel %vm2333, %v2456, -inf
        %2463 = vmax.xlane.f32.xlu0 %v2462
        %v2464 = vpop.xlane.xlu0 %2463
        %v2465 = vsub.f32 %v2453, %v2461
        %v2466 = vsub.f32 %v2456, %v2464
        %v2467 = vmul.f32 %v2465, 1.442695
        %v2468 = vpow.pop %v2467
        %v2469 = vmul.f32 %v2466, 1.442695
        %v2470 = vpow.pop %v2469
        %v2471 = vsel %vm2329, %v2468, 0.0
        %2472 = vadd.xlane.f32.xlu0 %v2471
        %v2473 = vpop.xlane.xlu0 %2472
        %v2474 = vsel %vm2333, %v2470, 0.0
        %2475 = vadd.xlane.f32.xlu0 %v2474
        %v2476 = vpop.xlane.xlu0 %2475
        %v2477 = vrcp.pop %v2473
        %v2478 = vrcp.pop %v2476
        %v2479 = vmul.f32 %v2468, %v2477
        %v2480 = vmul.f32 %v2470, %v2478
        %v2481 = vpack.c.bf16 %v2480, %v2479
        %2482 = vrot.lane.b32.xlu0 %v2354, 48
        %v2483 = vpop.permute.xlu0 %2482
        %v2485 = vsel %vm2329, %v2481, 0
        %v2488 = vsel %vm2361, %v2483, 0
        %2490 = vmatprep.subr.bf16.mxu0 0
        %2491 = vmatpush1.bf16.msra.mxu0 %v2488
        %2492 = vmatprep.subr.bf16.mxu0 0
        %2493 = vmatpush1.bf16.msra.mxu0 0
        %2494 = vmatprep.subr.bf16.mxu0 0
        %2495 = vmatpush1.bf16.msra.mxu0 0
        %2496 = vmatprep.subr.bf16.mxu0 0
        %2497 = vmatpush1.bf16.msra.mxu0 0
        %2498 = vmatprep.subr.bf16.mxu0 0
        %2499 = vmatpush1.bf16.msra.mxu0 0
        %2500 = vmatprep.subr.bf16.mxu0 0
        %2501 = vmatpush1.bf16.msra.mxu0 0
        %2502 = vmatprep.subr.bf16.mxu0 0
        %2503 = vmatpush1.bf16.msra.mxu0 0
        %2504 = vmatprep.subr.bf16.mxu0 0
        %2505 = vmatpush1.bf16.msra.mxu0 0
        %2506 = vmatprep.subr.bf16.mxu0 0
        %2507 = vmatpush1.bf16.msra.mxu0 0
        %2508 = vmatprep.subr.bf16.mxu0 0
        %2509 = vmatpush1.bf16.msra.mxu0 0
        %2510 = vmatprep.subr.bf16.mxu0 0
        %2511 = vmatpush1.bf16.msra.mxu0 0
        %2512 = vmatprep.subr.bf16.mxu0 0
        %2513 = vmatpush1.bf16.msra.mxu0 0
        %2514 = vmatprep.subr.bf16.mxu0 0
        %2515 = vmatpush1.bf16.msra.mxu0 0
        %2516 = vmatprep.subr.bf16.mxu0 0
        %2517 = vmatpush1.bf16.msra.mxu0 0
        %2518 = vmatprep.subr.bf16.mxu0 0
        %2519 = vmatpush1.bf16.msra.mxu0 0
        %2520 = vmatprep.subr.bf16.mxu0 0
        %2521 = vmatpush1.bf16.msra.mxu0 0
        %2522 = vmatprep.mubr.bf16.mxu0 0
        %2523 = vmatmul.mubr.bf16.gmra.mrb[0].mxu0 %v2485
        %v2524 = vpop.f32.mrb[0].mxu0
        %v2525 = vadd.f32 0.0, %v2524
        %v2526 = vpop.f32.mrb[0].mxu0
        %v2527 = vpop.f32.mrb[0].mxu0
        %v2528 = vadd.f32 0.0, %v2527
        %v2529 = vpop.f32.mrb[0].mxu0
        %2530 = vdwg.mxu0
        %v2531 = vpack.c.bf16 %v2528, %v2525
        %v2536 = vunpack.c.l.b16 %v2272
        %v2537 = vunpack.c.l.b16 %v2273
        %v2538 = vunpack.c.l.b16 %v2274
        %v2539 = vunpack.c.l.b16 %v2275
        %v2540 = vpack.c.b16 %v2537, %v2536
        %v2541 = vpack.c.b16 %v2539, %v2538
        %2542 = vrot.lane.b32.xlu0 %v2540, 112
        %v2543 = vpop.permute.xlu0 %2542
        %2544 = vrot.lane.b32.xlu0 %v2541, 112
        %v2545 = vpop.permute.xlu0 %2544
        %v2547 = vsel %vm982, %v2531, 0
        %v2550 = vsel %vm982, %v2543, 0
        %v2553 = vsel %vm982, %v2545, 0
        %2555 = vmatprep.subr.bf16.mxu0 0
        %2556 = vmatpush1.bf16.xpose.msra.mxu0 %v2550
        %2557 = vmatprep.subr.bf16.mxu0 0
        %2558 = vmatpush1.bf16.xpose.msra.mxu0 %v2553
        %2559 = vmatprep.subr.bf16.mxu0 0
        %2560 = vmatpush1.bf16.xpose.msra.mxu0 0
        %2561 = vmatprep.subr.bf16.mxu0 0
        %2562 = vmatpush1.bf16.xpose.msra.mxu0 0
        %2563 = vmatprep.subr.bf16.mxu0 0
        %2564 = vmatpush1.bf16.xpose.msra.mxu0 0
        %2565 = vmatprep.subr.bf16.mxu0 0
        %2566 = vmatpush1.bf16.xpose.msra.mxu0 0
        %2567 = vmatprep.subr.bf16.mxu0 0
        %2568 = vmatpush1.bf16.xpose.msra.mxu0 0
        %2569 = vmatprep.subr.bf16.mxu0 0
        %2570 = vmatpush1.bf16.xpose.msra.mxu0 0
        %2571 = vmatprep.subr.bf16.mxu0 0
        %2572 = vmatpush1.bf16.xpose.msra.mxu0 0
        %2573 = vmatprep.subr.bf16.mxu0 0
        %2574 = vmatpush1.bf16.xpose.msra.mxu0 0
        %2575 = vmatprep.subr.bf16.mxu0 0
        %2576 = vmatpush1.bf16.xpose.msra.mxu0 0
        %2577 = vmatprep.subr.bf16.mxu0 0
        %2578 = vmatpush1.bf16.xpose.msra.mxu0 0
        %2579 = vmatprep.subr.bf16.mxu0 0
        %2580 = vmatpush1.bf16.xpose.msra.mxu0 0
        %2581 = vmatprep.subr.bf16.mxu0 0
        %2582 = vmatpush1.bf16.xpose.msra.mxu0 0
        %2583 = vmatprep.subr.bf16.mxu0 0
        %2584 = vmatpush1.bf16.xpose.msra.mxu0 0
        %2585 = vmatprep.subr.bf16.mxu0 0
        %2586 = vmatpush1.bf16.xpose.msra.mxu0 0
        %2587 = vmatprep.mubr.bf16.mxu0 0
        %2588 = vmatmul.mubr.bf16.gmra.mrb[0].mxu0 %v2547
        %v2589 = vpop.f32.mrb[0].mxu0
        %v2590 = vadd.f32 0.0, %v2589
        %v2591 = vpop.f32.mrb[0].mxu0
        %v2592 = vpop.f32.mrb[0].mxu0
        %v2593 = vadd.f32 0.0, %v2592
        %v2594 = vpop.f32.mrb[0].mxu0
        %2595 = vdwg.mxu0
        %v2597 = vsel %vm982, %v2406, 0
        %v2600 = vsel %vm982, %v2540, 0
        %v2603 = vsel %vm982, %v2541, 0
        %2605 = vmatprep.subr.bf16.mxu0 0
        %2606 = vmatpush1.bf16.xpose.msra.mxu0 %v2600
        %2607 = vmatprep.subr.bf16.mxu0 0
        %2608 = vmatpush1.bf16.xpose.msra.mxu0 %v2603
        %2609 = vmatprep.subr.bf16.mxu0 0
        %2610 = vmatpush1.bf16.xpose.msra.mxu0 0
        %2611 = vmatprep.subr.bf16.mxu0 0
        %2612 = vmatpush1.bf16.xpose.msra.mxu0 0
        %2613 = vmatprep.subr.bf16.mxu0 0
        %2614 = vmatpush1.bf16.xpose.msra.mxu0 0
        %2615 = vmatprep.subr.bf16.mxu0 0
        %2616 = vmatpush1.bf16.xpose.msra.mxu0 0
        %2617 = vmatprep.subr.bf16.mxu0 0
        %2618 = vmatpush1.bf16.xpose.msra.mxu0 0
        %2619 = vmatprep.subr.bf16.mxu0 0
        %2620 = vmatpush1.bf16.xpose.msra.mxu0 0
        %2621 = vmatprep.subr.bf16.mxu0 0
        %2622 = vmatpush1.bf16.xpose.msra.mxu0 0
        %2623 = vmatprep.subr.bf16.mxu0 0
        %2624 = vmatpush1.bf16.xpose.msra.mxu0 0
        %2625 = vmatprep.subr.bf16.mxu0 0
        %2626 = vmatpush1.bf16.xpose.msra.mxu0 0
        %2627 = vmatprep.subr.bf16.mxu0 0
        %2628 = vmatpush1.bf16.xpose.msra.mxu0 0
        %2629 = vmatprep.subr.bf16.mxu0 0
        %2630 = vmatpush1.bf16.xpose.msra.mxu0 0
        %2631 = vmatprep.subr.bf16.mxu0 0
        %2632 = vmatpush1.bf16.xpose.msra.mxu0 0
        %2633 = vmatprep.subr.bf16.mxu0 0
        %2634 = vmatpush1.bf16.xpose.msra.mxu0 0
        %2635 = vmatprep.subr.bf16.mxu0 0
        %2636 = vmatpush1.bf16.xpose.msra.mxu0 0
        %2637 = vmatprep.mubr.bf16.mxu0 0
        %2638 = vmatmul.mubr.bf16.gmra.mrb[0].mxu0 %v2597
        %v2639 = vpop.f32.mrb[0].mxu0
        %v2640 = vadd.f32 %v2590, %v2639
        %v2641 = vpop.f32.mrb[0].mxu0
        %v2642 = vpop.f32.mrb[0].mxu0
        %v2643 = vadd.f32 %v2593, %v2642
        %v2644 = vpop.f32.mrb[0].mxu0
        %2645 = vdwg.mxu0
        %v2646 = vlaneseq
        %v2647 = vshrl.u32 %v2646, 7
        %v2648 = vsub.s32 0, %v2647
        %v2649 = vrot.slane %v2276, %v2648
        %v2650 = vadd.f32 %v2640, %v2649
        %v2651 = vadd.f32 %v2643, %v2649
        %v2652 = vadd.f32 %v2131, %v2650
        %v2653 = vadd.f32 %v2132, %v2651
        %v2654 = vld [vmem:[#allocation6 + $0x36] sm:$0x1]
        %v2655 = vld [vmem:[#allocation6 + $0x37] sm:$0x1]
        %v2656 = vsel %vm884, %v2652, 0.0
        %2657 = vadd.xlane.f32.xlu0 %v2656
        %v2658 = vpop.xlane.xlu0 %2657
        %v2659 = vsel %vm1327, %v2653, 0.0
        %2660 = vadd.xlane.f32.xlu0 %v2659
        %v2661 = vpop.xlane.xlu0 %2660
        %v2662 = vmul.f32 %v2658, %v1331
        %v2663 = vmul.f32 %v2661, %v1331
        %v2664 = vmul.f32 %v2652, %v2652
        %v2665 = vmul.f32 %v2653, %v2653
        %v2666 = vsel %vm884, %v2664, 0.0
        %2667 = vadd.xlane.f32.xlu0 %v2666
        %v2668 = vpop.xlane.xlu0 %2667
        %v2669 = vsel %vm1327, %v2665, 0.0
        %2670 = vadd.xlane.f32.xlu0 %v2669
        %v2671 = vpop.xlane.xlu0 %2670
        %v2672 = vmul.f32 %v2668, %v1331
        %v2673 = vmul.f32 %v2671, %v1331
        %v2674 = vsub.f32 %v2652, %v2662
        %v2675 = vsub.f32 %v2653, %v2663
        %v2676 = vmul.f32 %v2662, %v2662
        %v2677 = vmul.f32 %v2663, %v2663
        %v2678 = vsub.f32 %v2672, %v2676
        %v2679 = vsub.f32 %v2673, %v2677
        %v2680 = vadd.f32 %v2678, 1e-05
        %v2681 = vadd.f32 %v2679, 1e-05
        %v2682 = vrsqrt.pop %v2680
        %v2683 = vrsqrt.pop %v2681
        %v2684 = vmul.f32 %v2674, %v2682
        %v2685 = vmul.f32 %v2675, %v2683
        %v2686 = vlaneseq
        %v2687 = vshrl.u32 %v2686, 7
        %v2688 = vsub.s32 0, %v2687
        %v2689 = vrot.slane %v2654, %v2688
        %v2690 = vmul.f32 %v2684, %v2689
        %v2691 = vmul.f32 %v2685, %v2689
        %v2692 = vlaneseq
        %v2693 = vshrl.u32 %v2692, 7
        %v2694 = vsub.s32 0, %v2693
        %v2695 = vrot.slane %v2655, %v2694
        %v2696 = vadd.f32 %v2690, %v2695
        %v2697 = vadd.f32 %v2691, %v2695
        %v2698 = vld [vmem:[#allocation4 + $0x140] sm:$0xf]
        %v2699 = vld [vmem:[#allocation4 + $0x144] sm:$0xf]
        %v2700 = vld [vmem:[#allocation4 + $0x148] sm:$0xf]
        %v2701 = vld [vmem:[#allocation4 + $0x14c] sm:$0xf]
        %v2702 = vpack.c.bf16 %v2697, %v2696
        %v2703 = vld [vmem:[#allocation6 + $0x31] sm:$0x1]
        %v2704 = vlaneseq
        %v2705 = vshrl.u32 %v2704, 7
        %v2706 = vsub.s32 0, %v2705
        %v2707 = vrot.slane %v2703, %v2706
        %v2712 = vunpack.c.l.b16 %v2698
        %v2713 = vunpack.c.l.b16 %v2699
        %v2714 = vunpack.c.l.b16 %v2700
        %v2715 = vunpack.c.l.b16 %v2701
        %v2716 = vpack.c.b16 %v2713, %v2712
        %v2717 = vpack.c.b16 %v2715, %v2714
        %v2719 = vsel %vm884, %v2702, 0
        %v2722 = vsel %vm884, %v2716, 0
        %v2725 = vsel %vm884, %v2717, 0
        %2727 = vmatprep.subr.bf16.mxu0 0
        %2728 = vmatpush1.bf16.xpose.msra.mxu0 %v2722
        %2729 = vmatprep.subr.bf16.mxu0 0
        %2730 = vmatpush1.bf16.xpose.msra.mxu0 %v2725
        %2731 = vmatprep.subr.bf16.mxu0 0
        %2732 = vmatpush1.bf16.xpose.msra.mxu0 0
        %2733 = vmatprep.subr.bf16.mxu0 0
        %2734 = vmatpush1.bf16.xpose.msra.mxu0 0
        %2735 = vmatprep.subr.bf16.mxu0 0
        %2736 = vmatpush1.bf16.xpose.msra.mxu0 0
        %2737 = vmatprep.subr.bf16.mxu0 0
        %2738 = vmatpush1.bf16.xpose.msra.mxu0 0
        %2739 = vmatprep.subr.bf16.mxu0 0
        %2740 = vmatpush1.bf16.xpose.msra.mxu0 0
        %2741 = vmatprep.subr.bf16.mxu0 0
        %2742 = vmatpush1.bf16.xpose.msra.mxu0 0
        %2743 = vmatprep.subr.bf16.mxu0 0
        %2744 = vmatpush1.bf16.xpose.msra.mxu0 0
        %2745 = vmatprep.subr.bf16.mxu0 0
        %2746 = vmatpush1.bf16.xpose.msra.mxu0 0
        %2747 = vmatprep.subr.bf16.mxu0 0
        %2748 = vmatpush1.bf16.xpose.msra.mxu0 0
        %2749 = vmatprep.subr.bf16.mxu0 0
        %2750 = vmatpush1.bf16.xpose.msra.mxu0 0
        %2751 = vmatprep.subr.bf16.mxu0 0
        %2752 = vmatpush1.bf16.xpose.msra.mxu0 0
        %2753 = vmatprep.subr.bf16.mxu0 0
        %2754 = vmatpush1.bf16.xpose.msra.mxu0 0
        %2755 = vmatprep.subr.bf16.mxu0 0
        %2756 = vmatpush1.bf16.xpose.msra.mxu0 0
        %2757 = vmatprep.subr.bf16.mxu0 0
        %2758 = vmatpush1.bf16.xpose.msra.mxu0 0
        %2759 = vmatprep.mubr.bf16.mxu0 0
        %2760 = vmatmul.mubr.bf16.gmra.mrb[0].mxu0 %v2719
        %v2761 = vpop.f32.mrb[0].mxu0
        %v2762 = vadd.f32 %v2707, %v2761
        %v2763 = vpop.f32.mrb[0].mxu0
        %v2764 = vpop.f32.mrb[0].mxu0
        %v2765 = vadd.f32 %v2707, %v2764
        %v2766 = vpop.f32.mrb[0].mxu0
        %2767 = vdwg.mxu0
        %v2768 = vld [vmem:[#allocation4 + $0x150] sm:$0xf]
        %v2769 = vld [vmem:[#allocation4 + $0x154] sm:$0xf]
        %v2770 = vld [vmem:[#allocation4 + $0x158] sm:$0xf]
        %v2771 = vld [vmem:[#allocation4 + $0x15c] sm:$0xf]
        %v2772 = vld [vmem:[#allocation4 + $0x160] sm:$0xf]
        %v2773 = vld [vmem:[#allocation4 + $0x164] sm:$0xf]
        %v2774 = vld [vmem:[#allocation4 + $0x168] sm:$0xf]
        %v2775 = vld [vmem:[#allocation4 + $0x16c] sm:$0xf]
        %v2776 = vpack.c.bf16 %v2133, %v2131
        %v2785 = vunpack.c.l.b16 %v2768
        %v2786 = vunpack.c.l.b16 %v2769
        %v2787 = vunpack.c.l.b16 %v2770
        %v2788 = vunpack.c.l.b16 %v2771
        %v2789 = vunpack.c.l.b16 %v2772
        %v2790 = vunpack.c.l.b16 %v2773
        %v2791 = vunpack.c.l.b16 %v2774
        %v2792 = vunpack.c.l.b16 %v2775
        %v2793 = vpack.c.b16 %v2786, %v2785
        %v2794 = vpack.c.b16 %v2788, %v2787
        %v2795 = vpack.c.b16 %v2790, %v2789
        %v2796 = vpack.c.b16 %v2792, %v2791
        %v2798 = vsel %vm884, %v2776, 0
        %v2801 = vsel %vm884, %v2793, 0
        %v2804 = vsel %vm884, %v2794, 0
        %v2807 = vsel %vm884, %v2795, 0
        %v2810 = vsel %vm884, %v2796, 0
        %2812 = vmatprep.subr.bf16.mxu0 0
        %2813 = vmatpush1.bf16.xpose.msra.mxu0 %v2801
        %2814 = vmatprep.subr.bf16.mxu0 0
        %2815 = vmatpush1.bf16.xpose.msra.mxu0 %v2804
        %2816 = vmatprep.subr.bf16.mxu0 0
        %2817 = vmatpush1.bf16.xpose.msra.mxu0 %v2807
        %2818 = vmatprep.subr.bf16.mxu0 0
        %2819 = vmatpush1.bf16.xpose.msra.mxu0 %v2810
        %2820 = vmatprep.subr.bf16.mxu0 0
        %2821 = vmatpush1.bf16.xpose.msra.mxu0 0
        %2822 = vmatprep.subr.bf16.mxu0 0
        %2823 = vmatpush1.bf16.xpose.msra.mxu0 0
        %2824 = vmatprep.subr.bf16.mxu0 0
        %2825 = vmatpush1.bf16.xpose.msra.mxu0 0
        %2826 = vmatprep.subr.bf16.mxu0 0
        %2827 = vmatpush1.bf16.xpose.msra.mxu0 0
        %2828 = vmatprep.subr.bf16.mxu0 0
        %2829 = vmatpush1.bf16.xpose.msra.mxu0 0
        %2830 = vmatprep.subr.bf16.mxu0 0
        %2831 = vmatpush1.bf16.xpose.msra.mxu0 0
        %2832 = vmatprep.subr.bf16.mxu0 0
        %2833 = vmatpush1.bf16.xpose.msra.mxu0 0
        %2834 = vmatprep.subr.bf16.mxu0 0
        %2835 = vmatpush1.bf16.xpose.msra.mxu0 0
        %2836 = vmatprep.subr.bf16.mxu0 0
        %2837 = vmatpush1.bf16.xpose.msra.mxu0 0
        %2838 = vmatprep.subr.bf16.mxu0 0
        %2839 = vmatpush1.bf16.xpose.msra.mxu0 0
        %2840 = vmatprep.subr.bf16.mxu0 0
        %2841 = vmatpush1.bf16.xpose.msra.mxu0 0
        %2842 = vmatprep.subr.bf16.mxu0 0
        %2843 = vmatpush1.bf16.xpose.msra.mxu0 0
        %2844 = vmatprep.mubr.bf16.mxu0 0
        %2845 = vmatmul.mubr.bf16.gmra.mrb[0].mxu0 %v2798
        %v2846 = vpop.f32.mrb[0].mxu0
        %v2847 = vadd.f32 0.0, %v2846
        %v2848 = vpop.f32.mrb[0].mxu0
        %v2849 = vpop.f32.mrb[0].mxu0
        %v2850 = vadd.f32 0.0, %v2849
        %v2851 = vpop.f32.mrb[0].mxu0
        %2852 = vdwg.mxu0
        %v2853 = vld [vmem:[#allocation6 + $0x32] sm:$0x1]
        %v2854 = vlaneseq
        %v2855 = vshrl.u32 %v2854, 7
        %v2856 = vsub.s32 0, %v2855
        %v2857 = vrot.slane %v2853, %v2856
        %v2858 = vadd.f32 %v2847, %v2857
        %v2859 = vadd.f32 %v2850, %v2857
        %v2860 = vld [vmem:[#allocation6 + $0x33] sm:$0x1]
        %v2861 = vlaneseq
        %v2862 = vshrl.u32 %v2861, 7
        %v2863 = vsub.s32 0, %v2862
        %v2864 = vrot.slane %v2860, %v2863
        %2866 = vrot.lane.b32.xlu0 %v2864, 32
        %v2867 = vpop.permute.xlu0 %2866
        %v2869 = vadd.f32 %v2847, %v2867
        %v2870 = vadd.f32 %v2850, %v2867
        %v2871 = vld [vmem:[#allocation4 + $0x170] sm:$0xf]
        %v2872 = vld [vmem:[#allocation4 + $0x174] sm:$0xf]
        %v2873 = vld [vmem:[#allocation4 + $0x178] sm:$0xf]
        %v2874 = vld [vmem:[#allocation4 + $0x17c] sm:$0xf]
        %v2875 = vld [vmem:[#allocation6 + $0x34] sm:$0x1]
        %v2876 = vpack.c.bf16 %v2765, %v2762
        %v2877 = vpack.c.bf16 %v2859, %v2858
        %v2879 = vsel %vm982, %v2876, 0
        %v2882 = vsel %vm982, %v2877, 0
        %2884 = vmatprep.subr.bf16.mxu0 0
        %2885 = vmatpush1.bf16.xpose.msra.mxu0 %v2882
        %2886 = vmatprep.subr.bf16.mxu0 0
        %2887 = vmatpush1.bf16.xpose.msra.mxu0 0
        %2888 = vmatprep.subr.bf16.mxu0 0
        %2889 = vmatpush1.bf16.xpose.msra.mxu0 0
        %2890 = vmatprep.subr.bf16.mxu0 0
        %2891 = vmatpush1.bf16.xpose.msra.mxu0 0
        %2892 = vmatprep.subr.bf16.mxu0 0
        %2893 = vmatpush1.bf16.xpose.msra.mxu0 0
        %2894 = vmatprep.subr.bf16.mxu0 0
        %2895 = vmatpush1.bf16.xpose.msra.mxu0 0
        %2896 = vmatprep.subr.bf16.mxu0 0
        %2897 = vmatpush1.bf16.xpose.msra.mxu0 0
        %2898 = vmatprep.subr.bf16.mxu0 0
        %2899 = vmatpush1.bf16.xpose.msra.mxu0 0
        %2900 = vmatprep.subr.bf16.mxu0 0
        %2901 = vmatpush1.bf16.xpose.msra.mxu0 0
        %2902 = vmatprep.subr.bf16.mxu0 0
        %2903 = vmatpush1.bf16.xpose.msra.mxu0 0
        %2904 = vmatprep.subr.bf16.mxu0 0
        %2905 = vmatpush1.bf16.xpose.msra.mxu0 0
        %2906 = vmatprep.subr.bf16.mxu0 0
        %2907 = vmatpush1.bf16.xpose.msra.mxu0 0
        %2908 = vmatprep.subr.bf16.mxu0 0
        %2909 = vmatpush1.bf16.xpose.msra.mxu0 0
        %2910 = vmatprep.subr.bf16.mxu0 0
        %2911 = vmatpush1.bf16.xpose.msra.mxu0 0
        %2912 = vmatprep.subr.bf16.mxu0 0
        %2913 = vmatpush1.bf16.xpose.msra.mxu0 0
        %2914 = vmatprep.subr.bf16.mxu0 0
        %2915 = vmatpush1.bf16.xpose.msra.mxu0 0
        %2916 = vmatprep.mubr.bf16.mxu0 0
        %2917 = vmatmul.mubr.bf16.gmra.mrb[0].mxu0 %v2879
        %v2918 = vpop.f32.mrb[0].mxu0
        %v2919 = vadd.f32 %v2136, %v2918
        %v2920 = vpop.f32.mrb[0].mxu0
        %v2921 = vpop.f32.mrb[0].mxu0
        %v2922 = vadd.f32 %v2137, %v2921
        %v2923 = vpop.f32.mrb[0].mxu0
        %2924 = vdwg.mxu0
        %v2925 = vsel %vm982, %v2919, -inf
        %2926 = vmax.xlane.f32.xlu0 %v2925
        %v2927 = vpop.xlane.xlu0 %2926
        %vm2928 = vcmask 125952
        %v2929 = vsel %vm2928, %v2922, -inf
        %2930 = vmax.xlane.f32.xlu0 %v2929
        %v2931 = vpop.xlane.xlu0 %2930
        %v2932 = vsub.f32 %v2919, %v2927
        %v2933 = vsub.f32 %v2922, %v2931
        %v2934 = vmul.f32 %v2932, 1.442695
        %v2935 = vpow.pop %v2934
        %v2936 = vmul.f32 %v2933, 1.442695
        %v2937 = vpow.pop %v2936
        %v2938 = vsel %vm982, %v2935, 0.0
        %2939 = vadd.xlane.f32.xlu0 %v2938
        %v2940 = vpop.xlane.xlu0 %2939
        %v2941 = vsel %vm2928, %v2937, 0.0
        %2942 = vadd.xlane.f32.xlu0 %v2941
        %v2943 = vpop.xlane.xlu0 %2942
        %v2944 = vrcp.pop %v2940
        %v2945 = vrcp.pop %v2943
        %v2946 = vmul.f32 %v2935, %v2944
        %v2947 = vmul.f32 %v2937, %v2945
        %v2948 = vpack.c.bf16 %v2947, %v2946
        %v2949 = vpack.c.bf16 %v2870, %v2869
        %2951 = vrot.lane.b32.xlu0 %v2949, 96
        %v2952 = vpop.permute.xlu0 %2951
        %v2955 = vsel %vm982, %v2948, 0
        %2957 = vmatprep.subr.bf16.mxu0 0
        %2958 = vmatpush1.bf16.msra.mxu0 %v2952
        %2959 = vmatprep.subr.bf16.mxu0 0
        %2960 = vmatpush1.bf16.msra.mxu0 0
        %2961 = vmatprep.subr.bf16.mxu0 0
        %2962 = vmatpush1.bf16.msra.mxu0 0
        %2963 = vmatprep.subr.bf16.mxu0 0
        %2964 = vmatpush1.bf16.msra.mxu0 0
        %2965 = vmatprep.subr.bf16.mxu0 0
        %2966 = vmatpush1.bf16.msra.mxu0 0
        %2967 = vmatprep.subr.bf16.mxu0 0
        %2968 = vmatpush1.bf16.msra.mxu0 0
        %2969 = vmatprep.subr.bf16.mxu0 0
        %2970 = vmatpush1.bf16.msra.mxu0 0
        %2971 = vmatprep.subr.bf16.mxu0 0
        %2972 = vmatpush1.bf16.msra.mxu0 0
        %2973 = vmatprep.subr.bf16.mxu0 0
        %2974 = vmatpush1.bf16.msra.mxu0 0
        %2975 = vmatprep.subr.bf16.mxu0 0
        %2976 = vmatpush1.bf16.msra.mxu0 0
        %2977 = vmatprep.subr.bf16.mxu0 0
        %2978 = vmatpush1.bf16.msra.mxu0 0
        %2979 = vmatprep.subr.bf16.mxu0 0
        %2980 = vmatpush1.bf16.msra.mxu0 0
        %2981 = vmatprep.subr.bf16.mxu0 0
        %2982 = vmatpush1.bf16.msra.mxu0 0
        %2983 = vmatprep.subr.bf16.mxu0 0
        %2984 = vmatpush1.bf16.msra.mxu0 0
        %2985 = vmatprep.subr.bf16.mxu0 0
        %2986 = vmatpush1.bf16.msra.mxu0 0
        %2987 = vmatprep.subr.bf16.mxu0 0
        %2988 = vmatpush1.bf16.msra.mxu0 0
        %2989 = vmatprep.mubr.bf16.mxu0 0
        %2990 = vmatmul.mubr.bf16.gmra.mrb[0].mxu0 %v2955
        %v2991 = vpop.f32.mrb[0].mxu0
        %v2992 = vadd.f32 0.0, %v2991
        %v2993 = vpop.f32.mrb[0].mxu0
        %v2994 = vpop.f32.mrb[0].mxu0
        %v2995 = vadd.f32 0.0, %v2994
        %v2996 = vpop.f32.mrb[0].mxu0
        %2997 = vdwg.mxu0
        %v2998 = vpack.c.bf16 %v2995, %v2992
        %3000 = vrot.lane.b32.xlu0 %v2876, 112
        %v3001 = vpop.permute.xlu0 %3000
        %3003 = vrot.lane.b32.xlu0 %v2877, 112
        %v3004 = vpop.permute.xlu0 %3003
        %v3006 = vsel %vm982, %v3001, 0
        %v3009 = vsel %vm982, %v3004, 0
        %3011 = vmatprep.subr.bf16.mxu0 0
        %3012 = vmatpush1.bf16.xpose.msra.mxu0 %v3009
        %3013 = vmatprep.subr.bf16.mxu0 0
        %3014 = vmatpush1.bf16.xpose.msra.mxu0 0
        %3015 = vmatprep.subr.bf16.mxu0 0
        %3016 = vmatpush1.bf16.xpose.msra.mxu0 0
        %3017 = vmatprep.subr.bf16.mxu0 0
        %3018 = vmatpush1.bf16.xpose.msra.mxu0 0
        %3019 = vmatprep.subr.bf16.mxu0 0
        %3020 = vmatpush1.bf16.xpose.msra.mxu0 0
        %3021 = vmatprep.subr.bf16.mxu0 0
        %3022 = vmatpush1.bf16.xpose.msra.mxu0 0
        %3023 = vmatprep.subr.bf16.mxu0 0
        %3024 = vmatpush1.bf16.xpose.msra.mxu0 0
        %3025 = vmatprep.subr.bf16.mxu0 0
        %3026 = vmatpush1.bf16.xpose.msra.mxu0 0
        %3027 = vmatprep.subr.bf16.mxu0 0
        %3028 = vmatpush1.bf16.xpose.msra.mxu0 0
        %3029 = vmatprep.subr.bf16.mxu0 0
        %3030 = vmatpush1.bf16.xpose.msra.mxu0 0
        %3031 = vmatprep.subr.bf16.mxu0 0
        %3032 = vmatpush1.bf16.xpose.msra.mxu0 0
        %3033 = vmatprep.subr.bf16.mxu0 0
        %3034 = vmatpush1.bf16.xpose.msra.mxu0 0
        %3035 = vmatprep.subr.bf16.mxu0 0
        %3036 = vmatpush1.bf16.xpose.msra.mxu0 0
        %3037 = vmatprep.subr.bf16.mxu0 0
        %3038 = vmatpush1.bf16.xpose.msra.mxu0 0
        %3039 = vmatprep.subr.bf16.mxu0 0
        %3040 = vmatpush1.bf16.xpose.msra.mxu0 0
        %3041 = vmatprep.subr.bf16.mxu0 0
        %3042 = vmatpush1.bf16.xpose.msra.mxu0 0
        %3043 = vmatprep.mubr.bf16.mxu0 0
        %3044 = vmatmul.mubr.bf16.gmra.mrb[0].mxu0 %v3006
        %v3045 = vpop.f32.mrb[0].mxu0
        %v3046 = vadd.f32 %v2136, %v3045
        %v3047 = vpop.f32.mrb[0].mxu0
        %v3048 = vpop.f32.mrb[0].mxu0
        %v3049 = vadd.f32 %v2137, %v3048
        %v3050 = vpop.f32.mrb[0].mxu0
        %3051 = vdwg.mxu0
        %v3052 = vsel %vm982, %v3046, -inf
        %3053 = vmax.xlane.f32.xlu0 %v3052
        %v3054 = vpop.xlane.xlu0 %3053
        %v3055 = vsel %vm2928, %v3049, -inf
        %3056 = vmax.xlane.f32.xlu0 %v3055
        %v3057 = vpop.xlane.xlu0 %3056
        %v3058 = vsub.f32 %v3046, %v3054
        %v3059 = vsub.f32 %v3049, %v3057
        %v3060 = vmul.f32 %v3058, 1.442695
        %v3061 = vpow.pop %v3060
        %v3062 = vmul.f32 %v3059, 1.442695
        %v3063 = vpow.pop %v3062
        %v3064 = vsel %vm982, %v3061, 0.0
        %3065 = vadd.xlane.f32.xlu0 %v3064
        %v3066 = vpop.xlane.xlu0 %3065
        %v3067 = vsel %vm2928, %v3063, 0.0
        %3068 = vadd.xlane.f32.xlu0 %v3067
        %v3069 = vpop.xlane.xlu0 %3068
        %v3070 = vrcp.pop %v3066
        %v3071 = vrcp.pop %v3069
        %v3072 = vmul.f32 %v3061, %v3070
        %v3073 = vmul.f32 %v3063, %v3071
        %v3074 = vpack.c.bf16 %v3073, %v3072
        %3075 = vrot.lane.b32.xlu0 %v2949, 80
        %v3076 = vpop.permute.xlu0 %3075
        %v3079 = vsel %vm982, %v3074, 0
        %3081 = vmatprep.subr.bf16.mxu0 0
        %3082 = vmatpush1.bf16.msra.mxu0 %v3076
        %3083 = vmatprep.subr.bf16.mxu0 0
        %3084 = vmatpush1.bf16.msra.mxu0 0
        %3085 = vmatprep.subr.bf16.mxu0 0
        %3086 = vmatpush1.bf16.msra.mxu0 0
        %3087 = vmatprep.subr.bf16.mxu0 0
        %3088 = vmatpush1.bf16.msra.mxu0 0
        %3089 = vmatprep.subr.bf16.mxu0 0
        %3090 = vmatpush1.bf16.msra.mxu0 0
        %3091 = vmatprep.subr.bf16.mxu0 0
        %3092 = vmatpush1.bf16.msra.mxu0 0
        %3093 = vmatprep.subr.bf16.mxu0 0
        %3094 = vmatpush1.bf16.msra.mxu0 0
        %3095 = vmatprep.subr.bf16.mxu0 0
        %3096 = vmatpush1.bf16.msra.mxu0 0
        %3097 = vmatprep.subr.bf16.mxu0 0
        %3098 = vmatpush1.bf16.msra.mxu0 0
        %3099 = vmatprep.subr.bf16.mxu0 0
        %3100 = vmatpush1.bf16.msra.mxu0 0
        %3101 = vmatprep.subr.bf16.mxu0 0
        %3102 = vmatpush1.bf16.msra.mxu0 0
        %3103 = vmatprep.subr.bf16.mxu0 0
        %3104 = vmatpush1.bf16.msra.mxu0 0
        %3105 = vmatprep.subr.bf16.mxu0 0
        %3106 = vmatpush1.bf16.msra.mxu0 0
        %3107 = vmatprep.subr.bf16.mxu0 0
        %3108 = vmatpush1.bf16.msra.mxu0 0
        %3109 = vmatprep.subr.bf16.mxu0 0
        %3110 = vmatpush1.bf16.msra.mxu0 0
        %3111 = vmatprep.subr.bf16.mxu0 0
        %3112 = vmatpush1.bf16.msra.mxu0 0
        %3113 = vmatprep.mubr.bf16.mxu0 0
        %3114 = vmatmul.mubr.bf16.gmra.mrb[0].mxu0 %v3079
        %v3115 = vpop.f32.mrb[0].mxu0
        %v3116 = vadd.f32 0.0, %v3115
        %v3117 = vpop.f32.mrb[0].mxu0
        %v3118 = vpop.f32.mrb[0].mxu0
        %v3119 = vadd.f32 0.0, %v3118
        %v3120 = vpop.f32.mrb[0].mxu0
        %3121 = vdwg.mxu0
        %v3122 = vpack.c.bf16 %v3119, %v3116
        %v3127 = vunpack.c.l.b16 %v2871
        %v3128 = vunpack.c.l.b16 %v2872
        %v3129 = vunpack.c.l.b16 %v2873
        %v3130 = vunpack.c.l.b16 %v2874
        %v3131 = vpack.c.b16 %v3128, %v3127
        %v3132 = vpack.c.b16 %v3130, %v3129
        %3133 = vrot.lane.b32.xlu0 %v3131, 112
        %v3134 = vpop.permute.xlu0 %3133
        %3135 = vrot.lane.b32.xlu0 %v3132, 112
        %v3136 = vpop.permute.xlu0 %3135
        %v3138 = vsel %vm982, %v3122, 0
        %v3141 = vsel %vm982, %v3134, 0
        %v3144 = vsel %vm982, %v3136, 0
        %3146 = vmatprep.subr.bf16.mxu0 0
        %3147 = vmatpush1.bf16.xpose.msra.mxu0 %v3141
        %3148 = vmatprep.subr.bf16.mxu0 0
        %3149 = vmatpush1.bf16.xpose.msra.mxu0 %v3144
        %3150 = vmatprep.subr.bf16.mxu0 0
        %3151 = vmatpush1.bf16.xpose.msra.mxu0 0
        %3152 = vmatprep.subr.bf16.mxu0 0
        %3153 = vmatpush1.bf16.xpose.msra.mxu0 0
        %3154 = vmatprep.subr.bf16.mxu0 0
        %3155 = vmatpush1.bf16.xpose.msra.mxu0 0
        %3156 = vmatprep.subr.bf16.mxu0 0
        %3157 = vmatpush1.bf16.xpose.msra.mxu0 0
        %3158 = vmatprep.subr.bf16.mxu0 0
        %3159 = vmatpush1.bf16.xpose.msra.mxu0 0
        %3160 = vmatprep.subr.bf16.mxu0 0
        %3161 = vmatpush1.bf16.xpose.msra.mxu0 0
        %3162 = vmatprep.subr.bf16.mxu0 0
        %3163 = vmatpush1.bf16.xpose.msra.mxu0 0
        %3164 = vmatprep.subr.bf16.mxu0 0
        %3165 = vmatpush1.bf16.xpose.msra.mxu0 0
        %3166 = vmatprep.subr.bf16.mxu0 0
        %3167 = vmatpush1.bf16.xpose.msra.mxu0 0
        %3168 = vmatprep.subr.bf16.mxu0 0
        %3169 = vmatpush1.bf16.xpose.msra.mxu0 0
        %3170 = vmatprep.subr.bf16.mxu0 0
        %3171 = vmatpush1.bf16.xpose.msra.mxu0 0
        %3172 = vmatprep.subr.bf16.mxu0 0
        %3173 = vmatpush1.bf16.xpose.msra.mxu0 0
        %3174 = vmatprep.subr.bf16.mxu0 0
        %3175 = vmatpush1.bf16.xpose.msra.mxu0 0
        %3176 = vmatprep.subr.bf16.mxu0 0
        %3177 = vmatpush1.bf16.xpose.msra.mxu0 0
        %3178 = vmatprep.mubr.bf16.mxu0 0
        %3179 = vmatmul.mubr.bf16.gmra.mrb[0].mxu0 %v3138
        %v3180 = vpop.f32.mrb[0].mxu0
        %v3181 = vadd.f32 0.0, %v3180
        %v3182 = vpop.f32.mrb[0].mxu0
        %v3183 = vpop.f32.mrb[0].mxu0
        %v3184 = vadd.f32 0.0, %v3183
        %v3185 = vpop.f32.mrb[0].mxu0
        %3186 = vdwg.mxu0
        %v3188 = vsel %vm982, %v2998, 0
        %v3191 = vsel %vm982, %v3131, 0
        %v3194 = vsel %vm982, %v3132, 0
        %3196 = vmatprep.subr.bf16.mxu0 0
        %3197 = vmatpush1.bf16.xpose.msra.mxu0 %v3191
        %3198 = vmatprep.subr.bf16.mxu0 0
        %3199 = vmatpush1.bf16.xpose.msra.mxu0 %v3194
        %3200 = vmatprep.subr.bf16.mxu0 0
        %3201 = vmatpush1.bf16.xpose.msra.mxu0 0
        %3202 = vmatprep.subr.bf16.mxu0 0
        %3203 = vmatpush1.bf16.xpose.msra.mxu0 0
        %3204 = vmatprep.subr.bf16.mxu0 0
        %3205 = vmatpush1.bf16.xpose.msra.mxu0 0
        %3206 = vmatprep.subr.bf16.mxu0 0
        %3207 = vmatpush1.bf16.xpose.msra.mxu0 0
        %3208 = vmatprep.subr.bf16.mxu0 0
        %3209 = vmatpush1.bf16.xpose.msra.mxu0 0
        %3210 = vmatprep.subr.bf16.mxu0 0
        %3211 = vmatpush1.bf16.xpose.msra.mxu0 0
        %3212 = vmatprep.subr.bf16.mxu0 0
        %3213 = vmatpush1.bf16.xpose.msra.mxu0 0
        %3214 = vmatprep.subr.bf16.mxu0 0
        %3215 = vmatpush1.bf16.xpose.msra.mxu0 0
        %3216 = vmatprep.subr.bf16.mxu0 0
        %3217 = vmatpush1.bf16.xpose.msra.mxu0 0
        %3218 = vmatprep.subr.bf16.mxu0 0
        %3219 = vmatpush1.bf16.xpose.msra.mxu0 0
        %3220 = vmatprep.subr.bf16.mxu0 0
        %3221 = vmatpush1.bf16.xpose.msra.mxu0 0
        %3222 = vmatprep.subr.bf16.mxu0 0
        %3223 = vmatpush1.bf16.xpose.msra.mxu0 0
        %3224 = vmatprep.subr.bf16.mxu0 0
        %3225 = vmatpush1.bf16.xpose.msra.mxu0 0
        %3226 = vmatprep.subr.bf16.mxu0 0
        %3227 = vmatpush1.bf16.xpose.msra.mxu0 0
        %3228 = vmatprep.mubr.bf16.mxu0 0
        %3229 = vmatmul.mubr.bf16.gmra.mrb[0].mxu0 %v3188
        %v3230 = vpop.f32.mrb[0].mxu0
        %v3231 = vadd.f32 %v3181, %v3230
        %v3232 = vpop.f32.mrb[0].mxu0
        %v3233 = vpop.f32.mrb[0].mxu0
        %v3234 = vadd.f32 %v3184, %v3233
        %v3235 = vpop.f32.mrb[0].mxu0
        %3236 = vdwg.mxu0
        %v3237 = vlaneseq
        %v3238 = vshrl.u32 %v3237, 7
        %v3239 = vsub.s32 0, %v3238
        %v3240 = vrot.slane %v2875, %v3239
        %v3241 = vadd.f32 %v3231, %v3240
        %v3242 = vadd.f32 %v3234, %v3240
        %v3243 = vadd.f32 %v2696, %v3241
        %v3244 = vadd.f32 %v2697, %v3242
        %v3245 = vld [vmem:[#allocation6 + $0x38] sm:$0x1]
        %v3246 = vld [vmem:[#allocation6 + $0x39] sm:$0x1]
        %v3247 = vsel %vm884, %v3243, 0.0
        %3248 = vadd.xlane.f32.xlu0 %v3247
        %v3249 = vpop.xlane.xlu0 %3248
        %v3250 = vsel %vm1327, %v3244, 0.0
        %3251 = vadd.xlane.f32.xlu0 %v3250
        %v3252 = vpop.xlane.xlu0 %3251
        %v3253 = vmul.f32 %v3249, %v1331
        %v3254 = vmul.f32 %v3252, %v1331
        %v3255 = vmul.f32 %v3243, %v3243
        %v3256 = vmul.f32 %v3244, %v3244
        %v3257 = vsel %vm884, %v3255, 0.0
        %3258 = vadd.xlane.f32.xlu0 %v3257
        %v3259 = vpop.xlane.xlu0 %3258
        %v3260 = vsel %vm1327, %v3256, 0.0
        %3261 = vadd.xlane.f32.xlu0 %v3260
        %v3262 = vpop.xlane.xlu0 %3261
        %v3263 = vmul.f32 %v3259, %v1331
        %v3264 = vmul.f32 %v3262, %v1331
        %v3265 = vsub.f32 %v3243, %v3253
        %v3266 = vsub.f32 %v3244, %v3254
        %v3267 = vmul.f32 %v3253, %v3253
        %v3268 = vmul.f32 %v3254, %v3254
        %v3269 = vsub.f32 %v3263, %v3267
        %v3270 = vsub.f32 %v3264, %v3268
        %v3271 = vadd.f32 %v3269, 1e-05
        %v3272 = vadd.f32 %v3270, 1e-05
        %v3273 = vrsqrt.pop %v3271
        %v3274 = vrsqrt.pop %v3272
        %v3275 = vmul.f32 %v3265, %v3273
        %v3276 = vmul.f32 %v3266, %v3274
        %v3277 = vlaneseq
        %v3278 = vshrl.u32 %v3277, 7
        %v3279 = vsub.s32 0, %v3278
        %v3280 = vrot.slane %v3245, %v3279
        %v3281 = vmul.f32 %v3275, %v3280
        %v3282 = vmul.f32 %v3276, %v3280
        %v3283 = vlaneseq
        %v3284 = vshrl.u32 %v3283, 7
        %v3285 = vsub.s32 0, %v3284
        %v3286 = vrot.slane %v3246, %v3285
        %v3287 = vadd.f32 %v3281, %v3286
        %v3288 = vadd.f32 %v3282, %v3286
        %v3289 = vld [vmem:[#allocation4 + $0x180] sm:$0xf]
        %v3290 = vld [vmem:[#allocation4 + $0x184] sm:$0xf]
        %v3291 = vld [vmem:[#allocation4 + $0x188] sm:$0xf]
        %v3292 = vld [vmem:[#allocation4 + $0x18c] sm:$0xf]
        %v3293 = vld [vmem:[#allocation4 + $0x190] sm:$0xf]
        %v3294 = vld [vmem:[#allocation4 + $0x194] sm:$0xf]
        %v3295 = vld [vmem:[#allocation4 + $0x198] sm:$0xf]
        %v3296 = vld [vmem:[#allocation4 + $0x19c] sm:$0xf]
        %v3297 = vpack.c.bf16 %v3288, %v3287
        %v3298 = vld [vmem:[%s6 + $0x1] sm:$0x1]
        %v3299 = vlaneseq
        %v3300 = vshrl.u32 %v3299, 7
        %v3301 = vsub.s32 0, %v3300
        %v3302 = vrot.slane %v3298, %v3301
        %v3311 = vunpack.c.l.b16 %v3289
        %v3312 = vunpack.c.l.b16 %v3290
        %v3313 = vunpack.c.l.b16 %v3291
        %v3314 = vunpack.c.l.b16 %v3292
        %v3315 = vunpack.c.l.b16 %v3293
        %v3316 = vunpack.c.l.b16 %v3294
        %v3317 = vunpack.c.l.b16 %v3295
        %v3318 = vunpack.c.l.b16 %v3296
        %v3319 = vpack.c.b16 %v3312, %v3311
        %v3320 = vpack.c.b16 %v3314, %v3313
        %v3321 = vpack.c.b16 %v3316, %v3315
        %v3322 = vpack.c.b16 %v3318, %v3317
        %v3324 = vsel %vm884, %v3297, 0
        %v3327 = vsel %vm884, %v3319, 0
        %v3330 = vsel %vm884, %v3320, 0
        %v3333 = vsel %vm884, %v3321, 0
        %v3336 = vsel %vm884, %v3322, 0
        %3338 = vmatprep.subr.bf16.mxu0 0
        %3339 = vmatpush1.bf16.xpose.msra.mxu0 %v3327
        %3340 = vmatprep.subr.bf16.mxu0 0
        %3341 = vmatpush1.bf16.xpose.msra.mxu0 %v3330
        %3342 = vmatprep.subr.bf16.mxu0 0
        %3343 = vmatpush1.bf16.xpose.msra.mxu0 %v3333
        %3344 = vmatprep.subr.bf16.mxu0 0
        %3345 = vmatpush1.bf16.xpose.msra.mxu0 %v3336
        %3346 = vmatprep.subr.bf16.mxu0 0
        %3347 = vmatpush1.bf16.xpose.msra.mxu0 0
        %3348 = vmatprep.subr.bf16.mxu0 0
        %3349 = vmatpush1.bf16.xpose.msra.mxu0 0
        %3350 = vmatprep.subr.bf16.mxu0 0
        %3351 = vmatpush1.bf16.xpose.msra.mxu0 0
        %3352 = vmatprep.subr.bf16.mxu0 0
        %3353 = vmatpush1.bf16.xpose.msra.mxu0 0
        %3354 = vmatprep.subr.bf16.mxu0 0
        %3355 = vmatpush1.bf16.xpose.msra.mxu0 0
        %3356 = vmatprep.subr.bf16.mxu0 0
        %3357 = vmatpush1.bf16.xpose.msra.mxu0 0
        %3358 = vmatprep.subr.bf16.mxu0 0
        %3359 = vmatpush1.bf16.xpose.msra.mxu0 0
        %3360 = vmatprep.subr.bf16.mxu0 0
        %3361 = vmatpush1.bf16.xpose.msra.mxu0 0
        %3362 = vmatprep.subr.bf16.mxu0 0
        %3363 = vmatpush1.bf16.xpose.msra.mxu0 0
        %3364 = vmatprep.subr.bf16.mxu0 0
        %3365 = vmatpush1.bf16.xpose.msra.mxu0 0
        %3366 = vmatprep.subr.bf16.mxu0 0
        %3367 = vmatpush1.bf16.xpose.msra.mxu0 0
        %3368 = vmatprep.subr.bf16.mxu0 0
        %3369 = vmatpush1.bf16.xpose.msra.mxu0 0
        %3370 = vmatprep.mubr.bf16.mxu0 0
        %3371 = vmatmul.mubr.bf16.gmra.mrb[0].mxu0 %v3324
        %v3372 = vpop.f32.mrb[0].mxu0
        %v3373 = vadd.f32 %v3302, %v3372
        %v3374 = vpop.f32.mrb[0].mxu0
        %v3375 = vpop.f32.mrb[0].mxu0
        %v3376 = vadd.f32 %v3302, %v3375
        %v3377 = vpop.f32.mrb[0].mxu0
        %3378 = vdwg.mxu0
        %v3379 = vmax.f32 %v3373, 0.0
        %v3380 = vmax.f32 %v3376, 0.0
        %v3381 = vld [vmem:[#allocation4 + $0x1a0] sm:$0xf]
        %v3382 = vld [vmem:[#allocation4 + $0x1a4] sm:$0xf]
        %v3383 = vld [vmem:[#allocation4 + $0x1a8] sm:$0xf]
        %v3384 = vld [vmem:[#allocation4 + $0x1ac] sm:$0xf]
        %v3385 = vld [vmem:[#allocation4 + $0x1b0] sm:$0xf]
        %v3386 = vld [vmem:[#allocation4 + $0x1b4] sm:$0xf]
        %v3387 = vld [vmem:[#allocation4 + $0x1b8] sm:$0xf]
        %v3388 = vld [vmem:[#allocation4 + $0x1bc] sm:$0xf]
        %v3389 = vpack.c.bf16 %v3380, %v3379
        %v3398 = vunpack.c.l.b16 %v3381
        %v3399 = vunpack.c.l.b16 %v3382
        %v3400 = vunpack.c.l.b16 %v3383
        %v3401 = vunpack.c.l.b16 %v3384
        %v3402 = vunpack.c.l.b16 %v3385
        %v3403 = vunpack.c.l.b16 %v3386
        %v3404 = vunpack.c.l.b16 %v3387
        %v3405 = vunpack.c.l.b16 %v3388
        %v3406 = vpack.c.b16 %v3399, %v3398
        %v3407 = vpack.c.b16 %v3401, %v3400
        %v3408 = vpack.c.b16 %v3403, %v3402
        %v3409 = vpack.c.b16 %v3405, %v3404
        %v3415 = vsel %vm2022, %v3389, 0
        %3417 = vmatprep.subr.bf16.mxu0 0
        %3418 = vmatpush1.bf16.msra.mxu0 %v3406
        %3419 = vmatprep.subr.bf16.mxu0 0
        %3420 = vmatpush1.bf16.msra.mxu0 %v3407
        %3421 = vmatprep.subr.bf16.mxu0 0
        %3422 = vmatpush1.bf16.msra.mxu0 %v3408
        %3423 = vmatprep.subr.bf16.mxu0 0
        %3424 = vmatpush1.bf16.msra.mxu0 %v3409
        %3425 = vmatprep.subr.bf16.mxu0 0
        %3426 = vmatpush1.bf16.msra.mxu0 0
        %3427 = vmatprep.subr.bf16.mxu0 0
        %3428 = vmatpush1.bf16.msra.mxu0 0
        %3429 = vmatprep.subr.bf16.mxu0 0
        %3430 = vmatpush1.bf16.msra.mxu0 0
        %3431 = vmatprep.subr.bf16.mxu0 0
        %3432 = vmatpush1.bf16.msra.mxu0 0
        %3433 = vmatprep.subr.bf16.mxu0 0
        %3434 = vmatpush1.bf16.msra.mxu0 0
        %3435 = vmatprep.subr.bf16.mxu0 0
        %3436 = vmatpush1.bf16.msra.mxu0 0
        %3437 = vmatprep.subr.bf16.mxu0 0
        %3438 = vmatpush1.bf16.msra.mxu0 0
        %3439 = vmatprep.subr.bf16.mxu0 0
        %3440 = vmatpush1.bf16.msra.mxu0 0
        %3441 = vmatprep.subr.bf16.mxu0 0
        %3442 = vmatpush1.bf16.msra.mxu0 0
        %3443 = vmatprep.subr.bf16.mxu0 0
        %3444 = vmatpush1.bf16.msra.mxu0 0
        %3445 = vmatprep.subr.bf16.mxu0 0
        %3446 = vmatpush1.bf16.msra.mxu0 0
        %3447 = vmatprep.subr.bf16.mxu0 0
        %3448 = vmatpush1.bf16.msra.mxu0 0
        %3449 = vmatprep.mubr.bf16.mxu0 0
        %3450 = vmatmul.mubr.bf16.gmra.mrb[0].mxu0 %v3415
        %v3451 = vpop.f32.mrb[0].mxu0
        %v3452 = vadd.f32 0.0, %v3451
        %v3453 = vpop.f32.mrb[0].mxu0
        %v3454 = vpop.f32.mrb[0].mxu0
        %v3455 = vadd.f32 0.0, %v3454
        %v3456 = vpop.f32.mrb[0].mxu0
        %3457 = vdwg.mxu0
        %v3458 = vadd.f32 %v3287, %v3452
        %v3459 = vadd.f32 %v3288, %v3455
        %v3460 = vld [vmem:[#allocation6 + $0x35] sm:$0x1]
        %v3461 = vlaneseq
        %v3462 = vshrl.u32 %v3461, 7
        %v3463 = vsub.s32 0, %v3462
        %v3464 = vrot.slane %v3460, %v3463
        %v3465 = vadd.f32 %v3458, %v3464
        %v3466 = vadd.f32 %v3459, %v3464
        %v3467 = vld [vmem:[#allocation6 + $0x3a] sm:$0x1]
        %v3468 = vld [vmem:[#allocation6 + $0x3b] sm:$0x1]
        %v3469 = vsel %vm884, %v3465, 0.0
        %3470 = vadd.xlane.f32.xlu0 %v3469
        %v3471 = vpop.xlane.xlu0 %3470
        %v3472 = vsel %vm1327, %v3466, 0.0
        %3473 = vadd.xlane.f32.xlu0 %v3472
        %v3474 = vpop.xlane.xlu0 %3473
        %v3475 = vmul.f32 %v3471, %v1331
        %v3476 = vmul.f32 %v3474, %v1331
        %v3477 = vmul.f32 %v3465, %v3465
        %v3478 = vmul.f32 %v3466, %v3466
        %v3479 = vsel %vm884, %v3477, 0.0
        %3480 = vadd.xlane.f32.xlu0 %v3479
        %v3481 = vpop.xlane.xlu0 %3480
        %v3482 = vsel %vm1327, %v3478, 0.0
        %3483 = vadd.xlane.f32.xlu0 %v3482
        %v3484 = vpop.xlane.xlu0 %3483
        %v3485 = vmul.f32 %v3481, %v1331
        %v3486 = vmul.f32 %v3484, %v1331
        %v3487 = vsub.f32 %v3465, %v3475
        %v3488 = vsub.f32 %v3466, %v3476
        %v3489 = vmul.f32 %v3475, %v3475
        %v3490 = vmul.f32 %v3476, %v3476
        %v3491 = vsub.f32 %v3485, %v3489
        %v3492 = vsub.f32 %v3486, %v3490
        %v3493 = vadd.f32 %v3491, 1e-05
        %v3494 = vadd.f32 %v3492, 1e-05
        %v3495 = vrsqrt.pop %v3493
        %v3496 = vrsqrt.pop %v3494
        %v3497 = vmul.f32 %v3487, %v3495
        %v3498 = vmul.f32 %v3488, %v3496
        %v3499 = vlaneseq
        %v3500 = vshrl.u32 %v3499, 7
        %v3501 = vsub.s32 0, %v3500
        %v3502 = vrot.slane %v3467, %v3501
        %v3503 = vmul.f32 %v3497, %v3502
        %v3504 = vmul.f32 %v3498, %v3502
        %v3505 = vlaneseq
        %v3506 = vshrl.u32 %v3505, 7
        %v3507 = vsub.s32 0, %v3506
        %v3508 = vrot.slane %v3468, %v3507
        %v3509 = vadd.f32 %v3503, %v3508
        %v3510 = vadd.f32 %v3504, %v3508
        %v3511 = vld [vmem:[#allocation6 + $0x3c] sm:$0x1]
        %v3512 = vld [vmem:[#allocation6 + $0x3d] sm:$0x1]
        %v3513 = vsel %vm884, %v3509, 0.0
        %3514 = vadd.xlane.f32.xlu0 %v3513
        %v3515 = vpop.xlane.xlu0 %3514
        %v3516 = vsel %vm1327, %v3510, 0.0
        %3517 = vadd.xlane.f32.xlu0 %v3516
        %v3518 = vpop.xlane.xlu0 %3517
        %v3519 = vmul.f32 %v3515, %v1331
        %v3520 = vmul.f32 %v3518, %v1331
        %v3521 = vmul.f32 %v3509, %v3509
        %v3522 = vmul.f32 %v3510, %v3510
        %v3523 = vsel %vm884, %v3521, 0.0
        %3524 = vadd.xlane.f32.xlu0 %v3523
        %v3525 = vpop.xlane.xlu0 %3524
        %v3526 = vsel %vm1327, %v3522, 0.0
        %3527 = vadd.xlane.f32.xlu0 %v3526
        %v3528 = vpop.xlane.xlu0 %3527
        %v3529 = vmul.f32 %v3525, %v1331
        %v3530 = vmul.f32 %v3528, %v1331
        %v3531 = vsub.f32 %v3509, %v3519
        %v3532 = vsub.f32 %v3510, %v3520
        %v3533 = vmul.f32 %v3519, %v3519
        %v3534 = vmul.f32 %v3520, %v3520
        %v3535 = vsub.f32 %v3529, %v3533
        %v3536 = vsub.f32 %v3530, %v3534
        %v3537 = vadd.f32 %v3535, 1e-05
        %v3538 = vadd.f32 %v3536, 1e-05
        %v3539 = vrsqrt.pop %v3537
        %v3540 = vrsqrt.pop %v3538
        %v3541 = vmul.f32 %v3531, %v3539
        %v3542 = vmul.f32 %v3532, %v3540
        %v3543 = vlaneseq
        %v3544 = vshrl.u32 %v3543, 7
        %v3545 = vsub.s32 0, %v3544
        %v3546 = vrot.slane %v3511, %v3545
        %v3547 = vmul.f32 %v3541, %v3546
        %v3548 = vmul.f32 %v3542, %v3546
        %v3549 = vlaneseq
        %v3550 = vshrl.u32 %v3549, 7
        %v3551 = vsub.s32 0, %v3550
        %v3552 = vrot.slane %v3512, %v3551
        %v3553 = vadd.f32 %v3547, %v3552
        %v3554 = vadd.f32 %v3548, %v3552
        %v3555 = vld [vmem:[#allocation6 + $0x14] sm:$0xf]
        %v3556 = vld [vmem:[#allocation4 + $0x1c0] sm:$0xf]
        %v3557 = vld [vmem:[#allocation4 + $0x1c4] sm:$0xf]
        %v3558 = vld [vmem:[#allocation4 + $0x1c8] sm:$0xf]
        %v3559 = vld [vmem:[#allocation4 + $0x1cc] sm:$0xf]
        %v3560 = vld [vmem:[#allocation4 + $0x1d0] sm:$0xf]
        %v3561 = vld [vmem:[#allocation4 + $0x1d4] sm:$0xf]
        %v3562 = vld [vmem:[#allocation4 + $0x1d8] sm:$0xf]
        %v3563 = vld [vmem:[#allocation4 + $0x1dc] sm:$0xf]
        %v3564 = vld [vmem:[#allocation4 + $0x1e0] sm:$0xf]
        %v3565 = vld [vmem:[#allocation4 + $0x1e4] sm:$0xf]
        %v3566 = vld [vmem:[#allocation4 + $0x1e8] sm:$0xf]
        %v3567 = vld [vmem:[#allocation4 + $0x1ec] sm:$0xf]
        %v3568 = vpack.c.bf16 %v3555, %v3555
        %v3581 = vunpack.c.l.b16 %v3556
        %v3582 = vunpack.c.l.b16 %v3557
        %v3583 = vunpack.c.l.b16 %v3558
        %v3584 = vunpack.c.l.b16 %v3559
        %v3585 = vunpack.c.l.b16 %v3560
        %v3586 = vunpack.c.l.b16 %v3561
        %v3587 = vunpack.c.l.b16 %v3562
        %v3588 = vunpack.c.l.b16 %v3563
        %v3589 = vunpack.c.l.b16 %v3564
        %v3590 = vunpack.c.l.b16 %v3565
        %v3591 = vunpack.c.l.b16 %v3566
        %v3592 = vunpack.c.l.b16 %v3567
        %v3593 = vpack.c.b16 %v3582, %v3581
        %v3594 = vpack.c.b16 %v3584, %v3583
        %v3595 = vpack.c.b16 %v3586, %v3585
        %v3596 = vpack.c.b16 %v3588, %v3587
        %v3597 = vpack.c.b16 %v3590, %v3589
        %v3598 = vpack.c.b16 %v3592, %v3591
        %v3600 = vsel %vm884, %v3568, 0
        %v3603 = vsel %vm884, %v3593, 0
        %v3606 = vsel %vm884, %v3594, 0
        %v3609 = vsel %vm884, %v3595, 0
        %v3612 = vsel %vm884, %v3596, 0
        %v3615 = vsel %vm884, %v3597, 0
        %v3618 = vsel %vm884, %v3598, 0
        %3620 = vmatprep.subr.bf16.mxu0 0
        %3621 = vmatpush1.bf16.xpose.msra.mxu0 %v3603
        %3622 = vmatprep.subr.bf16.mxu0 0
        %3623 = vmatpush1.bf16.xpose.msra.mxu0 %v3606
        %3624 = vmatprep.subr.bf16.mxu0 0
        %3625 = vmatpush1.bf16.xpose.msra.mxu0 %v3609
        %3626 = vmatprep.subr.bf16.mxu0 0
        %3627 = vmatpush1.bf16.xpose.msra.mxu0 %v3612
        %3628 = vmatprep.subr.bf16.mxu0 0
        %3629 = vmatpush1.bf16.xpose.msra.mxu0 %v3615
        %3630 = vmatprep.subr.bf16.mxu0 0
        %3631 = vmatpush1.bf16.xpose.msra.mxu0 %v3618
        %3632 = vmatprep.subr.bf16.mxu0 0
        %3633 = vmatpush1.bf16.xpose.msra.mxu0 0
        %3634 = vmatprep.subr.bf16.mxu0 0
        %3635 = vmatpush1.bf16.xpose.msra.mxu0 0
        %3636 = vmatprep.subr.bf16.mxu0 0
        %3637 = vmatpush1.bf16.xpose.msra.mxu0 0
        %3638 = vmatprep.subr.bf16.mxu0 0
        %3639 = vmatpush1.bf16.xpose.msra.mxu0 0
        %3640 = vmatprep.subr.bf16.mxu0 0
        %3641 = vmatpush1.bf16.xpose.msra.mxu0 0
        %3642 = vmatprep.subr.bf16.mxu0 0
        %3643 = vmatpush1.bf16.xpose.msra.mxu0 0
        %3644 = vmatprep.subr.bf16.mxu0 0
        %3645 = vmatpush1.bf16.xpose.msra.mxu0 0
        %3646 = vmatprep.subr.bf16.mxu0 0
        %3647 = vmatpush1.bf16.xpose.msra.mxu0 0
        %3648 = vmatprep.subr.bf16.mxu0 0
        %3649 = vmatpush1.bf16.xpose.msra.mxu0 0
        %3650 = vmatprep.subr.bf16.mxu0 0
        %3651 = vmatpush1.bf16.xpose.msra.mxu0 0
        %3652 = vmatprep.mubr.bf16.mxu0 0
        %3653 = vmatmul.mubr.bf16.gmra.mrb[0].mxu0 %v3600
        %v3654 = vpop.f32.mrb[0].mxu0
        %v3655 = vadd.f32 0.0, %v3654
        %v3656 = vpop.f32.mrb[0].mxu0
        %v3657 = vpop.f32.mrb[0].mxu0
        %v3658 = vpop.f32.mrb[0].mxu0
        %3659 = vdwg.mxu0
        %v3660 = vld [vmem:[#allocation6 + $0x3e] sm:$0x1]
        %v3661 = vlaneseq
        %v3662 = vshrl.u32 %v3661, 7
        %v3663 = vsub.s32 0, %v3662
        %v3664 = vrot.slane %v3660, %v3663
        %v3665 = vadd.f32 %v3655, %v3664
        %v3666 = vld [vmem:[#allocation6 + $0x3f] sm:$0x1]
        %v3667 = vlaneseq
        %v3668 = vshrl.u32 %v3667, 7
        %v3669 = vsub.s32 0, %v3668
        %v3670 = vrot.slane %v3666, %v3669
        %3672 = vrot.lane.b32.xlu0 %v3670, 32
        %v3673 = vpop.permute.xlu0 %3672
        %v3675 = vadd.f32 %v3655, %v3673
        %v3676 = vld [vmem:[#allocation6 + $0x40] sm:$0x1]
        %v3677 = vlaneseq
        %v3678 = vshrl.u32 %v3677, 7
        %v3679 = vsub.s32 0, %v3678
        %v3680 = vrot.slane %v3676, %v3679
        %3682 = vrot.lane.b32.xlu0 %v3680, 64
        %v3683 = vpop.permute.xlu0 %3682
        %v3685 = vadd.f32 %v3655, %v3683
        %v3686 = vld [vmem:[#allocation4 + $0x1f0] sm:$0xf]
        %v3687 = vld [vmem:[#allocation4 + $0x1f4] sm:$0xf]
        %v3688 = vld [vmem:[#allocation4 + $0x1f8] sm:$0xf]
        %v3689 = vld [vmem:[#allocation4 + $0x1fc] sm:$0xf]
        %v3690 = vld [vmem:[#allocation6 + $0x41] sm:$0x1]
        %v3691 = vpack.c.bf16 %v3665, %v3665
        %v3692 = vpack.c.bf16 %v3675, %v3675
        %3694 = vrot.lane.b32.xlu0 %v3692, 96
        %v3695 = vpop.permute.xlu0 %3694
        %v3697 = vsel %vm982, %v3691, 0
        %v3700 = vsel %vm982, %v3695, 0
        %3702 = vmatprep.subr.bf16.mxu0 0
        %3703 = vmatpush1.bf16.xpose.msra.mxu0 %v3700
        %3704 = vmatprep.subr.bf16.mxu0 0
        %3705 = vmatpush1.bf16.xpose.msra.mxu0 0
        %3706 = vmatprep.subr.bf16.mxu0 0
        %3707 = vmatpush1.bf16.xpose.msra.mxu0 0
        %3708 = vmatprep.subr.bf16.mxu0 0
        %3709 = vmatpush1.bf16.xpose.msra.mxu0 0
        %3710 = vmatprep.subr.bf16.mxu0 0
        %3711 = vmatpush1.bf16.xpose.msra.mxu0 0
        %3712 = vmatprep.subr.bf16.mxu0 0
        %3713 = vmatpush1.bf16.xpose.msra.mxu0 0
        %3714 = vmatprep.subr.bf16.mxu0 0
        %3715 = vmatpush1.bf16.xpose.msra.mxu0 0
        %3716 = vmatprep.subr.bf16.mxu0 0
        %3717 = vmatpush1.bf16.xpose.msra.mxu0 0
        %3718 = vmatprep.subr.bf16.mxu0 0
        %3719 = vmatpush1.bf16.xpose.msra.mxu0 0
        %3720 = vmatprep.subr.bf16.mxu0 0
        %3721 = vmatpush1.bf16.xpose.msra.mxu0 0
        %3722 = vmatprep.subr.bf16.mxu0 0
        %3723 = vmatpush1.bf16.xpose.msra.mxu0 0
        %3724 = vmatprep.subr.bf16.mxu0 0
        %3725 = vmatpush1.bf16.xpose.msra.mxu0 0
        %3726 = vmatprep.subr.bf16.mxu0 0
        %3727 = vmatpush1.bf16.xpose.msra.mxu0 0
        %3728 = vmatprep.subr.bf16.mxu0 0
        %3729 = vmatpush1.bf16.xpose.msra.mxu0 0
        %3730 = vmatprep.subr.bf16.mxu0 0
        %3731 = vmatpush1.bf16.xpose.msra.mxu0 0
        %3732 = vmatprep.subr.bf16.mxu0 0
        %3733 = vmatpush1.bf16.xpose.msra.mxu0 0
        %3734 = vmatprep.mubr.bf16.mxu0 0
        %3735 = vmatmul.mubr.bf16.gmra.mrb[0].mxu0 %v3697
        %v3736 = vpop.f32.mrb[0].mxu0
        %v3737 = vadd.f32 0.0, %v3736
        %v3738 = vpop.f32.mrb[0].mxu0
        %v3739 = vpop.f32.mrb[0].mxu0
        %v3740 = vpop.f32.mrb[0].mxu0
        %3741 = vdwg.mxu0
        %v3742 = vsel %vm1029, %v3737, -inf
        %3743 = vmax.xlane.f32.xlu0 %v3742
        %v3744 = vpop.xlane.xlu0 %3743
        %v3745 = vsub.f32 %v3737, %v3744
        %v3746 = vmul.f32 %v3745, 1.442695
        %v3747 = vpow.pop %v3746
        %v3748 = vsel %vm1029, %v3747, 0.0
        %3749 = vadd.xlane.f32.xlu0 %v3748
        %v3750 = vpop.xlane.xlu0 %3749
        %v3751 = vrcp.pop %v3750
        %v3752 = vmul.f32 %v3747, %v3751
        %v3753 = vpack.c.bf16 %v3752, %v3752
        %v3754 = vpack.c.bf16 %v3685, %v3685
        %3756 = vrot.lane.b32.xlu0 %v3754, 64
        %v3757 = vpop.permute.xlu0 %3756
        %v3759 = vsel %vm1046, %v3753, 0
        %v3762 = vsel %vm1050, %v3757, 0
        %3764 = vmatprep.subr.bf16.mxu0 0
        %3765 = vmatpush1.bf16.msra.mxu0 %v3762
        %3766 = vmatprep.subr.bf16.mxu0 0
        %3767 = vmatpush1.bf16.msra.mxu0 0
        %3768 = vmatprep.subr.bf16.mxu0 0
        %3769 = vmatpush1.bf16.msra.mxu0 0
        %3770 = vmatprep.subr.bf16.mxu0 0
        %3771 = vmatpush1.bf16.msra.mxu0 0
        %3772 = vmatprep.subr.bf16.mxu0 0
        %3773 = vmatpush1.bf16.msra.mxu0 0
        %3774 = vmatprep.subr.bf16.mxu0 0
        %3775 = vmatpush1.bf16.msra.mxu0 0
        %3776 = vmatprep.subr.bf16.mxu0 0
        %3777 = vmatpush1.bf16.msra.mxu0 0
        %3778 = vmatprep.subr.bf16.mxu0 0
        %3779 = vmatpush1.bf16.msra.mxu0 0
        %3780 = vmatprep.subr.bf16.mxu0 0
        %3781 = vmatpush1.bf16.msra.mxu0 0
        %3782 = vmatprep.subr.bf16.mxu0 0
        %3783 = vmatpush1.bf16.msra.mxu0 0
        %3784 = vmatprep.subr.bf16.mxu0 0
        %3785 = vmatpush1.bf16.msra.mxu0 0
        %3786 = vmatprep.subr.bf16.mxu0 0
        %3787 = vmatpush1.bf16.msra.mxu0 0
        %3788 = vmatprep.subr.bf16.mxu0 0
        %3789 = vmatpush1.bf16.msra.mxu0 0
        %3790 = vmatprep.subr.bf16.mxu0 0
        %3791 = vmatpush1.bf16.msra.mxu0 0
        %3792 = vmatprep.subr.bf16.mxu0 0
        %3793 = vmatpush1.bf16.msra.mxu0 0
        %3794 = vmatprep.subr.bf16.mxu0 0
        %3795 = vmatpush1.bf16.msra.mxu0 0
        %3796 = vmatprep.mubr.bf16.mxu0 0
        %3797 = vmatmul.mubr.bf16.gmra.mrb[0].mxu0 %v3759
        %v3798 = vpop.f32.mrb[0].mxu0
        %v3799 = vadd.f32 0.0, %v3798
        %v3800 = vpop.f32.mrb[0].mxu0
        %v3801 = vpop.f32.mrb[0].mxu0
        %v3802 = vpop.f32.mrb[0].mxu0
        %3803 = vdwg.mxu0
        %v3804 = vpack.c.bf16 %v3799, %v3799
        %3806 = vrot.lane.b32.xlu0 %v3691, 112
        %v3807 = vpop.permute.xlu0 %3806
        %3808 = vrot.lane.b32.xlu0 %v3692, 80
        %v3809 = vpop.permute.xlu0 %3808
        %v3811 = vsel %vm982, %v3807, 0
        %v3814 = vsel %vm982, %v3809, 0
        %3816 = vmatprep.subr.bf16.mxu0 0
        %3817 = vmatpush1.bf16.xpose.msra.mxu0 %v3814
        %3818 = vmatprep.subr.bf16.mxu0 0
        %3819 = vmatpush1.bf16.xpose.msra.mxu0 0
        %3820 = vmatprep.subr.bf16.mxu0 0
        %3821 = vmatpush1.bf16.xpose.msra.mxu0 0
        %3822 = vmatprep.subr.bf16.mxu0 0
        %3823 = vmatpush1.bf16.xpose.msra.mxu0 0
        %3824 = vmatprep.subr.bf16.mxu0 0
        %3825 = vmatpush1.bf16.xpose.msra.mxu0 0
        %3826 = vmatprep.subr.bf16.mxu0 0
        %3827 = vmatpush1.bf16.xpose.msra.mxu0 0
        %3828 = vmatprep.subr.bf16.mxu0 0
        %3829 = vmatpush1.bf16.xpose.msra.mxu0 0
        %3830 = vmatprep.subr.bf16.mxu0 0
        %3831 = vmatpush1.bf16.xpose.msra.mxu0 0
        %3832 = vmatprep.subr.bf16.mxu0 0
        %3833 = vmatpush1.bf16.xpose.msra.mxu0 0
        %3834 = vmatprep.subr.bf16.mxu0 0
        %3835 = vmatpush1.bf16.xpose.msra.mxu0 0
        %3836 = vmatprep.subr.bf16.mxu0 0
        %3837 = vmatpush1.bf16.xpose.msra.mxu0 0
        %3838 = vmatprep.subr.bf16.mxu0 0
        %3839 = vmatpush1.bf16.xpose.msra.mxu0 0
        %3840 = vmatprep.subr.bf16.mxu0 0
        %3841 = vmatpush1.bf16.xpose.msra.mxu0 0
        %3842 = vmatprep.subr.bf16.mxu0 0
        %3843 = vmatpush1.bf16.xpose.msra.mxu0 0
        %3844 = vmatprep.subr.bf16.mxu0 0
        %3845 = vmatpush1.bf16.xpose.msra.mxu0 0
        %3846 = vmatprep.subr.bf16.mxu0 0
        %3847 = vmatpush1.bf16.xpose.msra.mxu0 0
        %3848 = vmatprep.mubr.bf16.mxu0 0
        %3849 = vmatmul.mubr.bf16.gmra.mrb[0].mxu0 %v3811
        %v3850 = vpop.f32.mrb[0].mxu0
        %v3851 = vadd.f32 0.0, %v3850
        %v3852 = vpop.f32.mrb[0].mxu0
        %v3853 = vpop.f32.mrb[0].mxu0
        %v3854 = vpop.f32.mrb[0].mxu0
        %3855 = vdwg.mxu0
        %v3856 = vsel %vm1029, %v3851, -inf
        %3857 = vmax.xlane.f32.xlu0 %v3856
        %v3858 = vpop.xlane.xlu0 %3857
        %v3859 = vsub.f32 %v3851, %v3858
        %v3860 = vmul.f32 %v3859, 1.442695
        %v3861 = vpow.pop %v3860
        %v3862 = vsel %vm1029, %v3861, 0.0
        %3863 = vadd.xlane.f32.xlu0 %v3862
        %v3864 = vpop.xlane.xlu0 %3863
        %v3865 = vrcp.pop %v3864
        %v3866 = vmul.f32 %v3861, %v3865
        %v3867 = vpack.c.bf16 %v3866, %v3866
        %3868 = vrot.lane.b32.xlu0 %v3754, 48
        %v3869 = vpop.permute.xlu0 %3868
        %v3871 = vsel %vm1046, %v3867, 0
        %v3874 = vsel %vm1050, %v3869, 0
        %3876 = vmatprep.subr.bf16.mxu0 0
        %3877 = vmatpush1.bf16.msra.mxu0 %v3874
        %3878 = vmatprep.subr.bf16.mxu0 0
        %3879 = vmatpush1.bf16.msra.mxu0 0
        %3880 = vmatprep.subr.bf16.mxu0 0
        %3881 = vmatpush1.bf16.msra.mxu0 0
        %3882 = vmatprep.subr.bf16.mxu0 0
        %3883 = vmatpush1.bf16.msra.mxu0 0
        %3884 = vmatprep.subr.bf16.mxu0 0
        %3885 = vmatpush1.bf16.msra.mxu0 0
        %3886 = vmatprep.subr.bf16.mxu0 0
        %3887 = vmatpush1.bf16.msra.mxu0 0
        %3888 = vmatprep.subr.bf16.mxu0 0
        %3889 = vmatpush1.bf16.msra.mxu0 0
        %3890 = vmatprep.subr.bf16.mxu0 0
        %3891 = vmatpush1.bf16.msra.mxu0 0
        %3892 = vmatprep.subr.bf16.mxu0 0
        %3893 = vmatpush1.bf16.msra.mxu0 0
        %3894 = vmatprep.subr.bf16.mxu0 0
        %3895 = vmatpush1.bf16.msra.mxu0 0
        %3896 = vmatprep.subr.bf16.mxu0 0
        %3897 = vmatpush1.bf16.msra.mxu0 0
        %3898 = vmatprep.subr.bf16.mxu0 0
        %3899 = vmatpush1.bf16.msra.mxu0 0
        %3900 = vmatprep.subr.bf16.mxu0 0
        %3901 = vmatpush1.bf16.msra.mxu0 0
        %3902 = vmatprep.subr.bf16.mxu0 0
        %3903 = vmatpush1.bf16.msra.mxu0 0
        %3904 = vmatprep.subr.bf16.mxu0 0
        %3905 = vmatpush1.bf16.msra.mxu0 0
        %3906 = vmatprep.subr.bf16.mxu0 0
        %3907 = vmatpush1.bf16.msra.mxu0 0
        %3908 = vmatprep.mubr.bf16.mxu0 0
        %3909 = vmatmul.mubr.bf16.gmra.mrb[0].mxu0 %v3871
        %v3910 = vpop.f32.mrb[0].mxu0
        %v3911 = vadd.f32 0.0, %v3910
        %v3912 = vpop.f32.mrb[0].mxu0
        %v3913 = vpop.f32.mrb[0].mxu0
        %v3914 = vpop.f32.mrb[0].mxu0
        %3915 = vdwg.mxu0
        %v3916 = vpack.c.bf16 %v3911, %v3911
        %v3921 = vunpack.c.l.b16 %v3686
        %v3922 = vunpack.c.l.b16 %v3687
        %v3923 = vunpack.c.l.b16 %v3688
        %v3924 = vunpack.c.l.b16 %v3689
        %v3925 = vpack.c.b16 %v3922, %v3921
        %v3926 = vpack.c.b16 %v3924, %v3923
        %3927 = vrot.lane.b32.xlu0 %v3925, 112
        %v3928 = vpop.permute.xlu0 %3927
        %3929 = vrot.lane.b32.xlu0 %v3926, 112
        %v3930 = vpop.permute.xlu0 %3929
        %v3932 = vsel %vm982, %v3916, 0
        %v3935 = vsel %vm982, %v3928, 0
        %v3938 = vsel %vm982, %v3930, 0
        %3940 = vmatprep.subr.bf16.mxu0 0
        %3941 = vmatpush1.bf16.xpose.msra.mxu0 %v3935
        %3942 = vmatprep.subr.bf16.mxu0 0
        %3943 = vmatpush1.bf16.xpose.msra.mxu0 %v3938
        %3944 = vmatprep.subr.bf16.mxu0 0
        %3945 = vmatpush1.bf16.xpose.msra.mxu0 0
        %3946 = vmatprep.subr.bf16.mxu0 0
        %3947 = vmatpush1.bf16.xpose.msra.mxu0 0
        %3948 = vmatprep.subr.bf16.mxu0 0
        %3949 = vmatpush1.bf16.xpose.msra.mxu0 0
        %3950 = vmatprep.subr.bf16.mxu0 0
        %3951 = vmatpush1.bf16.xpose.msra.mxu0 0
        %3952 = vmatprep.subr.bf16.mxu0 0
        %3953 = vmatpush1.bf16.xpose.msra.mxu0 0
        %3954 = vmatprep.subr.bf16.mxu0 0
        %3955 = vmatpush1.bf16.xpose.msra.mxu0 0
        %3956 = vmatprep.subr.bf16.mxu0 0
        %3957 = vmatpush1.bf16.xpose.msra.mxu0 0
        %3958 = vmatprep.subr.bf16.mxu0 0
        %3959 = vmatpush1.bf16.xpose.msra.mxu0 0
        %3960 = vmatprep.subr.bf16.mxu0 0
        %3961 = vmatpush1.bf16.xpose.msra.mxu0 0
        %3962 = vmatprep.subr.bf16.mxu0 0
        %3963 = vmatpush1.bf16.xpose.msra.mxu0 0
        %3964 = vmatprep.subr.bf16.mxu0 0
        %3965 = vmatpush1.bf16.xpose.msra.mxu0 0
        %3966 = vmatprep.subr.bf16.mxu0 0
        %3967 = vmatpush1.bf16.xpose.msra.mxu0 0
        %3968 = vmatprep.subr.bf16.mxu0 0
        %3969 = vmatpush1.bf16.xpose.msra.mxu0 0
        %3970 = vmatprep.subr.bf16.mxu0 0
        %3971 = vmatpush1.bf16.xpose.msra.mxu0 0
        %3972 = vmatprep.mubr.bf16.mxu0 0
        %3973 = vmatmul.mubr.bf16.gmra.mrb[0].mxu0 %v3932
        %v3974 = vpop.f32.mrb[0].mxu0
        %v3975 = vadd.f32 0.0, %v3974
        %v3976 = vpop.f32.mrb[0].mxu0
        %v3977 = vpop.f32.mrb[0].mxu0
        %v3978 = vpop.f32.mrb[0].mxu0
        %3979 = vdwg.mxu0
        %v3981 = vsel %vm982, %v3804, 0
        %v3984 = vsel %vm982, %v3925, 0
        %v3987 = vsel %vm982, %v3926, 0
        %3989 = vmatprep.subr.bf16.mxu0 0
        %3990 = vmatpush1.bf16.xpose.msra.mxu0 %v3984
        %3991 = vmatprep.subr.bf16.mxu0 0
        %3992 = vmatpush1.bf16.xpose.msra.mxu0 %v3987
        %3993 = vmatprep.subr.bf16.mxu0 0
        %3994 = vmatpush1.bf16.xpose.msra.mxu0 0
        %3995 = vmatprep.subr.bf16.mxu0 0
        %3996 = vmatpush1.bf16.xpose.msra.mxu0 0
        %3997 = vmatprep.subr.bf16.mxu0 0
        %3998 = vmatpush1.bf16.xpose.msra.mxu0 0
        %3999 = vmatprep.subr.bf16.mxu0 0
        %4000 = vmatpush1.bf16.xpose.msra.mxu0 0
        %4001 = vmatprep.subr.bf16.mxu0 0
        %4002 = vmatpush1.bf16.xpose.msra.mxu0 0
        %4003 = vmatprep.subr.bf16.mxu0 0
        %4004 = vmatpush1.bf16.xpose.msra.mxu0 0
        %4005 = vmatprep.subr.bf16.mxu0 0
        %4006 = vmatpush1.bf16.xpose.msra.mxu0 0
        %4007 = vmatprep.subr.bf16.mxu0 0
        %4008 = vmatpush1.bf16.xpose.msra.mxu0 0
        %4009 = vmatprep.subr.bf16.mxu0 0
        %4010 = vmatpush1.bf16.xpose.msra.mxu0 0
        %4011 = vmatprep.subr.bf16.mxu0 0
        %4012 = vmatpush1.bf16.xpose.msra.mxu0 0
        %4013 = vmatprep.subr.bf16.mxu0 0
        %4014 = vmatpush1.bf16.xpose.msra.mxu0 0
        %4015 = vmatprep.subr.bf16.mxu0 0
        %4016 = vmatpush1.bf16.xpose.msra.mxu0 0
        %4017 = vmatprep.subr.bf16.mxu0 0
        %4018 = vmatpush1.bf16.xpose.msra.mxu0 0
        %4019 = vmatprep.subr.bf16.mxu0 0
        %4020 = vmatpush1.bf16.xpose.msra.mxu0 0
        %4021 = vmatprep.mubr.bf16.mxu0 0
        %4022 = vmatmul.mubr.bf16.gmra.mrb[0].mxu0 %v3981
        %v4023 = vpop.f32.mrb[0].mxu0
        %v4024 = vadd.f32 %v3975, %v4023
        %v4025 = vpop.f32.mrb[0].mxu0
        %v4026 = vpop.f32.mrb[0].mxu0
        %v4027 = vpop.f32.mrb[0].mxu0
        %4028 = vdwg.mxu0
        %v4029 = vlaneseq
        %v4030 = vshrl.u32 %v4029, 7
        %v4031 = vsub.s32 0, %v4030
        %v4032 = vrot.slane %v3690, %v4031
        %v4033 = vadd.f32 %v4024, %v4032
        %v4034 = vadd.f32 %v3555, %v4033
        %v4035 = vld [vmem:[#allocation6 + $0x47] sm:$0x1]
        %v4036 = vld [vmem:[#allocation6 + $0x48] sm:$0x1]
        %v4037 = vsel %vm1327, %v4034, 0.0
        %4038 = vadd.xlane.f32.xlu0 %v4037
        %v4039 = vpop.xlane.xlu0 %4038
        %v4040 = vmul.f32 %v4039, %v1331
        %v4041 = vmul.f32 %v4034, %v4034
        %v4042 = vsel %vm1327, %v4041, 0.0
        %4043 = vadd.xlane.f32.xlu0 %v4042
        %v4044 = vpop.xlane.xlu0 %4043
        %v4045 = vmul.f32 %v4044, %v1331
        %v4046 = vsub.f32 %v4034, %v4040
        %v4047 = vmul.f32 %v4040, %v4040
        %v4048 = vsub.f32 %v4045, %v4047
        %v4049 = vadd.f32 %v4048, 1e-05
        %v4050 = vrsqrt.pop %v4049
        %v4051 = vmul.f32 %v4046, %v4050
        %v4052 = vlaneseq
        %v4053 = vshrl.u32 %v4052, 7
        %v4054 = vsub.s32 0, %v4053
        %v4055 = vrot.slane %v4035, %v4054
        %v4056 = vmul.f32 %v4051, %v4055
        %v4057 = vlaneseq
        %v4058 = vshrl.u32 %v4057, 7
        %v4059 = vsub.s32 0, %v4058
        %v4060 = vrot.slane %v4036, %v4059
        %v4061 = vadd.f32 %v4056, %v4060
        %v4062 = vld [vmem:[#allocation4 + $0x200] sm:$0xf]
        %v4063 = vld [vmem:[#allocation4 + $0x204] sm:$0xf]
        %v4064 = vld [vmem:[#allocation4 + $0x208] sm:$0xf]
        %v4065 = vld [vmem:[#allocation4 + $0x20c] sm:$0xf]
        %v4066 = vpack.c.bf16 %v4061, %v4061
        %v4067 = vld [vmem:[#allocation6 + $0x42] sm:$0x1]
        %v4068 = vlaneseq
        %v4069 = vshrl.u32 %v4068, 7
        %v4070 = vsub.s32 0, %v4069
        %v4071 = vrot.slane %v4067, %v4070
        %v4076 = vunpack.c.l.b16 %v4062
        %v4077 = vunpack.c.l.b16 %v4063
        %v4078 = vunpack.c.l.b16 %v4064
        %v4079 = vunpack.c.l.b16 %v4065
        %v4080 = vpack.c.b16 %v4077, %v4076
        %v4081 = vpack.c.b16 %v4079, %v4078
        %v4083 = vsel %vm884, %v4066, 0
        %v4086 = vsel %vm884, %v4080, 0
        %v4089 = vsel %vm884, %v4081, 0
        %4091 = vmatprep.subr.bf16.mxu0 0
        %4092 = vmatpush1.bf16.xpose.msra.mxu0 %v4086
        %4093 = vmatprep.subr.bf16.mxu0 0
        %4094 = vmatpush1.bf16.xpose.msra.mxu0 %v4089
        %4095 = vmatprep.subr.bf16.mxu0 0
        %4096 = vmatpush1.bf16.xpose.msra.mxu0 0
        %4097 = vmatprep.subr.bf16.mxu0 0
        %4098 = vmatpush1.bf16.xpose.msra.mxu0 0
        %4099 = vmatprep.subr.bf16.mxu0 0
        %4100 = vmatpush1.bf16.xpose.msra.mxu0 0
        %4101 = vmatprep.subr.bf16.mxu0 0
        %4102 = vmatpush1.bf16.xpose.msra.mxu0 0
        %4103 = vmatprep.subr.bf16.mxu0 0
        %4104 = vmatpush1.bf16.xpose.msra.mxu0 0
        %4105 = vmatprep.subr.bf16.mxu0 0
        %4106 = vmatpush1.bf16.xpose.msra.mxu0 0
        %4107 = vmatprep.subr.bf16.mxu0 0
        %4108 = vmatpush1.bf16.xpose.msra.mxu0 0
        %4109 = vmatprep.subr.bf16.mxu0 0
        %4110 = vmatpush1.bf16.xpose.msra.mxu0 0
        %4111 = vmatprep.subr.bf16.mxu0 0
        %4112 = vmatpush1.bf16.xpose.msra.mxu0 0
        %4113 = vmatprep.subr.bf16.mxu0 0
        %4114 = vmatpush1.bf16.xpose.msra.mxu0 0
        %4115 = vmatprep.subr.bf16.mxu0 0
        %4116 = vmatpush1.bf16.xpose.msra.mxu0 0
        %4117 = vmatprep.subr.bf16.mxu0 0
        %4118 = vmatpush1.bf16.xpose.msra.mxu0 0
        %4119 = vmatprep.subr.bf16.mxu0 0
        %4120 = vmatpush1.bf16.xpose.msra.mxu0 0
        %4121 = vmatprep.subr.bf16.mxu0 0
        %4122 = vmatpush1.bf16.xpose.msra.mxu0 0
        %4123 = vmatprep.mubr.bf16.mxu0 0
        %4124 = vmatmul.mubr.bf16.gmra.mrb[0].mxu0 %v4083
        %v4125 = vpop.f32.mrb[0].mxu0
        %v4126 = vadd.f32 %v4071, %v4125
        %v4127 = vpop.f32.mrb[0].mxu0
        %v4128 = vpop.f32.mrb[0].mxu0
        %v4129 = vpop.f32.mrb[0].mxu0
        %4130 = vdwg.mxu0
        %v4131 = vld [vmem:[#allocation4 + $0x210] sm:$0xf]
        %v4132 = vld [vmem:[#allocation4 + $0x214] sm:$0xf]
        %v4133 = vld [vmem:[#allocation4 + $0x218] sm:$0xf]
        %v4134 = vld [vmem:[#allocation4 + $0x21c] sm:$0xf]
        %v4135 = vld [vmem:[#allocation4 + $0x220] sm:$0xf]
        %v4136 = vld [vmem:[#allocation4 + $0x224] sm:$0xf]
        %v4137 = vld [vmem:[#allocation4 + $0x228] sm:$0xf]
        %v4138 = vld [vmem:[#allocation4 + $0x22c] sm:$0xf]
        %v4139 = vpack.c.bf16 %v2126, %v2126
        %v4148 = vunpack.c.l.b16 %v4131
        %v4149 = vunpack.c.l.b16 %v4132
        %v4150 = vunpack.c.l.b16 %v4133
        %v4151 = vunpack.c.l.b16 %v4134
        %v4152 = vunpack.c.l.b16 %v4135
        %v4153 = vunpack.c.l.b16 %v4136
        %v4154 = vunpack.c.l.b16 %v4137
        %v4155 = vunpack.c.l.b16 %v4138
        %v4156 = vpack.c.b16 %v4149, %v4148
        %v4157 = vpack.c.b16 %v4151, %v4150
        %v4158 = vpack.c.b16 %v4153, %v4152
        %v4159 = vpack.c.b16 %v4155, %v4154
        %v4161 = vsel %vm884, %v4139, 0
        %v4164 = vsel %vm884, %v4156, 0
        %v4167 = vsel %vm884, %v4157, 0
        %v4170 = vsel %vm884, %v4158, 0
        %v4173 = vsel %vm884, %v4159, 0
        %4175 = vmatprep.subr.bf16.mxu0 0
        %4176 = vmatpush1.bf16.xpose.msra.mxu0 %v4164
        %4177 = vmatprep.subr.bf16.mxu0 0
        %4178 = vmatpush1.bf16.xpose.msra.mxu0 %v4167
        %4179 = vmatprep.subr.bf16.mxu0 0
        %4180 = vmatpush1.bf16.xpose.msra.mxu0 %v4170
        %4181 = vmatprep.subr.bf16.mxu0 0
        %4182 = vmatpush1.bf16.xpose.msra.mxu0 %v4173
        %4183 = vmatprep.subr.bf16.mxu0 0
        %4184 = vmatpush1.bf16.xpose.msra.mxu0 0
        %4185 = vmatprep.subr.bf16.mxu0 0
        %4186 = vmatpush1.bf16.xpose.msra.mxu0 0
        %4187 = vmatprep.subr.bf16.mxu0 0
        %4188 = vmatpush1.bf16.xpose.msra.mxu0 0
        %4189 = vmatprep.subr.bf16.mxu0 0
        %4190 = vmatpush1.bf16.xpose.msra.mxu0 0
        %4191 = vmatprep.subr.bf16.mxu0 0
        %4192 = vmatpush1.bf16.xpose.msra.mxu0 0
        %4193 = vmatprep.subr.bf16.mxu0 0
        %4194 = vmatpush1.bf16.xpose.msra.mxu0 0
        %4195 = vmatprep.subr.bf16.mxu0 0
        %4196 = vmatpush1.bf16.xpose.msra.mxu0 0
        %4197 = vmatprep.subr.bf16.mxu0 0
        %4198 = vmatpush1.bf16.xpose.msra.mxu0 0
        %4199 = vmatprep.subr.bf16.mxu0 0
        %4200 = vmatpush1.bf16.xpose.msra.mxu0 0
        %4201 = vmatprep.subr.bf16.mxu0 0
        %4202 = vmatpush1.bf16.xpose.msra.mxu0 0
        %4203 = vmatprep.subr.bf16.mxu0 0
        %4204 = vmatpush1.bf16.xpose.msra.mxu0 0
        %4205 = vmatprep.subr.bf16.mxu0 0
        %4206 = vmatpush1.bf16.xpose.msra.mxu0 0
        %4207 = vmatprep.mubr.bf16.mxu0 0
        %4208 = vmatmul.mubr.bf16.gmra.mrb[0].mxu0 %v4161
        %v4209 = vpop.f32.mrb[0].mxu0
        %v4210 = vadd.f32 0.0, %v4209
        %v4211 = vpop.f32.mrb[0].mxu0
        %v4212 = vpop.f32.mrb[0].mxu0
        %v4213 = vpop.f32.mrb[0].mxu0
        %4214 = vdwg.mxu0
        %v4215 = vld [vmem:[#allocation6 + $0x43] sm:$0x1]
        %v4216 = vlaneseq
        %v4217 = vshrl.u32 %v4216, 7
        %v4218 = vsub.s32 0, %v4217
        %v4219 = vrot.slane %v4215, %v4218
        %v4220 = vadd.f32 %v4210, %v4219
        %v4221 = vld [vmem:[#allocation6 + $0x44] sm:$0x1]
        %v4222 = vlaneseq
        %v4223 = vshrl.u32 %v4222, 7
        %v4224 = vsub.s32 0, %v4223
        %v4225 = vrot.slane %v4221, %v4224
        %4227 = vrot.lane.b32.xlu0 %v4225, 32
        %v4228 = vpop.permute.xlu0 %4227
        %v4230 = vadd.f32 %v4210, %v4228
        %v4231 = vld [vmem:[#allocation4 + $0x230] sm:$0xf]
        %v4232 = vld [vmem:[#allocation4 + $0x234] sm:$0xf]
        %v4233 = vld [vmem:[#allocation4 + $0x238] sm:$0xf]
        %v4234 = vld [vmem:[#allocation4 + $0x23c] sm:$0xf]
        %v4235 = vld [vmem:[#allocation6 + $0x45] sm:$0x1]
        %v4236 = vpack.c.bf16 %v4126, %v4126
        %v4237 = vpack.c.bf16 %v4220, %v4220
        %v4239 = vsel %vm982, %v4236, 0
        %v4242 = vsel %vm982, %v4237, 0
        %4244 = vmatprep.subr.bf16.mxu0 0
        %4245 = vmatpush1.bf16.xpose.msra.mxu0 %v4242
        %4246 = vmatprep.subr.bf16.mxu0 0
        %4247 = vmatpush1.bf16.xpose.msra.mxu0 0
        %4248 = vmatprep.subr.bf16.mxu0 0
        %4249 = vmatpush1.bf16.xpose.msra.mxu0 0
        %4250 = vmatprep.subr.bf16.mxu0 0
        %4251 = vmatpush1.bf16.xpose.msra.mxu0 0
        %4252 = vmatprep.subr.bf16.mxu0 0
        %4253 = vmatpush1.bf16.xpose.msra.mxu0 0
        %4254 = vmatprep.subr.bf16.mxu0 0
        %4255 = vmatpush1.bf16.xpose.msra.mxu0 0
        %4256 = vmatprep.subr.bf16.mxu0 0
        %4257 = vmatpush1.bf16.xpose.msra.mxu0 0
        %4258 = vmatprep.subr.bf16.mxu0 0
        %4259 = vmatpush1.bf16.xpose.msra.mxu0 0
        %4260 = vmatprep.subr.bf16.mxu0 0
        %4261 = vmatpush1.bf16.xpose.msra.mxu0 0
        %4262 = vmatprep.subr.bf16.mxu0 0
        %4263 = vmatpush1.bf16.xpose.msra.mxu0 0
        %4264 = vmatprep.subr.bf16.mxu0 0
        %4265 = vmatpush1.bf16.xpose.msra.mxu0 0
        %4266 = vmatprep.subr.bf16.mxu0 0
        %4267 = vmatpush1.bf16.xpose.msra.mxu0 0
        %4268 = vmatprep.subr.bf16.mxu0 0
        %4269 = vmatpush1.bf16.xpose.msra.mxu0 0
        %4270 = vmatprep.subr.bf16.mxu0 0
        %4271 = vmatpush1.bf16.xpose.msra.mxu0 0
        %4272 = vmatprep.subr.bf16.mxu0 0
        %4273 = vmatpush1.bf16.xpose.msra.mxu0 0
        %4274 = vmatprep.subr.bf16.mxu0 0
        %4275 = vmatpush1.bf16.xpose.msra.mxu0 0
        %4276 = vmatprep.mubr.bf16.mxu0 0
        %4277 = vmatmul.mubr.bf16.gmra.mrb[0].mxu0 %v4239
        %v4278 = vpop.f32.mrb[0].mxu0
        %v4279 = vadd.f32 0.0, %v4278
        %v4280 = vpop.f32.mrb[0].mxu0
        %v4281 = vpop.f32.mrb[0].mxu0
        %v4282 = vpop.f32.mrb[0].mxu0
        %4283 = vdwg.mxu0
        %v4284 = vsel %vm1029, %v4279, -inf
        %4285 = vmax.xlane.f32.xlu0 %v4284
        %v4286 = vpop.xlane.xlu0 %4285
        %v4287 = vsub.f32 %v4279, %v4286
        %v4288 = vmul.f32 %v4287, 1.442695
        %v4289 = vpow.pop %v4288
        %v4290 = vsel %vm1029, %v4289, 0.0
        %4291 = vadd.xlane.f32.xlu0 %v4290
        %v4292 = vpop.xlane.xlu0 %4291
        %v4293 = vrcp.pop %v4292
        %v4294 = vmul.f32 %v4289, %v4293
        %v4295 = vpack.c.bf16 %v4294, %v4294
        %v4296 = vpack.c.bf16 %v4230, %v4230
        %4298 = vrot.lane.b32.xlu0 %v4296, 96
        %v4299 = vpop.permute.xlu0 %4298
        %v4301 = vsel %vm1046, %v4295, 0
        %v4304 = vsel %vm1050, %v4299, 0
        %4306 = vmatprep.subr.bf16.mxu0 0
        %4307 = vmatpush1.bf16.msra.mxu0 %v4304
        %4308 = vmatprep.subr.bf16.mxu0 0
        %4309 = vmatpush1.bf16.msra.mxu0 0
        %4310 = vmatprep.subr.bf16.mxu0 0
        %4311 = vmatpush1.bf16.msra.mxu0 0
        %4312 = vmatprep.subr.bf16.mxu0 0
        %4313 = vmatpush1.bf16.msra.mxu0 0
        %4314 = vmatprep.subr.bf16.mxu0 0
        %4315 = vmatpush1.bf16.msra.mxu0 0
        %4316 = vmatprep.subr.bf16.mxu0 0
        %4317 = vmatpush1.bf16.msra.mxu0 0
        %4318 = vmatprep.subr.bf16.mxu0 0
        %4319 = vmatpush1.bf16.msra.mxu0 0
        %4320 = vmatprep.subr.bf16.mxu0 0
        %4321 = vmatpush1.bf16.msra.mxu0 0
        %4322 = vmatprep.subr.bf16.mxu0 0
        %4323 = vmatpush1.bf16.msra.mxu0 0
        %4324 = vmatprep.subr.bf16.mxu0 0
        %4325 = vmatpush1.bf16.msra.mxu0 0
        %4326 = vmatprep.subr.bf16.mxu0 0
        %4327 = vmatpush1.bf16.msra.mxu0 0
        %4328 = vmatprep.subr.bf16.mxu0 0
        %4329 = vmatpush1.bf16.msra.mxu0 0
        %4330 = vmatprep.subr.bf16.mxu0 0
        %4331 = vmatpush1.bf16.msra.mxu0 0
        %4332 = vmatprep.subr.bf16.mxu0 0
        %4333 = vmatpush1.bf16.msra.mxu0 0
        %4334 = vmatprep.subr.bf16.mxu0 0
        %4335 = vmatpush1.bf16.msra.mxu0 0
        %4336 = vmatprep.subr.bf16.mxu0 0
        %4337 = vmatpush1.bf16.msra.mxu0 0
        %4338 = vmatprep.mubr.bf16.mxu0 0
        %4339 = vmatmul.mubr.bf16.gmra.mrb[0].mxu0 %v4301
        %v4340 = vpop.f32.mrb[0].mxu0
        %v4341 = vadd.f32 0.0, %v4340
        %v4342 = vpop.f32.mrb[0].mxu0
        %v4343 = vpop.f32.mrb[0].mxu0
        %v4344 = vpop.f32.mrb[0].mxu0
        %4345 = vdwg.mxu0
        %v4346 = vpack.c.bf16 %v4341, %v4341
        %4348 = vrot.lane.b32.xlu0 %v4236, 112
        %v4349 = vpop.permute.xlu0 %4348
        %4351 = vrot.lane.b32.xlu0 %v4237, 112
        %v4352 = vpop.permute.xlu0 %4351
        %v4354 = vsel %vm982, %v4349, 0
        %v4357 = vsel %vm982, %v4352, 0
        %4359 = vmatprep.subr.bf16.mxu0 0
        %4360 = vmatpush1.bf16.xpose.msra.mxu0 %v4357
        %4361 = vmatprep.subr.bf16.mxu0 0
        %4362 = vmatpush1.bf16.xpose.msra.mxu0 0
        %4363 = vmatprep.subr.bf16.mxu0 0
        %4364 = vmatpush1.bf16.xpose.msra.mxu0 0
        %4365 = vmatprep.subr.bf16.mxu0 0
        %4366 = vmatpush1.bf16.xpose.msra.mxu0 0
        %4367 = vmatprep.subr.bf16.mxu0 0
        %4368 = vmatpush1.bf16.xpose.msra.mxu0 0
        %4369 = vmatprep.subr.bf16.mxu0 0
        %4370 = vmatpush1.bf16.xpose.msra.mxu0 0
        %4371 = vmatprep.subr.bf16.mxu0 0
        %4372 = vmatpush1.bf16.xpose.msra.mxu0 0
        %4373 = vmatprep.subr.bf16.mxu0 0
        %4374 = vmatpush1.bf16.xpose.msra.mxu0 0
        %4375 = vmatprep.subr.bf16.mxu0 0
        %4376 = vmatpush1.bf16.xpose.msra.mxu0 0
        %4377 = vmatprep.subr.bf16.mxu0 0
        %4378 = vmatpush1.bf16.xpose.msra.mxu0 0
        %4379 = vmatprep.subr.bf16.mxu0 0
        %4380 = vmatpush1.bf16.xpose.msra.mxu0 0
        %4381 = vmatprep.subr.bf16.mxu0 0
        %4382 = vmatpush1.bf16.xpose.msra.mxu0 0
        %4383 = vmatprep.subr.bf16.mxu0 0
        %4384 = vmatpush1.bf16.xpose.msra.mxu0 0
        %4385 = vmatprep.subr.bf16.mxu0 0
        %4386 = vmatpush1.bf16.xpose.msra.mxu0 0
        %4387 = vmatprep.subr.bf16.mxu0 0
        %4388 = vmatpush1.bf16.xpose.msra.mxu0 0
        %4389 = vmatprep.subr.bf16.mxu0 0
        %4390 = vmatpush1.bf16.xpose.msra.mxu0 0
        %4391 = vmatprep.mubr.bf16.mxu0 0
        %4392 = vmatmul.mubr.bf16.gmra.mrb[0].mxu0 %v4354
        %v4393 = vpop.f32.mrb[0].mxu0
        %v4394 = vadd.f32 0.0, %v4393
        %v4395 = vpop.f32.mrb[0].mxu0
        %v4396 = vpop.f32.mrb[0].mxu0
        %v4397 = vpop.f32.mrb[0].mxu0
        %4398 = vdwg.mxu0
        %v4399 = vsel %vm1029, %v4394, -inf
        %4400 = vmax.xlane.f32.xlu0 %v4399
        %v4401 = vpop.xlane.xlu0 %4400
        %v4402 = vsub.f32 %v4394, %v4401
        %v4403 = vmul.f32 %v4402, 1.442695
        %v4404 = vpow.pop %v4403
        %v4405 = vsel %vm1029, %v4404, 0.0
        %4406 = vadd.xlane.f32.xlu0 %v4405
        %v4407 = vpop.xlane.xlu0 %4406
        %v4408 = vrcp.pop %v4407
        %v4409 = vmul.f32 %v4404, %v4408
        %v4410 = vpack.c.bf16 %v4409, %v4409
        %4411 = vrot.lane.b32.xlu0 %v4296, 80
        %v4412 = vpop.permute.xlu0 %4411
        %v4414 = vsel %vm1046, %v4410, 0
        %v4417 = vsel %vm1050, %v4412, 0
        %4419 = vmatprep.subr.bf16.mxu0 0
        %4420 = vmatpush1.bf16.msra.mxu0 %v4417
        %4421 = vmatprep.subr.bf16.mxu0 0
        %4422 = vmatpush1.bf16.msra.mxu0 0
        %4423 = vmatprep.subr.bf16.mxu0 0
        %4424 = vmatpush1.bf16.msra.mxu0 0
        %4425 = vmatprep.subr.bf16.mxu0 0
        %4426 = vmatpush1.bf16.msra.mxu0 0
        %4427 = vmatprep.subr.bf16.mxu0 0
        %4428 = vmatpush1.bf16.msra.mxu0 0
        %4429 = vmatprep.subr.bf16.mxu0 0
        %4430 = vmatpush1.bf16.msra.mxu0 0
        %4431 = vmatprep.subr.bf16.mxu0 0
        %4432 = vmatpush1.bf16.msra.mxu0 0
        %4433 = vmatprep.subr.bf16.mxu0 0
        %4434 = vmatpush1.bf16.msra.mxu0 0
        %4435 = vmatprep.subr.bf16.mxu0 0
        %4436 = vmatpush1.bf16.msra.mxu0 0
        %4437 = vmatprep.subr.bf16.mxu0 0
        %4438 = vmatpush1.bf16.msra.mxu0 0
        %4439 = vmatprep.subr.bf16.mxu0 0
        %4440 = vmatpush1.bf16.msra.mxu0 0
        %4441 = vmatprep.subr.bf16.mxu0 0
        %4442 = vmatpush1.bf16.msra.mxu0 0
        %4443 = vmatprep.subr.bf16.mxu0 0
        %4444 = vmatpush1.bf16.msra.mxu0 0
        %4445 = vmatprep.subr.bf16.mxu0 0
        %4446 = vmatpush1.bf16.msra.mxu0 0
        %4447 = vmatprep.subr.bf16.mxu0 0
        %4448 = vmatpush1.bf16.msra.mxu0 0
        %4449 = vmatprep.subr.bf16.mxu0 0
        %4450 = vmatpush1.bf16.msra.mxu0 0
        %4451 = vmatprep.mubr.bf16.mxu0 0
        %4452 = vmatmul.mubr.bf16.gmra.mrb[0].mxu0 %v4414
        %v4453 = vpop.f32.mrb[0].mxu0
        %v4454 = vadd.f32 0.0, %v4453
        %v4455 = vpop.f32.mrb[0].mxu0
        %v4456 = vpop.f32.mrb[0].mxu0
        %v4457 = vpop.f32.mrb[0].mxu0
        %4458 = vdwg.mxu0
        %v4459 = vpack.c.bf16 %v4454, %v4454
        %v4464 = vunpack.c.l.b16 %v4231
        %v4465 = vunpack.c.l.b16 %v4232
        %v4466 = vunpack.c.l.b16 %v4233
        %v4467 = vunpack.c.l.b16 %v4234
        %v4468 = vpack.c.b16 %v4465, %v4464
        %v4469 = vpack.c.b16 %v4467, %v4466
        %4470 = vrot.lane.b32.xlu0 %v4468, 112
        %v4471 = vpop.permute.xlu0 %4470
        %4472 = vrot.lane.b32.xlu0 %v4469, 112
        %v4473 = vpop.permute.xlu0 %4472
        %v4475 = vsel %vm982, %v4459, 0
        %v4478 = vsel %vm982, %v4471, 0
        %v4481 = vsel %vm982, %v4473, 0
        %4483 = vmatprep.subr.bf16.mxu0 0
        %4484 = vmatpush1.bf16.xpose.msra.mxu0 %v4478
        %4485 = vmatprep.subr.bf16.mxu0 0
        %4486 = vmatpush1.bf16.xpose.msra.mxu0 %v4481
        %4487 = vmatprep.subr.bf16.mxu0 0
        %4488 = vmatpush1.bf16.xpose.msra.mxu0 0
        %4489 = vmatprep.subr.bf16.mxu0 0
        %4490 = vmatpush1.bf16.xpose.msra.mxu0 0
        %4491 = vmatprep.subr.bf16.mxu0 0
        %4492 = vmatpush1.bf16.xpose.msra.mxu0 0
        %4493 = vmatprep.subr.bf16.mxu0 0
        %4494 = vmatpush1.bf16.xpose.msra.mxu0 0
        %4495 = vmatprep.subr.bf16.mxu0 0
        %4496 = vmatpush1.bf16.xpose.msra.mxu0 0
        %4497 = vmatprep.subr.bf16.mxu0 0
        %4498 = vmatpush1.bf16.xpose.msra.mxu0 0
        %4499 = vmatprep.subr.bf16.mxu0 0
        %4500 = vmatpush1.bf16.xpose.msra.mxu0 0
        %4501 = vmatprep.subr.bf16.mxu0 0
        %4502 = vmatpush1.bf16.xpose.msra.mxu0 0
        %4503 = vmatprep.subr.bf16.mxu0 0
        %4504 = vmatpush1.bf16.xpose.msra.mxu0 0
        %4505 = vmatprep.subr.bf16.mxu0 0
        %4506 = vmatpush1.bf16.xpose.msra.mxu0 0
        %4507 = vmatprep.subr.bf16.mxu0 0
        %4508 = vmatpush1.bf16.xpose.msra.mxu0 0
        %4509 = vmatprep.subr.bf16.mxu0 0
        %4510 = vmatpush1.bf16.xpose.msra.mxu0 0
        %4511 = vmatprep.subr.bf16.mxu0 0
        %4512 = vmatpush1.bf16.xpose.msra.mxu0 0
        %4513 = vmatprep.subr.bf16.mxu0 0
        %4514 = vmatpush1.bf16.xpose.msra.mxu0 0
        %4515 = vmatprep.mubr.bf16.mxu0 0
        %4516 = vmatmul.mubr.bf16.gmra.mrb[0].mxu0 %v4475
        %v4517 = vpop.f32.mrb[0].mxu0
        %v4518 = vadd.f32 0.0, %v4517
        %v4519 = vpop.f32.mrb[0].mxu0
        %v4520 = vpop.f32.mrb[0].mxu0
        %v4521 = vpop.f32.mrb[0].mxu0
        %4522 = vdwg.mxu0
        %v4524 = vsel %vm982, %v4346, 0
        %v4527 = vsel %vm982, %v4468, 0
        %v4530 = vsel %vm982, %v4469, 0
        %4532 = vmatprep.subr.bf16.mxu0 0
        %4533 = vmatpush1.bf16.xpose.msra.mxu0 %v4527
        %4534 = vmatprep.subr.bf16.mxu0 0
        %4535 = vmatpush1.bf16.xpose.msra.mxu0 %v4530
        %4536 = vmatprep.subr.bf16.mxu0 0
        %4537 = vmatpush1.bf16.xpose.msra.mxu0 0
        %4538 = vmatprep.subr.bf16.mxu0 0
        %4539 = vmatpush1.bf16.xpose.msra.mxu0 0
        %4540 = vmatprep.subr.bf16.mxu0 0
        %4541 = vmatpush1.bf16.xpose.msra.mxu0 0
        %4542 = vmatprep.subr.bf16.mxu0 0
        %4543 = vmatpush1.bf16.xpose.msra.mxu0 0
        %4544 = vmatprep.subr.bf16.mxu0 0
        %4545 = vmatpush1.bf16.xpose.msra.mxu0 0
        %4546 = vmatprep.subr.bf16.mxu0 0
        %4547 = vmatpush1.bf16.xpose.msra.mxu0 0
        %4548 = vmatprep.subr.bf16.mxu0 0
        %4549 = vmatpush1.bf16.xpose.msra.mxu0 0
        %4550 = vmatprep.subr.bf16.mxu0 0
        %4551 = vmatpush1.bf16.xpose.msra.mxu0 0
        %4552 = vmatprep.subr.bf16.mxu0 0
        %4553 = vmatpush1.bf16.xpose.msra.mxu0 0
        %4554 = vmatprep.subr.bf16.mxu0 0
        %4555 = vmatpush1.bf16.xpose.msra.mxu0 0
        %4556 = vmatprep.subr.bf16.mxu0 0
        %4557 = vmatpush1.bf16.xpose.msra.mxu0 0
        %4558 = vmatprep.subr.bf16.mxu0 0
        %4559 = vmatpush1.bf16.xpose.msra.mxu0 0
        %4560 = vmatprep.subr.bf16.mxu0 0
        %4561 = vmatpush1.bf16.xpose.msra.mxu0 0
        %4562 = vmatprep.subr.bf16.mxu0 0
        %4563 = vmatpush1.bf16.xpose.msra.mxu0 0
        %4564 = vmatprep.mubr.bf16.mxu0 0
        %4565 = vmatmul.mubr.bf16.gmra.mrb[0].mxu0 %v4524
        %v4566 = vpop.f32.mrb[0].mxu0
        %v4567 = vadd.f32 %v4518, %v4566
        %v4568 = vpop.f32.mrb[0].mxu0
        %v4569 = vpop.f32.mrb[0].mxu0
        %v4570 = vpop.f32.mrb[0].mxu0
        %4571 = vdwg.mxu0
        %v4572 = vlaneseq
        %v4573 = vshrl.u32 %v4572, 7
        %v4574 = vsub.s32 0, %v4573
        %v4575 = vrot.slane %v4235, %v4574
        %v4576 = vadd.f32 %v4567, %v4575
        %v4577 = vadd.f32 %v4061, %v4576
        %v4578 = vld [vmem:[#allocation6 + $0x49] sm:$0x1]
        %v4579 = vld [vmem:[#allocation6 + $0x4a] sm:$0x1]
        %v4580 = vsel %vm1327, %v4577, 0.0
        %4581 = vadd.xlane.f32.xlu0 %v4580
        %v4582 = vpop.xlane.xlu0 %4581
        %v4583 = vmul.f32 %v4582, %v1331
        %v4584 = vmul.f32 %v4577, %v4577
        %v4585 = vsel %vm1327, %v4584, 0.0
        %4586 = vadd.xlane.f32.xlu0 %v4585
        %v4587 = vpop.xlane.xlu0 %4586
        %v4588 = vmul.f32 %v4587, %v1331
        %v4589 = vsub.f32 %v4577, %v4583
        %v4590 = vmul.f32 %v4583, %v4583
        %v4591 = vsub.f32 %v4588, %v4590
        %v4592 = vadd.f32 %v4591, 1e-05
        %v4593 = vrsqrt.pop %v4592
        %v4594 = vmul.f32 %v4589, %v4593
        %v4595 = vlaneseq
        %v4596 = vshrl.u32 %v4595, 7
        %v4597 = vsub.s32 0, %v4596
        %v4598 = vrot.slane %v4578, %v4597
        %v4599 = vmul.f32 %v4594, %v4598
        %v4600 = vlaneseq
        %v4601 = vshrl.u32 %v4600, 7
        %v4602 = vsub.s32 0, %v4601
        %v4603 = vrot.slane %v4579, %v4602
        %v4604 = vadd.f32 %v4599, %v4603
        %v4605 = vld [vmem:[#allocation4 + $0x240] sm:$0xf]
        %v4606 = vld [vmem:[#allocation4 + $0x244] sm:$0xf]
        %v4607 = vld [vmem:[#allocation4 + $0x248] sm:$0xf]
        %v4608 = vld [vmem:[#allocation4 + $0x24c] sm:$0xf]
        %v4609 = vld [vmem:[#allocation4 + $0x250] sm:$0xf]
        %v4610 = vld [vmem:[#allocation4 + $0x254] sm:$0xf]
        %v4611 = vld [vmem:[#allocation4 + $0x258] sm:$0xf]
        %v4612 = vld [vmem:[#allocation4 + $0x25c] sm:$0xf]
        %v4613 = vpack.c.bf16 %v4604, %v4604
        %v4614 = vld [vmem:[%s6 + $0x2] sm:$0x1]
        %v4615 = vlaneseq
        %v4616 = vshrl.u32 %v4615, 7
        %v4617 = vsub.s32 0, %v4616
        %v4618 = vrot.slane %v4614, %v4617
        %v4627 = vunpack.c.l.b16 %v4605
        %v4628 = vunpack.c.l.b16 %v4606
        %v4629 = vunpack.c.l.b16 %v4607
        %v4630 = vunpack.c.l.b16 %v4608
        %v4631 = vunpack.c.l.b16 %v4609
        %v4632 = vunpack.c.l.b16 %v4610
        %v4633 = vunpack.c.l.b16 %v4611
        %v4634 = vunpack.c.l.b16 %v4612
        %v4635 = vpack.c.b16 %v4628, %v4627
        %v4636 = vpack.c.b16 %v4630, %v4629
        %v4637 = vpack.c.b16 %v4632, %v4631
        %v4638 = vpack.c.b16 %v4634, %v4633
        %v4640 = vsel %vm884, %v4613, 0
        %v4643 = vsel %vm884, %v4635, 0
        %v4646 = vsel %vm884, %v4636, 0
        %v4649 = vsel %vm884, %v4637, 0
        %v4652 = vsel %vm884, %v4638, 0
        %4654 = vmatprep.subr.bf16.mxu0 0
        %4655 = vmatpush1.bf16.xpose.msra.mxu0 %v4643
        %4656 = vmatprep.subr.bf16.mxu0 0
        %4657 = vmatpush1.bf16.xpose.msra.mxu0 %v4646
        %4658 = vmatprep.subr.bf16.mxu0 0
        %4659 = vmatpush1.bf16.xpose.msra.mxu0 %v4649
        %4660 = vmatprep.subr.bf16.mxu0 0
        %4661 = vmatpush1.bf16.xpose.msra.mxu0 %v4652
        %4662 = vmatprep.subr.bf16.mxu0 0
        %4663 = vmatpush1.bf16.xpose.msra.mxu0 0
        %4664 = vmatprep.subr.bf16.mxu0 0
        %4665 = vmatpush1.bf16.xpose.msra.mxu0 0
        %4666 = vmatprep.subr.bf16.mxu0 0
        %4667 = vmatpush1.bf16.xpose.msra.mxu0 0
        %4668 = vmatprep.subr.bf16.mxu0 0
        %4669 = vmatpush1.bf16.xpose.msra.mxu0 0
        %4670 = vmatprep.subr.bf16.mxu0 0
        %4671 = vmatpush1.bf16.xpose.msra.mxu0 0
        %4672 = vmatprep.subr.bf16.mxu0 0
        %4673 = vmatpush1.bf16.xpose.msra.mxu0 0
        %4674 = vmatprep.subr.bf16.mxu0 0
        %4675 = vmatpush1.bf16.xpose.msra.mxu0 0
        %4676 = vmatprep.subr.bf16.mxu0 0
        %4677 = vmatpush1.bf16.xpose.msra.mxu0 0
        %4678 = vmatprep.subr.bf16.mxu0 0
        %4679 = vmatpush1.bf16.xpose.msra.mxu0 0
        %4680 = vmatprep.subr.bf16.mxu0 0
        %4681 = vmatpush1.bf16.xpose.msra.mxu0 0
        %4682 = vmatprep.subr.bf16.mxu0 0
        %4683 = vmatpush1.bf16.xpose.msra.mxu0 0
        %4684 = vmatprep.subr.bf16.mxu0 0
        %4685 = vmatpush1.bf16.xpose.msra.mxu0 0
        %4686 = vmatprep.mubr.bf16.mxu0 0
        %4687 = vmatmul.mubr.bf16.gmra.mrb[0].mxu0 %v4640
        %v4688 = vpop.f32.mrb[0].mxu0
        %v4689 = vadd.f32 %v4618, %v4688
        %v4690 = vpop.f32.mrb[0].mxu0
        %v4691 = vpop.f32.mrb[0].mxu0
        %v4692 = vpop.f32.mrb[0].mxu0
        %4693 = vdwg.mxu0
        %v4694 = vmax.f32 %v4689, 0.0
        %v4695 = vld [vmem:[#allocation4 + $0x260] sm:$0xf]
        %v4696 = vld [vmem:[#allocation4 + $0x264] sm:$0xf]
        %v4697 = vld [vmem:[#allocation4 + $0x268] sm:$0xf]
        %v4698 = vld [vmem:[#allocation4 + $0x26c] sm:$0xf]
        %v4699 = vld [vmem:[#allocation4 + $0x270] sm:$0xf]
        %v4700 = vld [vmem:[#allocation4 + $0x274] sm:$0xf]
        %v4701 = vld [vmem:[#allocation4 + $0x278] sm:$0xf]
        %v4702 = vld [vmem:[#allocation4 + $0x27c] sm:$0xf]
        %v4703 = vpack.c.bf16 %v4694, %v4694
        %v4712 = vunpack.c.l.b16 %v4695
        %v4713 = vunpack.c.l.b16 %v4696
        %v4714 = vunpack.c.l.b16 %v4697
        %v4715 = vunpack.c.l.b16 %v4698
        %v4716 = vunpack.c.l.b16 %v4699
        %v4717 = vunpack.c.l.b16 %v4700
        %v4718 = vunpack.c.l.b16 %v4701
        %v4719 = vunpack.c.l.b16 %v4702
        %v4720 = vpack.c.b16 %v4713, %v4712
        %v4721 = vpack.c.b16 %v4715, %v4714
        %v4722 = vpack.c.b16 %v4717, %v4716
        %v4723 = vpack.c.b16 %v4719, %v4718
        %v4729 = vsel %vm2022, %v4703, 0
        %4731 = vmatprep.subr.bf16.mxu0 0
        %4732 = vmatpush1.bf16.msra.mxu0 %v4720
        %4733 = vmatprep.subr.bf16.mxu0 0
        %4734 = vmatpush1.bf16.msra.mxu0 %v4721
        %4735 = vmatprep.subr.bf16.mxu0 0
        %4736 = vmatpush1.bf16.msra.mxu0 %v4722
        %4737 = vmatprep.subr.bf16.mxu0 0
        %4738 = vmatpush1.bf16.msra.mxu0 %v4723
        %4739 = vmatprep.subr.bf16.mxu0 0
        %4740 = vmatpush1.bf16.msra.mxu0 0
        %4741 = vmatprep.subr.bf16.mxu0 0
        %4742 = vmatpush1.bf16.msra.mxu0 0
        %4743 = vmatprep.subr.bf16.mxu0 0
        %4744 = vmatpush1.bf16.msra.mxu0 0
        %4745 = vmatprep.subr.bf16.mxu0 0
        %4746 = vmatpush1.bf16.msra.mxu0 0
        %4747 = vmatprep.subr.bf16.mxu0 0
        %4748 = vmatpush1.bf16.msra.mxu0 0
        %4749 = vmatprep.subr.bf16.mxu0 0
        %4750 = vmatpush1.bf16.msra.mxu0 0
        %4751 = vmatprep.subr.bf16.mxu0 0
        %4752 = vmatpush1.bf16.msra.mxu0 0
        %4753 = vmatprep.subr.bf16.mxu0 0
        %4754 = vmatpush1.bf16.msra.mxu0 0
        %4755 = vmatprep.subr.bf16.mxu0 0
        %4756 = vmatpush1.bf16.msra.mxu0 0
        %4757 = vmatprep.subr.bf16.mxu0 0
        %4758 = vmatpush1.bf16.msra.mxu0 0
        %4759 = vmatprep.subr.bf16.mxu0 0
        %4760 = vmatpush1.bf16.msra.mxu0 0
        %4761 = vmatprep.subr.bf16.mxu0 0
        %4762 = vmatpush1.bf16.msra.mxu0 0
        %4763 = vmatprep.mubr.bf16.mxu0 0
        %4764 = vmatmul.mubr.bf16.gmra.mrb[0].mxu0 %v4729
        %v4765 = vpop.f32.mrb[0].mxu0
        %v4766 = vadd.f32 0.0, %v4765
        %v4767 = vpop.f32.mrb[0].mxu0
        %v4768 = vpop.f32.mrb[0].mxu0
        %v4769 = vpop.f32.mrb[0].mxu0
        %4770 = vdwg.mxu0
        %v4771 = vadd.f32 %v4604, %v4766
        %v4772 = vld [vmem:[#allocation6 + $0x46] sm:$0x1]
        %v4773 = vlaneseq
        %v4774 = vshrl.u32 %v4773, 7
        %v4775 = vsub.s32 0, %v4774
        %v4776 = vrot.slane %v4772, %v4775
        %v4777 = vadd.f32 %v4771, %v4776
        %v4778 = vld [vmem:[#allocation6 + $0x4b] sm:$0x1]
        %v4779 = vld [vmem:[#allocation6 + $0x4c] sm:$0x1]
        %v4780 = vsel %vm1327, %v4777, 0.0
        %4781 = vadd.xlane.f32.xlu0 %v4780
        %v4782 = vpop.xlane.xlu0 %4781
        %v4783 = vmul.f32 %v4782, %v1331
        %v4784 = vmul.f32 %v4777, %v4777
        %v4785 = vsel %vm1327, %v4784, 0.0
        %4786 = vadd.xlane.f32.xlu0 %v4785
        %v4787 = vpop.xlane.xlu0 %4786
        %v4788 = vmul.f32 %v4787, %v1331
        %v4789 = vsub.f32 %v4777, %v4783
        %v4790 = vmul.f32 %v4783, %v4783
        %v4791 = vsub.f32 %v4788, %v4790
        %v4792 = vadd.f32 %v4791, 1e-05
        %v4793 = vrsqrt.pop %v4792
        %v4794 = vmul.f32 %v4789, %v4793
        %v4795 = vlaneseq
        %v4796 = vshrl.u32 %v4795, 7
        %v4797 = vsub.s32 0, %v4796
        %v4798 = vrot.slane %v4778, %v4797
        %v4799 = vmul.f32 %v4794, %v4798
        %v4800 = vlaneseq
        %v4801 = vshrl.u32 %v4800, 7
        %v4802 = vsub.s32 0, %v4801
        %v4803 = vrot.slane %v4779, %v4802
        %v4804 = vadd.f32 %v4799, %v4803
        %v4805 = vld [vmem:[#allocation6 + $0x4d] sm:$0x1]
        %v4806 = vld [vmem:[#allocation6 + $0x4e] sm:$0x1]
        %v4807 = vsel %vm1327, %v4804, 0.0
        %4808 = vadd.xlane.f32.xlu0 %v4807
        %v4809 = vpop.xlane.xlu0 %4808
        %v4810 = vmul.f32 %v4809, %v1331
        %v4811 = vmul.f32 %v4804, %v4804
        %v4812 = vsel %vm1327, %v4811, 0.0
        %4813 = vadd.xlane.f32.xlu0 %v4812
        %v4814 = vpop.xlane.xlu0 %4813
        %v4815 = vmul.f32 %v4814, %v1331
        %v4816 = vsub.f32 %v4804, %v4810
        %v4817 = vmul.f32 %v4810, %v4810
        %v4818 = vsub.f32 %v4815, %v4817
        %v4819 = vadd.f32 %v4818, 1e-05
        %v4820 = vrsqrt.pop %v4819
        %v4821 = vmul.f32 %v4816, %v4820
        %v4822 = vlaneseq
        %v4823 = vshrl.u32 %v4822, 7
        %v4824 = vsub.s32 0, %v4823
        %v4825 = vrot.slane %v4805, %v4824
        %v4826 = vmul.f32 %v4821, %v4825
        %v4827 = vlaneseq
        %v4828 = vshrl.u32 %v4827, 7
        %v4829 = vsub.s32 0, %v4828
        %v4830 = vrot.slane %v4806, %v4829
        %v4831 = vadd.f32 %v4826, %v4830
        %v4832 = vld [vmem:[#allocation4] sm:$0xf]
        %v4833 = vld [vmem:[#allocation4 + $0x4] sm:$0xf]
        %v4834 = vld [vmem:[#allocation4 + $0x8] sm:$0xf]
        %v4835 = vld [vmem:[#allocation4 + $0xc] sm:$0xf]
        %v4836 = vld [vmem:[#allocation4 + $0x10] sm:$0xf]
        %v4837 = vld [vmem:[#allocation4 + $0x14] sm:$0xf]
        %v4838 = vld [vmem:[#allocation4 + $0x18] sm:$0xf]
        %v4839 = vld [vmem:[#allocation4 + $0x1c] sm:$0xf]
        %v4840 = vld [vmem:[#allocation4 + $0x20] sm:$0xf]
        %v4841 = vld [vmem:[#allocation4 + $0x24] sm:$0xf]
        %v4842 = vld [vmem:[#allocation4 + $0x28] sm:$0xf]
        %v4843 = vld [vmem:[#allocation4 + $0x2c] sm:$0xf]
        %v4844 = vld [vmem:[#allocation4 + $0x30] sm:$0xf]
        %v4845 = vld [vmem:[#allocation4 + $0x34] sm:$0xf]
        %v4846 = vld [vmem:[#allocation4 + $0x38] sm:$0xf]
        %v4847 = vld [vmem:[#allocation4 + $0x3c] sm:$0xf]
        %v4848 = vld [vmem:[%s7] sm:$0x1]
        %v4849 = vpack.c.bf16 %v3554, %v3553
        %v4851 = vlaneseq
        %v4852 = vshrl.u32 %v4851, 7
        %v4853 = vsub.s32 0, %v4852
        %v4854 = vrot.slane %v4848, %v4853
        %v4857 = vrot.slane %v4849, 1
        %v4874 = vunpack.c.l.b16 %v4832
        %v4875 = vunpack.c.l.b16 %v4833
        %v4876 = vunpack.c.l.b16 %v4834
        %v4877 = vunpack.c.l.b16 %v4835
        %v4878 = vunpack.c.l.b16 %v4836
        %v4879 = vunpack.c.l.b16 %v4837
        %v4880 = vunpack.c.l.b16 %v4838
        %v4881 = vunpack.c.l.b16 %v4839
        %v4882 = vunpack.c.l.b16 %v4840
        %v4883 = vunpack.c.l.b16 %v4841
        %v4884 = vunpack.c.l.b16 %v4842
        %v4885 = vunpack.c.l.b16 %v4843
        %v4886 = vunpack.c.l.b16 %v4844
        %v4887 = vunpack.c.l.b16 %v4845
        %v4888 = vunpack.c.l.b16 %v4846
        %v4889 = vunpack.c.l.b16 %v4847
        %v4890 = vpack.c.b16 %v4875, %v4874
        %v4891 = vpack.c.b16 %v4877, %v4876
        %v4892 = vpack.c.b16 %v4879, %v4878
        %v4893 = vpack.c.b16 %v4881, %v4880
        %v4894 = vpack.c.b16 %v4883, %v4882
        %v4895 = vpack.c.b16 %v4885, %v4884
        %v4896 = vpack.c.b16 %v4887, %v4886
        %v4897 = vpack.c.b16 %v4889, %v4888
        %v4899 = vsel %vm884, %v4857, 0
        %v4902 = vsel %vm884, %v4890, 0
        %v4905 = vsel %vm884, %v4891, 0
        %v4908 = vsel %vm884, %v4892, 0
        %v4911 = vsel %vm884, %v4893, 0
        %v4914 = vsel %vm884, %v4894, 0
        %v4917 = vsel %vm884, %v4895, 0
        %v4920 = vsel %vm884, %v4896, 0
        %v4923 = vsel %vm884, %v4897, 0
        %4925 = vmatprep.subr.bf16.mxu0 0
        %4926 = vmatpush1.bf16.xpose.msra.mxu0 %v4902
        %4927 = vmatprep.subr.bf16.mxu0 0
        %4928 = vmatpush1.bf16.xpose.msra.mxu0 %v4905
        %4929 = vmatprep.subr.bf16.mxu0 0
        %4930 = vmatpush1.bf16.xpose.msra.mxu0 %v4908
        %4931 = vmatprep.subr.bf16.mxu0 0
        %4932 = vmatpush1.bf16.xpose.msra.mxu0 %v4911
        %4933 = vmatprep.subr.bf16.mxu0 0
        %4934 = vmatpush1.bf16.xpose.msra.mxu0 %v4914
        %4935 = vmatprep.subr.bf16.mxu0 0
        %4936 = vmatpush1.bf16.xpose.msra.mxu0 %v4917
        %4937 = vmatprep.subr.bf16.mxu0 0
        %4938 = vmatpush1.bf16.xpose.msra.mxu0 %v4920
        %4939 = vmatprep.subr.bf16.mxu0 0
        %4940 = vmatpush1.bf16.xpose.msra.mxu0 %v4923
        %4941 = vmatprep.subr.bf16.mxu0 0
        %4942 = vmatpush1.bf16.xpose.msra.mxu0 0
        %4943 = vmatprep.subr.bf16.mxu0 0
        %4944 = vmatpush1.bf16.xpose.msra.mxu0 0
        %4945 = vmatprep.subr.bf16.mxu0 0
        %4946 = vmatpush1.bf16.xpose.msra.mxu0 0
        %4947 = vmatprep.subr.bf16.mxu0 0
        %4948 = vmatpush1.bf16.xpose.msra.mxu0 0
        %4949 = vmatprep.subr.bf16.mxu0 0
        %4950 = vmatpush1.bf16.xpose.msra.mxu0 0
        %4951 = vmatprep.subr.bf16.mxu0 0
        %4952 = vmatpush1.bf16.xpose.msra.mxu0 0
        %4953 = vmatprep.subr.bf16.mxu0 0
        %4954 = vmatpush1.bf16.xpose.msra.mxu0 0
        %4955 = vmatprep.subr.bf16.mxu0 0
        %4956 = vmatpush1.bf16.xpose.msra.mxu0 0
        %4957 = vmatprep.mubr.bf16.mxu0 0
        %4958 = vmatmul.mubr.bf16.gmra.mrb[0].mxu0 %v4899
        %v4959 = vpop.f32.mrb[0].mxu0
        %v4960 = vadd.f32 %v4854, %v4959
        %v4961 = vpop.f32.mrb[0].mxu0
        %v4962 = vpop.f32.mrb[0].mxu0
        %v4963 = vadd.f32 %v4854, %v4962
        %v4964 = vpop.f32.mrb[0].mxu0
        %4965 = vdwg.mxu0
        %4966 = vst [vmem:[%s560] sm:$0xff] %v4960
        %4967 = vst [vmem:[%s560 + $0x8] sm:$0x3] %v4963
        %4968 = vst.msk [vmem:[#allocation3] sm:$0xf] %vm1327, %v2126
        %4969 = vst.msk [vmem:[#allocation3 + $0x4] sm:$0xf] %vm1327, %v4831
        %vm4970 = vcmask 261122
        %4971 = vst.msk [vmem:[#allocation3 + $0x6] sm:$0xfc] %vm4970, %v3553
        %4972 = vst.msk [vmem:[#allocation3 + $0xe] sm:$0xf] %vm1327, %v3554
        %v4973 = vld [vmem:[#allocation3] sm:$0xff]
        %v4974 = vld [vmem:[#allocation3 + $0x8] sm:$0xff]
        %v4975 = vld [vmem:[#allocation3 + $0x10] sm:$0x3]
        %v4976 = vld [vmem:[#allocation12] sm:$0xff]
        %v4977 = vld [vmem:[#allocation12 + $0x8] sm:$0x3]
        %v4978 = vld [vmem:[#allocation14] sm:$0xff]
        %v4979 = vld [vmem:[#allocation14 + $0x8] sm:$0x3]
        %v4980 = vld [vmem:[#allocation4 + $0x280] sm:$0xf]
        %v4981 = vld [vmem:[#allocation4 + $0x284] sm:$0xf]
        %v4982 = vld [vmem:[#allocation4 + $0x288] sm:$0xf]
        %v4983 = vld [vmem:[#allocation4 + $0x28c] sm:$0xf]
        %v4984 = vld [vmem:[#allocation4 + $0x290] sm:$0xf]
        %v4985 = vld [vmem:[#allocation4 + $0x294] sm:$0xf]
        %v4986 = vld [vmem:[#allocation4 + $0x298] sm:$0xf]
        %v4987 = vld [vmem:[#allocation4 + $0x29c] sm:$0xf]
        %v4988 = vld [vmem:[#allocation4 + $0x2a0] sm:$0xf]
        %v4989 = vld [vmem:[#allocation4 + $0x2a4] sm:$0xf]
        %v4990 = vld [vmem:[#allocation4 + $0x2a8] sm:$0xf]
        %v4991 = vld [vmem:[#allocation4 + $0x2ac] sm:$0xf]
        %v5004 = vunpack.c.l.b16 %v4980
        %v5005 = vunpack.c.l.b16 %v4981
        %v5006 = vunpack.c.l.b16 %v4982
        %v5007 = vunpack.c.l.b16 %v4983
        %v5008 = vunpack.c.l.b16 %v4984
        %v5009 = vunpack.c.l.b16 %v4985
        %v5010 = vunpack.c.l.b16 %v4986
        %v5011 = vunpack.c.l.b16 %v4987
        %v5012 = vunpack.c.l.b16 %v4988
        %v5013 = vunpack.c.l.b16 %v4989
        %v5014 = vunpack.c.l.b16 %v4990
        %v5015 = vunpack.c.l.b16 %v4991
        %v5016 = vpack.c.b16 %v5005, %v5004
        %v5017 = vpack.c.b16 %v5007, %v5006
        %v5018 = vpack.c.b16 %v5009, %v5008
        %v5019 = vpack.c.b16 %v5011, %v5010
        %v5020 = vpack.c.b16 %v5013, %v5012
        %v5021 = vpack.c.b16 %v5015, %v5014
        %v5023 = vsel %vm884, %v5016, 0
        %v5026 = vsel %vm884, %v5017, 0
        %v5029 = vsel %vm884, %v5018, 0
        %v5032 = vsel %vm884, %v5019, 0
        %v5035 = vsel %vm884, %v5020, 0
        %v5038 = vsel %vm884, %v5021, 0
        %5040 = vmatprep.subr.bf16.mxu0 0
        %5041 = vmatpush1.bf16.xpose.msra.mxu0 %v5023
        %5042 = vmatprep.subr.bf16.mxu0 0
        %5043 = vmatpush1.bf16.xpose.msra.mxu0 %v5026
        %5044 = vmatprep.subr.bf16.mxu0 0
        %5045 = vmatpush1.bf16.xpose.msra.mxu0 %v5029
        %5046 = vmatprep.subr.bf16.mxu0 0
        %5047 = vmatpush1.bf16.xpose.msra.mxu0 %v5032
        %5048 = vmatprep.subr.bf16.mxu0 0
        %5049 = vmatpush1.bf16.xpose.msra.mxu0 %v5035
        %5050 = vmatprep.subr.bf16.mxu0 0
        %5051 = vmatpush1.bf16.xpose.msra.mxu0 %v5038
        %5052 = vmatprep.subr.bf16.mxu0 0
        %5053 = vmatpush1.bf16.xpose.msra.mxu0 0
        %5054 = vmatprep.subr.bf16.mxu0 0
        %5055 = vmatpush1.bf16.xpose.msra.mxu0 0
        %5056 = vmatprep.subr.bf16.mxu0 0
        %5057 = vmatpush1.bf16.xpose.msra.mxu0 0
        %5058 = vmatprep.subr.bf16.mxu0 0
        %5059 = vmatpush1.bf16.xpose.msra.mxu0 0
        %5060 = vmatprep.subr.bf16.mxu0 0
        %5061 = vmatpush1.bf16.xpose.msra.mxu0 0
        %5062 = vmatprep.subr.bf16.mxu0 0
        %5063 = vmatpush1.bf16.xpose.msra.mxu0 0
        %5064 = vmatprep.subr.bf16.mxu0 0
        %5065 = vmatpush1.bf16.xpose.msra.mxu0 0
        %5066 = vmatprep.subr.bf16.mxu0 0
        %5067 = vmatpush1.bf16.xpose.msra.mxu0 0
        %5068 = vmatprep.subr.bf16.mxu0 0
        %5069 = vmatpush1.bf16.xpose.msra.mxu0 0
        %5070 = vmatprep.subr.bf16.mxu0 0
        %5071 = vmatpush1.bf16.xpose.msra.mxu0 0
        %5072 = vmatprep.mubr.bf16.mxu0 0
        %5073 = vmatmul.mubr.bf16.gmra.mrb[0].mxu0 %v4899
        %v5074 = vpop.f32.mrb[0].mxu0
        %v5075 = vadd.f32 0.0, %v5074
        %v5076 = vpop.f32.mrb[0].mxu0
        %v5077 = vpop.f32.mrb[0].mxu0
        %v5078 = vadd.f32 0.0, %v5077
        %v5079 = vpop.f32.mrb[0].mxu0
        %5080 = vdwg.mxu0
        %v5081 = vld [vmem:[#allocation6 + $0x4f] sm:$0x1]
        %v5082 = vlaneseq
        %v5083 = vshrl.u32 %v5082, 7
        %v5084 = vsub.s32 0, %v5083
        %v5085 = vrot.slane %v5081, %v5084
        %v5086 = vadd.f32 %v5075, %v5085
        %v5087 = vadd.f32 %v5078, %v5085
        %v5088 = vld [vmem:[#allocation6 + $0x50] sm:$0x1]
        %v5089 = vlaneseq
        %v5090 = vshrl.u32 %v5089, 7
        %v5091 = vsub.s32 0, %v5090
        %v5092 = vrot.slane %v5088, %v5091
        %5094 = vrot.lane.b32.xlu0 %v5092, 32
        %v5095 = vpop.permute.xlu0 %5094
        %v5097 = vadd.f32 %v5075, %v5095
        %v5098 = vadd.f32 %v5078, %v5095
        %v5099 = vld [vmem:[#allocation6 + $0x51] sm:$0x1]
        %v5100 = vlaneseq
        %v5101 = vshrl.u32 %v5100, 7
        %v5102 = vsub.s32 0, %v5101
        %v5103 = vrot.slane %v5099, %v5102
        %5105 = vrot.lane.b32.xlu0 %v5103, 64
        %v5106 = vpop.permute.xlu0 %5105
        %v5108 = vadd.f32 %v5075, %v5106
        %v5109 = vadd.f32 %v5078, %v5106
        %v5110 = vld [vmem:[#allocation4 + $0x2b0] sm:$0xf]
        %v5111 = vld [vmem:[#allocation4 + $0x2b4] sm:$0xf]
        %v5112 = vld [vmem:[#allocation4 + $0x2b8] sm:$0xf]
        %v5113 = vld [vmem:[#allocation4 + $0x2bc] sm:$0xf]
        %v5114 = vld [vmem:[#allocation6 + $0x52] sm:$0x1]
        %v5115 = vpack.c.bf16 %v5087, %v5086
        %v5116 = vpack.c.bf16 %v5098, %v5097
        %5118 = vrot.lane.b32.xlu0 %v5116, 96
        %v5119 = vpop.permute.xlu0 %5118
        %v5121 = vsel %vm982, %v5115, 0
        %v5124 = vsel %vm982, %v5119, 0
        %5126 = vmatprep.subr.bf16.mxu0 0
        %5127 = vmatpush1.bf16.xpose.msra.mxu0 %v5124
        %5128 = vmatprep.subr.bf16.mxu0 0
        %5129 = vmatpush1.bf16.xpose.msra.mxu0 0
        %5130 = vmatprep.subr.bf16.mxu0 0
        %5131 = vmatpush1.bf16.xpose.msra.mxu0 0
        %5132 = vmatprep.subr.bf16.mxu0 0
        %5133 = vmatpush1.bf16.xpose.msra.mxu0 0
        %5134 = vmatprep.subr.bf16.mxu0 0
        %5135 = vmatpush1.bf16.xpose.msra.mxu0 0
        %5136 = vmatprep.subr.bf16.mxu0 0
        %5137 = vmatpush1.bf16.xpose.msra.mxu0 0
        %5138 = vmatprep.subr.bf16.mxu0 0
        %5139 = vmatpush1.bf16.xpose.msra.mxu0 0
        %5140 = vmatprep.subr.bf16.mxu0 0
        %5141 = vmatpush1.bf16.xpose.msra.mxu0 0
        %5142 = vmatprep.subr.bf16.mxu0 0
        %5143 = vmatpush1.bf16.xpose.msra.mxu0 0
        %5144 = vmatprep.subr.bf16.mxu0 0
        %5145 = vmatpush1.bf16.xpose.msra.mxu0 0
        %5146 = vmatprep.subr.bf16.mxu0 0
        %5147 = vmatpush1.bf16.xpose.msra.mxu0 0
        %5148 = vmatprep.subr.bf16.mxu0 0
        %5149 = vmatpush1.bf16.xpose.msra.mxu0 0
        %5150 = vmatprep.subr.bf16.mxu0 0
        %5151 = vmatpush1.bf16.xpose.msra.mxu0 0
        %5152 = vmatprep.subr.bf16.mxu0 0
        %5153 = vmatpush1.bf16.xpose.msra.mxu0 0
        %5154 = vmatprep.subr.bf16.mxu0 0
        %5155 = vmatpush1.bf16.xpose.msra.mxu0 0
        %5156 = vmatprep.subr.bf16.mxu0 0
        %5157 = vmatpush1.bf16.xpose.msra.mxu0 0
        %5158 = vmatprep.mubr.bf16.mxu0 0
        %5159 = vmatmul.mubr.bf16.gmra.mrb[0].mxu0 %v5121
        %v5160 = vpop.f32.mrb[0].mxu0
        %v5161 = vadd.f32 %v4976, %v5160
        %v5162 = vpop.f32.mrb[0].mxu0
        %v5163 = vpop.f32.mrb[0].mxu0
        %v5164 = vadd.f32 %v4977, %v5163
        %v5165 = vpop.f32.mrb[0].mxu0
        %5166 = vdwg.mxu0
        %vm5167 = vcmask 80896
        %v5168 = vsel %vm5167, %v5161, -inf
        %5169 = vmax.xlane.f32.xlu0 %v5168
        %v5170 = vpop.xlane.xlu0 %5169
        %vm5171 = vcmask 74752
        %v5172 = vsel %vm5171, %v5164, -inf
        %5173 = vmax.xlane.f32.xlu0 %v5172
        %v5174 = vpop.xlane.xlu0 %5173
        %v5175 = vsub.f32 %v5161, %v5170
        %v5176 = vsub.f32 %v5164, %v5174
        %v5177 = vmul.f32 %v5175, 1.442695
        %v5178 = vpow.pop %v5177
        %v5179 = vmul.f32 %v5176, 1.442695
        %v5180 = vpow.pop %v5179
        %v5181 = vsel %vm5167, %v5178, 0.0
        %5182 = vadd.xlane.f32.xlu0 %v5181
        %v5183 = vpop.xlane.xlu0 %5182
        %v5184 = vsel %vm5171, %v5180, 0.0
        %5185 = vadd.xlane.f32.xlu0 %v5184
        %v5186 = vpop.xlane.xlu0 %5185
        %v5187 = vrcp.pop %v5183
        %v5188 = vrcp.pop %v5186
        %v5189 = vmul.f32 %v5178, %v5187
        %v5190 = vmul.f32 %v5180, %v5188
        %v5191 = vpack.c.bf16 %v5190, %v5189
        %v5192 = vpack.c.bf16 %v5109, %v5108
        %5194 = vrot.lane.b32.xlu0 %v5192, 64
        %v5195 = vpop.permute.xlu0 %5194
        %v5197 = vsel %vm5167, %v5191, 0
        %vm5199 = vcmask 1044480
        %v5201 = vsel %vm5199, %v5195, 0
        %5203 = vmatprep.subr.bf16.mxu0 0
        %5204 = vmatpush1.bf16.msra.mxu0 %v5201
        %5205 = vmatprep.subr.bf16.mxu0 0
        %5206 = vmatpush1.bf16.msra.mxu0 0
        %5207 = vmatprep.subr.bf16.mxu0 0
        %5208 = vmatpush1.bf16.msra.mxu0 0
        %5209 = vmatprep.subr.bf16.mxu0 0
        %5210 = vmatpush1.bf16.msra.mxu0 0
        %5211 = vmatprep.subr.bf16.mxu0 0
        %5212 = vmatpush1.bf16.msra.mxu0 0
        %5213 = vmatprep.subr.bf16.mxu0 0
        %5214 = vmatpush1.bf16.msra.mxu0 0
        %5215 = vmatprep.subr.bf16.mxu0 0
        %5216 = vmatpush1.bf16.msra.mxu0 0
        %5217 = vmatprep.subr.bf16.mxu0 0
        %5218 = vmatpush1.bf16.msra.mxu0 0
        %5219 = vmatprep.subr.bf16.mxu0 0
        %5220 = vmatpush1.bf16.msra.mxu0 0
        %5221 = vmatprep.subr.bf16.mxu0 0
        %5222 = vmatpush1.bf16.msra.mxu0 0
        %5223 = vmatprep.subr.bf16.mxu0 0
        %5224 = vmatpush1.bf16.msra.mxu0 0
        %5225 = vmatprep.subr.bf16.mxu0 0
        %5226 = vmatpush1.bf16.msra.mxu0 0
        %5227 = vmatprep.subr.bf16.mxu0 0
        %5228 = vmatpush1.bf16.msra.mxu0 0
        %5229 = vmatprep.subr.bf16.mxu0 0
        %5230 = vmatpush1.bf16.msra.mxu0 0
        %5231 = vmatprep.subr.bf16.mxu0 0
        %5232 = vmatpush1.bf16.msra.mxu0 0
        %5233 = vmatprep.subr.bf16.mxu0 0
        %5234 = vmatpush1.bf16.msra.mxu0 0
        %5235 = vmatprep.mubr.bf16.mxu0 0
        %5236 = vmatmul.mubr.bf16.gmra.mrb[0].mxu0 %v5197
        %v5237 = vpop.f32.mrb[0].mxu0
        %v5238 = vadd.f32 0.0, %v5237
        %v5239 = vpop.f32.mrb[0].mxu0
        %v5240 = vpop.f32.mrb[0].mxu0
        %v5241 = vadd.f32 0.0, %v5240
        %v5242 = vpop.f32.mrb[0].mxu0
        %5243 = vdwg.mxu0
        %v5244 = vpack.c.bf16 %v5241, %v5238
        %5246 = vrot.lane.b32.xlu0 %v5115, 112
        %v5247 = vpop.permute.xlu0 %5246
        %5248 = vrot.lane.b32.xlu0 %v5116, 80
        %v5249 = vpop.permute.xlu0 %5248
        %v5251 = vsel %vm982, %v5247, 0
        %v5254 = vsel %vm982, %v5249, 0
        %5256 = vmatprep.subr.bf16.mxu0 0
        %5257 = vmatpush1.bf16.xpose.msra.mxu0 %v5254
        %5258 = vmatprep.subr.bf16.mxu0 0
        %5259 = vmatpush1.bf16.xpose.msra.mxu0 0
        %5260 = vmatprep.subr.bf16.mxu0 0
        %5261 = vmatpush1.bf16.xpose.msra.mxu0 0
        %5262 = vmatprep.subr.bf16.mxu0 0
        %5263 = vmatpush1.bf16.xpose.msra.mxu0 0
        %5264 = vmatprep.subr.bf16.mxu0 0
        %5265 = vmatpush1.bf16.xpose.msra.mxu0 0
        %5266 = vmatprep.subr.bf16.mxu0 0
        %5267 = vmatpush1.bf16.xpose.msra.mxu0 0
        %5268 = vmatprep.subr.bf16.mxu0 0
        %5269 = vmatpush1.bf16.xpose.msra.mxu0 0
        %5270 = vmatprep.subr.bf16.mxu0 0
        %5271 = vmatpush1.bf16.xpose.msra.mxu0 0
        %5272 = vmatprep.subr.bf16.mxu0 0
        %5273 = vmatpush1.bf16.xpose.msra.mxu0 0
        %5274 = vmatprep.subr.bf16.mxu0 0
        %5275 = vmatpush1.bf16.xpose.msra.mxu0 0
        %5276 = vmatprep.subr.bf16.mxu0 0
        %5277 = vmatpush1.bf16.xpose.msra.mxu0 0
        %5278 = vmatprep.subr.bf16.mxu0 0
        %5279 = vmatpush1.bf16.xpose.msra.mxu0 0
        %5280 = vmatprep.subr.bf16.mxu0 0
        %5281 = vmatpush1.bf16.xpose.msra.mxu0 0
        %5282 = vmatprep.subr.bf16.mxu0 0
        %5283 = vmatpush1.bf16.xpose.msra.mxu0 0
        %5284 = vmatprep.subr.bf16.mxu0 0
        %5285 = vmatpush1.bf16.xpose.msra.mxu0 0
        %5286 = vmatprep.subr.bf16.mxu0 0
        %5287 = vmatpush1.bf16.xpose.msra.mxu0 0
        %5288 = vmatprep.mubr.bf16.mxu0 0
        %5289 = vmatmul.mubr.bf16.gmra.mrb[0].mxu0 %v5251
        %v5290 = vpop.f32.mrb[0].mxu0
        %v5291 = vadd.f32 %v4976, %v5290
        %v5292 = vpop.f32.mrb[0].mxu0
        %v5293 = vpop.f32.mrb[0].mxu0
        %v5294 = vadd.f32 %v4977, %v5293
        %v5295 = vpop.f32.mrb[0].mxu0
        %5296 = vdwg.mxu0
        %v5297 = vsel %vm5167, %v5291, -inf
        %5298 = vmax.xlane.f32.xlu0 %v5297
        %v5299 = vpop.xlane.xlu0 %5298
        %v5300 = vsel %vm5171, %v5294, -inf
        %5301 = vmax.xlane.f32.xlu0 %v5300
        %v5302 = vpop.xlane.xlu0 %5301
        %v5303 = vsub.f32 %v5291, %v5299
        %v5304 = vsub.f32 %v5294, %v5302
        %v5305 = vmul.f32 %v5303, 1.442695
        %v5306 = vpow.pop %v5305
        %v5307 = vmul.f32 %v5304, 1.442695
        %v5308 = vpow.pop %v5307
        %v5309 = vsel %vm5167, %v5306, 0.0
        %5310 = vadd.xlane.f32.xlu0 %v5309
        %v5311 = vpop.xlane.xlu0 %5310
        %v5312 = vsel %vm5171, %v5308, 0.0
        %5313 = vadd.xlane.f32.xlu0 %v5312
        %v5314 = vpop.xlane.xlu0 %5313
        %v5315 = vrcp.pop %v5311
        %v5316 = vrcp.pop %v5314
        %v5317 = vmul.f32 %v5306, %v5315
        %v5318 = vmul.f32 %v5308, %v5316
        %v5319 = vpack.c.bf16 %v5318, %v5317
        %5320 = vrot.lane.b32.xlu0 %v5192, 48
        %v5321 = vpop.permute.xlu0 %5320
        %v5323 = vsel %vm5167, %v5319, 0
        %v5326 = vsel %vm5199, %v5321, 0
        %5328 = vmatprep.subr.bf16.mxu0 0
        %5329 = vmatpush1.bf16.msra.mxu0 %v5326
        %5330 = vmatprep.subr.bf16.mxu0 0
        %5331 = vmatpush1.bf16.msra.mxu0 0
        %5332 = vmatprep.subr.bf16.mxu0 0
        %5333 = vmatpush1.bf16.msra.mxu0 0
        %5334 = vmatprep.subr.bf16.mxu0 0
        %5335 = vmatpush1.bf16.msra.mxu0 0
        %5336 = vmatprep.subr.bf16.mxu0 0
        %5337 = vmatpush1.bf16.msra.mxu0 0
        %5338 = vmatprep.subr.bf16.mxu0 0
        %5339 = vmatpush1.bf16.msra.mxu0 0
        %5340 = vmatprep.subr.bf16.mxu0 0
        %5341 = vmatpush1.bf16.msra.mxu0 0
        %5342 = vmatprep.subr.bf16.mxu0 0
        %5343 = vmatpush1.bf16.msra.mxu0 0
        %5344 = vmatprep.subr.bf16.mxu0 0
        %5345 = vmatpush1.bf16.msra.mxu0 0
        %5346 = vmatprep.subr.bf16.mxu0 0
        %5347 = vmatpush1.bf16.msra.mxu0 0
        %5348 = vmatprep.subr.bf16.mxu0 0
        %5349 = vmatpush1.bf16.msra.mxu0 0
        %5350 = vmatprep.subr.bf16.mxu0 0
        %5351 = vmatpush1.bf16.msra.mxu0 0
        %5352 = vmatprep.subr.bf16.mxu0 0
        %5353 = vmatpush1.bf16.msra.mxu0 0
        %5354 = vmatprep.subr.bf16.mxu0 0
        %5355 = vmatpush1.bf16.msra.mxu0 0
        %5356 = vmatprep.subr.bf16.mxu0 0
        %5357 = vmatpush1.bf16.msra.mxu0 0
        %5358 = vmatprep.subr.bf16.mxu0 0
        %5359 = vmatpush1.bf16.msra.mxu0 0
        %5360 = vmatprep.mubr.bf16.mxu0 0
        %5361 = vmatmul.mubr.bf16.gmra.mrb[0].mxu0 %v5323
        %v5362 = vpop.f32.mrb[0].mxu0
        %v5363 = vadd.f32 0.0, %v5362
        %v5364 = vpop.f32.mrb[0].mxu0
        %v5365 = vpop.f32.mrb[0].mxu0
        %v5366 = vadd.f32 0.0, %v5365
        %v5367 = vpop.f32.mrb[0].mxu0
        %5368 = vdwg.mxu0
        %v5369 = vpack.c.bf16 %v5366, %v5363
        %v5374 = vunpack.c.l.b16 %v5110
        %v5375 = vunpack.c.l.b16 %v5111
        %v5376 = vunpack.c.l.b16 %v5112
        %v5377 = vunpack.c.l.b16 %v5113
        %v5378 = vpack.c.b16 %v5375, %v5374
        %v5379 = vpack.c.b16 %v5377, %v5376
        %5380 = vrot.lane.b32.xlu0 %v5378, 112
        %v5381 = vpop.permute.xlu0 %5380
        %5382 = vrot.lane.b32.xlu0 %v5379, 112
        %v5383 = vpop.permute.xlu0 %5382
        %v5385 = vsel %vm982, %v5369, 0
        %v5388 = vsel %vm982, %v5381, 0
        %v5391 = vsel %vm982, %v5383, 0
        %5393 = vmatprep.subr.bf16.mxu0 0
        %5394 = vmatpush1.bf16.xpose.msra.mxu0 %v5388
        %5395 = vmatprep.subr.bf16.mxu0 0
        %5396 = vmatpush1.bf16.xpose.msra.mxu0 %v5391
        %5397 = vmatprep.subr.bf16.mxu0 0
        %5398 = vmatpush1.bf16.xpose.msra.mxu0 0
        %5399 = vmatprep.subr.bf16.mxu0 0
        %5400 = vmatpush1.bf16.xpose.msra.mxu0 0
        %5401 = vmatprep.subr.bf16.mxu0 0
        %5402 = vmatpush1.bf16.xpose.msra.mxu0 0
        %5403 = vmatprep.subr.bf16.mxu0 0
        %5404 = vmatpush1.bf16.xpose.msra.mxu0 0
        %5405 = vmatprep.subr.bf16.mxu0 0
        %5406 = vmatpush1.bf16.xpose.msra.mxu0 0
        %5407 = vmatprep.subr.bf16.mxu0 0
        %5408 = vmatpush1.bf16.xpose.msra.mxu0 0
        %5409 = vmatprep.subr.bf16.mxu0 0
        %5410 = vmatpush1.bf16.xpose.msra.mxu0 0
        %5411 = vmatprep.subr.bf16.mxu0 0
        %5412 = vmatpush1.bf16.xpose.msra.mxu0 0
        %5413 = vmatprep.subr.bf16.mxu0 0
        %5414 = vmatpush1.bf16.xpose.msra.mxu0 0
        %5415 = vmatprep.subr.bf16.mxu0 0
        %5416 = vmatpush1.bf16.xpose.msra.mxu0 0
        %5417 = vmatprep.subr.bf16.mxu0 0
        %5418 = vmatpush1.bf16.xpose.msra.mxu0 0
        %5419 = vmatprep.subr.bf16.mxu0 0
        %5420 = vmatpush1.bf16.xpose.msra.mxu0 0
        %5421 = vmatprep.subr.bf16.mxu0 0
        %5422 = vmatpush1.bf16.xpose.msra.mxu0 0
        %5423 = vmatprep.subr.bf16.mxu0 0
        %5424 = vmatpush1.bf16.xpose.msra.mxu0 0
        %5425 = vmatprep.mubr.bf16.mxu0 0
        %5426 = vmatmul.mubr.bf16.gmra.mrb[0].mxu0 %v5385
        %v5427 = vpop.f32.mrb[0].mxu0
        %v5428 = vadd.f32 0.0, %v5427
        %v5429 = vpop.f32.mrb[0].mxu0
        %v5430 = vpop.f32.mrb[0].mxu0
        %v5431 = vadd.f32 0.0, %v5430
        %v5432 = vpop.f32.mrb[0].mxu0
        %5433 = vdwg.mxu0
        %v5435 = vsel %vm982, %v5244, 0
        %v5438 = vsel %vm982, %v5378, 0
        %v5441 = vsel %vm982, %v5379, 0
        %5443 = vmatprep.subr.bf16.mxu0 0
        %5444 = vmatpush1.bf16.xpose.msra.mxu0 %v5438
        %5445 = vmatprep.subr.bf16.mxu0 0
        %5446 = vmatpush1.bf16.xpose.msra.mxu0 %v5441
        %5447 = vmatprep.subr.bf16.mxu0 0
        %5448 = vmatpush1.bf16.xpose.msra.mxu0 0
        %5449 = vmatprep.subr.bf16.mxu0 0
        %5450 = vmatpush1.bf16.xpose.msra.mxu0 0
        %5451 = vmatprep.subr.bf16.mxu0 0
        %5452 = vmatpush1.bf16.xpose.msra.mxu0 0
        %5453 = vmatprep.subr.bf16.mxu0 0
        %5454 = vmatpush1.bf16.xpose.msra.mxu0 0
        %5455 = vmatprep.subr.bf16.mxu0 0
        %5456 = vmatpush1.bf16.xpose.msra.mxu0 0
        %5457 = vmatprep.subr.bf16.mxu0 0
        %5458 = vmatpush1.bf16.xpose.msra.mxu0 0
        %5459 = vmatprep.subr.bf16.mxu0 0
        %5460 = vmatpush1.bf16.xpose.msra.mxu0 0
        %5461 = vmatprep.subr.bf16.mxu0 0
        %5462 = vmatpush1.bf16.xpose.msra.mxu0 0
        %5463 = vmatprep.subr.bf16.mxu0 0
        %5464 = vmatpush1.bf16.xpose.msra.mxu0 0
        %5465 = vmatprep.subr.bf16.mxu0 0
        %5466 = vmatpush1.bf16.xpose.msra.mxu0 0
        %5467 = vmatprep.subr.bf16.mxu0 0
        %5468 = vmatpush1.bf16.xpose.msra.mxu0 0
        %5469 = vmatprep.subr.bf16.mxu0 0
        %5470 = vmatpush1.bf16.xpose.msra.mxu0 0
        %5471 = vmatprep.subr.bf16.mxu0 0
        %5472 = vmatpush1.bf16.xpose.msra.mxu0 0
        %5473 = vmatprep.subr.bf16.mxu0 0
        %5474 = vmatpush1.bf16.xpose.msra.mxu0 0
        %5475 = vmatprep.mubr.bf16.mxu0 0
        %5476 = vmatmul.mubr.bf16.gmra.mrb[0].mxu0 %v5435
        %v5477 = vpop.f32.mrb[0].mxu0
        %v5478 = vadd.f32 %v5428, %v5477
        %v5479 = vpop.f32.mrb[0].mxu0
        %v5480 = vpop.f32.mrb[0].mxu0
        %v5481 = vadd.f32 %v5431, %v5480
        %v5482 = vpop.f32.mrb[0].mxu0
        %5483 = vdwg.mxu0
        %v5484 = vlaneseq
        %v5485 = vshrl.u32 %v5484, 7
        %v5486 = vsub.s32 0, %v5485
        %v5487 = vrot.slane %v5114, %v5486
        %v5488 = vadd.f32 %v5478, %v5487
        %v5489 = vadd.f32 %v5481, %v5487
        %v5492 = vrot.slane %v5488, 6
        %v5493 = vrot.slane %v5489, 6
        %v5494 = vsel %vm1050, %v5492, %v5493
        %v5497 = vadd.f32 %v3553, %v5492
        %v5498 = vadd.f32 %v3554, %v5494
        %v5499 = vld [vmem:[#allocation6 + $0x58] sm:$0x1]
        %v5500 = vld [vmem:[#allocation6 + $0x59] sm:$0x1]
        %v5501 = vsel %vm4970, %v5497, 0.0
        %5502 = vadd.xlane.f32.xlu0 %v5501
        %v5503 = vpop.xlane.xlu0 %5502
        %v5504 = vsel %vm1327, %v5498, 0.0
        %5505 = vadd.xlane.f32.xlu0 %v5504
        %v5506 = vpop.xlane.xlu0 %5505
        %v5507 = vmul.f32 %v5503, %v1331
        %v5508 = vmul.f32 %v5506, %v1331
        %v5509 = vmul.f32 %v5497, %v5497
        %v5510 = vmul.f32 %v5498, %v5498
        %v5511 = vsel %vm4970, %v5509, 0.0
        %5512 = vadd.xlane.f32.xlu0 %v5511
        %v5513 = vpop.xlane.xlu0 %5512
        %v5514 = vsel %vm1327, %v5510, 0.0
        %5515 = vadd.xlane.f32.xlu0 %v5514
        %v5516 = vpop.xlane.xlu0 %5515
        %v5517 = vmul.f32 %v5513, %v1331
        %v5518 = vmul.f32 %v5516, %v1331
        %v5519 = vsub.f32 %v5497, %v5507
        %v5520 = vsub.f32 %v5498, %v5508
        %v5521 = vmul.f32 %v5507, %v5507
        %v5522 = vmul.f32 %v5508, %v5508
        %v5523 = vsub.f32 %v5517, %v5521
        %v5524 = vsub.f32 %v5518, %v5522
        %v5525 = vadd.f32 %v5523, 1e-05
        %v5526 = vadd.f32 %v5524, 1e-05
        %v5527 = vrsqrt.pop %v5525
        %v5528 = vrsqrt.pop %v5526
        %v5529 = vmul.f32 %v5519, %v5527
        %v5530 = vmul.f32 %v5520, %v5528
        %v5531 = vlaneseq
        %v5532 = vshrl.u32 %v5531, 7
        %v5533 = vsub.s32 0, %v5532
        %v5534 = vrot.slane %v5499, %v5533
        %v5535 = vmul.f32 %v5529, %v5534
        %v5536 = vmul.f32 %v5530, %v5534
        %v5537 = vlaneseq
        %v5538 = vshrl.u32 %v5537, 7
        %v5539 = vsub.s32 0, %v5538
        %v5540 = vrot.slane %v5500, %v5539
        %v5541 = vadd.f32 %v5535, %v5540
        %v5542 = vadd.f32 %v5536, %v5540
        %v5543 = vld [vmem:[#allocation4 + $0x2c0] sm:$0xf]
        %v5544 = vld [vmem:[#allocation4 + $0x2c4] sm:$0xf]
        %v5545 = vld [vmem:[#allocation4 + $0x2c8] sm:$0xf]
        %v5546 = vld [vmem:[#allocation4 + $0x2cc] sm:$0xf]
        %v5547 = vpack.c.bf16 %v5542, %v5541
        %v5548 = vld [vmem:[#allocation6 + $0x53] sm:$0x1]
        %v5549 = vlaneseq
        %v5550 = vshrl.u32 %v5549, 7
        %v5551 = vsub.s32 0, %v5550
        %v5552 = vrot.slane %v5548, %v5551
        %v5554 = vrot.slane %v5547, 1
        %v5559 = vunpack.c.l.b16 %v5543
        %v5560 = vunpack.c.l.b16 %v5544
        %v5561 = vunpack.c.l.b16 %v5545
        %v5562 = vunpack.c.l.b16 %v5546
        %v5563 = vpack.c.b16 %v5560, %v5559
        %v5564 = vpack.c.b16 %v5562, %v5561
        %v5566 = vsel %vm884, %v5554, 0
        %v5569 = vsel %vm884, %v5563, 0
        %v5572 = vsel %vm884, %v5564, 0
        %5574 = vmatprep.subr.bf16.mxu0 0
        %5575 = vmatpush1.bf16.xpose.msra.mxu0 %v5569
        %5576 = vmatprep.subr.bf16.mxu0 0
        %5577 = vmatpush1.bf16.xpose.msra.mxu0 %v5572
        %5578 = vmatprep.subr.bf16.mxu0 0
        %5579 = vmatpush1.bf16.xpose.msra.mxu0 0
        %5580 = vmatprep.subr.bf16.mxu0 0
        %5581 = vmatpush1.bf16.xpose.msra.mxu0 0
        %5582 = vmatprep.subr.bf16.mxu0 0
        %5583 = vmatpush1.bf16.xpose.msra.mxu0 0
        %5584 = vmatprep.subr.bf16.mxu0 0
        %5585 = vmatpush1.bf16.xpose.msra.mxu0 0
        %5586 = vmatprep.subr.bf16.mxu0 0
        %5587 = vmatpush1.bf16.xpose.msra.mxu0 0
        %5588 = vmatprep.subr.bf16.mxu0 0
        %5589 = vmatpush1.bf16.xpose.msra.mxu0 0
        %5590 = vmatprep.subr.bf16.mxu0 0
        %5591 = vmatpush1.bf16.xpose.msra.mxu0 0
        %5592 = vmatprep.subr.bf16.mxu0 0
        %5593 = vmatpush1.bf16.xpose.msra.mxu0 0
        %5594 = vmatprep.subr.bf16.mxu0 0
        %5595 = vmatpush1.bf16.xpose.msra.mxu0 0
        %5596 = vmatprep.subr.bf16.mxu0 0
        %5597 = vmatpush1.bf16.xpose.msra.mxu0 0
        %5598 = vmatprep.subr.bf16.mxu0 0
        %5599 = vmatpush1.bf16.xpose.msra.mxu0 0
        %5600 = vmatprep.subr.bf16.mxu0 0
        %5601 = vmatpush1.bf16.xpose.msra.mxu0 0
        %5602 = vmatprep.subr.bf16.mxu0 0
        %5603 = vmatpush1.bf16.xpose.msra.mxu0 0
        %5604 = vmatprep.subr.bf16.mxu0 0
        %5605 = vmatpush1.bf16.xpose.msra.mxu0 0
        %5606 = vmatprep.mubr.bf16.mxu0 0
        %5607 = vmatmul.mubr.bf16.gmra.mrb[0].mxu0 %v5566
        %v5608 = vpop.f32.mrb[0].mxu0
        %v5609 = vadd.f32 %v5552, %v5608
        %v5610 = vpop.f32.mrb[0].mxu0
        %v5611 = vpop.f32.mrb[0].mxu0
        %v5612 = vadd.f32 %v5552, %v5611
        %v5613 = vpop.f32.mrb[0].mxu0
        %5614 = vdwg.mxu0
        %v5615 = vld [vmem:[#allocation4 + $0x2d0] sm:$0xf]
        %v5616 = vld [vmem:[#allocation4 + $0x2d4] sm:$0xf]
        %v5617 = vld [vmem:[#allocation4 + $0x2d8] sm:$0xf]
        %v5618 = vld [vmem:[#allocation4 + $0x2dc] sm:$0xf]
        %v5619 = vld [vmem:[#allocation4 + $0x2e0] sm:$0xf]
        %v5620 = vld [vmem:[#allocation4 + $0x2e4] sm:$0xf]
        %v5621 = vld [vmem:[#allocation4 + $0x2e8] sm:$0xf]
        %v5622 = vld [vmem:[#allocation4 + $0x2ec] sm:$0xf]
        %v5623 = vpack.c.bf16 %v4974, %v4973
        %v5624 = vpack.c.bf16 %v4975, %v4975
        %v5633 = vunpack.c.l.b16 %v5615
        %v5634 = vunpack.c.l.b16 %v5616
        %v5635 = vunpack.c.l.b16 %v5617
        %v5636 = vunpack.c.l.b16 %v5618
        %v5637 = vunpack.c.l.b16 %v5619
        %v5638 = vunpack.c.l.b16 %v5620
        %v5639 = vunpack.c.l.b16 %v5621
        %v5640 = vunpack.c.l.b16 %v5622
        %v5641 = vpack.c.b16 %v5634, %v5633
        %v5642 = vpack.c.b16 %v5636, %v5635
        %v5643 = vpack.c.b16 %v5638, %v5637
        %v5644 = vpack.c.b16 %v5640, %v5639
        %v5646 = vsel %vm884, %v5623, 0
        %v5649 = vsel %vm884, %v5624, 0
        %v5652 = vsel %vm884, %v5641, 0
        %v5655 = vsel %vm884, %v5642, 0
        %v5658 = vsel %vm884, %v5643, 0
        %v5661 = vsel %vm884, %v5644, 0
        %5663 = vmatprep.subr.bf16.mxu0 0
        %5664 = vmatpush1.bf16.xpose.msra.mxu0 %v5652
        %5665 = vmatprep.subr.bf16.mxu0 0
        %5666 = vmatpush1.bf16.xpose.msra.mxu0 %v5655
        %5667 = vmatprep.subr.bf16.mxu0 0
        %5668 = vmatpush1.bf16.xpose.msra.mxu0 %v5658
        %5669 = vmatprep.subr.bf16.mxu0 0
        %5670 = vmatpush1.bf16.xpose.msra.mxu0 %v5661
        %5671 = vmatprep.subr.bf16.mxu0 0
        %5672 = vmatpush1.bf16.xpose.msra.mxu0 0
        %5673 = vmatprep.subr.bf16.mxu0 0
        %5674 = vmatpush1.bf16.xpose.msra.mxu0 0
        %5675 = vmatprep.subr.bf16.mxu0 0
        %5676 = vmatpush1.bf16.xpose.msra.mxu0 0
        %5677 = vmatprep.subr.bf16.mxu0 0
        %5678 = vmatpush1.bf16.xpose.msra.mxu0 0
        %5679 = vmatprep.subr.bf16.mxu0 0
        %5680 = vmatpush1.bf16.xpose.msra.mxu0 0
        %5681 = vmatprep.subr.bf16.mxu0 0
        %5682 = vmatpush1.bf16.xpose.msra.mxu0 0
        %5683 = vmatprep.subr.bf16.mxu0 0
        %5684 = vmatpush1.bf16.xpose.msra.mxu0 0
        %5685 = vmatprep.subr.bf16.mxu0 0
        %5686 = vmatpush1.bf16.xpose.msra.mxu0 0
        %5687 = vmatprep.subr.bf16.mxu0 0
        %5688 = vmatpush1.bf16.xpose.msra.mxu0 0
        %5689 = vmatprep.subr.bf16.mxu0 0
        %5690 = vmatpush1.bf16.xpose.msra.mxu0 0
        %5691 = vmatprep.subr.bf16.mxu0 0
        %5692 = vmatpush1.bf16.xpose.msra.mxu0 0
        %5693 = vmatprep.subr.bf16.mxu0 0
        %5694 = vmatpush1.bf16.xpose.msra.mxu0 0
        %5695 = vmatprep.mubr.bf16.mxu0 0
        %5696 = vmatmul.mubr.bf16.gmra.mrb[0].mxu0 %v5646
        %v5697 = vpop.f32.mrb[0].mxu0
        %v5698 = vadd.f32 0.0, %v5697
        %v5699 = vpop.f32.mrb[0].mxu0
        %v5700 = vpop.f32.mrb[0].mxu0
        %v5701 = vadd.f32 0.0, %v5700
        %v5702 = vpop.f32.mrb[0].mxu0
        %5703 = vmatprep.mubr.bf16.mxu0 0
        %5704 = vmatmul.mubr.bf16.gmra.mrb[0].mxu0 %v5649
        %v5705 = vpop.f32.mrb[0].mxu0
        %v5706 = vadd.f32 0.0, %v5705
        %v5707 = vpop.f32.mrb[0].mxu0
        %v5708 = vpop.f32.mrb[0].mxu0
        %v5709 = vpop.f32.mrb[0].mxu0
        %5710 = vdwg.mxu0
        %v5711 = vld [vmem:[#allocation6 + $0x54] sm:$0x1]
        %v5712 = vlaneseq
        %v5713 = vshrl.u32 %v5712, 7
        %v5714 = vsub.s32 0, %v5713
        %v5715 = vrot.slane %v5711, %v5714
        %v5716 = vadd.f32 %v5698, %v5715
        %v5717 = vadd.f32 %v5701, %v5715
        %v5718 = vadd.f32 %v5706, %v5715
        %v5719 = vld [vmem:[#allocation6 + $0x55] sm:$0x1]
        %v5720 = vlaneseq
        %v5721 = vshrl.u32 %v5720, 7
        %v5722 = vsub.s32 0, %v5721
        %v5723 = vrot.slane %v5719, %v5722
        %5725 = vrot.lane.b32.xlu0 %v5723, 32
        %v5726 = vpop.permute.xlu0 %5725
        %v5728 = vadd.f32 %v5698, %v5726
        %v5729 = vadd.f32 %v5701, %v5726
        %v5730 = vadd.f32 %v5706, %v5726
        %v5731 = vld [vmem:[#allocation4 + $0x2f0] sm:$0xf]
        %v5732 = vld [vmem:[#allocation4 + $0x2f4] sm:$0xf]
        %v5733 = vld [vmem:[#allocation4 + $0x2f8] sm:$0xf]
        %v5734 = vld [vmem:[#allocation4 + $0x2fc] sm:$0xf]
        %v5735 = vld [vmem:[#allocation6 + $0x56] sm:$0x1]
        %v5736 = vpack.c.bf16 %v5612, %v5609
        %v5737 = vpack.c.bf16 %v5717, %v5716
        %v5738 = vpack.c.bf16 %v5718, %v5718
        %v5740 = vsel %vm982, %v5736, 0
        %v5743 = vsel %vm982, %v5737, 0
        %v5746 = vsel %vm982, %v5738, 0
        %5748 = vmatprep.subr.bf16.mxu0 0
        %5749 = vmatpush1.bf16.xpose.msra.mxu0 %v5743
        %5750 = vmatprep.subr.bf16.mxu0 0
        %5751 = vmatpush1.bf16.xpose.msra.mxu0 %v5746
        %5752 = vmatprep.subr.bf16.mxu0 0
        %5753 = vmatpush1.bf16.xpose.msra.mxu0 0
        %5754 = vmatprep.subr.bf16.mxu0 0
        %5755 = vmatpush1.bf16.xpose.msra.mxu0 0
        %5756 = vmatprep.subr.bf16.mxu0 0
        %5757 = vmatpush1.bf16.xpose.msra.mxu0 0
        %5758 = vmatprep.subr.bf16.mxu0 0
        %5759 = vmatpush1.bf16.xpose.msra.mxu0 0
        %5760 = vmatprep.subr.bf16.mxu0 0
        %5761 = vmatpush1.bf16.xpose.msra.mxu0 0
        %5762 = vmatprep.subr.bf16.mxu0 0
        %5763 = vmatpush1.bf16.xpose.msra.mxu0 0
        %5764 = vmatprep.subr.bf16.mxu0 0
        %5765 = vmatpush1.bf16.xpose.msra.mxu0 0
        %5766 = vmatprep.subr.bf16.mxu0 0
        %5767 = vmatpush1.bf16.xpose.msra.mxu0 0
        %5768 = vmatprep.subr.bf16.mxu0 0
        %5769 = vmatpush1.bf16.xpose.msra.mxu0 0
        %5770 = vmatprep.subr.bf16.mxu0 0
        %5771 = vmatpush1.bf16.xpose.msra.mxu0 0
        %5772 = vmatprep.subr.bf16.mxu0 0
        %5773 = vmatpush1.bf16.xpose.msra.mxu0 0
        %5774 = vmatprep.subr.bf16.mxu0 0
        %5775 = vmatpush1.bf16.xpose.msra.mxu0 0
        %5776 = vmatprep.subr.bf16.mxu0 0
        %5777 = vmatpush1.bf16.xpose.msra.mxu0 0
        %5778 = vmatprep.subr.bf16.mxu0 0
        %5779 = vmatpush1.bf16.xpose.msra.mxu0 0
        %5780 = vmatprep.mubr.bf16.mxu0 0
        %5781 = vmatmul.mubr.bf16.gmra.mrb[0].mxu0 %v5740
        %v5782 = vpop.f32.mrb[0].mxu0
        %v5783 = vadd.f32 %v4978, %v5782
        %v5784 = vpop.f32.mrb[0].mxu0
        %v5785 = vpop.f32.mrb[0].mxu0
        %v5786 = vadd.f32 %v4979, %v5785
        %v5787 = vpop.f32.mrb[0].mxu0
        %5788 = vdwg.mxu0
        %vm5789 = vcmask 146432
        %v5790 = vsel %vm5789, %v5783, -inf
        %5791 = vmax.xlane.f32.xlu0 %v5790
        %v5792 = vpop.xlane.xlu0 %5791
        %vm5793 = vcmask 140288
        %v5794 = vsel %vm5793, %v5786, -inf
        %5795 = vmax.xlane.f32.xlu0 %v5794
        %v5796 = vpop.xlane.xlu0 %5795
        %v5797 = vsub.f32 %v5783, %v5792
        %v5798 = vsub.f32 %v5786, %v5796
        %v5799 = vmul.f32 %v5797, 1.442695
        %v5800 = vpow.pop %v5799
        %v5801 = vmul.f32 %v5798, 1.442695
        %v5802 = vpow.pop %v5801
        %v5803 = vsel %vm5789, %v5800, 0.0
        %5804 = vadd.xlane.f32.xlu0 %v5803
        %v5805 = vpop.xlane.xlu0 %5804
        %v5806 = vsel %vm5793, %v5802, 0.0
        %5807 = vadd.xlane.f32.xlu0 %v5806
        %v5808 = vpop.xlane.xlu0 %5807
        %v5809 = vrcp.pop %v5805
        %v5810 = vrcp.pop %v5808
        %v5811 = vmul.f32 %v5800, %v5809
        %v5812 = vmul.f32 %v5802, %v5810
        %v5813 = vpack.c.bf16 %v5812, %v5811
        %v5814 = vpack.c.bf16 %v5729, %v5728
        %v5815 = vpack.c.bf16 %v5730, %v5730
        %5818 = vrot.lane.b32.xlu0 %v5814, 96
        %v5819 = vpop.permute.xlu0 %5818
        %5820 = vrot.lane.b32.xlu0 %v5815, 96
        %v5821 = vpop.permute.xlu0 %5820
        %v5824 = vsel %vm5789, %v5813, 0
        %vm5826 = vcmask 1040384
        %v5828 = vsel %vm5826, %v5821, 0
        %5830 = vmatprep.subr.bf16.mxu0 0
        %5831 = vmatpush1.bf16.msra.mxu0 %v5819
        %5832 = vmatprep.subr.bf16.mxu0 0
        %5833 = vmatpush1.bf16.msra.mxu0 %v5828
        %5834 = vmatprep.subr.bf16.mxu0 0
        %5835 = vmatpush1.bf16.msra.mxu0 0
        %5836 = vmatprep.subr.bf16.mxu0 0
        %5837 = vmatpush1.bf16.msra.mxu0 0
        %5838 = vmatprep.subr.bf16.mxu0 0
        %5839 = vmatpush1.bf16.msra.mxu0 0
        %5840 = vmatprep.subr.bf16.mxu0 0
        %5841 = vmatpush1.bf16.msra.mxu0 0
        %5842 = vmatprep.subr.bf16.mxu0 0
        %5843 = vmatpush1.bf16.msra.mxu0 0
        %5844 = vmatprep.subr.bf16.mxu0 0
        %5845 = vmatpush1.bf16.msra.mxu0 0
        %5846 = vmatprep.subr.bf16.mxu0 0
        %5847 = vmatpush1.bf16.msra.mxu0 0
        %5848 = vmatprep.subr.bf16.mxu0 0
        %5849 = vmatpush1.bf16.msra.mxu0 0
        %5850 = vmatprep.subr.bf16.mxu0 0
        %5851 = vmatpush1.bf16.msra.mxu0 0
        %5852 = vmatprep.subr.bf16.mxu0 0
        %5853 = vmatpush1.bf16.msra.mxu0 0
        %5854 = vmatprep.subr.bf16.mxu0 0
        %5855 = vmatpush1.bf16.msra.mxu0 0
        %5856 = vmatprep.subr.bf16.mxu0 0
        %5857 = vmatpush1.bf16.msra.mxu0 0
        %5858 = vmatprep.subr.bf16.mxu0 0
        %5859 = vmatpush1.bf16.msra.mxu0 0
        %5860 = vmatprep.subr.bf16.mxu0 0
        %5861 = vmatpush1.bf16.msra.mxu0 0
        %5862 = vmatprep.mubr.bf16.mxu0 0
        %5863 = vmatmul.mubr.bf16.gmra.mrb[0].mxu0 %v5824
        %v5864 = vpop.f32.mrb[0].mxu0
        %v5865 = vadd.f32 0.0, %v5864
        %v5866 = vpop.f32.mrb[0].mxu0
        %v5867 = vpop.f32.mrb[0].mxu0
        %v5868 = vadd.f32 0.0, %v5867
        %v5869 = vpop.f32.mrb[0].mxu0
        %5870 = vdwg.mxu0
        %v5871 = vpack.c.bf16 %v5868, %v5865
        %5873 = vrot.lane.b32.xlu0 %v5736, 112
        %v5874 = vpop.permute.xlu0 %5873
        %5877 = vrot.lane.b32.xlu0 %v5737, 112
        %v5878 = vpop.permute.xlu0 %5877
        %5879 = vrot.lane.b32.xlu0 %v5738, 112
        %v5880 = vpop.permute.xlu0 %5879
        %v5882 = vsel %vm982, %v5874, 0
        %v5885 = vsel %vm982, %v5878, 0
        %v5888 = vsel %vm982, %v5880, 0
        %5890 = vmatprep.subr.bf16.mxu0 0
        %5891 = vmatpush1.bf16.xpose.msra.mxu0 %v5885
        %5892 = vmatprep.subr.bf16.mxu0 0
        %5893 = vmatpush1.bf16.xpose.msra.mxu0 %v5888
        %5894 = vmatprep.subr.bf16.mxu0 0
        %5895 = vmatpush1.bf16.xpose.msra.mxu0 0
        %5896 = vmatprep.subr.bf16.mxu0 0
        %5897 = vmatpush1.bf16.xpose.msra.mxu0 0
        %5898 = vmatprep.subr.bf16.mxu0 0
        %5899 = vmatpush1.bf16.xpose.msra.mxu0 0
        %5900 = vmatprep.subr.bf16.mxu0 0
        %5901 = vmatpush1.bf16.xpose.msra.mxu0 0
        %5902 = vmatprep.subr.bf16.mxu0 0
        %5903 = vmatpush1.bf16.xpose.msra.mxu0 0
        %5904 = vmatprep.subr.bf16.mxu0 0
        %5905 = vmatpush1.bf16.xpose.msra.mxu0 0
        %5906 = vmatprep.subr.bf16.mxu0 0
        %5907 = vmatpush1.bf16.xpose.msra.mxu0 0
        %5908 = vmatprep.subr.bf16.mxu0 0
        %5909 = vmatpush1.bf16.xpose.msra.mxu0 0
        %5910 = vmatprep.subr.bf16.mxu0 0
        %5911 = vmatpush1.bf16.xpose.msra.mxu0 0
        %5912 = vmatprep.subr.bf16.mxu0 0
        %5913 = vmatpush1.bf16.xpose.msra.mxu0 0
        %5914 = vmatprep.subr.bf16.mxu0 0
        %5915 = vmatpush1.bf16.xpose.msra.mxu0 0
        %5916 = vmatprep.subr.bf16.mxu0 0
        %5917 = vmatpush1.bf16.xpose.msra.mxu0 0
        %5918 = vmatprep.subr.bf16.mxu0 0
        %5919 = vmatpush1.bf16.xpose.msra.mxu0 0
        %5920 = vmatprep.subr.bf16.mxu0 0
        %5921 = vmatpush1.bf16.xpose.msra.mxu0 0
        %5922 = vmatprep.mubr.bf16.mxu0 0
        %5923 = vmatmul.mubr.bf16.gmra.mrb[0].mxu0 %v5882
        %v5924 = vpop.f32.mrb[0].mxu0
        %v5925 = vadd.f32 %v4978, %v5924
        %v5926 = vpop.f32.mrb[0].mxu0
        %v5927 = vpop.f32.mrb[0].mxu0
        %v5928 = vadd.f32 %v4979, %v5927
        %v5929 = vpop.f32.mrb[0].mxu0
        %5930 = vdwg.mxu0
        %v5931 = vsel %vm5789, %v5925, -inf
        %5932 = vmax.xlane.f32.xlu0 %v5931
        %v5933 = vpop.xlane.xlu0 %5932
        %v5934 = vsel %vm5793, %v5928, -inf
        %5935 = vmax.xlane.f32.xlu0 %v5934
        %v5936 = vpop.xlane.xlu0 %5935
        %v5937 = vsub.f32 %v5925, %v5933
        %v5938 = vsub.f32 %v5928, %v5936
        %v5939 = vmul.f32 %v5937, 1.442695
        %v5940 = vpow.pop %v5939
        %v5941 = vmul.f32 %v5938, 1.442695
        %v5942 = vpow.pop %v5941
        %v5943 = vsel %vm5789, %v5940, 0.0
        %5944 = vadd.xlane.f32.xlu0 %v5943
        %v5945 = vpop.xlane.xlu0 %5944
        %v5946 = vsel %vm5793, %v5942, 0.0
        %5947 = vadd.xlane.f32.xlu0 %v5946
        %v5948 = vpop.xlane.xlu0 %5947
        %v5949 = vrcp.pop %v5945
        %v5950 = vrcp.pop %v5948
        %v5951 = vmul.f32 %v5940, %v5949
        %v5952 = vmul.f32 %v5942, %v5950
        %v5953 = vpack.c.bf16 %v5952, %v5951
        %5954 = vrot.lane.b32.xlu0 %v5814, 80
        %v5955 = vpop.permute.xlu0 %5954
        %5956 = vrot.lane.b32.xlu0 %v5815, 80
        %v5957 = vpop.permute.xlu0 %5956
        %v5960 = vsel %vm5789, %v5953, 0
        %v5963 = vsel %vm5826, %v5957, 0
        %5965 = vmatprep.subr.bf16.mxu0 0
        %5966 = vmatpush1.bf16.msra.mxu0 %v5955
        %5967 = vmatprep.subr.bf16.mxu0 0
        %5968 = vmatpush1.bf16.msra.mxu0 %v5963
        %5969 = vmatprep.subr.bf16.mxu0 0
        %5970 = vmatpush1.bf16.msra.mxu0 0
        %5971 = vmatprep.subr.bf16.mxu0 0
        %5972 = vmatpush1.bf16.msra.mxu0 0
        %5973 = vmatprep.subr.bf16.mxu0 0
        %5974 = vmatpush1.bf16.msra.mxu0 0
        %5975 = vmatprep.subr.bf16.mxu0 0
        %5976 = vmatpush1.bf16.msra.mxu0 0
        %5977 = vmatprep.subr.bf16.mxu0 0
        %5978 = vmatpush1.bf16.msra.mxu0 0
        %5979 = vmatprep.subr.bf16.mxu0 0
        %5980 = vmatpush1.bf16.msra.mxu0 0
        %5981 = vmatprep.subr.bf16.mxu0 0
        %5982 = vmatpush1.bf16.msra.mxu0 0
        %5983 = vmatprep.subr.bf16.mxu0 0
        %5984 = vmatpush1.bf16.msra.mxu0 0
        %5985 = vmatprep.subr.bf16.mxu0 0
        %5986 = vmatpush1.bf16.msra.mxu0 0
        %5987 = vmatprep.subr.bf16.mxu0 0
        %5988 = vmatpush1.bf16.msra.mxu0 0
        %5989 = vmatprep.subr.bf16.mxu0 0
        %5990 = vmatpush1.bf16.msra.mxu0 0
        %5991 = vmatprep.subr.bf16.mxu0 0
        %5992 = vmatpush1.bf16.msra.mxu0 0
        %5993 = vmatprep.subr.bf16.mxu0 0
        %5994 = vmatpush1.bf16.msra.mxu0 0
        %5995 = vmatprep.subr.bf16.mxu0 0
        %5996 = vmatpush1.bf16.msra.mxu0 0
        %5997 = vmatprep.mubr.bf16.mxu0 0
        %5998 = vmatmul.mubr.bf16.gmra.mrb[0].mxu0 %v5960
        %v5999 = vpop.f32.mrb[0].mxu0
        %v6000 = vadd.f32 0.0, %v5999
        %v6001 = vpop.f32.mrb[0].mxu0
        %v6002 = vpop.f32.mrb[0].mxu0
        %v6003 = vadd.f32 0.0, %v6002
        %v6004 = vpop.f32.mrb[0].mxu0
        %6005 = vdwg.mxu0
        %v6006 = vpack.c.bf16 %v6003, %v6000
        %v6011 = vunpack.c.l.b16 %v5731
        %v6012 = vunpack.c.l.b16 %v5732
        %v6013 = vunpack.c.l.b16 %v5733
        %v6014 = vunpack.c.l.b16 %v5734
        %v6015 = vpack.c.b16 %v6012, %v6011
        %v6016 = vpack.c.b16 %v6014, %v6013
        %6017 = vrot.lane.b32.xlu0 %v6015, 112
        %v6018 = vpop.permute.xlu0 %6017
        %6019 = vrot.lane.b32.xlu0 %v6016, 112
        %v6020 = vpop.permute.xlu0 %6019
        %v6022 = vsel %vm982, %v6006, 0
        %v6025 = vsel %vm982, %v6018, 0
        %v6028 = vsel %vm982, %v6020, 0
        %6030 = vmatprep.subr.bf16.mxu0 0
        %6031 = vmatpush1.bf16.xpose.msra.mxu0 %v6025
        %6032 = vmatprep.subr.bf16.mxu0 0
        %6033 = vmatpush1.bf16.xpose.msra.mxu0 %v6028
        %6034 = vmatprep.subr.bf16.mxu0 0
        %6035 = vmatpush1.bf16.xpose.msra.mxu0 0
        %6036 = vmatprep.subr.bf16.mxu0 0
        %6037 = vmatpush1.bf16.xpose.msra.mxu0 0
        %6038 = vmatprep.subr.bf16.mxu0 0
        %6039 = vmatpush1.bf16.xpose.msra.mxu0 0
        %6040 = vmatprep.subr.bf16.mxu0 0
        %6041 = vmatpush1.bf16.xpose.msra.mxu0 0
        %6042 = vmatprep.subr.bf16.mxu0 0
        %6043 = vmatpush1.bf16.xpose.msra.mxu0 0
        %6044 = vmatprep.subr.bf16.mxu0 0
        %6045 = vmatpush1.bf16.xpose.msra.mxu0 0
        %6046 = vmatprep.subr.bf16.mxu0 0
        %6047 = vmatpush1.bf16.xpose.msra.mxu0 0
        %6048 = vmatprep.subr.bf16.mxu0 0
        %6049 = vmatpush1.bf16.xpose.msra.mxu0 0
        %6050 = vmatprep.subr.bf16.mxu0 0
        %6051 = vmatpush1.bf16.xpose.msra.mxu0 0
        %6052 = vmatprep.subr.bf16.mxu0 0
        %6053 = vmatpush1.bf16.xpose.msra.mxu0 0
        %6054 = vmatprep.subr.bf16.mxu0 0
        %6055 = vmatpush1.bf16.xpose.msra.mxu0 0
        %6056 = vmatprep.subr.bf16.mxu0 0
        %6057 = vmatpush1.bf16.xpose.msra.mxu0 0
        %6058 = vmatprep.subr.bf16.mxu0 0
        %6059 = vmatpush1.bf16.xpose.msra.mxu0 0
        %6060 = vmatprep.subr.bf16.mxu0 0
        %6061 = vmatpush1.bf16.xpose.msra.mxu0 0
        %6062 = vmatprep.mubr.bf16.mxu0 0
        %6063 = vmatmul.mubr.bf16.gmra.mrb[0].mxu0 %v6022
        %v6064 = vpop.f32.mrb[0].mxu0
        %v6065 = vadd.f32 0.0, %v6064
        %v6066 = vpop.f32.mrb[0].mxu0
        %v6067 = vpop.f32.mrb[0].mxu0
        %v6068 = vadd.f32 0.0, %v6067
        %v6069 = vpop.f32.mrb[0].mxu0
        %6070 = vdwg.mxu0
        %v6072 = vsel %vm982, %v5871, 0
        %v6075 = vsel %vm982, %v6015, 0
        %v6078 = vsel %vm982, %v6016, 0
        %6080 = vmatprep.subr.bf16.mxu0 0
        %6081 = vmatpush1.bf16.xpose.msra.mxu0 %v6075
        %6082 = vmatprep.subr.bf16.mxu0 0
        %6083 = vmatpush1.bf16.xpose.msra.mxu0 %v6078
        %6084 = vmatprep.subr.bf16.mxu0 0
        %6085 = vmatpush1.bf16.xpose.msra.mxu0 0
        %6086 = vmatprep.subr.bf16.mxu0 0
        %6087 = vmatpush1.bf16.xpose.msra.mxu0 0
        %6088 = vmatprep.subr.bf16.mxu0 0
        %6089 = vmatpush1.bf16.xpose.msra.mxu0 0
        %6090 = vmatprep.subr.bf16.mxu0 0
        %6091 = vmatpush1.bf16.xpose.msra.mxu0 0
        %6092 = vmatprep.subr.bf16.mxu0 0
        %6093 = vmatpush1.bf16.xpose.msra.mxu0 0
        %6094 = vmatprep.subr.bf16.mxu0 0
        %6095 = vmatpush1.bf16.xpose.msra.mxu0 0
        %6096 = vmatprep.subr.bf16.mxu0 0
        %6097 = vmatpush1.bf16.xpose.msra.mxu0 0
        %6098 = vmatprep.subr.bf16.mxu0 0
        %6099 = vmatpush1.bf16.xpose.msra.mxu0 0
        %6100 = vmatprep.subr.bf16.mxu0 0
        %6101 = vmatpush1.bf16.xpose.msra.mxu0 0
        %6102 = vmatprep.subr.bf16.mxu0 0
        %6103 = vmatpush1.bf16.xpose.msra.mxu0 0
        %6104 = vmatprep.subr.bf16.mxu0 0
        %6105 = vmatpush1.bf16.xpose.msra.mxu0 0
        %6106 = vmatprep.subr.bf16.mxu0 0
        %6107 = vmatpush1.bf16.xpose.msra.mxu0 0
        %6108 = vmatprep.subr.bf16.mxu0 0
        %6109 = vmatpush1.bf16.xpose.msra.mxu0 0
        %6110 = vmatprep.subr.bf16.mxu0 0
        %6111 = vmatpush1.bf16.xpose.msra.mxu0 0
        %6112 = vmatprep.mubr.bf16.mxu0 0
        %6113 = vmatmul.mubr.bf16.gmra.mrb[0].mxu0 %v6072
        %v6114 = vpop.f32.mrb[0].mxu0
        %v6115 = vadd.f32 %v6065, %v6114
        %v6116 = vpop.f32.mrb[0].mxu0
        %v6117 = vpop.f32.mrb[0].mxu0
        %v6118 = vadd.f32 %v6068, %v6117
        %v6119 = vpop.f32.mrb[0].mxu0
        %6120 = vdwg.mxu0
        %v6121 = vlaneseq
        %v6122 = vshrl.u32 %v6121, 7
        %v6123 = vsub.s32 0, %v6122
        %v6124 = vrot.slane %v5735, %v6123
        %v6125 = vadd.f32 %v6115, %v6124
        %v6126 = vadd.f32 %v6118, %v6124
        %v6129 = vrot.slane %v6125, 6
        %v6130 = vrot.slane %v6126, 6
        %v6131 = vsel %vm1050, %v6129, %v6130
        %v6134 = vadd.f32 %v5541, %v6129
        %v6135 = vadd.f32 %v5542, %v6131
        %v6136 = vld [vmem:[#allocation6 + $0x5a] sm:$0x1]
        %v6137 = vld [vmem:[#allocation6 + $0x5b] sm:$0x1]
        %v6138 = vsel %vm4970, %v6134, 0.0
        %6139 = vadd.xlane.f32.xlu0 %v6138
        %v6140 = vpop.xlane.xlu0 %6139
        %v6141 = vsel %vm1327, %v6135, 0.0
        %6142 = vadd.xlane.f32.xlu0 %v6141
        %v6143 = vpop.xlane.xlu0 %6142
        %v6144 = vmul.f32 %v6140, %v1331
        %v6145 = vmul.f32 %v6143, %v1331
        %v6146 = vmul.f32 %v6134, %v6134
        %v6147 = vmul.f32 %v6135, %v6135
        %v6148 = vsel %vm4970, %v6146, 0.0
        %6149 = vadd.xlane.f32.xlu0 %v6148
        %v6150 = vpop.xlane.xlu0 %6149
        %v6151 = vsel %vm1327, %v6147, 0.0
        %6152 = vadd.xlane.f32.xlu0 %v6151
        %v6153 = vpop.xlane.xlu0 %6152
        %v6154 = vmul.f32 %v6150, %v1331
        %v6155 = vmul.f32 %v6153, %v1331
        %v6156 = vsub.f32 %v6134, %v6144
        %v6157 = vsub.f32 %v6135, %v6145
        %v6158 = vmul.f32 %v6144, %v6144
        %v6159 = vmul.f32 %v6145, %v6145
        %v6160 = vsub.f32 %v6154, %v6158
        %v6161 = vsub.f32 %v6155, %v6159
        %v6162 = vadd.f32 %v6160, 1e-05
        %v6163 = vadd.f32 %v6161, 1e-05
        %v6164 = vrsqrt.pop %v6162
        %v6165 = vrsqrt.pop %v6163
        %v6166 = vmul.f32 %v6156, %v6164
        %v6167 = vmul.f32 %v6157, %v6165
        %v6168 = vlaneseq
        %v6169 = vshrl.u32 %v6168, 7
        %v6170 = vsub.s32 0, %v6169
        %v6171 = vrot.slane %v6136, %v6170
        %v6172 = vmul.f32 %v6166, %v6171
        %v6173 = vmul.f32 %v6167, %v6171
        %v6174 = vlaneseq
        %v6175 = vshrl.u32 %v6174, 7
        %v6176 = vsub.s32 0, %v6175
        %v6177 = vrot.slane %v6137, %v6176
        %v6178 = vadd.f32 %v6172, %v6177
        %v6179 = vadd.f32 %v6173, %v6177
        %v6180 = vld [vmem:[#allocation4 + $0x300] sm:$0xf]
        %v6181 = vld [vmem:[#allocation4 + $0x304] sm:$0xf]
        %v6182 = vld [vmem:[#allocation4 + $0x308] sm:$0xf]
        %v6183 = vld [vmem:[#allocation4 + $0x30c] sm:$0xf]
        %v6184 = vld [vmem:[#allocation4 + $0x310] sm:$0xf]
        %v6185 = vld [vmem:[#allocation4 + $0x314] sm:$0xf]
        %v6186 = vld [vmem:[#allocation4 + $0x318] sm:$0xf]
        %v6187 = vld [vmem:[#allocation4 + $0x31c] sm:$0xf]
        %v6188 = vpack.c.bf16 %v6179, %v6178
        %v6189 = vld [vmem:[%s6 + $0x3] sm:$0x1]
        %v6190 = vlaneseq
        %v6191 = vshrl.u32 %v6190, 7
        %v6192 = vsub.s32 0, %v6191
        %v6193 = vrot.slane %v6189, %v6192
        %v6195 = vrot.slane %v6188, 1
        %v6204 = vunpack.c.l.b16 %v6180
        %v6205 = vunpack.c.l.b16 %v6181
        %v6206 = vunpack.c.l.b16 %v6182
        %v6207 = vunpack.c.l.b16 %v6183
        %v6208 = vunpack.c.l.b16 %v6184
        %v6209 = vunpack.c.l.b16 %v6185
        %v6210 = vunpack.c.l.b16 %v6186
        %v6211 = vunpack.c.l.b16 %v6187
        %v6212 = vpack.c.b16 %v6205, %v6204
        %v6213 = vpack.c.b16 %v6207, %v6206
        %v6214 = vpack.c.b16 %v6209, %v6208
        %v6215 = vpack.c.b16 %v6211, %v6210
        %v6217 = vsel %vm884, %v6195, 0
        %v6220 = vsel %vm884, %v6212, 0
        %v6223 = vsel %vm884, %v6213, 0
        %v6226 = vsel %vm884, %v6214, 0
        %v6229 = vsel %vm884, %v6215, 0
        %6231 = vmatprep.subr.bf16.mxu0 0
        %6232 = vmatpush1.bf16.xpose.msra.mxu0 %v6220
        %6233 = vmatprep.subr.bf16.mxu0 0
        %6234 = vmatpush1.bf16.xpose.msra.mxu0 %v6223
        %6235 = vmatprep.subr.bf16.mxu0 0
        %6236 = vmatpush1.bf16.xpose.msra.mxu0 %v6226
        %6237 = vmatprep.subr.bf16.mxu0 0
        %6238 = vmatpush1.bf16.xpose.msra.mxu0 %v6229
        %6239 = vmatprep.subr.bf16.mxu0 0
        %6240 = vmatpush1.bf16.xpose.msra.mxu0 0
        %6241 = vmatprep.subr.bf16.mxu0 0
        %6242 = vmatpush1.bf16.xpose.msra.mxu0 0
        %6243 = vmatprep.subr.bf16.mxu0 0
        %6244 = vmatpush1.bf16.xpose.msra.mxu0 0
        %6245 = vmatprep.subr.bf16.mxu0 0
        %6246 = vmatpush1.bf16.xpose.msra.mxu0 0
        %6247 = vmatprep.subr.bf16.mxu0 0
        %6248 = vmatpush1.bf16.xpose.msra.mxu0 0
        %6249 = vmatprep.subr.bf16.mxu0 0
        %6250 = vmatpush1.bf16.xpose.msra.mxu0 0
        %6251 = vmatprep.subr.bf16.mxu0 0
        %6252 = vmatpush1.bf16.xpose.msra.mxu0 0
        %6253 = vmatprep.subr.bf16.mxu0 0
        %6254 = vmatpush1.bf16.xpose.msra.mxu0 0
        %6255 = vmatprep.subr.bf16.mxu0 0
        %6256 = vmatpush1.bf16.xpose.msra.mxu0 0
        %6257 = vmatprep.subr.bf16.mxu0 0
        %6258 = vmatpush1.bf16.xpose.msra.mxu0 0
        %6259 = vmatprep.subr.bf16.mxu0 0
        %6260 = vmatpush1.bf16.xpose.msra.mxu0 0
        %6261 = vmatprep.subr.bf16.mxu0 0
        %6262 = vmatpush1.bf16.xpose.msra.mxu0 0
        %6263 = vmatprep.mubr.bf16.mxu0 0
        %6264 = vmatmul.mubr.bf16.gmra.mrb[0].mxu0 %v6217
        %v6265 = vpop.f32.mrb[0].mxu0
        %v6266 = vadd.f32 %v6193, %v6265
        %v6267 = vpop.f32.mrb[0].mxu0
        %v6268 = vpop.f32.mrb[0].mxu0
        %v6269 = vadd.f32 %v6193, %v6268
        %v6270 = vpop.f32.mrb[0].mxu0
        %6271 = vdwg.mxu0
        %v6272 = vmax.f32 %v6266, 0.0
        %v6273 = vmax.f32 %v6269, 0.0
        %v6274 = vld [vmem:[#allocation4 + $0x320] sm:$0xf]
        %v6275 = vld [vmem:[#allocation4 + $0x324] sm:$0xf]
        %v6276 = vld [vmem:[#allocation4 + $0x328] sm:$0xf]
        %v6277 = vld [vmem:[#allocation4 + $0x32c] sm:$0xf]
        %v6278 = vld [vmem:[#allocation4 + $0x330] sm:$0xf]
        %v6279 = vld [vmem:[#allocation4 + $0x334] sm:$0xf]
        %v6280 = vld [vmem:[#allocation4 + $0x338] sm:$0xf]
        %v6281 = vld [vmem:[#allocation4 + $0x33c] sm:$0xf]
        %v6282 = vpack.c.bf16 %v6273, %v6272
        %v6291 = vunpack.c.l.b16 %v6274
        %v6292 = vunpack.c.l.b16 %v6275
        %v6293 = vunpack.c.l.b16 %v6276
        %v6294 = vunpack.c.l.b16 %v6277
        %v6295 = vunpack.c.l.b16 %v6278
        %v6296 = vunpack.c.l.b16 %v6279
        %v6297 = vunpack.c.l.b16 %v6280
        %v6298 = vunpack.c.l.b16 %v6281
        %v6299 = vpack.c.b16 %v6292, %v6291
        %v6300 = vpack.c.b16 %v6294, %v6293
        %v6301 = vpack.c.b16 %v6296, %v6295
        %v6302 = vpack.c.b16 %v6298, %v6297
        %v6308 = vsel %vm2022, %v6282, 0
        %6310 = vmatprep.subr.bf16.mxu0 0
        %6311 = vmatpush1.bf16.msra.mxu0 %v6299
        %6312 = vmatprep.subr.bf16.mxu0 0
        %6313 = vmatpush1.bf16.msra.mxu0 %v6300
        %6314 = vmatprep.subr.bf16.mxu0 0
        %6315 = vmatpush1.bf16.msra.mxu0 %v6301
        %6316 = vmatprep.subr.bf16.mxu0 0
        %6317 = vmatpush1.bf16.msra.mxu0 %v6302
        %6318 = vmatprep.subr.bf16.mxu0 0
        %6319 = vmatpush1.bf16.msra.mxu0 0
        %6320 = vmatprep.subr.bf16.mxu0 0
        %6321 = vmatpush1.bf16.msra.mxu0 0
        %6322 = vmatprep.subr.bf16.mxu0 0
        %6323 = vmatpush1.bf16.msra.mxu0 0
        %6324 = vmatprep.subr.bf16.mxu0 0
        %6325 = vmatpush1.bf16.msra.mxu0 0
        %6326 = vmatprep.subr.bf16.mxu0 0
        %6327 = vmatpush1.bf16.msra.mxu0 0
        %6328 = vmatprep.subr.bf16.mxu0 0
        %6329 = vmatpush1.bf16.msra.mxu0 0
        %6330 = vmatprep.subr.bf16.mxu0 0
        %6331 = vmatpush1.bf16.msra.mxu0 0
        %6332 = vmatprep.subr.bf16.mxu0 0
        %6333 = vmatpush1.bf16.msra.mxu0 0
        %6334 = vmatprep.subr.bf16.mxu0 0
        %6335 = vmatpush1.bf16.msra.mxu0 0
        %6336 = vmatprep.subr.bf16.mxu0 0
        %6337 = vmatpush1.bf16.msra.mxu0 0
        %6338 = vmatprep.subr.bf16.mxu0 0
        %6339 = vmatpush1.bf16.msra.mxu0 0
        %6340 = vmatprep.subr.bf16.mxu0 0
        %6341 = vmatpush1.bf16.msra.mxu0 0
        %6342 = vmatprep.mubr.bf16.mxu0 0
        %6343 = vmatmul.mubr.bf16.gmra.mrb[0].mxu0 %v6308
        %v6344 = vpop.f32.mrb[0].mxu0
        %v6345 = vadd.f32 0.0, %v6344
        %v6346 = vpop.f32.mrb[0].mxu0
        %v6347 = vpop.f32.mrb[0].mxu0
        %v6348 = vadd.f32 0.0, %v6347
        %v6349 = vpop.f32.mrb[0].mxu0
        %6350 = vdwg.mxu0
        %v6353 = vrot.slane %v6345, 6
        %v6354 = vrot.slane %v6348, 6
        %v6355 = vsel %vm1050, %v6353, %v6354
        %v6358 = vadd.f32 %v6178, %v6353
        %v6359 = vadd.f32 %v6179, %v6355
        %v6360 = vld [vmem:[#allocation6 + $0x57] sm:$0x1]
        %v6361 = vlaneseq
        %v6362 = vshrl.u32 %v6361, 7
        %v6363 = vsub.s32 0, %v6362
        %v6364 = vrot.slane %v6360, %v6363
        %v6365 = vadd.f32 %v6358, %v6364
        %v6366 = vadd.f32 %v6359, %v6364
        %v6367 = vld [vmem:[#allocation6 + $0x5c] sm:$0x1]
        %v6368 = vld [vmem:[#allocation6 + $0x5d] sm:$0x1]
        %v6369 = vsel %vm4970, %v6365, 0.0
        %6370 = vadd.xlane.f32.xlu0 %v6369
        %v6371 = vpop.xlane.xlu0 %6370
        %v6372 = vsel %vm1327, %v6366, 0.0
        %6373 = vadd.xlane.f32.xlu0 %v6372
        %v6374 = vpop.xlane.xlu0 %6373
        %v6375 = vmul.f32 %v6371, %v1331
        %v6376 = vmul.f32 %v6374, %v1331
        %v6377 = vmul.f32 %v6365, %v6365
        %v6378 = vmul.f32 %v6366, %v6366
        %v6379 = vsel %vm4970, %v6377, 0.0
        %6380 = vadd.xlane.f32.xlu0 %v6379
        %v6381 = vpop.xlane.xlu0 %6380
        %v6382 = vsel %vm1327, %v6378, 0.0
        %6383 = vadd.xlane.f32.xlu0 %v6382
        %v6384 = vpop.xlane.xlu0 %6383
        %v6385 = vmul.f32 %v6381, %v1331
        %v6386 = vmul.f32 %v6384, %v1331
        %v6387 = vsub.f32 %v6365, %v6375
        %v6388 = vsub.f32 %v6366, %v6376
        %v6389 = vmul.f32 %v6375, %v6375
        %v6390 = vmul.f32 %v6376, %v6376
        %v6391 = vsub.f32 %v6385, %v6389
        %v6392 = vsub.f32 %v6386, %v6390
        %v6393 = vadd.f32 %v6391, 1e-05
        %v6394 = vadd.f32 %v6392, 1e-05
        %v6395 = vrsqrt.pop %v6393
        %v6396 = vrsqrt.pop %v6394
        %v6397 = vmul.f32 %v6387, %v6395
        %v6398 = vmul.f32 %v6388, %v6396
        %v6399 = vlaneseq
        %v6400 = vshrl.u32 %v6399, 7
        %v6401 = vsub.s32 0, %v6400
        %v6402 = vrot.slane %v6367, %v6401
        %v6403 = vmul.f32 %v6397, %v6402
        %v6404 = vmul.f32 %v6398, %v6402
        %v6405 = vlaneseq
        %v6406 = vshrl.u32 %v6405, 7
        %v6407 = vsub.s32 0, %v6406
        %v6408 = vrot.slane %v6368, %v6407
        %v6409 = vadd.f32 %v6403, %v6408
        %v6410 = vadd.f32 %v6404, %v6408
        %v6411 = vld [vmem:[#allocation6 + $0x5e] sm:$0x1]
        %v6412 = vld [vmem:[#allocation6 + $0x5f] sm:$0x1]
        %v6413 = vsel %vm4970, %v6409, 0.0
        %6414 = vadd.xlane.f32.xlu0 %v6413
        %v6415 = vpop.xlane.xlu0 %6414
        %v6416 = vsel %vm1327, %v6410, 0.0
        %6417 = vadd.xlane.f32.xlu0 %v6416
        %v6418 = vpop.xlane.xlu0 %6417
        %v6419 = vmul.f32 %v6415, %v1331
        %v6420 = vmul.f32 %v6418, %v1331
        %v6421 = vmul.f32 %v6409, %v6409
        %v6422 = vmul.f32 %v6410, %v6410
        %v6423 = vsel %vm4970, %v6421, 0.0
        %6424 = vadd.xlane.f32.xlu0 %v6423
        %v6425 = vpop.xlane.xlu0 %6424
        %v6426 = vsel %vm1327, %v6422, 0.0
        %6427 = vadd.xlane.f32.xlu0 %v6426
        %v6428 = vpop.xlane.xlu0 %6427
        %v6429 = vmul.f32 %v6425, %v1331
        %v6430 = vmul.f32 %v6428, %v1331
        %v6431 = vsub.f32 %v6409, %v6419
        %v6432 = vsub.f32 %v6410, %v6420
        %v6433 = vmul.f32 %v6419, %v6419
        %v6434 = vmul.f32 %v6420, %v6420
        %v6435 = vsub.f32 %v6429, %v6433
        %v6436 = vsub.f32 %v6430, %v6434
        %v6437 = vadd.f32 %v6435, 1e-05
        %v6438 = vadd.f32 %v6436, 1e-05
        %v6439 = vrsqrt.pop %v6437
        %v6440 = vrsqrt.pop %v6438
        %v6441 = vmul.f32 %v6431, %v6439
        %v6442 = vmul.f32 %v6432, %v6440
        %v6443 = vlaneseq
        %v6444 = vshrl.u32 %v6443, 7
        %v6445 = vsub.s32 0, %v6444
        %v6446 = vrot.slane %v6411, %v6445
        %v6447 = vmul.f32 %v6441, %v6446
        %v6448 = vmul.f32 %v6442, %v6446
        %v6449 = vlaneseq
        %v6450 = vshrl.u32 %v6449, 7
        %v6451 = vsub.s32 0, %v6450
        %v6452 = vrot.slane %v6412, %v6451
        %v6453 = vadd.f32 %v6447, %v6452
        %v6454 = vadd.f32 %v6448, %v6452
        %v6455 = vpack.c.bf16 %v6454, %v6453
        %v6457 = vrot.slane %v6455, 1
        %v6459 = vsel %vm884, %v6457, 0
        %6461 = vmatprep.subr.bf16.mxu0 0
        %6462 = vmatpush1.bf16.xpose.msra.mxu0 %v4902
        %6463 = vmatprep.subr.bf16.mxu0 0
        %6464 = vmatpush1.bf16.xpose.msra.mxu0 %v4905
        %6465 = vmatprep.subr.bf16.mxu0 0
        %6466 = vmatpush1.bf16.xpose.msra.mxu0 %v4908
        %6467 = vmatprep.subr.bf16.mxu0 0
        %6468 = vmatpush1.bf16.xpose.msra.mxu0 %v4911
        %6469 = vmatprep.subr.bf16.mxu0 0
        %6470 = vmatpush1.bf16.xpose.msra.mxu0 %v4914
        %6471 = vmatprep.subr.bf16.mxu0 0
        %6472 = vmatpush1.bf16.xpose.msra.mxu0 %v4917
        %6473 = vmatprep.subr.bf16.mxu0 0
        %6474 = vmatpush1.bf16.xpose.msra.mxu0 %v4920
        %6475 = vmatprep.subr.bf16.mxu0 0
        %6476 = vmatpush1.bf16.xpose.msra.mxu0 %v4923
        %6477 = vmatprep.subr.bf16.mxu0 0
        %6478 = vmatpush1.bf16.xpose.msra.mxu0 0
        %6479 = vmatprep.subr.bf16.mxu0 0
        %6480 = vmatpush1.bf16.xpose.msra.mxu0 0
        %6481 = vmatprep.subr.bf16.mxu0 0
        %6482 = vmatpush1.bf16.xpose.msra.mxu0 0
        %6483 = vmatprep.subr.bf16.mxu0 0
        %6484 = vmatpush1.bf16.xpose.msra.mxu0 0
        %6485 = vmatprep.subr.bf16.mxu0 0
        %6486 = vmatpush1.bf16.xpose.msra.mxu0 0
        %6487 = vmatprep.subr.bf16.mxu0 0
        %6488 = vmatpush1.bf16.xpose.msra.mxu0 0
        %6489 = vmatprep.subr.bf16.mxu0 0
        %6490 = vmatpush1.bf16.xpose.msra.mxu0 0
        %6491 = vmatprep.subr.bf16.mxu0 0
        %6492 = vmatpush1.bf16.xpose.msra.mxu0 0
        %6493 = vmatprep.mubr.bf16.mxu0 0
        %6494 = vmatmul.mubr.bf16.gmra.mrb[0].mxu0 %v6459
        %v6495 = vpop.f32.mrb[0].mxu0
        %v6496 = vadd.f32 %v4854, %v6495
        %v6497 = vpop.f32.mrb[0].mxu0
        %v6498 = vpop.f32.mrb[0].mxu0
        %v6499 = vadd.f32 %v4854, %v6498
        %v6500 = vpop.f32.mrb[0].mxu0
        %6501 = vdwg.mxu0
        %6502 = vst [vmem:[%s560 + $0xa] sm:$0xff] %v6496
        %6503 = vst [vmem:[%s560 + $0x12] sm:$0x3] %v6499
        %6504 = vst.msk [vmem:[#allocation3 + $0x6] sm:$0xfc] %vm4970, %v6453
        %6505 = vst.msk [vmem:[#allocation3 + $0xe] sm:$0xf] %vm1327, %v6454
        %v6506 = vld [vmem:[#allocation3] sm:$0xff]
        %v6507 = vld [vmem:[#allocation3 + $0x8] sm:$0xff]
        %v6508 = vld [vmem:[#allocation3 + $0x10] sm:$0x3]
        %v6509 = vld [vmem:[#allocation12] sm:$0xff]
        %v6510 = vld [vmem:[#allocation12 + $0x8] sm:$0x3]
        %v6511 = vld [vmem:[#allocation14] sm:$0xff]
        %v6512 = vld [vmem:[#allocation14 + $0x8] sm:$0x3]
        %v6513 = vld [vmem:[#allocation4 + $0x340] sm:$0xf]
        %v6514 = vld [vmem:[#allocation4 + $0x344] sm:$0xf]
        %v6515 = vld [vmem:[#allocation4 + $0x348] sm:$0xf]
        %v6516 = vld [vmem:[#allocation4 + $0x34c] sm:$0xf]
        %v6517 = vld [vmem:[#allocation4 + $0x350] sm:$0xf]
        %v6518 = vld [vmem:[#allocation4 + $0x354] sm:$0xf]
        %v6519 = vld [vmem:[#allocation4 + $0x358] sm:$0xf]
        %v6520 = vld [vmem:[#allocation4 + $0x35c] sm:$0xf]
        %v6521 = vld [vmem:[#allocation4 + $0x360] sm:$0xf]
        %v6522 = vld [vmem:[#allocation4 + $0x364] sm:$0xf]
        %v6523 = vld [vmem:[#allocation4 + $0x368] sm:$0xf]
        %v6524 = vld [vmem:[#allocation4 + $0x36c] sm:$0xf]
        %v6537 = vunpack.c.l.b16 %v6513
        %v6538 = vunpack.c.l.b16 %v6514
        %v6539 = vunpack.c.l.b16 %v6515
        %v6540 = vunpack.c.l.b16 %v6516
        %v6541 = vunpack.c.l.b16 %v6517
        %v6542 = vunpack.c.l.b16 %v6518
        %v6543 = vunpack.c.l.b16 %v6519
        %v6544 = vunpack.c.l.b16 %v6520
        %v6545 = vunpack.c.l.b16 %v6521
        %v6546 = vunpack.c.l.b16 %v6522
        %v6547 = vunpack.c.l.b16 %v6523
        %v6548 = vunpack.c.l.b16 %v6524
        %v6549 = vpack.c.b16 %v6538, %v6537
        %v6550 = vpack.c.b16 %v6540, %v6539
        %v6551 = vpack.c.b16 %v6542, %v6541
        %v6552 = vpack.c.b16 %v6544, %v6543
        %v6553 = vpack.c.b16 %v6546, %v6545
        %v6554 = vpack.c.b16 %v6548, %v6547
        %v6556 = vsel %vm884, %v6549, 0
        %v6559 = vsel %vm884, %v6550, 0
        %v6562 = vsel %vm884, %v6551, 0
        %v6565 = vsel %vm884, %v6552, 0
        %v6568 = vsel %vm884, %v6553, 0
        %v6571 = vsel %vm884, %v6554, 0
        %6573 = vmatprep.subr.bf16.mxu0 0
        %6574 = vmatpush1.bf16.xpose.msra.mxu0 %v6556
        %6575 = vmatprep.subr.bf16.mxu0 0
        %6576 = vmatpush1.bf16.xpose.msra.mxu0 %v6559
        %6577 = vmatprep.subr.bf16.mxu0 0
        %6578 = vmatpush1.bf16.xpose.msra.mxu0 %v6562
        %6579 = vmatprep.subr.bf16.mxu0 0
        %6580 = vmatpush1.bf16.xpose.msra.mxu0 %v6565
        %6581 = vmatprep.subr.bf16.mxu0 0
        %6582 = vmatpush1.bf16.xpose.msra.mxu0 %v6568
        %6583 = vmatprep.subr.bf16.mxu0 0
        %6584 = vmatpush1.bf16.xpose.msra.mxu0 %v6571
        %6585 = vmatprep.subr.bf16.mxu0 0
        %6586 = vmatpush1.bf16.xpose.msra.mxu0 0
        %6587 = vmatprep.subr.bf16.mxu0 0
        %6588 = vmatpush1.bf16.xpose.msra.mxu0 0
        %6589 = vmatprep.subr.bf16.mxu0 0
        %6590 = vmatpush1.bf16.xpose.msra.mxu0 0
        %6591 = vmatprep.subr.bf16.mxu0 0
        %6592 = vmatpush1.bf16.xpose.msra.mxu0 0
        %6593 = vmatprep.subr.bf16.mxu0 0
        %6594 = vmatpush1.bf16.xpose.msra.mxu0 0
        %6595 = vmatprep.subr.bf16.mxu0 0
        %6596 = vmatpush1.bf16.xpose.msra.mxu0 0
        %6597 = vmatprep.subr.bf16.mxu0 0
        %6598 = vmatpush1.bf16.xpose.msra.mxu0 0
        %6599 = vmatprep.subr.bf16.mxu0 0
        %6600 = vmatpush1.bf16.xpose.msra.mxu0 0
        %6601 = vmatprep.subr.bf16.mxu0 0
        %6602 = vmatpush1.bf16.xpose.msra.mxu0 0
        %6603 = vmatprep.subr.bf16.mxu0 0
        %6604 = vmatpush1.bf16.xpose.msra.mxu0 0
        %6605 = vmatprep.mubr.bf16.mxu0 0
        %6606 = vmatmul.mubr.bf16.gmra.mrb[0].mxu0 %v6459
        %v6607 = vpop.f32.mrb[0].mxu0
        %v6608 = vadd.f32 0.0, %v6607
        %v6609 = vpop.f32.mrb[0].mxu0
        %v6610 = vpop.f32.mrb[0].mxu0
        %v6611 = vadd.f32 0.0, %v6610
        %v6612 = vpop.f32.mrb[0].mxu0
        %6613 = vdwg.mxu0
        %v6614 = vld [vmem:[#allocation6 + $0x60] sm:$0x1]
        %v6615 = vlaneseq
        %v6616 = vshrl.u32 %v6615, 7
        %v6617 = vsub.s32 0, %v6616
        %v6618 = vrot.slane %v6614, %v6617
        %v6619 = vadd.f32 %v6608, %v6618
        %v6620 = vadd.f32 %v6611, %v6618
        %v6621 = vld [vmem:[#allocation6 + $0x61] sm:$0x1]
        %v6622 = vlaneseq
        %v6623 = vshrl.u32 %v6622, 7
        %v6624 = vsub.s32 0, %v6623
        %v6625 = vrot.slane %v6621, %v6624
        %6627 = vrot.lane.b32.xlu0 %v6625, 32
        %v6628 = vpop.permute.xlu0 %6627
        %v6630 = vadd.f32 %v6608, %v6628
        %v6631 = vadd.f32 %v6611, %v6628
        %v6632 = vld [vmem:[#allocation6 + $0x62] sm:$0x1]
        %v6633 = vlaneseq
        %v6634 = vshrl.u32 %v6633, 7
        %v6635 = vsub.s32 0, %v6634
        %v6636 = vrot.slane %v6632, %v6635
        %6638 = vrot.lane.b32.xlu0 %v6636, 64
        %v6639 = vpop.permute.xlu0 %6638
        %v6641 = vadd.f32 %v6608, %v6639
        %v6642 = vadd.f32 %v6611, %v6639
        %v6643 = vld [vmem:[#allocation4 + $0x370] sm:$0xf]
        %v6644 = vld [vmem:[#allocation4 + $0x374] sm:$0xf]
        %v6645 = vld [vmem:[#allocation4 + $0x378] sm:$0xf]
        %v6646 = vld [vmem:[#allocation4 + $0x37c] sm:$0xf]
        %v6647 = vld [vmem:[#allocation6 + $0x63] sm:$0x1]
        %v6648 = vpack.c.bf16 %v6620, %v6619
        %v6649 = vpack.c.bf16 %v6631, %v6630
        %6651 = vrot.lane.b32.xlu0 %v6649, 96
        %v6652 = vpop.permute.xlu0 %6651
        %v6654 = vsel %vm982, %v6648, 0
        %v6657 = vsel %vm982, %v6652, 0
        %6659 = vmatprep.subr.bf16.mxu0 0
        %6660 = vmatpush1.bf16.xpose.msra.mxu0 %v6657
        %6661 = vmatprep.subr.bf16.mxu0 0
        %6662 = vmatpush1.bf16.xpose.msra.mxu0 0
        %6663 = vmatprep.subr.bf16.mxu0 0
        %6664 = vmatpush1.bf16.xpose.msra.mxu0 0
        %6665 = vmatprep.subr.bf16.mxu0 0
        %6666 = vmatpush1.bf16.xpose.msra.mxu0 0
        %6667 = vmatprep.subr.bf16.mxu0 0
        %6668 = vmatpush1.bf16.xpose.msra.mxu0 0
        %6669 = vmatprep.subr.bf16.mxu0 0
        %6670 = vmatpush1.bf16.xpose.msra.mxu0 0
        %6671 = vmatprep.subr.bf16.mxu0 0
        %6672 = vmatpush1.bf16.xpose.msra.mxu0 0
        %6673 = vmatprep.subr.bf16.mxu0 0
        %6674 = vmatpush1.bf16.xpose.msra.mxu0 0
        %6675 = vmatprep.subr.bf16.mxu0 0
        %6676 = vmatpush1.bf16.xpose.msra.mxu0 0
        %6677 = vmatprep.subr.bf16.mxu0 0
        %6678 = vmatpush1.bf16.xpose.msra.mxu0 0
        %6679 = vmatprep.subr.bf16.mxu0 0
        %6680 = vmatpush1.bf16.xpose.msra.mxu0 0
        %6681 = vmatprep.subr.bf16.mxu0 0
        %6682 = vmatpush1.bf16.xpose.msra.mxu0 0
        %6683 = vmatprep.subr.bf16.mxu0 0
        %6684 = vmatpush1.bf16.xpose.msra.mxu0 0
        %6685 = vmatprep.subr.bf16.mxu0 0
        %6686 = vmatpush1.bf16.xpose.msra.mxu0 0
        %6687 = vmatprep.subr.bf16.mxu0 0
        %6688 = vmatpush1.bf16.xpose.msra.mxu0 0
        %6689 = vmatprep.subr.bf16.mxu0 0
        %6690 = vmatpush1.bf16.xpose.msra.mxu0 0
        %6691 = vmatprep.mubr.bf16.mxu0 0
        %6692 = vmatmul.mubr.bf16.gmra.mrb[0].mxu0 %v6654
        %v6693 = vpop.f32.mrb[0].mxu0
        %v6694 = vadd.f32 %v6509, %v6693
        %v6695 = vpop.f32.mrb[0].mxu0
        %v6696 = vpop.f32.mrb[0].mxu0
        %v6697 = vadd.f32 %v6510, %v6696
        %v6698 = vpop.f32.mrb[0].mxu0
        %6699 = vdwg.mxu0
        %v6700 = vsel %vm5167, %v6694, -inf
        %6701 = vmax.xlane.f32.xlu0 %v6700
        %v6702 = vpop.xlane.xlu0 %6701
        %v6703 = vsel %vm5171, %v6697, -inf
        %6704 = vmax.xlane.f32.xlu0 %v6703
        %v6705 = vpop.xlane.xlu0 %6704
        %v6706 = vsub.f32 %v6694, %v6702
        %v6707 = vsub.f32 %v6697, %v6705
        %v6708 = vmul.f32 %v6706, 1.442695
        %v6709 = vpow.pop %v6708
        %v6710 = vmul.f32 %v6707, 1.442695
        %v6711 = vpow.pop %v6710
        %v6712 = vsel %vm5167, %v6709, 0.0
        %6713 = vadd.xlane.f32.xlu0 %v6712
        %v6714 = vpop.xlane.xlu0 %6713
        %v6715 = vsel %vm5171, %v6711, 0.0
        %6716 = vadd.xlane.f32.xlu0 %v6715
        %v6717 = vpop.xlane.xlu0 %6716
        %v6718 = vrcp.pop %v6714
        %v6719 = vrcp.pop %v6717
        %v6720 = vmul.f32 %v6709, %v6718
        %v6721 = vmul.f32 %v6711, %v6719
        %v6722 = vpack.c.bf16 %v6721, %v6720
        %v6723 = vpack.c.bf16 %v6642, %v6641
        %6725 = vrot.lane.b32.xlu0 %v6723, 64
        %v6726 = vpop.permute.xlu0 %6725
        %v6728 = vsel %vm5167, %v6722, 0
        %v6731 = vsel %vm5199, %v6726, 0
        %6733 = vmatprep.subr.bf16.mxu0 0
        %6734 = vmatpush1.bf16.msra.mxu0 %v6731
        %6735 = vmatprep.subr.bf16.mxu0 0
        %6736 = vmatpush1.bf16.msra.mxu0 0
        %6737 = vmatprep.subr.bf16.mxu0 0
        %6738 = vmatpush1.bf16.msra.mxu0 0
        %6739 = vmatprep.subr.bf16.mxu0 0
        %6740 = vmatpush1.bf16.msra.mxu0 0
        %6741 = vmatprep.subr.bf16.mxu0 0
        %6742 = vmatpush1.bf16.msra.mxu0 0
        %6743 = vmatprep.subr.bf16.mxu0 0
        %6744 = vmatpush1.bf16.msra.mxu0 0
        %6745 = vmatprep.subr.bf16.mxu0 0
        %6746 = vmatpush1.bf16.msra.mxu0 0
        %6747 = vmatprep.subr.bf16.mxu0 0
        %6748 = vmatpush1.bf16.msra.mxu0 0
        %6749 = vmatprep.subr.bf16.mxu0 0
        %6750 = vmatpush1.bf16.msra.mxu0 0
        %6751 = vmatprep.subr.bf16.mxu0 0
        %6752 = vmatpush1.bf16.msra.mxu0 0
        %6753 = vmatprep.subr.bf16.mxu0 0
        %6754 = vmatpush1.bf16.msra.mxu0 0
        %6755 = vmatprep.subr.bf16.mxu0 0
        %6756 = vmatpush1.bf16.msra.mxu0 0
        %6757 = vmatprep.subr.bf16.mxu0 0
        %6758 = vmatpush1.bf16.msra.mxu0 0
        %6759 = vmatprep.subr.bf16.mxu0 0
        %6760 = vmatpush1.bf16.msra.mxu0 0
        %6761 = vmatprep.subr.bf16.mxu0 0
        %6762 = vmatpush1.bf16.msra.mxu0 0
        %6763 = vmatprep.subr.bf16.mxu0 0
        %6764 = vmatpush1.bf16.msra.mxu0 0
        %6765 = vmatprep.mubr.bf16.mxu0 0
        %6766 = vmatmul.mubr.bf16.gmra.mrb[0].mxu0 %v6728
        %v6767 = vpop.f32.mrb[0].mxu0
        %v6768 = vadd.f32 0.0, %v6767
        %v6769 = vpop.f32.mrb[0].mxu0
        %v6770 = vpop.f32.mrb[0].mxu0
        %v6771 = vadd.f32 0.0, %v6770
        %v6772 = vpop.f32.mrb[0].mxu0
        %6773 = vdwg.mxu0
        %v6774 = vpack.c.bf16 %v6771, %v6768
        %6776 = vrot.lane.b32.xlu0 %v6648, 112
        %v6777 = vpop.permute.xlu0 %6776
        %6778 = vrot.lane.b32.xlu0 %v6649, 80
        %v6779 = vpop.permute.xlu0 %6778
        %v6781 = vsel %vm982, %v6777, 0
        %v6784 = vsel %vm982, %v6779, 0
        %6786 = vmatprep.subr.bf16.mxu0 0
        %6787 = vmatpush1.bf16.xpose.msra.mxu0 %v6784
        %6788 = vmatprep.subr.bf16.mxu0 0
        %6789 = vmatpush1.bf16.xpose.msra.mxu0 0
        %6790 = vmatprep.subr.bf16.mxu0 0
        %6791 = vmatpush1.bf16.xpose.msra.mxu0 0
        %6792 = vmatprep.subr.bf16.mxu0 0
        %6793 = vmatpush1.bf16.xpose.msra.mxu0 0
        %6794 = vmatprep.subr.bf16.mxu0 0
        %6795 = vmatpush1.bf16.xpose.msra.mxu0 0
        %6796 = vmatprep.subr.bf16.mxu0 0
        %6797 = vmatpush1.bf16.xpose.msra.mxu0 0
        %6798 = vmatprep.subr.bf16.mxu0 0
        %6799 = vmatpush1.bf16.xpose.msra.mxu0 0
        %6800 = vmatprep.subr.bf16.mxu0 0
        %6801 = vmatpush1.bf16.xpose.msra.mxu0 0
        %6802 = vmatprep.subr.bf16.mxu0 0
        %6803 = vmatpush1.bf16.xpose.msra.mxu0 0
        %6804 = vmatprep.subr.bf16.mxu0 0
        %6805 = vmatpush1.bf16.xpose.msra.mxu0 0
        %6806 = vmatprep.subr.bf16.mxu0 0
        %6807 = vmatpush1.bf16.xpose.msra.mxu0 0
        %6808 = vmatprep.subr.bf16.mxu0 0
        %6809 = vmatpush1.bf16.xpose.msra.mxu0 0
        %6810 = vmatprep.subr.bf16.mxu0 0
        %6811 = vmatpush1.bf16.xpose.msra.mxu0 0
        %6812 = vmatprep.subr.bf16.mxu0 0
        %6813 = vmatpush1.bf16.xpose.msra.mxu0 0
        %6814 = vmatprep.subr.bf16.mxu0 0
        %6815 = vmatpush1.bf16.xpose.msra.mxu0 0
        %6816 = vmatprep.subr.bf16.mxu0 0
        %6817 = vmatpush1.bf16.xpose.msra.mxu0 0
        %6818 = vmatprep.mubr.bf16.mxu0 0
        %6819 = vmatmul.mubr.bf16.gmra.mrb[0].mxu0 %v6781
        %v6820 = vpop.f32.mrb[0].mxu0
        %v6821 = vadd.f32 %v6509, %v6820
        %v6822 = vpop.f32.mrb[0].mxu0
        %v6823 = vpop.f32.mrb[0].mxu0
        %v6824 = vadd.f32 %v6510, %v6823
        %v6825 = vpop.f32.mrb[0].mxu0
        %6826 = vdwg.mxu0
        %v6827 = vsel %vm5167, %v6821, -inf
        %6828 = vmax.xlane.f32.xlu0 %v6827
        %v6829 = vpop.xlane.xlu0 %6828
        %v6830 = vsel %vm5171, %v6824, -inf
        %6831 = vmax.xlane.f32.xlu0 %v6830
        %v6832 = vpop.xlane.xlu0 %6831
        %v6833 = vsub.f32 %v6821, %v6829
        %v6834 = vsub.f32 %v6824, %v6832
        %v6835 = vmul.f32 %v6833, 1.442695
        %v6836 = vpow.pop %v6835
        %v6837 = vmul.f32 %v6834, 1.442695
        %v6838 = vpow.pop %v6837
        %v6839 = vsel %vm5167, %v6836, 0.0
        %6840 = vadd.xlane.f32.xlu0 %v6839
        %v6841 = vpop.xlane.xlu0 %6840
        %v6842 = vsel %vm5171, %v6838, 0.0
        %6843 = vadd.xlane.f32.xlu0 %v6842
        %v6844 = vpop.xlane.xlu0 %6843
        %v6845 = vrcp.pop %v6841
        %v6846 = vrcp.pop %v6844
        %v6847 = vmul.f32 %v6836, %v6845
        %v6848 = vmul.f32 %v6838, %v6846
        %v6849 = vpack.c.bf16 %v6848, %v6847
        %6850 = vrot.lane.b32.xlu0 %v6723, 48
        %v6851 = vpop.permute.xlu0 %6850
        %v6853 = vsel %vm5167, %v6849, 0
        %v6856 = vsel %vm5199, %v6851, 0
        %6858 = vmatprep.subr.bf16.mxu0 0
        %6859 = vmatpush1.bf16.msra.mxu0 %v6856
        %6860 = vmatprep.subr.bf16.mxu0 0
        %6861 = vmatpush1.bf16.msra.mxu0 0
        %6862 = vmatprep.subr.bf16.mxu0 0
        %6863 = vmatpush1.bf16.msra.mxu0 0
        %6864 = vmatprep.subr.bf16.mxu0 0
        %6865 = vmatpush1.bf16.msra.mxu0 0
        %6866 = vmatprep.subr.bf16.mxu0 0
        %6867 = vmatpush1.bf16.msra.mxu0 0
        %6868 = vmatprep.subr.bf16.mxu0 0
        %6869 = vmatpush1.bf16.msra.mxu0 0
        %6870 = vmatprep.subr.bf16.mxu0 0
        %6871 = vmatpush1.bf16.msra.mxu0 0
        %6872 = vmatprep.subr.bf16.mxu0 0
        %6873 = vmatpush1.bf16.msra.mxu0 0
        %6874 = vmatprep.subr.bf16.mxu0 0
        %6875 = vmatpush1.bf16.msra.mxu0 0
        %6876 = vmatprep.subr.bf16.mxu0 0
        %6877 = vmatpush1.bf16.msra.mxu0 0
        %6878 = vmatprep.subr.bf16.mxu0 0
        %6879 = vmatpush1.bf16.msra.mxu0 0
        %6880 = vmatprep.subr.bf16.mxu0 0
        %6881 = vmatpush1.bf16.msra.mxu0 0
        %6882 = vmatprep.subr.bf16.mxu0 0
        %6883 = vmatpush1.bf16.msra.mxu0 0
        %6884 = vmatprep.subr.bf16.mxu0 0
        %6885 = vmatpush1.bf16.msra.mxu0 0
        %6886 = vmatprep.subr.bf16.mxu0 0
        %6887 = vmatpush1.bf16.msra.mxu0 0
        %6888 = vmatprep.subr.bf16.mxu0 0
        %6889 = vmatpush1.bf16.msra.mxu0 0
        %6890 = vmatprep.mubr.bf16.mxu0 0
        %6891 = vmatmul.mubr.bf16.gmra.mrb[0].mxu0 %v6853
        %v6892 = vpop.f32.mrb[0].mxu0
        %v6893 = vadd.f32 0.0, %v6892
        %v6894 = vpop.f32.mrb[0].mxu0
        %v6895 = vpop.f32.mrb[0].mxu0
        %v6896 = vadd.f32 0.0, %v6895
        %v6897 = vpop.f32.mrb[0].mxu0
        %6898 = vdwg.mxu0
        %v6899 = vpack.c.bf16 %v6896, %v6893
        %v6904 = vunpack.c.l.b16 %v6643
        %v6905 = vunpack.c.l.b16 %v6644
        %v6906 = vunpack.c.l.b16 %v6645
        %v6907 = vunpack.c.l.b16 %v6646
        %v6908 = vpack.c.b16 %v6905, %v6904
        %v6909 = vpack.c.b16 %v6907, %v6906
        %6910 = vrot.lane.b32.xlu0 %v6908, 112
        %v6911 = vpop.permute.xlu0 %6910
        %6912 = vrot.lane.b32.xlu0 %v6909, 112
        %v6913 = vpop.permute.xlu0 %6912
        %v6915 = vsel %vm982, %v6899, 0
        %v6918 = vsel %vm982, %v6911, 0
        %v6921 = vsel %vm982, %v6913, 0
        %6923 = vmatprep.subr.bf16.mxu0 0
        %6924 = vmatpush1.bf16.xpose.msra.mxu0 %v6918
        %6925 = vmatprep.subr.bf16.mxu0 0
        %6926 = vmatpush1.bf16.xpose.msra.mxu0 %v6921
        %6927 = vmatprep.subr.bf16.mxu0 0
        %6928 = vmatpush1.bf16.xpose.msra.mxu0 0
        %6929 = vmatprep.subr.bf16.mxu0 0
        %6930 = vmatpush1.bf16.xpose.msra.mxu0 0
        %6931 = vmatprep.subr.bf16.mxu0 0
        %6932 = vmatpush1.bf16.xpose.msra.mxu0 0
        %6933 = vmatprep.subr.bf16.mxu0 0
        %6934 = vmatpush1.bf16.xpose.msra.mxu0 0
        %6935 = vmatprep.subr.bf16.mxu0 0
        %6936 = vmatpush1.bf16.xpose.msra.mxu0 0
        %6937 = vmatprep.subr.bf16.mxu0 0
        %6938 = vmatpush1.bf16.xpose.msra.mxu0 0
        %6939 = vmatprep.subr.bf16.mxu0 0
        %6940 = vmatpush1.bf16.xpose.msra.mxu0 0
        %6941 = vmatprep.subr.bf16.mxu0 0
        %6942 = vmatpush1.bf16.xpose.msra.mxu0 0
        %6943 = vmatprep.subr.bf16.mxu0 0
        %6944 = vmatpush1.bf16.xpose.msra.mxu0 0
        %6945 = vmatprep.subr.bf16.mxu0 0
        %6946 = vmatpush1.bf16.xpose.msra.mxu0 0
        %6947 = vmatprep.subr.bf16.mxu0 0
        %6948 = vmatpush1.bf16.xpose.msra.mxu0 0
        %6949 = vmatprep.subr.bf16.mxu0 0
        %6950 = vmatpush1.bf16.xpose.msra.mxu0 0
        %6951 = vmatprep.subr.bf16.mxu0 0
        %6952 = vmatpush1.bf16.xpose.msra.mxu0 0
        %6953 = vmatprep.subr.bf16.mxu0 0
        %6954 = vmatpush1.bf16.xpose.msra.mxu0 0
        %6955 = vmatprep.mubr.bf16.mxu0 0
        %6956 = vmatmul.mubr.bf16.gmra.mrb[0].mxu0 %v6915
        %v6957 = vpop.f32.mrb[0].mxu0
        %v6958 = vadd.f32 0.0, %v6957
        %v6959 = vpop.f32.mrb[0].mxu0
        %v6960 = vpop.f32.mrb[0].mxu0
        %v6961 = vadd.f32 0.0, %v6960
        %v6962 = vpop.f32.mrb[0].mxu0
        %6963 = vdwg.mxu0
        %v6965 = vsel %vm982, %v6774, 0
        %v6968 = vsel %vm982, %v6908, 0
        %v6971 = vsel %vm982, %v6909, 0
        %6973 = vmatprep.subr.bf16.mxu0 0
        %6974 = vmatpush1.bf16.xpose.msra.mxu0 %v6968
        %6975 = vmatprep.subr.bf16.mxu0 0
        %6976 = vmatpush1.bf16.xpose.msra.mxu0 %v6971
        %6977 = vmatprep.subr.bf16.mxu0 0
        %6978 = vmatpush1.bf16.xpose.msra.mxu0 0
        %6979 = vmatprep.subr.bf16.mxu0 0
        %6980 = vmatpush1.bf16.xpose.msra.mxu0 0
        %6981 = vmatprep.subr.bf16.mxu0 0
        %6982 = vmatpush1.bf16.xpose.msra.mxu0 0
        %6983 = vmatprep.subr.bf16.mxu0 0
        %6984 = vmatpush1.bf16.xpose.msra.mxu0 0
        %6985 = vmatprep.subr.bf16.mxu0 0
        %6986 = vmatpush1.bf16.xpose.msra.mxu0 0
        %6987 = vmatprep.subr.bf16.mxu0 0
        %6988 = vmatpush1.bf16.xpose.msra.mxu0 0
        %6989 = vmatprep.subr.bf16.mxu0 0
        %6990 = vmatpush1.bf16.xpose.msra.mxu0 0
        %6991 = vmatprep.subr.bf16.mxu0 0
        %6992 = vmatpush1.bf16.xpose.msra.mxu0 0
        %6993 = vmatprep.subr.bf16.mxu0 0
        %6994 = vmatpush1.bf16.xpose.msra.mxu0 0
        %6995 = vmatprep.subr.bf16.mxu0 0
        %6996 = vmatpush1.bf16.xpose.msra.mxu0 0
        %6997 = vmatprep.subr.bf16.mxu0 0
        %6998 = vmatpush1.bf16.xpose.msra.mxu0 0
        %6999 = vmatprep.subr.bf16.mxu0 0
        %7000 = vmatpush1.bf16.xpose.msra.mxu0 0
        %7001 = vmatprep.subr.bf16.mxu0 0
        %7002 = vmatpush1.bf16.xpose.msra.mxu0 0
        %7003 = vmatprep.subr.bf16.mxu0 0
        %7004 = vmatpush1.bf16.xpose.msra.mxu0 0
        %7005 = vmatprep.mubr.bf16.mxu0 0
        %7006 = vmatmul.mubr.bf16.gmra.mrb[0].mxu0 %v6965
        %v7007 = vpop.f32.mrb[0].mxu0
        %v7008 = vadd.f32 %v6958, %v7007
        %v7009 = vpop.f32.mrb[0].mxu0
        %v7010 = vpop.f32.mrb[0].mxu0
        %v7011 = vadd.f32 %v6961, %v7010
        %v7012 = vpop.f32.mrb[0].mxu0
        %7013 = vdwg.mxu0
        %v7014 = vlaneseq
        %v7015 = vshrl.u32 %v7014, 7
        %v7016 = vsub.s32 0, %v7015
        %v7017 = vrot.slane %v6647, %v7016
        %v7018 = vadd.f32 %v7008, %v7017
        %v7019 = vadd.f32 %v7011, %v7017
        %v7022 = vrot.slane %v7018, 6
        %v7023 = vrot.slane %v7019, 6
        %v7024 = vsel %vm1050, %v7022, %v7023
        %v7027 = vadd.f32 %v6453, %v7022
        %v7028 = vadd.f32 %v6454, %v7024
        %v7029 = vld [vmem:[#allocation6 + $0x69] sm:$0x1]
        %v7030 = vld [vmem:[#allocation6 + $0x6a] sm:$0x1]
        %v7031 = vsel %vm4970, %v7027, 0.0
        %7032 = vadd.xlane.f32.xlu0 %v7031
        %v7033 = vpop.xlane.xlu0 %7032
        %v7034 = vsel %vm1327, %v7028, 0.0
        %7035 = vadd.xlane.f32.xlu0 %v7034
        %v7036 = vpop.xlane.xlu0 %7035
        %v7037 = vmul.f32 %v7033, %v1331
        %v7038 = vmul.f32 %v7036, %v1331
        %v7039 = vmul.f32 %v7027, %v7027
        %v7040 = vmul.f32 %v7028, %v7028
        %v7041 = vsel %vm4970, %v7039, 0.0
        %7042 = vadd.xlane.f32.xlu0 %v7041
        %v7043 = vpop.xlane.xlu0 %7042
        %v7044 = vsel %vm1327, %v7040, 0.0
        %7045 = vadd.xlane.f32.xlu0 %v7044
        %v7046 = vpop.xlane.xlu0 %7045
        %v7047 = vmul.f32 %v7043, %v1331
        %v7048 = vmul.f32 %v7046, %v1331
        %v7049 = vsub.f32 %v7027, %v7037
        %v7050 = vsub.f32 %v7028, %v7038
        %v7051 = vmul.f32 %v7037, %v7037
        %v7052 = vmul.f32 %v7038, %v7038
        %v7053 = vsub.f32 %v7047, %v7051
        %v7054 = vsub.f32 %v7048, %v7052
        %v7055 = vadd.f32 %v7053, 1e-05
        %v7056 = vadd.f32 %v7054, 1e-05
        %v7057 = vrsqrt.pop %v7055
        %v7058 = vrsqrt.pop %v7056
        %v7059 = vmul.f32 %v7049, %v7057
        %v7060 = vmul.f32 %v7050, %v7058
        %v7061 = vlaneseq
        %v7062 = vshrl.u32 %v7061, 7
        %v7063 = vsub.s32 0, %v7062
        %v7064 = vrot.slane %v7029, %v7063
        %v7065 = vmul.f32 %v7059, %v7064
        %v7066 = vmul.f32 %v7060, %v7064
        %v7067 = vlaneseq
        %v7068 = vshrl.u32 %v7067, 7
        %v7069 = vsub.s32 0, %v7068
        %v7070 = vrot.slane %v7030, %v7069
        %v7071 = vadd.f32 %v7065, %v7070
        %v7072 = vadd.f32 %v7066, %v7070
        %v7073 = vld [vmem:[#allocation4 + $0x380] sm:$0xf]
        %v7074 = vld [vmem:[#allocation4 + $0x384] sm:$0xf]
        %v7075 = vld [vmem:[#allocation4 + $0x388] sm:$0xf]
        %v7076 = vld [vmem:[#allocation4 + $0x38c] sm:$0xf]
        %v7077 = vpack.c.bf16 %v7072, %v7071
        %v7078 = vld [vmem:[#allocation6 + $0x64] sm:$0x1]
        %v7079 = vlaneseq
        %v7080 = vshrl.u32 %v7079, 7
        %v7081 = vsub.s32 0, %v7080
        %v7082 = vrot.slane %v7078, %v7081
        %v7084 = vrot.slane %v7077, 1
        %v7089 = vunpack.c.l.b16 %v7073
        %v7090 = vunpack.c.l.b16 %v7074
        %v7091 = vunpack.c.l.b16 %v7075
        %v7092 = vunpack.c.l.b16 %v7076
        %v7093 = vpack.c.b16 %v7090, %v7089
        %v7094 = vpack.c.b16 %v7092, %v7091
        %v7096 = vsel %vm884, %v7084, 0
        %v7099 = vsel %vm884, %v7093, 0
        %v7102 = vsel %vm884, %v7094, 0
        %7104 = vmatprep.subr.bf16.mxu0 0
        %7105 = vmatpush1.bf16.xpose.msra.mxu0 %v7099
        %7106 = vmatprep.subr.bf16.mxu0 0
        %7107 = vmatpush1.bf16.xpose.msra.mxu0 %v7102
        %7108 = vmatprep.subr.bf16.mxu0 0
        %7109 = vmatpush1.bf16.xpose.msra.mxu0 0
        %7110 = vmatprep.subr.bf16.mxu0 0
        %7111 = vmatpush1.bf16.xpose.msra.mxu0 0
        %7112 = vmatprep.subr.bf16.mxu0 0
        %7113 = vmatpush1.bf16.xpose.msra.mxu0 0
        %7114 = vmatprep.subr.bf16.mxu0 0
        %7115 = vmatpush1.bf16.xpose.msra.mxu0 0
        %7116 = vmatprep.subr.bf16.mxu0 0
        %7117 = vmatpush1.bf16.xpose.msra.mxu0 0
        %7118 = vmatprep.subr.bf16.mxu0 0
        %7119 = vmatpush1.bf16.xpose.msra.mxu0 0
        %7120 = vmatprep.subr.bf16.mxu0 0
        %7121 = vmatpush1.bf16.xpose.msra.mxu0 0
        %7122 = vmatprep.subr.bf16.mxu0 0
        %7123 = vmatpush1.bf16.xpose.msra.mxu0 0
        %7124 = vmatprep.subr.bf16.mxu0 0
        %7125 = vmatpush1.bf16.xpose.msra.mxu0 0
        %7126 = vmatprep.subr.bf16.mxu0 0
        %7127 = vmatpush1.bf16.xpose.msra.mxu0 0
        %7128 = vmatprep.subr.bf16.mxu0 0
        %7129 = vmatpush1.bf16.xpose.msra.mxu0 0
        %7130 = vmatprep.subr.bf16.mxu0 0
        %7131 = vmatpush1.bf16.xpose.msra.mxu0 0
        %7132 = vmatprep.subr.bf16.mxu0 0
        %7133 = vmatpush1.bf16.xpose.msra.mxu0 0
        %7134 = vmatprep.subr.bf16.mxu0 0
        %7135 = vmatpush1.bf16.xpose.msra.mxu0 0
        %7136 = vmatprep.mubr.bf16.mxu0 0
        %7137 = vmatmul.mubr.bf16.gmra.mrb[0].mxu0 %v7096
        %v7138 = vpop.f32.mrb[0].mxu0
        %v7139 = vadd.f32 %v7082, %v7138
        %v7140 = vpop.f32.mrb[0].mxu0
        %v7141 = vpop.f32.mrb[0].mxu0
        %v7142 = vadd.f32 %v7082, %v7141
        %v7143 = vpop.f32.mrb[0].mxu0
        %7144 = vdwg.mxu0
        %v7145 = vld [vmem:[#allocation4 + $0x390] sm:$0xf]
        %v7146 = vld [vmem:[#allocation4 + $0x394] sm:$0xf]
        %v7147 = vld [vmem:[#allocation4 + $0x398] sm:$0xf]
        %v7148 = vld [vmem:[#allocation4 + $0x39c] sm:$0xf]
        %v7149 = vld [vmem:[#allocation4 + $0x3a0] sm:$0xf]
        %v7150 = vld [vmem:[#allocation4 + $0x3a4] sm:$0xf]
        %v7151 = vld [vmem:[#allocation4 + $0x3a8] sm:$0xf]
        %v7152 = vld [vmem:[#allocation4 + $0x3ac] sm:$0xf]
        %v7153 = vpack.c.bf16 %v6507, %v6506
        %v7154 = vpack.c.bf16 %v6508, %v6508
        %v7163 = vunpack.c.l.b16 %v7145
        %v7164 = vunpack.c.l.b16 %v7146
        %v7165 = vunpack.c.l.b16 %v7147
        %v7166 = vunpack.c.l.b16 %v7148
        %v7167 = vunpack.c.l.b16 %v7149
        %v7168 = vunpack.c.l.b16 %v7150
        %v7169 = vunpack.c.l.b16 %v7151
        %v7170 = vunpack.c.l.b16 %v7152
        %v7171 = vpack.c.b16 %v7164, %v7163
        %v7172 = vpack.c.b16 %v7166, %v7165
        %v7173 = vpack.c.b16 %v7168, %v7167
        %v7174 = vpack.c.b16 %v7170, %v7169
        %v7176 = vsel %vm884, %v7153, 0
        %v7179 = vsel %vm884, %v7154, 0
        %v7182 = vsel %vm884, %v7171, 0
        %v7185 = vsel %vm884, %v7172, 0
        %v7188 = vsel %vm884, %v7173, 0
        %v7191 = vsel %vm884, %v7174, 0
        %7193 = vmatprep.subr.bf16.mxu0 0
        %7194 = vmatpush1.bf16.xpose.msra.mxu0 %v7182
        %7195 = vmatprep.subr.bf16.mxu0 0
        %7196 = vmatpush1.bf16.xpose.msra.mxu0 %v7185
        %7197 = vmatprep.subr.bf16.mxu0 0
        %7198 = vmatpush1.bf16.xpose.msra.mxu0 %v7188
        %7199 = vmatprep.subr.bf16.mxu0 0
        %7200 = vmatpush1.bf16.xpose.msra.mxu0 %v7191
        %7201 = vmatprep.subr.bf16.mxu0 0
        %7202 = vmatpush1.bf16.xpose.msra.mxu0 0
        %7203 = vmatprep.subr.bf16.mxu0 0
        %7204 = vmatpush1.bf16.xpose.msra.mxu0 0
        %7205 = vmatprep.subr.bf16.mxu0 0
        %7206 = vmatpush1.bf16.xpose.msra.mxu0 0
        %7207 = vmatprep.subr.bf16.mxu0 0
        %7208 = vmatpush1.bf16.xpose.msra.mxu0 0
        %7209 = vmatprep.subr.bf16.mxu0 0
        %7210 = vmatpush1.bf16.xpose.msra.mxu0 0
        %7211 = vmatprep.subr.bf16.mxu0 0
        %7212 = vmatpush1.bf16.xpose.msra.mxu0 0
        %7213 = vmatprep.subr.bf16.mxu0 0
        %7214 = vmatpush1.bf16.xpose.msra.mxu0 0
        %7215 = vmatprep.subr.bf16.mxu0 0
        %7216 = vmatpush1.bf16.xpose.msra.mxu0 0
        %7217 = vmatprep.subr.bf16.mxu0 0
        %7218 = vmatpush1.bf16.xpose.msra.mxu0 0
        %7219 = vmatprep.subr.bf16.mxu0 0
        %7220 = vmatpush1.bf16.xpose.msra.mxu0 0
        %7221 = vmatprep.subr.bf16.mxu0 0
        %7222 = vmatpush1.bf16.xpose.msra.mxu0 0
        %7223 = vmatprep.subr.bf16.mxu0 0
        %7224 = vmatpush1.bf16.xpose.msra.mxu0 0
        %7225 = vmatprep.mubr.bf16.mxu0 0
        %7226 = vmatmul.mubr.bf16.gmra.mrb[0].mxu0 %v7176
        %v7227 = vpop.f32.mrb[0].mxu0
        %v7228 = vadd.f32 0.0, %v7227
        %v7229 = vpop.f32.mrb[0].mxu0
        %v7230 = vpop.f32.mrb[0].mxu0
        %v7231 = vadd.f32 0.0, %v7230
        %v7232 = vpop.f32.mrb[0].mxu0
        %7233 = vmatprep.mubr.bf16.mxu0 0
        %7234 = vmatmul.mubr.bf16.gmra.mrb[0].mxu0 %v7179
        %v7235 = vpop.f32.mrb[0].mxu0
        %v7236 = vadd.f32 0.0, %v7235
        %v7237 = vpop.f32.mrb[0].mxu0
        %v7238 = vpop.f32.mrb[0].mxu0
        %v7239 = vpop.f32.mrb[0].mxu0
        %7240 = vdwg.mxu0
        %v7241 = vld [vmem:[#allocation6 + $0x65] sm:$0x1]
        %v7242 = vlaneseq
        %v7243 = vshrl.u32 %v7242, 7
        %v7244 = vsub.s32 0, %v7243
        %v7245 = vrot.slane %v7241, %v7244
        %v7246 = vadd.f32 %v7228, %v7245
        %v7247 = vadd.f32 %v7231, %v7245
        %v7248 = vadd.f32 %v7236, %v7245
        %v7249 = vld [vmem:[#allocation6 + $0x66] sm:$0x1]
        %v7250 = vlaneseq
        %v7251 = vshrl.u32 %v7250, 7
        %v7252 = vsub.s32 0, %v7251
        %v7253 = vrot.slane %v7249, %v7252
        %7255 = vrot.lane.b32.xlu0 %v7253, 32
        %v7256 = vpop.permute.xlu0 %7255
        %v7258 = vadd.f32 %v7228, %v7256
        %v7259 = vadd.f32 %v7231, %v7256
        %v7260 = vadd.f32 %v7236, %v7256
        %v7261 = vld [vmem:[#allocation4 + $0x3b0] sm:$0xf]
        %v7262 = vld [vmem:[#allocation4 + $0x3b4] sm:$0xf]
        %v7263 = vld [vmem:[#allocation4 + $0x3b8] sm:$0xf]
        %v7264 = vld [vmem:[#allocation4 + $0x3bc] sm:$0xf]
        %v7265 = vld [vmem:[#allocation6 + $0x67] sm:$0x1]
        %v7266 = vpack.c.bf16 %v7142, %v7139
        %v7267 = vpack.c.bf16 %v7247, %v7246
        %v7268 = vpack.c.bf16 %v7248, %v7248
        %v7270 = vsel %vm982, %v7266, 0
        %v7273 = vsel %vm982, %v7267, 0
        %v7276 = vsel %vm982, %v7268, 0
        %7278 = vmatprep.subr.bf16.mxu0 0
        %7279 = vmatpush1.bf16.xpose.msra.mxu0 %v7273
        %7280 = vmatprep.subr.bf16.mxu0 0
        %7281 = vmatpush1.bf16.xpose.msra.mxu0 %v7276
        %7282 = vmatprep.subr.bf16.mxu0 0
        %7283 = vmatpush1.bf16.xpose.msra.mxu0 0
        %7284 = vmatprep.subr.bf16.mxu0 0
        %7285 = vmatpush1.bf16.xpose.msra.mxu0 0
        %7286 = vmatprep.subr.bf16.mxu0 0
        %7287 = vmatpush1.bf16.xpose.msra.mxu0 0
        %7288 = vmatprep.subr.bf16.mxu0 0
        %7289 = vmatpush1.bf16.xpose.msra.mxu0 0
        %7290 = vmatprep.subr.bf16.mxu0 0
        %7291 = vmatpush1.bf16.xpose.msra.mxu0 0
        %7292 = vmatprep.subr.bf16.mxu0 0
        %7293 = vmatpush1.bf16.xpose.msra.mxu0 0
        %7294 = vmatprep.subr.bf16.mxu0 0
        %7295 = vmatpush1.bf16.xpose.msra.mxu0 0
        %7296 = vmatprep.subr.bf16.mxu0 0
        %7297 = vmatpush1.bf16.xpose.msra.mxu0 0
        %7298 = vmatprep.subr.bf16.mxu0 0
        %7299 = vmatpush1.bf16.xpose.msra.mxu0 0
        %7300 = vmatprep.subr.bf16.mxu0 0
        %7301 = vmatpush1.bf16.xpose.msra.mxu0 0
        %7302 = vmatprep.subr.bf16.mxu0 0
        %7303 = vmatpush1.bf16.xpose.msra.mxu0 0
        %7304 = vmatprep.subr.bf16.mxu0 0
        %7305 = vmatpush1.bf16.xpose.msra.mxu0 0
        %7306 = vmatprep.subr.bf16.mxu0 0
        %7307 = vmatpush1.bf16.xpose.msra.mxu0 0
        %7308 = vmatprep.subr.bf16.mxu0 0
        %7309 = vmatpush1.bf16.xpose.msra.mxu0 0
        %7310 = vmatprep.mubr.bf16.mxu0 0
        %7311 = vmatmul.mubr.bf16.gmra.mrb[0].mxu0 %v7270
        %v7312 = vpop.f32.mrb[0].mxu0
        %v7313 = vadd.f32 %v6511, %v7312
        %v7314 = vpop.f32.mrb[0].mxu0
        %v7315 = vpop.f32.mrb[0].mxu0
        %v7316 = vadd.f32 %v6512, %v7315
        %v7317 = vpop.f32.mrb[0].mxu0
        %7318 = vdwg.mxu0
        %v7319 = vsel %vm5789, %v7313, -inf
        %7320 = vmax.xlane.f32.xlu0 %v7319
        %v7321 = vpop.xlane.xlu0 %7320
        %v7322 = vsel %vm5793, %v7316, -inf
        %7323 = vmax.xlane.f32.xlu0 %v7322
        %v7324 = vpop.xlane.xlu0 %7323
        %v7325 = vsub.f32 %v7313, %v7321
        %v7326 = vsub.f32 %v7316, %v7324
        %v7327 = vmul.f32 %v7325, 1.442695
        %v7328 = vpow.pop %v7327
        %v7329 = vmul.f32 %v7326, 1.442695
        %v7330 = vpow.pop %v7329
        %v7331 = vsel %vm5789, %v7328, 0.0
        %7332 = vadd.xlane.f32.xlu0 %v7331
        %v7333 = vpop.xlane.xlu0 %7332
        %v7334 = vsel %vm5793, %v7330, 0.0
        %7335 = vadd.xlane.f32.xlu0 %v7334
        %v7336 = vpop.xlane.xlu0 %7335
        %v7337 = vrcp.pop %v7333
        %v7338 = vrcp.pop %v7336
        %v7339 = vmul.f32 %v7328, %v7337
        %v7340 = vmul.f32 %v7330, %v7338
        %v7341 = vpack.c.bf16 %v7340, %v7339
        %v7342 = vpack.c.bf16 %v7259, %v7258
        %v7343 = vpack.c.bf16 %v7260, %v7260
        %7346 = vrot.lane.b32.xlu0 %v7342, 96
        %v7347 = vpop.permute.xlu0 %7346
        %7348 = vrot.lane.b32.xlu0 %v7343, 96
        %v7349 = vpop.permute.xlu0 %7348
        %v7352 = vsel %vm5789, %v7341, 0
        %v7355 = vsel %vm5826, %v7349, 0
        %7357 = vmatprep.subr.bf16.mxu0 0
        %7358 = vmatpush1.bf16.msra.mxu0 %v7347
        %7359 = vmatprep.subr.bf16.mxu0 0
        %7360 = vmatpush1.bf16.msra.mxu0 %v7355
        %7361 = vmatprep.subr.bf16.mxu0 0
        %7362 = vmatpush1.bf16.msra.mxu0 0
        %7363 = vmatprep.subr.bf16.mxu0 0
        %7364 = vmatpush1.bf16.msra.mxu0 0
        %7365 = vmatprep.subr.bf16.mxu0 0
        %7366 = vmatpush1.bf16.msra.mxu0 0
        %7367 = vmatprep.subr.bf16.mxu0 0
        %7368 = vmatpush1.bf16.msra.mxu0 0
        %7369 = vmatprep.subr.bf16.mxu0 0
        %7370 = vmatpush1.bf16.msra.mxu0 0
        %7371 = vmatprep.subr.bf16.mxu0 0
        %7372 = vmatpush1.bf16.msra.mxu0 0
        %7373 = vmatprep.subr.bf16.mxu0 0
        %7374 = vmatpush1.bf16.msra.mxu0 0
        %7375 = vmatprep.subr.bf16.mxu0 0
        %7376 = vmatpush1.bf16.msra.mxu0 0
        %7377 = vmatprep.subr.bf16.mxu0 0
        %7378 = vmatpush1.bf16.msra.mxu0 0
        %7379 = vmatprep.subr.bf16.mxu0 0
        %7380 = vmatpush1.bf16.msra.mxu0 0
        %7381 = vmatprep.subr.bf16.mxu0 0
        %7382 = vmatpush1.bf16.msra.mxu0 0
        %7383 = vmatprep.subr.bf16.mxu0 0
        %7384 = vmatpush1.bf16.msra.mxu0 0
        %7385 = vmatprep.subr.bf16.mxu0 0
        %7386 = vmatpush1.bf16.msra.mxu0 0
        %7387 = vmatprep.subr.bf16.mxu0 0
        %7388 = vmatpush1.bf16.msra.mxu0 0
        %7389 = vmatprep.mubr.bf16.mxu0 0
        %7390 = vmatmul.mubr.bf16.gmra.mrb[0].mxu0 %v7352
        %v7391 = vpop.f32.mrb[0].mxu0
        %v7392 = vadd.f32 0.0, %v7391
        %v7393 = vpop.f32.mrb[0].mxu0
        %v7394 = vpop.f32.mrb[0].mxu0
        %v7395 = vadd.f32 0.0, %v7394
        %v7396 = vpop.f32.mrb[0].mxu0
        %7397 = vdwg.mxu0
        %v7398 = vpack.c.bf16 %v7395, %v7392
        %7400 = vrot.lane.b32.xlu0 %v7266, 112
        %v7401 = vpop.permute.xlu0 %7400
        %7404 = vrot.lane.b32.xlu0 %v7267, 112
        %v7405 = vpop.permute.xlu0 %7404
        %7406 = vrot.lane.b32.xlu0 %v7268, 112
        %v7407 = vpop.permute.xlu0 %7406
        %v7409 = vsel %vm982, %v7401, 0
        %v7412 = vsel %vm982, %v7405, 0
        %v7415 = vsel %vm982, %v7407, 0
        %7417 = vmatprep.subr.bf16.mxu0 0
        %7418 = vmatpush1.bf16.xpose.msra.mxu0 %v7412
        %7419 = vmatprep.subr.bf16.mxu0 0
        %7420 = vmatpush1.bf16.xpose.msra.mxu0 %v7415
        %7421 = vmatprep.subr.bf16.mxu0 0
        %7422 = vmatpush1.bf16.xpose.msra.mxu0 0
        %7423 = vmatprep.subr.bf16.mxu0 0
        %7424 = vmatpush1.bf16.xpose.msra.mxu0 0
        %7425 = vmatprep.subr.bf16.mxu0 0
        %7426 = vmatpush1.bf16.xpose.msra.mxu0 0
        %7427 = vmatprep.subr.bf16.mxu0 0
        %7428 = vmatpush1.bf16.xpose.msra.mxu0 0
        %7429 = vmatprep.subr.bf16.mxu0 0
        %7430 = vmatpush1.bf16.xpose.msra.mxu0 0
        %7431 = vmatprep.subr.bf16.mxu0 0
        %7432 = vmatpush1.bf16.xpose.msra.mxu0 0
        %7433 = vmatprep.subr.bf16.mxu0 0
        %7434 = vmatpush1.bf16.xpose.msra.mxu0 0
        %7435 = vmatprep.subr.bf16.mxu0 0
        %7436 = vmatpush1.bf16.xpose.msra.mxu0 0
        %7437 = vmatprep.subr.bf16.mxu0 0
        %7438 = vmatpush1.bf16.xpose.msra.mxu0 0
        %7439 = vmatprep.subr.bf16.mxu0 0
        %7440 = vmatpush1.bf16.xpose.msra.mxu0 0
        %7441 = vmatprep.subr.bf16.mxu0 0
        %7442 = vmatpush1.bf16.xpose.msra.mxu0 0
        %7443 = vmatprep.subr.bf16.mxu0 0
        %7444 = vmatpush1.bf16.xpose.msra.mxu0 0
        %7445 = vmatprep.subr.bf16.mxu0 0
        %7446 = vmatpush1.bf16.xpose.msra.mxu0 0
        %7447 = vmatprep.subr.bf16.mxu0 0
        %7448 = vmatpush1.bf16.xpose.msra.mxu0 0
        %7449 = vmatprep.mubr.bf16.mxu0 0
        %7450 = vmatmul.mubr.bf16.gmra.mrb[0].mxu0 %v7409
        %v7451 = vpop.f32.mrb[0].mxu0
        %v7452 = vadd.f32 %v6511, %v7451
        %v7453 = vpop.f32.mrb[0].mxu0
        %v7454 = vpop.f32.mrb[0].mxu0
        %v7455 = vadd.f32 %v6512, %v7454
        %v7456 = vpop.f32.mrb[0].mxu0
        %7457 = vdwg.mxu0
        %v7458 = vsel %vm5789, %v7452, -inf
        %7459 = vmax.xlane.f32.xlu0 %v7458
        %v7460 = vpop.xlane.xlu0 %7459
        %v7461 = vsel %vm5793, %v7455, -inf
        %7462 = vmax.xlane.f32.xlu0 %v7461
        %v7463 = vpop.xlane.xlu0 %7462
        %v7464 = vsub.f32 %v7452, %v7460
        %v7465 = vsub.f32 %v7455, %v7463
        %v7466 = vmul.f32 %v7464, 1.442695
        %v7467 = vpow.pop %v7466
        %v7468 = vmul.f32 %v7465, 1.442695
        %v7469 = vpow.pop %v7468
        %v7470 = vsel %vm5789, %v7467, 0.0
        %7471 = vadd.xlane.f32.xlu0 %v7470
        %v7472 = vpop.xlane.xlu0 %7471
        %v7473 = vsel %vm5793, %v7469, 0.0
        %7474 = vadd.xlane.f32.xlu0 %v7473
        %v7475 = vpop.xlane.xlu0 %7474
        %v7476 = vrcp.pop %v7472
        %v7477 = vrcp.pop %v7475
        %v7478 = vmul.f32 %v7467, %v7476
        %v7479 = vmul.f32 %v7469, %v7477
        %v7480 = vpack.c.bf16 %v7479, %v7478
        %7481 = vrot.lane.b32.xlu0 %v7342, 80
        %v7482 = vpop.permute.xlu0 %7481
        %7483 = vrot.lane.b32.xlu0 %v7343, 80
        %v7484 = vpop.permute.xlu0 %7483
        %v7487 = vsel %vm5789, %v7480, 0
        %v7490 = vsel %vm5826, %v7484, 0
        %7492 = vmatprep.subr.bf16.mxu0 0
        %7493 = vmatpush1.bf16.msra.mxu0 %v7482
        %7494 = vmatprep.subr.bf16.mxu0 0
        %7495 = vmatpush1.bf16.msra.mxu0 %v7490
        %7496 = vmatprep.subr.bf16.mxu0 0
        %7497 = vmatpush1.bf16.msra.mxu0 0
        %7498 = vmatprep.subr.bf16.mxu0 0
        %7499 = vmatpush1.bf16.msra.mxu0 0
        %7500 = vmatprep.subr.bf16.mxu0 0
        %7501 = vmatpush1.bf16.msra.mxu0 0
        %7502 = vmatprep.subr.bf16.mxu0 0
        %7503 = vmatpush1.bf16.msra.mxu0 0
        %7504 = vmatprep.subr.bf16.mxu0 0
        %7505 = vmatpush1.bf16.msra.mxu0 0
        %7506 = vmatprep.subr.bf16.mxu0 0
        %7507 = vmatpush1.bf16.msra.mxu0 0
        %7508 = vmatprep.subr.bf16.mxu0 0
        %7509 = vmatpush1.bf16.msra.mxu0 0
        %7510 = vmatprep.subr.bf16.mxu0 0
        %7511 = vmatpush1.bf16.msra.mxu0 0
        %7512 = vmatprep.subr.bf16.mxu0 0
        %7513 = vmatpush1.bf16.msra.mxu0 0
        %7514 = vmatprep.subr.bf16.mxu0 0
        %7515 = vmatpush1.bf16.msra.mxu0 0
        %7516 = vmatprep.subr.bf16.mxu0 0
        %7517 = vmatpush1.bf16.msra.mxu0 0
        %7518 = vmatprep.subr.bf16.mxu0 0
        %7519 = vmatpush1.bf16.msra.mxu0 0
        %7520 = vmatprep.subr.bf16.mxu0 0
        %7521 = vmatpush1.bf16.msra.mxu0 0
        %7522 = vmatprep.subr.bf16.mxu0 0
        %7523 = vmatpush1.bf16.msra.mxu0 0
        %7524 = vmatprep.mubr.bf16.mxu0 0
        %7525 = vmatmul.mubr.bf16.gmra.mrb[0].mxu0 %v7487
        %v7526 = vpop.f32.mrb[0].mxu0
        %v7527 = vadd.f32 0.0, %v7526
        %v7528 = vpop.f32.mrb[0].mxu0
        %v7529 = vpop.f32.mrb[0].mxu0
        %v7530 = vadd.f32 0.0, %v7529
        %v7531 = vpop.f32.mrb[0].mxu0
        %7532 = vdwg.mxu0
        %v7533 = vpack.c.bf16 %v7530, %v7527
        %v7538 = vunpack.c.l.b16 %v7261
        %v7539 = vunpack.c.l.b16 %v7262
        %v7540 = vunpack.c.l.b16 %v7263
        %v7541 = vunpack.c.l.b16 %v7264
        %v7542 = vpack.c.b16 %v7539, %v7538
        %v7543 = vpack.c.b16 %v7541, %v7540
        %7544 = vrot.lane.b32.xlu0 %v7542, 112
        %v7545 = vpop.permute.xlu0 %7544
        %7546 = vrot.lane.b32.xlu0 %v7543, 112
        %v7547 = vpop.permute.xlu0 %7546
        %v7549 = vsel %vm982, %v7533, 0
        %v7552 = vsel %vm982, %v7545, 0
        %v7555 = vsel %vm982, %v7547, 0
        %7557 = vmatprep.subr.bf16.mxu0 0
        %7558 = vmatpush1.bf16.xpose.msra.mxu0 %v7552
        %7559 = vmatprep.subr.bf16.mxu0 0
        %7560 = vmatpush1.bf16.xpose.msra.mxu0 %v7555
        %7561 = vmatprep.subr.bf16.mxu0 0
        %7562 = vmatpush1.bf16.xpose.msra.mxu0 0
        %7563 = vmatprep.subr.bf16.mxu0 0
        %7564 = vmatpush1.bf16.xpose.msra.mxu0 0
        %7565 = vmatprep.subr.bf16.mxu0 0
        %7566 = vmatpush1.bf16.xpose.msra.mxu0 0
        %7567 = vmatprep.subr.bf16.mxu0 0
        %7568 = vmatpush1.bf16.xpose.msra.mxu0 0
        %7569 = vmatprep.subr.bf16.mxu0 0
        %7570 = vmatpush1.bf16.xpose.msra.mxu0 0
        %7571 = vmatprep.subr.bf16.mxu0 0
        %7572 = vmatpush1.bf16.xpose.msra.mxu0 0
        %7573 = vmatprep.subr.bf16.mxu0 0
        %7574 = vmatpush1.bf16.xpose.msra.mxu0 0
        %7575 = vmatprep.subr.bf16.mxu0 0
        %7576 = vmatpush1.bf16.xpose.msra.mxu0 0
        %7577 = vmatprep.subr.bf16.mxu0 0
        %7578 = vmatpush1.bf16.xpose.msra.mxu0 0
        %7579 = vmatprep.subr.bf16.mxu0 0
        %7580 = vmatpush1.bf16.xpose.msra.mxu0 0
        %7581 = vmatprep.subr.bf16.mxu0 0
        %7582 = vmatpush1.bf16.xpose.msra.mxu0 0
        %7583 = vmatprep.subr.bf16.mxu0 0
        %7584 = vmatpush1.bf16.xpose.msra.mxu0 0
        %7585 = vmatprep.subr.bf16.mxu0 0
        %7586 = vmatpush1.bf16.xpose.msra.mxu0 0
        %7587 = vmatprep.subr.bf16.mxu0 0
        %7588 = vmatpush1.bf16.xpose.msra.mxu0 0
        %7589 = vmatprep.mubr.bf16.mxu0 0
        %7590 = vmatmul.mubr.bf16.gmra.mrb[0].mxu0 %v7549
        %v7591 = vpop.f32.mrb[0].mxu0
        %v7592 = vadd.f32 0.0, %v7591
        %v7593 = vpop.f32.mrb[0].mxu0
        %v7594 = vpop.f32.mrb[0].mxu0
        %v7595 = vadd.f32 0.0, %v7594
        %v7596 = vpop.f32.mrb[0].mxu0
        %7597 = vdwg.mxu0
        %v7599 = vsel %vm982, %v7398, 0
        %v7602 = vsel %vm982, %v7542, 0
        %v7605 = vsel %vm982, %v7543, 0
        %7607 = vmatprep.subr.bf16.mxu0 0
        %7608 = vmatpush1.bf16.xpose.msra.mxu0 %v7602
        %7609 = vmatprep.subr.bf16.mxu0 0
        %7610 = vmatpush1.bf16.xpose.msra.mxu0 %v7605
        %7611 = vmatprep.subr.bf16.mxu0 0
        %7612 = vmatpush1.bf16.xpose.msra.mxu0 0
        %7613 = vmatprep.subr.bf16.mxu0 0
        %7614 = vmatpush1.bf16.xpose.msra.mxu0 0
        %7615 = vmatprep.subr.bf16.mxu0 0
        %7616 = vmatpush1.bf16.xpose.msra.mxu0 0
        %7617 = vmatprep.subr.bf16.mxu0 0
        %7618 = vmatpush1.bf16.xpose.msra.mxu0 0
        %7619 = vmatprep.subr.bf16.mxu0 0
        %7620 = vmatpush1.bf16.xpose.msra.mxu0 0
        %7621 = vmatprep.subr.bf16.mxu0 0
        %7622 = vmatpush1.bf16.xpose.msra.mxu0 0
        %7623 = vmatprep.subr.bf16.mxu0 0
        %7624 = vmatpush1.bf16.xpose.msra.mxu0 0
        %7625 = vmatprep.subr.bf16.mxu0 0
        %7626 = vmatpush1.bf16.xpose.msra.mxu0 0
        %7627 = vmatprep.subr.bf16.mxu0 0
        %7628 = vmatpush1.bf16.xpose.msra.mxu0 0
        %7629 = vmatprep.subr.bf16.mxu0 0
        %7630 = vmatpush1.bf16.xpose.msra.mxu0 0
        %7631 = vmatprep.subr.bf16.mxu0 0
        %7632 = vmatpush1.bf16.xpose.msra.mxu0 0
        %7633 = vmatprep.subr.bf16.mxu0 0
        %7634 = vmatpush1.bf16.xpose.msra.mxu0 0
        %7635 = vmatprep.subr.bf16.mxu0 0
        %7636 = vmatpush1.bf16.xpose.msra.mxu0 0
        %7637 = vmatprep.subr.bf16.mxu0 0
        %7638 = vmatpush1.bf16.xpose.msra.mxu0 0
        %7639 = vmatprep.mubr.bf16.mxu0 0
        %7640 = vmatmul.mubr.bf16.gmra.mrb[0].mxu0 %v7599
        %v7641 = vpop.f32.mrb[0].mxu0
        %v7642 = vadd.f32 %v7592, %v7641
        %v7643 = vpop.f32.mrb[0].mxu0
        %v7644 = vpop.f32.mrb[0].mxu0
        %v7645 = vadd.f32 %v7595, %v7644
        %v7646 = vpop.f32.mrb[0].mxu0
        %7647 = vdwg.mxu0
        %v7648 = vlaneseq
        %v7649 = vshrl.u32 %v7648, 7
        %v7650 = vsub.s32 0, %v7649
        %v7651 = vrot.slane %v7265, %v7650
        %v7652 = vadd.f32 %v7642, %v7651
        %v7653 = vadd.f32 %v7645, %v7651
        %v7656 = vrot.slane %v7652, 6
        %v7657 = vrot.slane %v7653, 6
        %v7658 = vsel %vm1050, %v7656, %v7657
        %v7661 = vadd.f32 %v7071, %v7656
        %v7662 = vadd.f32 %v7072, %v7658
        %v7663 = vld [vmem:[#allocation6 + $0x6b] sm:$0x1]
        %v7664 = vld [vmem:[#allocation6 + $0x6c] sm:$0x1]
        %v7665 = vsel %vm4970, %v7661, 0.0
        %7666 = vadd.xlane.f32.xlu0 %v7665
        %v7667 = vpop.xlane.xlu0 %7666
        %v7668 = vsel %vm1327, %v7662, 0.0
        %7669 = vadd.xlane.f32.xlu0 %v7668
        %v7670 = vpop.xlane.xlu0 %7669
        %v7671 = vmul.f32 %v7667, %v1331
        %v7672 = vmul.f32 %v7670, %v1331
        %v7673 = vmul.f32 %v7661, %v7661
        %v7674 = vmul.f32 %v7662, %v7662
        %v7675 = vsel %vm4970, %v7673, 0.0
        %7676 = vadd.xlane.f32.xlu0 %v7675
        %v7677 = vpop.xlane.xlu0 %7676
        %v7678 = vsel %vm1327, %v7674, 0.0
        %7679 = vadd.xlane.f32.xlu0 %v7678
        %v7680 = vpop.xlane.xlu0 %7679
        %v7681 = vmul.f32 %v7677, %v1331
        %v7682 = vmul.f32 %v7680, %v1331
        %v7683 = vsub.f32 %v7661, %v7671
        %v7684 = vsub.f32 %v7662, %v7672
        %v7685 = vmul.f32 %v7671, %v7671
        %v7686 = vmul.f32 %v7672, %v7672
        %v7687 = vsub.f32 %v7681, %v7685
        %v7688 = vsub.f32 %v7682, %v7686
        %v7689 = vadd.f32 %v7687, 1e-05
        %v7690 = vadd.f32 %v7688, 1e-05
        %v7691 = vrsqrt.pop %v7689
        %v7692 = vrsqrt.pop %v7690
        %v7693 = vmul.f32 %v7683, %v7691
        %v7694 = vmul.f32 %v7684, %v7692
        %v7695 = vlaneseq
        %v7696 = vshrl.u32 %v7695, 7
        %v7697 = vsub.s32 0, %v7696
        %v7698 = vrot.slane %v7663, %v7697
        %v7699 = vmul.f32 %v7693, %v7698
        %v7700 = vmul.f32 %v7694, %v7698
        %v7701 = vlaneseq
        %v7702 = vshrl.u32 %v7701, 7
        %v7703 = vsub.s32 0, %v7702
        %v7704 = vrot.slane %v7664, %v7703
        %v7705 = vadd.f32 %v7699, %v7704
        %v7706 = vadd.f32 %v7700, %v7704
        %v7707 = vld [vmem:[#allocation4 + $0x3c0] sm:$0xf]
        %v7708 = vld [vmem:[#allocation4 + $0x3c4] sm:$0xf]
        %v7709 = vld [vmem:[#allocation4 + $0x3c8] sm:$0xf]
        %v7710 = vld [vmem:[#allocation4 + $0x3cc] sm:$0xf]
        %v7711 = vld [vmem:[#allocation4 + $0x3d0] sm:$0xf]
        %v7712 = vld [vmem:[#allocation4 + $0x3d4] sm:$0xf]
        %v7713 = vld [vmem:[#allocation4 + $0x3d8] sm:$0xf]
        %v7714 = vld [vmem:[#allocation4 + $0x3dc] sm:$0xf]
        %v7715 = vpack.c.bf16 %v7706, %v7705
        %v7716 = vld [vmem:[%s6 + $0x4] sm:$0x1]
        %v7717 = vlaneseq
        %v7718 = vshrl.u32 %v7717, 7
        %v7719 = vsub.s32 0, %v7718
        %v7720 = vrot.slane %v7716, %v7719
        %v7722 = vrot.slane %v7715, 1
        %v7731 = vunpack.c.l.b16 %v7707
        %v7732 = vunpack.c.l.b16 %v7708
        %v7733 = vunpack.c.l.b16 %v7709
        %v7734 = vunpack.c.l.b16 %v7710
        %v7735 = vunpack.c.l.b16 %v7711
        %v7736 = vunpack.c.l.b16 %v7712
        %v7737 = vunpack.c.l.b16 %v7713
        %v7738 = vunpack.c.l.b16 %v7714
        %v7739 = vpack.c.b16 %v7732, %v7731
        %v7740 = vpack.c.b16 %v7734, %v7733
        %v7741 = vpack.c.b16 %v7736, %v7735
        %v7742 = vpack.c.b16 %v7738, %v7737
        %v7744 = vsel %vm884, %v7722, 0
        %v7747 = vsel %vm884, %v7739, 0
        %v7750 = vsel %vm884, %v7740, 0
        %v7753 = vsel %vm884, %v7741, 0
        %v7756 = vsel %vm884, %v7742, 0
        %7758 = vmatprep.subr.bf16.mxu0 0
        %7759 = vmatpush1.bf16.xpose.msra.mxu0 %v7747
        %7760 = vmatprep.subr.bf16.mxu0 0
        %7761 = vmatpush1.bf16.xpose.msra.mxu0 %v7750
        %7762 = vmatprep.subr.bf16.mxu0 0
        %7763 = vmatpush1.bf16.xpose.msra.mxu0 %v7753
        %7764 = vmatprep.subr.bf16.mxu0 0
        %7765 = vmatpush1.bf16.xpose.msra.mxu0 %v7756
        %7766 = vmatprep.subr.bf16.mxu0 0
        %7767 = vmatpush1.bf16.xpose.msra.mxu0 0
        %7768 = vmatprep.subr.bf16.mxu0 0
        %7769 = vmatpush1.bf16.xpose.msra.mxu0 0
        %7770 = vmatprep.subr.bf16.mxu0 0
        %7771 = vmatpush1.bf16.xpose.msra.mxu0 0
        %7772 = vmatprep.subr.bf16.mxu0 0
        %7773 = vmatpush1.bf16.xpose.msra.mxu0 0
        %7774 = vmatprep.subr.bf16.mxu0 0
        %7775 = vmatpush1.bf16.xpose.msra.mxu0 0
        %7776 = vmatprep.subr.bf16.mxu0 0
        %7777 = vmatpush1.bf16.xpose.msra.mxu0 0
        %7778 = vmatprep.subr.bf16.mxu0 0
        %7779 = vmatpush1.bf16.xpose.msra.mxu0 0
        %7780 = vmatprep.subr.bf16.mxu0 0
        %7781 = vmatpush1.bf16.xpose.msra.mxu0 0
        %7782 = vmatprep.subr.bf16.mxu0 0
        %7783 = vmatpush1.bf16.xpose.msra.mxu0 0
        %7784 = vmatprep.subr.bf16.mxu0 0
        %7785 = vmatpush1.bf16.xpose.msra.mxu0 0
        %7786 = vmatprep.subr.bf16.mxu0 0
        %7787 = vmatpush1.bf16.xpose.msra.mxu0 0
        %7788 = vmatprep.subr.bf16.mxu0 0
        %7789 = vmatpush1.bf16.xpose.msra.mxu0 0
        %7790 = vmatprep.mubr.bf16.mxu0 0
        %7791 = vmatmul.mubr.bf16.gmra.mrb[0].mxu0 %v7744
        %v7792 = vpop.f32.mrb[0].mxu0
        %v7793 = vadd.f32 %v7720, %v7792
        %v7794 = vpop.f32.mrb[0].mxu0
        %v7795 = vpop.f32.mrb[0].mxu0
        %v7796 = vadd.f32 %v7720, %v7795
        %v7797 = vpop.f32.mrb[0].mxu0
        %7798 = vdwg.mxu0
        %v7799 = vmax.f32 %v7793, 0.0
        %v7800 = vmax.f32 %v7796, 0.0
        %v7801 = vld [vmem:[#allocation4 + $0x3e0] sm:$0xf]
        %v7802 = vld [vmem:[#allocation4 + $0x3e4] sm:$0xf]
        %v7803 = vld [vmem:[#allocation4 + $0x3e8] sm:$0xf]
        %v7804 = vld [vmem:[#allocation4 + $0x3ec] sm:$0xf]
        %v7805 = vld [vmem:[#allocation4 + $0x3f0] sm:$0xf]
        %v7806 = vld [vmem:[#allocation4 + $0x3f4] sm:$0xf]
        %v7807 = vld [vmem:[#allocation4 + $0x3f8] sm:$0xf]
        %v7808 = vld [vmem:[#allocation4 + $0x3fc] sm:$0xf]
        %v7809 = vpack.c.bf16 %v7800, %v7799
        %v7818 = vunpack.c.l.b16 %v7801
        %v7819 = vunpack.c.l.b16 %v7802
        %v7820 = vunpack.c.l.b16 %v7803
        %v7821 = vunpack.c.l.b16 %v7804
        %v7822 = vunpack.c.l.b16 %v7805
        %v7823 = vunpack.c.l.b16 %v7806
        %v7824 = vunpack.c.l.b16 %v7807
        %v7825 = vunpack.c.l.b16 %v7808
        %v7826 = vpack.c.b16 %v7819, %v7818
        %v7827 = vpack.c.b16 %v7821, %v7820
        %v7828 = vpack.c.b16 %v7823, %v7822
        %v7829 = vpack.c.b16 %v7825, %v7824
        %v7835 = vsel %vm2022, %v7809, 0
        %7837 = vmatprep.subr.bf16.mxu0 0
        %7838 = vmatpush1.bf16.msra.mxu0 %v7826
        %7839 = vmatprep.subr.bf16.mxu0 0
        %7840 = vmatpush1.bf16.msra.mxu0 %v7827
        %7841 = vmatprep.subr.bf16.mxu0 0
        %7842 = vmatpush1.bf16.msra.mxu0 %v7828
        %7843 = vmatprep.subr.bf16.mxu0 0
        %7844 = vmatpush1.bf16.msra.mxu0 %v7829
        %7845 = vmatprep.subr.bf16.mxu0 0
        %7846 = vmatpush1.bf16.msra.mxu0 0
        %7847 = vmatprep.subr.bf16.mxu0 0
        %7848 = vmatpush1.bf16.msra.mxu0 0
        %7849 = vmatprep.subr.bf16.mxu0 0
        %7850 = vmatpush1.bf16.msra.mxu0 0
        %7851 = vmatprep.subr.bf16.mxu0 0
        %7852 = vmatpush1.bf16.msra.mxu0 0
        %7853 = vmatprep.subr.bf16.mxu0 0
        %7854 = vmatpush1.bf16.msra.mxu0 0
        %7855 = vmatprep.subr.bf16.mxu0 0
        %7856 = vmatpush1.bf16.msra.mxu0 0
        %7857 = vmatprep.subr.bf16.mxu0 0
        %7858 = vmatpush1.bf16.msra.mxu0 0
        %7859 = vmatprep.subr.bf16.mxu0 0
        %7860 = vmatpush1.bf16.msra.mxu0 0
        %7861 = vmatprep.subr.bf16.mxu0 0
        %7862 = vmatpush1.bf16.msra.mxu0 0
        %7863 = vmatprep.subr.bf16.mxu0 0
        %7864 = vmatpush1.bf16.msra.mxu0 0
        %7865 = vmatprep.subr.bf16.mxu0 0
        %7866 = vmatpush1.bf16.msra.mxu0 0
        %7867 = vmatprep.subr.bf16.mxu0 0
        %7868 = vmatpush1.bf16.msra.mxu0 0
        %7869 = vmatprep.mubr.bf16.mxu0 0
        %7870 = vmatmul.mubr.bf16.gmra.mrb[0].mxu0 %v7835
        %v7871 = vpop.f32.mrb[0].mxu0
        %v7872 = vadd.f32 0.0, %v7871
        %v7873 = vpop.f32.mrb[0].mxu0
        %v7874 = vpop.f32.mrb[0].mxu0
        %v7875 = vadd.f32 0.0, %v7874
        %v7876 = vpop.f32.mrb[0].mxu0
        %7877 = vdwg.mxu0
        %v7880 = vrot.slane %v7872, 6
        %v7881 = vrot.slane %v7875, 6
        %v7882 = vsel %vm1050, %v7880, %v7881
        %v7885 = vadd.f32 %v7705, %v7880
        %v7886 = vadd.f32 %v7706, %v7882
        %v7887 = vld [vmem:[#allocation6 + $0x68] sm:$0x1]
        %v7888 = vlaneseq
        %v7889 = vshrl.u32 %v7888, 7
        %v7890 = vsub.s32 0, %v7889
        %v7891 = vrot.slane %v7887, %v7890
        %v7892 = vadd.f32 %v7885, %v7891
        %v7893 = vadd.f32 %v7886, %v7891
        %v7894 = vld [vmem:[#allocation6 + $0x6d] sm:$0x1]
        %v7895 = vld [vmem:[#allocation6 + $0x6e] sm:$0x1]
        %v7896 = vsel %vm4970, %v7892, 0.0
        %7897 = vadd.xlane.f32.xlu0 %v7896
        %v7898 = vpop.xlane.xlu0 %7897
        %v7899 = vsel %vm1327, %v7893, 0.0
        %7900 = vadd.xlane.f32.xlu0 %v7899
        %v7901 = vpop.xlane.xlu0 %7900
        %v7902 = vmul.f32 %v7898, %v1331
        %v7903 = vmul.f32 %v7901, %v1331
        %v7904 = vmul.f32 %v7892, %v7892
        %v7905 = vmul.f32 %v7893, %v7893
        %v7906 = vsel %vm4970, %v7904, 0.0
        %7907 = vadd.xlane.f32.xlu0 %v7906
        %v7908 = vpop.xlane.xlu0 %7907
        %v7909 = vsel %vm1327, %v7905, 0.0
        %7910 = vadd.xlane.f32.xlu0 %v7909
        %v7911 = vpop.xlane.xlu0 %7910
        %v7912 = vmul.f32 %v7908, %v1331
        %v7913 = vmul.f32 %v7911, %v1331
        %v7914 = vsub.f32 %v7892, %v7902
        %v7915 = vsub.f32 %v7893, %v7903
        %v7916 = vmul.f32 %v7902, %v7902
        %v7917 = vmul.f32 %v7903, %v7903
        %v7918 = vsub.f32 %v7912, %v7916
        %v7919 = vsub.f32 %v7913, %v7917
        %v7920 = vadd.f32 %v7918, 1e-05
        %v7921 = vadd.f32 %v7919, 1e-05
        %v7922 = vrsqrt.pop %v7920
        %v7923 = vrsqrt.pop %v7921
        %v7924 = vmul.f32 %v7914, %v7922
        %v7925 = vmul.f32 %v7915, %v7923
        %v7926 = vlaneseq
        %v7927 = vshrl.u32 %v7926, 7
        %v7928 = vsub.s32 0, %v7927
        %v7929 = vrot.slane %v7894, %v7928
        %v7930 = vmul.f32 %v7924, %v7929
        %v7931 = vmul.f32 %v7925, %v7929
        %v7932 = vlaneseq
        %v7933 = vshrl.u32 %v7932, 7
        %v7934 = vsub.s32 0, %v7933
        %v7935 = vrot.slane %v7895, %v7934
        %v7936 = vadd.f32 %v7930, %v7935
        %v7937 = vadd.f32 %v7931, %v7935
        %v7938 = vld [vmem:[#allocation6 + $0x6f] sm:$0x1]
        %v7939 = vld [vmem:[#allocation6 + $0x70] sm:$0x1]
        %v7940 = vsel %vm4970, %v7936, 0.0
        %7941 = vadd.xlane.f32.xlu0 %v7940
        %v7942 = vpop.xlane.xlu0 %7941
        %v7943 = vsel %vm1327, %v7937, 0.0
        %7944 = vadd.xlane.f32.xlu0 %v7943
        %v7945 = vpop.xlane.xlu0 %7944
        %v7946 = vmul.f32 %v7942, %v1331
        %v7947 = vmul.f32 %v7945, %v1331
        %v7948 = vmul.f32 %v7936, %v7936
        %v7949 = vmul.f32 %v7937, %v7937
        %v7950 = vsel %vm4970, %v7948, 0.0
        %7951 = vadd.xlane.f32.xlu0 %v7950
        %v7952 = vpop.xlane.xlu0 %7951
        %v7953 = vsel %vm1327, %v7949, 0.0
        %7954 = vadd.xlane.f32.xlu0 %v7953
        %v7955 = vpop.xlane.xlu0 %7954
        %v7956 = vmul.f32 %v7952, %v1331
        %v7957 = vmul.f32 %v7955, %v1331
        %v7958 = vsub.f32 %v7936, %v7946
        %v7959 = vsub.f32 %v7937, %v7947
        %v7960 = vmul.f32 %v7946, %v7946
        %v7961 = vmul.f32 %v7947, %v7947
        %v7962 = vsub.f32 %v7956, %v7960
        %v7963 = vsub.f32 %v7957, %v7961
        %v7964 = vadd.f32 %v7962, 1e-05
        %v7965 = vadd.f32 %v7963, 1e-05
        %v7966 = vrsqrt.pop %v7964
        %v7967 = vrsqrt.pop %v7965
        %v7968 = vmul.f32 %v7958, %v7966
        %v7969 = vmul.f32 %v7959, %v7967
        %v7970 = vlaneseq
        %v7971 = vshrl.u32 %v7970, 7
        %v7972 = vsub.s32 0, %v7971
        %v7973 = vrot.slane %v7938, %v7972
        %v7974 = vmul.f32 %v7968, %v7973
        %v7975 = vmul.f32 %v7969, %v7973
        %v7976 = vlaneseq
        %v7977 = vshrl.u32 %v7976, 7
        %v7978 = vsub.s32 0, %v7977
        %v7979 = vrot.slane %v7939, %v7978
        %v7980 = vadd.f32 %v7974, %v7979
        %v7981 = vadd.f32 %v7975, %v7979
        %v7982 = vpack.c.bf16 %v7981, %v7980
        %v7984 = vrot.slane %v7982, 1
        %v7986 = vsel %vm884, %v7984, 0
        %7988 = vmatprep.subr.bf16.mxu0 0
        %7989 = vmatpush1.bf16.xpose.msra.mxu0 %v4902
        %7990 = vmatprep.subr.bf16.mxu0 0
        %7991 = vmatpush1.bf16.xpose.msra.mxu0 %v4905
        %7992 = vmatprep.subr.bf16.mxu0 0
        %7993 = vmatpush1.bf16.xpose.msra.mxu0 %v4908
        %7994 = vmatprep.subr.bf16.mxu0 0
        %7995 = vmatpush1.bf16.xpose.msra.mxu0 %v4911
        %7996 = vmatprep.subr.bf16.mxu0 0
        %7997 = vmatpush1.bf16.xpose.msra.mxu0 %v4914
        %7998 = vmatprep.subr.bf16.mxu0 0
        %7999 = vmatpush1.bf16.xpose.msra.mxu0 %v4917
        %8000 = vmatprep.subr.bf16.mxu0 0
        %8001 = vmatpush1.bf16.xpose.msra.mxu0 %v4920
        %8002 = vmatprep.subr.bf16.mxu0 0
        %8003 = vmatpush1.bf16.xpose.msra.mxu0 %v4923
        %8004 = vmatprep.subr.bf16.mxu0 0
        %8005 = vmatpush1.bf16.xpose.msra.mxu0 0
        %8006 = vmatprep.subr.bf16.mxu0 0
        %8007 = vmatpush1.bf16.xpose.msra.mxu0 0
        %8008 = vmatprep.subr.bf16.mxu0 0
        %8009 = vmatpush1.bf16.xpose.msra.mxu0 0
        %8010 = vmatprep.subr.bf16.mxu0 0
        %8011 = vmatpush1.bf16.xpose.msra.mxu0 0
        %8012 = vmatprep.subr.bf16.mxu0 0
        %8013 = vmatpush1.bf16.xpose.msra.mxu0 0
        %8014 = vmatprep.subr.bf16.mxu0 0
        %8015 = vmatpush1.bf16.xpose.msra.mxu0 0
        %8016 = vmatprep.subr.bf16.mxu0 0
        %8017 = vmatpush1.bf16.xpose.msra.mxu0 0
        %8018 = vmatprep.subr.bf16.mxu0 0
        %8019 = vmatpush1.bf16.xpose.msra.mxu0 0
        %8020 = vmatprep.mubr.bf16.mxu0 0
        %8021 = vmatmul.mubr.bf16.gmra.mrb[0].mxu0 %v7986
        %v8022 = vpop.f32.mrb[0].mxu0
        %v8023 = vadd.f32 %v4854, %v8022
        %v8024 = vpop.f32.mrb[0].mxu0
        %v8025 = vpop.f32.mrb[0].mxu0
        %v8026 = vadd.f32 %v4854, %v8025
        %v8027 = vpop.f32.mrb[0].mxu0
        %8028 = vdwg.mxu0
        %8029 = vst [vmem:[%s560 + $0x14] sm:$0xff] %v8023
        %8030 = vst [vmem:[%s560 + $0x1c] sm:$0x3] %v8026
        %v8031 = vld [vmem:[#allocation8] sm:$0xff]
        %v8033 = vsel %vm1046, %v8031, 0
        %v8036 = vsel %vm1596, %v4831, 0
        %8038 = vmatprep.subr.mxu0 0.0
        %8039 = vmatpush1.msra.mxu0 %v8036
        %8040 = vmatprep.subr.mxu0 0.0
        %8041 = vmatpush1.msra.mxu0 0.0
        %8042 = vmatprep.subr.mxu0 0.0
        %8043 = vmatpush1.msra.mxu0 0.0
        %8044 = vmatprep.subr.mxu0 0.0
        %8045 = vmatpush1.msra.mxu0 0.0
        %8046 = vmatprep.subr.mxu0 0.0
        %8047 = vmatpush1.msra.mxu0 0.0
        %8048 = vmatprep.subr.mxu0 0.0
        %8049 = vmatpush1.msra.mxu0 0.0
        %8050 = vmatprep.subr.mxu0 0.0
        %8051 = vmatpush1.msra.mxu0 0.0
        %8052 = vmatprep.subr.mxu0 0.0
        %8053 = vmatpush1.msra.mxu0 0.0
        %8054 = vmatprep.subr.mxu0 0.0
        %8055 = vmatpush1.msra.mxu0 0.0
        %8056 = vmatprep.subr.mxu0 0.0
        %8057 = vmatpush1.msra.mxu0 0.0
        %8058 = vmatprep.subr.mxu0 0.0
        %8059 = vmatpush1.msra.mxu0 0.0
        %8060 = vmatprep.subr.mxu0 0.0
        %8061 = vmatpush1.msra.mxu0 0.0
        %8062 = vmatprep.subr.mxu0 0.0
        %8063 = vmatpush1.msra.mxu0 0.0
        %8064 = vmatprep.subr.mxu0 0.0
        %8065 = vmatpush1.msra.mxu0 0.0
        %8066 = vmatprep.subr.mxu0 0.0
        %8067 = vmatpush1.msra.mxu0 0.0
        %8068 = vmatprep.subr.mxu0 0.0
        %8069 = vmatpush1.msra.mxu0 0.0
        %8070 = vmatprep.subr.mxu0 0.0
        %8071 = vmatpush1.msra.mxu0 0.0
        %8072 = vmatprep.subr.mxu0 0.0
        %8073 = vmatpush1.msra.mxu0 0.0
        %8074 = vmatprep.subr.mxu0 0.0
        %8075 = vmatpush1.msra.mxu0 0.0
        %8076 = vmatprep.subr.mxu0 0.0
        %8077 = vmatpush1.msra.mxu0 0.0
        %8078 = vmatprep.subr.mxu0 0.0
        %8079 = vmatpush1.msra.mxu0 0.0
        %8080 = vmatprep.subr.mxu0 0.0
        %8081 = vmatpush1.msra.mxu0 0.0
        %8082 = vmatprep.subr.mxu0 0.0
        %8083 = vmatpush1.msra.mxu0 0.0
        %8084 = vmatprep.subr.mxu0 0.0
        %8085 = vmatpush1.msra.mxu0 0.0
        %8086 = vmatprep.subr.mxu0 0.0
        %8087 = vmatpush1.msra.mxu0 0.0
        %8088 = vmatprep.subr.mxu0 0.0
        %8089 = vmatpush1.msra.mxu0 0.0
        %8090 = vmatprep.subr.mxu0 0.0
        %8091 = vmatpush1.msra.mxu0 0.0
        %8092 = vmatprep.subr.mxu0 0.0
        %8093 = vmatpush1.msra.mxu0 0.0
        %8094 = vmatprep.subr.mxu0 0.0
        %8095 = vmatpush1.msra.mxu0 0.0
        %8096 = vmatprep.subr.mxu0 0.0
        %8097 = vmatpush1.msra.mxu0 0.0
        %8098 = vmatprep.subr.mxu0 0.0
        %8099 = vmatpush1.msra.mxu0 0.0
        %8100 = vmatprep.subr.mxu0 0.0
        %8101 = vmatpush1.msra.mxu0 0.0
        %8102 = vmatprep.mubr.f32.mxu0 0.0
        %8103 = vmatmul.mubr.f32.gmra.mrb[0].mxu0 %v8033
        %v8104 = vpop.f32.mrb[0].mxu0
        %v8105 = vadd.f32 0.0, %v8104
        %v8106 = vpop.f32.mrb[0].mxu0
        %8107 = vdwg.mxu0
        %v8108 = vpack.c.bf16 %v8105, %v8105
        %v8110 = vsel %vm884, %v8108, 0
        %8112 = vmatprep.subr.bf16.mxu0 0
        %8113 = vmatpush1.bf16.xpose.msra.mxu0 %v4902
        %8114 = vmatprep.subr.bf16.mxu0 0
        %8115 = vmatpush1.bf16.xpose.msra.mxu0 %v4905
        %8116 = vmatprep.subr.bf16.mxu0 0
        %8117 = vmatpush1.bf16.xpose.msra.mxu0 %v4908
        %8118 = vmatprep.subr.bf16.mxu0 0
        %8119 = vmatpush1.bf16.xpose.msra.mxu0 %v4911
        %8120 = vmatprep.subr.bf16.mxu0 0
        %8121 = vmatpush1.bf16.xpose.msra.mxu0 %v4914
        %8122 = vmatprep.subr.bf16.mxu0 0
        %8123 = vmatpush1.bf16.xpose.msra.mxu0 %v4917
        %8124 = vmatprep.subr.bf16.mxu0 0
        %8125 = vmatpush1.bf16.xpose.msra.mxu0 %v4920
        %8126 = vmatprep.subr.bf16.mxu0 0
        %8127 = vmatpush1.bf16.xpose.msra.mxu0 %v4923
        %8128 = vmatprep.subr.bf16.mxu0 0
        %8129 = vmatpush1.bf16.xpose.msra.mxu0 0
        %8130 = vmatprep.subr.bf16.mxu0 0
        %8131 = vmatpush1.bf16.xpose.msra.mxu0 0
        %8132 = vmatprep.subr.bf16.mxu0 0
        %8133 = vmatpush1.bf16.xpose.msra.mxu0 0
        %8134 = vmatprep.subr.bf16.mxu0 0
        %8135 = vmatpush1.bf16.xpose.msra.mxu0 0
        %8136 = vmatprep.subr.bf16.mxu0 0
        %8137 = vmatpush1.bf16.xpose.msra.mxu0 0
        %8138 = vmatprep.subr.bf16.mxu0 0
        %8139 = vmatpush1.bf16.xpose.msra.mxu0 0
        %8140 = vmatprep.subr.bf16.mxu0 0
        %8141 = vmatpush1.bf16.xpose.msra.mxu0 0
        %8142 = vmatprep.subr.bf16.mxu0 0
        %8143 = vmatpush1.bf16.xpose.msra.mxu0 0
        %8144 = vmatprep.mubr.bf16.mxu0 0
        %8145 = vmatmul.mubr.bf16.gmra.mrb[0].mxu0 %v8110
        %v8146 = vpop.f32.mrb[0].mxu0
        %v8147 = vadd.f32 %v4854, %v8146
        %v8148 = vpop.f32.mrb[0].mxu0
        %v8149 = vpop.f32.mrb[0].mxu0
        %v8150 = vpop.f32.mrb[0].mxu0
        %8151 = vdwg.mxu0
        %8152 = vst [vmem:[%s560 + $0x1e] sm:$0xff] %v8147
        %p8153 = scmp.lt.s32.totalorder %s28, 1
        %s8154 = scalar_select %p8153, %s28, 1
        %s8155 = smul.addr %s8154, 5
        %s8156 = smul.addr %s8155, 8
        %s8157 = scalar_lea.vmem %s13, %s8156
        // Predicated region
        $region101: #{forward.1} parent=71 // pred_check
          %p8158 = pneg %p329
        $region102: #{forward.1} parent=71 // pred_check_branch
          %8160 = sbr.rel (%p8158) target = $region104
        $region103: #{forward.1} parent=71 // pred_region
          _
        $region104: #{forward.1} parent=71 // pred_fallthru
          _
      $region72: #{forward.1} parent=5 // pred_fallthru
        _
      %p8161 = scmp.le.s32.totalorder 2, %s23
      // Predicated region
      $region105: #{forward.1} parent=5 // pred_check
        %p8162 = pneg %p8161
      $region106: #{forward.1} parent=5 // pred_check_branch
        %8164 = sbr.rel (%p8162) target = $region108
      $region107: #{forward.1} parent=5 // pred_region
        %s8165 = ssub.s32 %s23, 2
        // Predicated region
        $region109: #{forward.1} parent=107 // pred_check
          %p8166 = pneg %p335
        $region110: #{forward.1} parent=107 // pred_check_branch
          %8168 = sbr.rel (%p8166) target = $region112
        $region111: #{forward.1} parent=107 // pred_region
          %p8169 = scmp.lt.s32.totalorder %s29, 1
          %s8170 = scalar_select %p8169, %s29, 1
          %s8171 = smul.addr %s8170, 5
          %s8172 = smul.addr %s8171, 8
          %s8173 = scalar_lea.vmem %s13, %s8172
        $region112: #{forward.1} parent=107 // pred_fallthru
          _
      $region108: #{forward.1} parent=5 // pred_fallthru
        _
    $region6: #{forward.1} parent=1 // loop_footer
      %s27 = sadd.s32 1, %s23
    $region7: #{forward.1} parent=1 // loop_footer_branch
      %22 = sbr.rel target = $region3
    $region8: #{forward.1} parent=1 // loop_exit
      _
    %8174 = vsyncpa [#allocation5], 1
    %s8175 = scalar_lea.sflag [#allocation5], 1
    %8176 = vsyncpa %s8175, 1
    %8177 = vsyncpa [#allocation7], 1
    %8178 = vsyncpa [#allocation10], 1
    %8179 = vsyncpa [#allocation13], 1

</llo_original>
